<compile_context>
chip_gen: v6e
topology: v6e:2x2x1
jax: 0.10.0
libtpu: 0.0.40
codegen_flags: <defaults>
</compile_context>

<pallas_src>
import functools
import math

import numpy as np
import jax
import jax.numpy as jnp
from jax.experimental import pallas as pl
from jax.experimental.pallas import tpu as pltpu

# ---------------- config (the `opt` of HDRPointwiseNN) ----------------
LUMA_BINS = 2        # lb
CHANNEL_MULT = 1     # cm
SPATIAL_BIN = 2      # sb
NET_INPUT_SIZE = 32  # lowres H = W
BATCH_NORM = True
THETA = 0.7
NIN, NOUT = 4, 3

MEAN = (0.485, 0.456, 0.406)
STD = (0.229, 0.224, 0.225)
BN_EPS = 1e-5


# =====================================================================
# structural constants (only the small pool-compaction matrices remain)
# =====================================================================
@functools.lru_cache(maxsize=None)
def _pool_compact_mat(H, W):
    """(P, P//4) 0/1 matrix selecting the top-left pixel of every 2x2 cell."""
    P, Ho, Wo = H * W, H // 2, W // 2
    S = np.zeros((P, Ho * Wo), np.float32)
    for i2 in range(Ho):
        for j2 in range(Wo):
            S[(2 * i2) * W + (2 * j2), i2 * Wo + j2] = 1.0
    return S


def _bcast_spec(a, ngrid):
    """Constant (grid-invariant) block: full array, index map -> zeros."""
    nd = a.ndim
    if ngrid == 1:
        im = lambda b: (0,) * nd
    else:
        im = lambda b, t: (0,) * nd
    return pl.BlockSpec(tuple(a.shape), im)


# =====================================================================
# weight folding helpers (wrapper / XLA side)
# =====================================================================
def _fold_cd(w, theta):
    """Central-difference conv folded into an effective 3x3 kernel."""
    return w.at[:, :, 1, 1].add(-theta * w.sum(axis=(2, 3)))


def _fold_bn(w, b, bn):
    """Eval-mode BN folded into conv weight / bias.  w: (O, ...)."""
    if b is None:
        b = jnp.zeros((w.shape[0],), jnp.float32)
    if bn is None:
        return w, b
    scale = bn["gamma"] / jnp.sqrt(bn["var"] + BN_EPS)
    w = w * scale.reshape((-1,) + (1,) * (w.ndim - 1))
    b = (b - bn["mean"]) * scale + bn["beta"]
    return w, b


def _conv_w9(w):
    """(O, C, 3, 3) -> (O, 9*C); column index = (kh*3 + kw)*C + c (tap-major)."""
    O, C = w.shape[0], w.shape[1]
    return jnp.transpose(w, (0, 2, 3, 1)).reshape(O, 9 * C)


# =====================================================================
# in-kernel building blocks (kernel 1)
# =====================================================================
def _shift_px(x, off):
    """out[:, p] = x[:, p + off] if 0 <= p + off < P else 0   (static off)."""
    if off == 0:
        return x
    C, P = x.shape
    pad = jnp.zeros((C, abs(off)), x.dtype)
    if off > 0:
        return jnp.concatenate([x[:, off:], pad], axis=1)
    return jnp.concatenate([pad, x[:, :P + off]], axis=1)


def _conv3x3(x, w_ref, b_ref, W, relu):
    """3x3 'same' conv on (C, P) (row-major pixels, width W = power of 2).

    Builds the 9 shifted/masked copies in registers, stacks them to (9C, P)
    and does a single MXU matmul against the (O, 9C) folded weight matrix."""
    C, P = x.shape
    lane = jax.lax.broadcasted_iota(jnp.int32, (1, P), 1)
    j = jnp.bitwise_and(lane, W - 1)                    # column index (W is 2^k)
    ok_left = j > 0
    ok_right = j < (W - 1)
    taps = []
    for dh in (-1, 0, 1):
        for dw in (-1, 0, 1):
            s = _shift_px(x, dh * W + dw)
            if dw == -1:
                s = jnp.where(ok_left, s, 0.0)
            elif dw == 1:
                s = jnp.where(ok_right, s, 0.0)
            taps.append(s)
    xs = jnp.concatenate(taps, axis=0)                  # (9*C, P)
    y = jnp.dot(w_ref[...], xs, preferred_element_type=jnp.float32) + b_ref[...]
    return jnp.maximum(y, 0.0) if relu else y


def _maxpool2(x, W, csel_ref):
    """2x2 stride-2 maxpool on (C, P): max of shifted copies + one compaction."""
    m = x
    for off in (1, W, W + 1):
        m = jnp.maximum(m, _shift_px(x, off))
    return jnp.dot(m, csel_ref[...], preferred_element_type=jnp.float32)


# =====================================================================
# Pallas kernel 1: fused Coeffs path (one grid step per batch element)
# =====================================================================
def _coeffs_kernel(x_ref,
                   w0_ref, b0_ref, w1_ref, b1_ref, w2_ref, b2_ref, w3_ref, b3_ref,
                   r1aw, r1ab, r1bw, r1bb,
                   r2aw, r2ab, r2bw, r2bb,
                   r3aw, r3ab, r3bw, r3bb,
                   wq_ref, bq_ref, wk_ref, bk_ref, wv_ref, bv_ref, gamma_ref,
                   wout_ref, bout_ref,
                   c32_ref, c16_ref, c8_ref, c4_ref,
                   o_ref, *, nsize, inv_d):
    W = nsize
    x = x_ref[0]                                                       # (3, 1024)

    # --- splat stages: Conv2d_cd(+BN folded)+relu, then 2x2 maxpool ---
    x = _maxpool2(_conv3x3(x, w0_ref, b0_ref, W, True), W, c32_ref); W //= 2   # (2, 256)
    x = _maxpool2(_conv3x3(x, w1_ref, b1_ref, W, True), W, c16_ref); W //= 2   # (4, 64)
    x = _maxpool2(_conv3x3(x, w2_ref, b2_ref, W, True), W, c8_ref);  W //= 2   # (8, 16)
    x = _maxpool2(_conv3x3(x, w3_ref, b3_ref, W, True), W, c4_ref);  W //= 2   # (16, 4)

    # --- 3 residual blocks at 2x2 ---
    for wa, ba, wb, bb in ((r1aw, r1ab, r1bw, r1bb),
                           (r2aw, r2ab, r2bw, r2bb),
                           (r3aw, r3ab, r3bw, r3bb)):
        h = _conv3x3(x, wa, ba, W, True)
        h = _conv3x3(h, wb, bb, W, False)
        x = jnp.maximum(x + h, 0.0)

    # --- self-attention over the N = 4 spatial positions ---
    q = jnp.dot(wq_ref[...], x, preferred_element_type=jnp.float32) + bq_ref[...]   # (dq, N)
    k = jnp.dot(wk_ref[...], x, preferred_element_type=jnp.float32) + bk_ref[...]   # (dq, N)
    v = jnp.dot(wv_ref[...], x, preferred_element_type=jnp.float32) + bv_ref[...]   # (C, N)
    e = jnp.dot(q.T, k, preferred_element_type=jnp.float32) * inv_d                 # (N, N)
    e = e - jnp.max(e, axis=-1, keepdims=True)
    a = jnp.exp(e)
    a = a / jnp.sum(a, axis=-1, keepdims=True)
    sa_out = jnp.dot(v, a.T, preferred_element_type=jnp.float32)                    # (C, N)
    x = gamma_ref[...] * sa_out + x

    # --- 1x1 output conv -> (lb*nin*nout, sb*sb) ---
    o_ref[0] = jnp.dot(wout_ref[...], x, preferred_element_type=jnp.float32) + bout_ref[...]


def coeffs_forward(params, lowres):
    B, C_in, H, W = lowres.shape
    n_layers = int(math.log2(NET_INPUT_SIZE / SPATIAL_BIN))
    assert n_layers == 4 and H == NET_INPUT_SIZE and W == NET_INPUT_SIZE and C_in == 3
    assert (H & (H - 1)) == 0 and (W & (W - 1)) == 0

    # splat convs: cd-fold (+ eval-mode BN fold) as (O, 9C) tap-major matrices
    splat_in = []
    for li in range(4):
        sp = params["splat"][li]
        w, b = _fold_bn(_fold_cd(sp["w"], THETA), None, sp["bn"])
        splat_in += [_conv_w9(w), b.reshape(-1, 1)]

    res_in = []
    for rp in params["res"]:
        wa, ba = _fold_bn(rp["w1"], None, rp["bn1"])
        wb, bb = _fold_bn(rp["w2"], None, rp["bn2"])
        res_in += [_conv_w9(wa), ba.reshape(-1, 1), _conv_w9(wb), bb.reshape(-1, 1)]

    sa = params["sa"]
    wq = sa["wq"].reshape(sa["wq"].shape[0], -1); bq = sa["bq"].reshape(-1, 1)
    wk = sa["wk"].reshape(sa["wk"].shape[0], -1); bk = sa["bk"].reshape(-1, 1)
    wv = sa["wv"].reshape(sa["wv"].shape[0], -1); bv = sa["bv"].reshape(-1, 1)
    gamma = jnp.asarray(sa["gamma"], jnp.float32).reshape(1, 1)
    wout = params["out_w"].reshape(params["out_w"].shape[0], -1)
    bout = params["out_b"].reshape(-1, 1)

    # pool compaction matrices (the only structural constants, ~1 MiB total)
    csel = [jnp.asarray(_pool_compact_mat(H >> i, W >> i)) for i in range(4)]

    x_flat = lowres.reshape(B, 3, H * W)
    inputs = [x_flat, *splat_in, *res_in,
              wq, bq, wk, bk, wv, bv, gamma, wout, bout, *csel]

    in_specs = [pl.BlockSpec((1, 3, H * W), lambda b: (b, 0, 0))]
    in_specs += [_bcast_spec(a, 1) for a in inputs[1:]]

    nch = LUMA_BINS * NIN * NOUT                                       # 24
    ncell = SPATIAL_BIN * SPATIAL_BIN                                  # 4
    dq = wq.shape[0]
    kern = functools.partial(_coeffs_kernel, nsize=W, inv_d=1.0 / math.sqrt(dq))

    y = pl.pallas_call(
        kern,
        out_shape=jax.ShapeDtypeStruct((B, nch, ncell), jnp.float32),
        grid=(B,),
        in_specs=in_specs,
        out_specs=pl.BlockSpec((1, nch, ncell), lambda b: (b, 0, 0)),
        compiler_params=pltpu.CompilerParams(
            dimension_semantics=("parallel",)),
    )(*inputs)
    # TODO(synk): for large batches, lane-batch several images per grid step to
    # fill the MXU at the deep (4x4 / 2x2) stages.

    # torch: stack(split(x, 12, dim=1), 2) -> (B, 12, lb, sb, sb)
    # here:  (B, lb*12, sb*sb) -> cells (B, 12, lb*sb*sb), cell = d*sb*sb + iy*sb + ix
    grid_cells = (y.reshape(B, LUMA_BINS, NIN * NOUT, ncell)
                    .transpose(0, 2, 1, 3)
                    .reshape(B, NIN * NOUT, LUMA_BINS * ncell))
    return grid_cells


# =====================================================================
# Pallas kernel 2: fused GuideNN + Slice + ApplyCoeffs + sigmoid + clip
# =====================================================================
def _fullres_kernel(fr_ref, grid_ref, wg1_ref, bg1_ref, wg2_ref, bg2_ref,
                    out_ref, guide_ref, *, lb, sb, H, W):
    fr = fr_ref[0]                                                     # (3, TP), normalized RGB
    TP = fr.shape[1]

    # ---- GuideNN: 1x1 conv (BN folded) + relu, then 1x1 conv + tanh ----
    g = jnp.dot(wg1_ref[...], fr, preferred_element_type=jnp.float32) + bg1_ref[...]
    g = jnp.maximum(g, 0.0)
    guide = jnp.tanh(jnp.dot(wg2_ref[...], g, preferred_element_type=jnp.float32) + bg2_ref[...])
    guide_ref[0] = guide                                               # (1, TP) single store

    # ---- per-pixel (h, w) recovered in-kernel (no HBM tent matrix) ----
    t = pl.program_id(1)
    idx = jax.lax.broadcasted_iota(jnp.int32, (1, TP), 1) + t * TP
    if (W & (W - 1)) == 0:                              # exact bit ops for 2^k widths
        sh = W.bit_length() - 1
        hN = (idx >> sh).astype(jnp.float32)
        wN = (idx & (W - 1)).astype(jnp.float32)
    else:                                               # exact for P <= 2^22 (asserted)
        pf = idx.astype(jnp.float32)
        hN = jnp.floor((pf + 0.5) * (1.0 / W))
        wN = pf - hN * W
    a_co = hN * ((sb - 1) / max(H - 1, 1))              # row coord -> pairs with ix
    b_co = wN * ((sb - 1) / max(W - 1, 1))              # col coord -> pairs with iy
    zc = (guide + 1.0) * (0.5 * (lb - 1))               # depth coord from tanh guide

    # ---- trilinear slice: one fused matmul over all (d, iy, ix) cells ----
    rows = []
    for d in range(lb):
        wz = jnp.maximum(1.0 - jnp.abs(zc - float(d)), 0.0)
        for iy in range(sb):
            wy = jnp.maximum(1.0 - jnp.abs(b_co - float(iy)), 0.0)
            for ix in range(sb):
                wx = jnp.maximum(1.0 - jnp.abs(a_co - float(ix)), 0.0)
                rows.append(wz * wy * wx)
    wall = jnp.concatenate(rows, axis=0)                               # (lb*sb*sb, TP)
    coeff = jnp.dot(grid_ref[0], wall, preferred_element_type=jnp.float32)  # (12, TP)

    # ---- ApplyCoeffs on the denormalized input, then sigmoid + clip ----
    r_in = fr[0:1] * STD[0] + MEAN[0]
    g_in = fr[1:2] * STD[1] + MEAN[1]
    b_in = fr[2:3] * STD[2] + MEAN[2]
    rr = coeff[0:1] * r_in + coeff[1:2] * g_in + coeff[2:3] * b_in + coeff[3:4]
    gg = coeff[4:5] * r_in + coeff[5:6] * g_in + coeff[6:7] * b_in + coeff[7:8]
    bb = coeff[8:9] * r_in + coeff[9:10] * g_in + coeff[10:11] * b_in + coeff[11:12]
    # The clip bounds ((0-mean)/std, (1-mean)/std) lie outside sigmoid's (0,1)
    # range, so this matches the (effectively no-op) clip of the torch reference.
    rr = jnp.clip(jax.nn.sigmoid(rr), (0.0 - MEAN[0]) / STD[0], (1.0 - MEAN[0]) / STD[0])
    gg = jnp.clip(jax.nn.sigmoid(gg), (0.0 - MEAN[1]) / STD[1], (1.0 - MEAN[1]) / STD[1])
    bb = jnp.clip(jax.nn.sigmoid(bb), (0.0 - MEAN[2]) / STD[2], (1.0 - MEAN[2]) / STD[2])
    out_ref[0] = jnp.concatenate([rr, gg, bb], axis=0)                 # (3, TP) single store


def fullres_apply(params, grid_cells, fullres):
    B, _, H, W = fullres.shape
    P = H * W
    if (W & (W - 1)) != 0:
        # TODO(synk): float-based in-kernel h,w recovery is exact only up to ~4M
        # pixels for non-power-of-two widths.
        assert P <= (1 << 22)

    # lane-dense pixel tile: capped so VMEM stays small even on v7x; pad P up.
    TP = min(16384, ((P + 127) // 128) * 128)
    Ppad = ((P + TP - 1) // TP) * TP
    nt = Ppad // TP

    fr = fullres.reshape(B, 3, P)
    if Ppad != P:
        fr = jnp.pad(fr, ((0, 0), (0, 0), (0, Ppad - P)))

    wg1, bg1 = _fold_bn(params["g1_w"].reshape(params["g1_w"].shape[0], -1),
                        params["g1_b"], params["g1_bn"])
    bg1 = bg1.reshape(-1, 1)
    wg2 = params["g2_w"].reshape(params["g2_w"].shape[0], -1)
    bg2 = params["g2_b"].reshape(-1, 1)

    nsp = SPATIAL_BIN * SPATIAL_BIN
    kern = functools.partial(_fullres_kernel, lb=LUMA_BINS, sb=SPATIAL_BIN, H=H, W=W)
    out, guide = pl.pallas_call(
        kern,
        out_shape=(jax.ShapeDtypeStruct((B, 3, Ppad), jnp.float32),
                   jax.ShapeDtypeStruct((B, 1, Ppad), jnp.float32)),
        grid=(B, nt),
        in_specs=[
            pl.BlockSpec((1, 3, TP), lambda b, t: (b, 0, t)),
            pl.BlockSpec((1, NIN * NOUT, LUMA_BINS * nsp), lambda b, t: (b, 0, 0)),
            _bcast_spec(wg1, 2), _bcast_spec(bg1, 2),
            _bcast_spec(wg2, 2), _bcast_spec(bg2, 2),
        ],
        out_specs=(
            pl.BlockSpec((1, 3, TP), lambda b, t: (b, 0, t)),
            pl.BlockSpec((1, 1, TP), lambda b, t: (b, 0, t)),
        ),
        compiler_params=pltpu.CompilerParams(
            dimension_semantics=("parallel", "parallel")),
    )(fr, grid_cells, wg1, bg1, wg2, bg2)
    out = out[:, :, :P].reshape(B, 3, H, W)
    guide = guide[:, :, :P].reshape(B, 1, H, W)
    return out, guide


# =====================================================================
# parameter init (deterministic, synthetic) and full forward
# =====================================================================
def init_params(key):
    keys = iter(jax.random.split(key, 64))
    nxt = lambda: next(keys)

    def conv_w(o, i, k):
        return jax.random.normal(nxt(), (o, i, k, k), jnp.float32) / math.sqrt(i * k * k)

    def bias(o):
        return 0.01 * jax.random.normal(nxt(), (o,), jnp.float32)

    def bn_init(ch):
        return {
            "gamma": 1.0 + 0.05 * jax.random.normal(nxt(), (ch,), jnp.float32),
            "beta": 0.05 * jax.random.normal(nxt(), (ch,), jnp.float32),
            "mean": jnp.zeros((ch,), jnp.float32),
            "var": jnp.ones((ch,), jnp.float32),
        }

    n_layers = int(math.log2(NET_INPUT_SIZE / SPATIAL_BIN))  # = 4
    params = {"splat": [], "res": []}
    prev = 3
    for i in range(n_layers):
        out_ch = CHANNEL_MULT * (2 ** i) * LUMA_BINS
        params["splat"].append({
            "w": conv_w(out_ch, prev, 3),
            "bn": bn_init(out_ch) if (i > 0 and BATCH_NORM) else None,
        })
        prev = out_ch
    for _ in range(3):
        params["res"].append({
            "w1": conv_w(prev, prev, 3), "bn1": bn_init(prev),
            "w2": conv_w(prev, prev, 3), "bn2": bn_init(prev),
        })
    dq = prev // 8
    params["sa"] = {
        "wq": conv_w(dq, prev, 1), "bq": bias(dq),
        "wk": conv_w(dq, prev, 1), "bk": bias(dq),
        "wv": conv_w(prev, prev, 1), "bv": bias(prev),
        "gamma": 0.0,  # nn.Parameter(torch.zeros(1))
    }
    params["out_w"] = conv_w(LUMA_BINS * NIN * NOUT, prev, 1)
    params["out_b"] = bias(LUMA_BINS * NIN * NOUT)
    params["g1_w"] = conv_w(16, 3, 1)
    params["g1_b"] = bias(16)
    params["g1_bn"] = bn_init(16)
    params["g2_w"] = conv_w(1, 16, 1)
    params["g2_b"] = bias(1)
    return params


def hdr_forward(params, lowres, fullres):
    grid_cells = coeffs_forward(params, lowres)          # (B, 12, lb*sb*sb)
    out, guide = fullres_apply(params, grid_cells, fullres)
    return out, guide


if __name__ == "__main__":
    root = jax.random.PRNGKey(0)
    kp, kl, kf = jax.random.split(root, 3)
    params = init_params(kp)
    lowres = jax.random.normal(kl, (2, 3, NET_INPUT_SIZE, NET_INPUT_SIZE), jnp.float32) * 0.5
    fullres = jax.random.normal(kf, (2, 3, 16, 16), jnp.float32) * 0.5

    fwd = jax.jit(functools.partial(hdr_forward, params))
    out, guide = fwd(lowres, fullres)
    jax.block_until_ready((out, guide))
    assert out.shape == (2, 3, 16, 16) and guide.shape == (2, 1, 16, 16)
    assert bool(jnp.isfinite(out).all()) and bool(jnp.isfinite(guide).all())
    print("KERNEL_OK")
</pallas_src>

<mosaic_0001>
module attributes {stable_mosaic.version = 11 : i64} {
  func.func @_coeffs_kernel(%arg0: i32, %arg1: memref<1x3x1024xf32, #tpu.memory_space<vmem>>, %arg2: memref<2x27xf32, #tpu.memory_space<vmem>>, %arg3: memref<2x1xf32, #tpu.memory_space<vmem>>, %arg4: memref<4x18xf32, #tpu.memory_space<vmem>>, %arg5: memref<4x1xf32, #tpu.memory_space<vmem>>, %arg6: memref<8x36xf32, #tpu.memory_space<vmem>>, %arg7: memref<8x1xf32, #tpu.memory_space<vmem>>, %arg8: memref<16x72xf32, #tpu.memory_space<vmem>>, %arg9: memref<16x1xf32, #tpu.memory_space<vmem>>, %arg10: memref<16x144xf32, #tpu.memory_space<vmem>>, %arg11: memref<16x1xf32, #tpu.memory_space<vmem>>, %arg12: memref<16x144xf32, #tpu.memory_space<vmem>>, %arg13: memref<16x1xf32, #tpu.memory_space<vmem>>, %arg14: memref<16x144xf32, #tpu.memory_space<vmem>>, %arg15: memref<16x1xf32, #tpu.memory_space<vmem>>, %arg16: memref<16x144xf32, #tpu.memory_space<vmem>>, %arg17: memref<16x1xf32, #tpu.memory_space<vmem>>, %arg18: memref<16x144xf32, #tpu.memory_space<vmem>>, %arg19: memref<16x1xf32, #tpu.memory_space<vmem>>, %arg20: memref<16x144xf32, #tpu.memory_space<vmem>>, %arg21: memref<16x1xf32, #tpu.memory_space<vmem>>, %arg22: memref<2x16xf32, #tpu.memory_space<vmem>>, %arg23: memref<2x1xf32, #tpu.memory_space<vmem>>, %arg24: memref<2x16xf32, #tpu.memory_space<vmem>>, %arg25: memref<2x1xf32, #tpu.memory_space<vmem>>, %arg26: memref<16x16xf32, #tpu.memory_space<vmem>>, %arg27: memref<16x1xf32, #tpu.memory_space<vmem>>, %arg28: memref<1x1xf32, #tpu.memory_space<vmem>>, %arg29: memref<24x16xf32, #tpu.memory_space<vmem>>, %arg30: memref<24x1xf32, #tpu.memory_space<vmem>>, %arg31: memref<1024x256xf32, #tpu.memory_space<vmem>>, %arg32: memref<256x64xf32, #tpu.memory_space<vmem>>, %arg33: memref<64x16xf32, #tpu.memory_space<vmem>>, %arg34: memref<16x4xf32, #tpu.memory_space<vmem>>, %arg35: memref<1x24x4xf32, #tpu.memory_space<vmem>>) attributes {dimension_semantics = [#tpu.dimension_semantics<parallel>], iteration_bounds = array<i64: 2>, scalar_prefetch = 0 : i64, scratch_operands = 0 : i64, tpu.core_type = #tpu.core_type<tc>, window_params = [{transform_indices = @transform_0, window_bounds = array<i64: 1, 3, 1024>}, {pipeline_mode = #tpu.pipeline_mode<synchronous>, transform_indices = @transform_1, window_bounds = array<i64: 2, 27>}, {pipeline_mode = #tpu.pipeline_mode<synchronous>, transform_indices = @transform_2, window_bounds = array<i64: 2, 1>}, {pipeline_mode = #tpu.pipeline_mode<synchronous>, transform_indices = @transform_3, window_bounds = array<i64: 4, 18>}, {pipeline_mode = #tpu.pipeline_mode<synchronous>, transform_indices = @transform_4, window_bounds = array<i64: 4, 1>}, {pipeline_mode = #tpu.pipeline_mode<synchronous>, transform_indices = @transform_5, window_bounds = array<i64: 8, 36>}, {pipeline_mode = #tpu.pipeline_mode<synchronous>, transform_indices = @transform_6, window_bounds = array<i64: 8, 1>}, {pipeline_mode = #tpu.pipeline_mode<synchronous>, transform_indices = @transform_7, window_bounds = array<i64: 16, 72>}, {pipeline_mode = #tpu.pipeline_mode<synchronous>, transform_indices = @transform_8, window_bounds = array<i64: 16, 1>}, {pipeline_mode = #tpu.pipeline_mode<synchronous>, transform_indices = @transform_9, window_bounds = array<i64: 16, 144>}, {pipeline_mode = #tpu.pipeline_mode<synchronous>, transform_indices = @transform_10, window_bounds = array<i64: 16, 1>}, {pipeline_mode = #tpu.pipeline_mode<synchronous>, transform_indices = @transform_11, window_bounds = array<i64: 16, 144>}, {pipeline_mode = #tpu.pipeline_mode<synchronous>, transform_indices = @transform_12, window_bounds = array<i64: 16, 1>}, {pipeline_mode = #tpu.pipeline_mode<synchronous>, transform_indices = @transform_13, window_bounds = array<i64: 16, 144>}, {pipeline_mode = #tpu.pipeline_mode<synchronous>, transform_indices = @transform_14, window_bounds = array<i64: 16, 1>}, {pipeline_mode = #tpu.pipeline_mode<synchronous>, transform_indices = @transform_15, window_bounds = array<i64: 16, 144>}, {pipeline_mode = #tpu.pipeline_mode<synchronous>, transform_indices = @transform_16, window_bounds = array<i64: 16, 1>}, {pipeline_mode = #tpu.pipeline_mode<synchronous>, transform_indices = @transform_17, window_bounds = array<i64: 16, 144>}, {pipeline_mode = #tpu.pipeline_mode<synchronous>, transform_indices = @transform_18, window_bounds = array<i64: 16, 1>}, {pipeline_mode = #tpu.pipeline_mode<synchronous>, transform_indices = @transform_19, window_bounds = array<i64: 16, 144>}, {pipeline_mode = #tpu.pipeline_mode<synchronous>, transform_indices = @transform_20, window_bounds = array<i64: 16, 1>}, {pipeline_mode = #tpu.pipeline_mode<synchronous>, transform_indices = @transform_21, window_bounds = array<i64: 2, 16>}, {pipeline_mode = #tpu.pipeline_mode<synchronous>, transform_indices = @transform_22, window_bounds = array<i64: 2, 1>}, {pipeline_mode = #tpu.pipeline_mode<synchronous>, transform_indices = @transform_23, window_bounds = array<i64: 2, 16>}, {pipeline_mode = #tpu.pipeline_mode<synchronous>, transform_indices = @transform_24, window_bounds = array<i64: 2, 1>}, {pipeline_mode = #tpu.pipeline_mode<synchronous>, transform_indices = @transform_25, window_bounds = array<i64: 16, 16>}, {pipeline_mode = #tpu.pipeline_mode<synchronous>, transform_indices = @transform_26, window_bounds = array<i64: 16, 1>}, {pipeline_mode = #tpu.pipeline_mode<synchronous>, transform_indices = @transform_27, window_bounds = array<i64: 1, 1>}, {pipeline_mode = #tpu.pipeline_mode<synchronous>, transform_indices = @transform_28, window_bounds = array<i64: 24, 16>}, {pipeline_mode = #tpu.pipeline_mode<synchronous>, transform_indices = @transform_29, window_bounds = array<i64: 24, 1>}, {pipeline_mode = #tpu.pipeline_mode<synchronous>, transform_indices = @transform_30, window_bounds = array<i64: 1024, 256>}, {pipeline_mode = #tpu.pipeline_mode<synchronous>, transform_indices = @transform_31, window_bounds = array<i64: 256, 64>}, {pipeline_mode = #tpu.pipeline_mode<synchronous>, transform_indices = @transform_32, window_bounds = array<i64: 64, 16>}, {pipeline_mode = #tpu.pipeline_mode<synchronous>, transform_indices = @transform_33, window_bounds = array<i64: 16, 4>}, {transform_indices = @transform_34, window_bounds = array<i64: 1, 24, 4>}]} {
    %c0 = arith.constant 0 : index
    %c0_0 = arith.constant 0 : index
    %c0_1 = arith.constant 0 : index
    %0 = vector.load %arg1[%c0, %c0_0, %c0_1] : memref<1x3x1024xf32, #tpu.memory_space<vmem>>, vector<1x3x1024xf32>
    %1 = vector.shape_cast %0 : vector<1x3x1024xf32> to vector<3x1024xf32>
    %2 = tpu.iota {dimensions = array<i32: 1>} : vector<1x1024xi32>
    %c31_i32 = arith.constant 31 : i32
    %3 = vector.broadcast %c31_i32 : i32 to vector<1x1024xi32>
    %4 = arith.andi %2, %3 : vector<1x1024xi32>
    %c0_i32 = arith.constant 0 : i32
    %5 = vector.broadcast %c0_i32 : i32 to vector<1x1024xi32>
    %6 = arith.cmpi sgt, %4, %5 : vector<1x1024xi32>
    %c31_i32_2 = arith.constant 31 : i32
    %7 = vector.broadcast %c31_i32_2 : i32 to vector<1x1024xi32>
    %8 = arith.cmpi slt, %4, %7 : vector<1x1024xi32>
    %cst = arith.constant 0.000000e+00 : f32
    %9 = vector.broadcast %cst : f32 to vector<3x33xf32>
    %10 = vector.extract_strided_slice %1 {offsets = [0, 0], sizes = [3, 991], strides = [1, 1]} : vector<3x1024xf32> to vector<3x991xf32>
    %11 = tpu.concatenate %9, %10 in 1 : vector<3x33xf32>, vector<3x991xf32> -> vector<3x1024xf32>
    %cst_3 = arith.constant 0.000000e+00 : f32
    %12 = vector.shape_cast %6 : vector<1x1024xi1> to vector<1x1024xi1>
    %13 = vector.broadcast %12 : vector<1x1024xi1> to vector<3x1024xi1>
    %14 = vector.broadcast %cst_3 : f32 to vector<3x1024xf32>
    %15 = arith.select %13, %11, %14 : vector<3x1024xi1>, vector<3x1024xf32>
    %cst_4 = arith.constant 0.000000e+00 : f32
    %16 = vector.broadcast %cst_4 : f32 to vector<3x32xf32>
    %17 = vector.extract_strided_slice %1 {offsets = [0, 0], sizes = [3, 992], strides = [1, 1]} : vector<3x1024xf32> to vector<3x992xf32>
    %18 = tpu.concatenate %16, %17 in 1 : vector<3x32xf32>, vector<3x992xf32> -> vector<3x1024xf32>
    %cst_5 = arith.constant 0.000000e+00 : f32
    %19 = vector.broadcast %cst_5 : f32 to vector<3x31xf32>
    %20 = vector.extract_strided_slice %1 {offsets = [0, 0], sizes = [3, 993], strides = [1, 1]} : vector<3x1024xf32> to vector<3x993xf32>
    %21 = tpu.concatenate %19, %20 in 1 : vector<3x31xf32>, vector<3x993xf32> -> vector<3x1024xf32>
    %cst_6 = arith.constant 0.000000e+00 : f32
    %22 = vector.shape_cast %8 : vector<1x1024xi1> to vector<1x1024xi1>
    %23 = vector.broadcast %22 : vector<1x1024xi1> to vector<3x1024xi1>
    %24 = vector.broadcast %cst_6 : f32 to vector<3x1024xf32>
    %25 = arith.select %23, %21, %24 : vector<3x1024xi1>, vector<3x1024xf32>
    %cst_7 = arith.constant 0.000000e+00 : f32
    %26 = vector.broadcast %cst_7 : f32 to vector<3x1xf32>
    %27 = vector.extract_strided_slice %1 {offsets = [0, 0], sizes = [3, 1023], strides = [1, 1]} : vector<3x1024xf32> to vector<3x1023xf32>
    %28 = tpu.concatenate %26, %27 in 1 : vector<3x1xf32>, vector<3x1023xf32> -> vector<3x1024xf32>
    %cst_8 = arith.constant 0.000000e+00 : f32
    %29 = vector.shape_cast %6 : vector<1x1024xi1> to vector<1x1024xi1>
    %30 = vector.broadcast %29 : vector<1x1024xi1> to vector<3x1024xi1>
    %31 = vector.broadcast %cst_8 : f32 to vector<3x1024xf32>
    %32 = arith.select %30, %28, %31 : vector<3x1024xi1>, vector<3x1024xf32>
    %cst_9 = arith.constant 0.000000e+00 : f32
    %33 = vector.broadcast %cst_9 : f32 to vector<3x1xf32>
    %34 = vector.extract_strided_slice %1 {offsets = [0, 1], sizes = [3, 1023], strides = [1, 1]} : vector<3x1024xf32> to vector<3x1023xf32>
    %35 = tpu.concatenate %34, %33 in 1 : vector<3x1023xf32>, vector<3x1xf32> -> vector<3x1024xf32>
    %cst_10 = arith.constant 0.000000e+00 : f32
    %36 = vector.shape_cast %8 : vector<1x1024xi1> to vector<1x1024xi1>
    %37 = vector.broadcast %36 : vector<1x1024xi1> to vector<3x1024xi1>
    %38 = vector.broadcast %cst_10 : f32 to vector<3x1024xf32>
    %39 = arith.select %37, %35, %38 : vector<3x1024xi1>, vector<3x1024xf32>
    %cst_11 = arith.constant 0.000000e+00 : f32
    %40 = vector.broadcast %cst_11 : f32 to vector<3x31xf32>
    %41 = vector.extract_strided_slice %1 {offsets = [0, 31], sizes = [3, 993], strides = [1, 1]} : vector<3x1024xf32> to vector<3x993xf32>
    %42 = tpu.concatenate %41, %40 in 1 : vector<3x993xf32>, vector<3x31xf32> -> vector<3x1024xf32>
    %cst_12 = arith.constant 0.000000e+00 : f32
    %43 = vector.shape_cast %6 : vector<1x1024xi1> to vector<1x1024xi1>
    %44 = vector.broadcast %43 : vector<1x1024xi1> to vector<3x1024xi1>
    %45 = vector.broadcast %cst_12 : f32 to vector<3x1024xf32>
    %46 = arith.select %44, %42, %45 : vector<3x1024xi1>, vector<3x1024xf32>
    %cst_13 = arith.constant 0.000000e+00 : f32
    %47 = vector.broadcast %cst_13 : f32 to vector<3x32xf32>
    %48 = vector.extract_strided_slice %1 {offsets = [0, 32], sizes = [3, 992], strides = [1, 1]} : vector<3x1024xf32> to vector<3x992xf32>
    %49 = tpu.concatenate %48, %47 in 1 : vector<3x992xf32>, vector<3x32xf32> -> vector<3x1024xf32>
    %cst_14 = arith.constant 0.000000e+00 : f32
    %50 = vector.broadcast %cst_14 : f32 to vector<3x33xf32>
    %51 = vector.extract_strided_slice %1 {offsets = [0, 33], sizes = [3, 991], strides = [1, 1]} : vector<3x1024xf32> to vector<3x991xf32>
    %52 = tpu.concatenate %51, %50 in 1 : vector<3x991xf32>, vector<3x33xf32> -> vector<3x1024xf32>
    %cst_15 = arith.constant 0.000000e+00 : f32
    %53 = vector.shape_cast %8 : vector<1x1024xi1> to vector<1x1024xi1>
    %54 = vector.broadcast %53 : vector<1x1024xi1> to vector<3x1024xi1>
    %55 = vector.broadcast %cst_15 : f32 to vector<3x1024xf32>
    %56 = arith.select %54, %52, %55 : vector<3x1024xi1>, vector<3x1024xf32>
    %57 = tpu.concatenate %15, %18, %25, %32, %1, %39, %46, %49, %56 in 0 : vector<3x1024xf32>, vector<3x1024xf32>, vector<3x1024xf32>, vector<3x1024xf32>, vector<3x1024xf32>, vector<3x1024xf32>, vector<3x1024xf32>, vector<3x1024xf32>, vector<3x1024xf32> -> vector<27x1024xf32>
    %c0_16 = arith.constant 0 : index
    %c0_17 = arith.constant 0 : index
    %58 = vector.load %arg2[%c0_16, %c0_17] : memref<2x27xf32, #tpu.memory_space<vmem>>, vector<2x27xf32>
    %cst_18 = arith.constant dense<0.000000e+00> : vector<2x1024xf32>
    %59 = tpu.matmul %58, %57, %cst_18 {dimension_numbers = #tpu.dot_dimension_numbers<[1], [0], [0], [1], [0, 0, 1, 1], [], []>} : vector<2x27xf32>, vector<27x1024xf32>, vector<2x1024xf32> -> vector<2x1024xf32>
    %c0_19 = arith.constant 0 : index
    %c0_20 = arith.constant 0 : index
    %60 = vector.load %arg3[%c0_19, %c0_20] : memref<2x1xf32, #tpu.memory_space<vmem>>, vector<2x1xf32>
    %61 = vector.broadcast %60 : vector<2x1xf32> to vector<2x1024xf32>
    %62 = arith.addf %59, %61 : vector<2x1024xf32>
    %cst_21 = arith.constant 0.000000e+00 : f32
    %63 = vector.broadcast %cst_21 : f32 to vector<2x1024xf32>
    %64 = arith.maximumf %62, %63 : vector<2x1024xf32>
    %cst_22 = arith.constant 0.000000e+00 : f32
    %65 = vector.broadcast %cst_22 : f32 to vector<2x1xf32>
    %66 = vector.extract_strided_slice %64 {offsets = [0, 1], sizes = [2, 1023], strides = [1, 1]} : vector<2x1024xf32> to vector<2x1023xf32>
    %67 = tpu.concatenate %66, %65 in 1 : vector<2x1023xf32>, vector<2x1xf32> -> vector<2x1024xf32>
    %68 = arith.maximumf %64, %67 : vector<2x1024xf32>
    %cst_23 = arith.constant 0.000000e+00 : f32
    %69 = vector.broadcast %cst_23 : f32 to vector<2x32xf32>
    %70 = vector.extract_strided_slice %64 {offsets = [0, 32], sizes = [2, 992], strides = [1, 1]} : vector<2x1024xf32> to vector<2x992xf32>
    %71 = tpu.concatenate %70, %69 in 1 : vector<2x992xf32>, vector<2x32xf32> -> vector<2x1024xf32>
    %72 = arith.maximumf %68, %71 : vector<2x1024xf32>
    %cst_24 = arith.constant 0.000000e+00 : f32
    %73 = vector.broadcast %cst_24 : f32 to vector<2x33xf32>
    %74 = vector.extract_strided_slice %64 {offsets = [0, 33], sizes = [2, 991], strides = [1, 1]} : vector<2x1024xf32> to vector<2x991xf32>
    %75 = tpu.concatenate %74, %73 in 1 : vector<2x991xf32>, vector<2x33xf32> -> vector<2x1024xf32>
    %76 = arith.maximumf %72, %75 : vector<2x1024xf32>
    %c0_25 = arith.constant 0 : index
    %c0_26 = arith.constant 0 : index
    %77 = vector.load %arg31[%c0_25, %c0_26] : memref<1024x256xf32, #tpu.memory_space<vmem>>, vector<1024x256xf32>
    %cst_27 = arith.constant dense<0.000000e+00> : vector<2x256xf32>
    %78 = tpu.matmul %76, %77, %cst_27 {dimension_numbers = #tpu.dot_dimension_numbers<[1], [0], [0], [1], [0, 0, 1, 1], [], []>} : vector<2x1024xf32>, vector<1024x256xf32>, vector<2x256xf32> -> vector<2x256xf32>
    %79 = tpu.iota {dimensions = array<i32: 1>} : vector<1x256xi32>
    %c15_i32 = arith.constant 15 : i32
    %80 = vector.broadcast %c15_i32 : i32 to vector<1x256xi32>
    %81 = arith.andi %79, %80 : vector<1x256xi32>
    %c0_i32_28 = arith.constant 0 : i32
    %82 = vector.broadcast %c0_i32_28 : i32 to vector<1x256xi32>
    %83 = arith.cmpi sgt, %81, %82 : vector<1x256xi32>
    %c15_i32_29 = arith.constant 15 : i32
    %84 = vector.broadcast %c15_i32_29 : i32 to vector<1x256xi32>
    %85 = arith.cmpi slt, %81, %84 : vector<1x256xi32>
    %cst_30 = arith.constant 0.000000e+00 : f32
    %86 = vector.broadcast %cst_30 : f32 to vector<2x17xf32>
    %87 = vector.extract_strided_slice %78 {offsets = [0, 0], sizes = [2, 239], strides = [1, 1]} : vector<2x256xf32> to vector<2x239xf32>
    %88 = tpu.concatenate %86, %87 in 1 : vector<2x17xf32>, vector<2x239xf32> -> vector<2x256xf32>
    %cst_31 = arith.constant 0.000000e+00 : f32
    %89 = vector.shape_cast %83 : vector<1x256xi1> to vector<1x256xi1>
    %90 = vector.broadcast %89 : vector<1x256xi1> to vector<2x256xi1>
    %91 = vector.broadcast %cst_31 : f32 to vector<2x256xf32>
    %92 = arith.select %90, %88, %91 : vector<2x256xi1>, vector<2x256xf32>
    %cst_32 = arith.constant 0.000000e+00 : f32
    %93 = vector.broadcast %cst_32 : f32 to vector<2x16xf32>
    %94 = vector.extract_strided_slice %78 {offsets = [0, 0], sizes = [2, 240], strides = [1, 1]} : vector<2x256xf32> to vector<2x240xf32>
    %95 = tpu.concatenate %93, %94 in 1 : vector<2x16xf32>, vector<2x240xf32> -> vector<2x256xf32>
    %cst_33 = arith.constant 0.000000e+00 : f32
    %96 = vector.broadcast %cst_33 : f32 to vector<2x15xf32>
    %97 = vector.extract_strided_slice %78 {offsets = [0, 0], sizes = [2, 241], strides = [1, 1]} : vector<2x256xf32> to vector<2x241xf32>
    %98 = tpu.concatenate %96, %97 in 1 : vector<2x15xf32>, vector<2x241xf32> -> vector<2x256xf32>
    %cst_34 = arith.constant 0.000000e+00 : f32
    %99 = vector.shape_cast %85 : vector<1x256xi1> to vector<1x256xi1>
    %100 = vector.broadcast %99 : vector<1x256xi1> to vector<2x256xi1>
    %101 = vector.broadcast %cst_34 : f32 to vector<2x256xf32>
    %102 = arith.select %100, %98, %101 : vector<2x256xi1>, vector<2x256xf32>
    %cst_35 = arith.constant 0.000000e+00 : f32
    %103 = vector.broadcast %cst_35 : f32 to vector<2x1xf32>
    %104 = vector.extract_strided_slice %78 {offsets = [0, 0], sizes = [2, 255], strides = [1, 1]} : vector<2x256xf32> to vector<2x255xf32>
    %105 = tpu.concatenate %103, %104 in 1 : vector<2x1xf32>, vector<2x255xf32> -> vector<2x256xf32>
    %cst_36 = arith.constant 0.000000e+00 : f32
    %106 = vector.shape_cast %83 : vector<1x256xi1> to vector<1x256xi1>
    %107 = vector.broadcast %106 : vector<1x256xi1> to vector<2x256xi1>
    %108 = vector.broadcast %cst_36 : f32 to vector<2x256xf32>
    %109 = arith.select %107, %105, %108 : vector<2x256xi1>, vector<2x256xf32>
    %cst_37 = arith.constant 0.000000e+00 : f32
    %110 = vector.broadcast %cst_37 : f32 to vector<2x1xf32>
    %111 = vector.extract_strided_slice %78 {offsets = [0, 1], sizes = [2, 255], strides = [1, 1]} : vector<2x256xf32> to vector<2x255xf32>
    %112 = tpu.concatenate %111, %110 in 1 : vector<2x255xf32>, vector<2x1xf32> -> vector<2x256xf32>
    %cst_38 = arith.constant 0.000000e+00 : f32
    %113 = vector.shape_cast %85 : vector<1x256xi1> to vector<1x256xi1>
    %114 = vector.broadcast %113 : vector<1x256xi1> to vector<2x256xi1>
    %115 = vector.broadcast %cst_38 : f32 to vector<2x256xf32>
    %116 = arith.select %114, %112, %115 : vector<2x256xi1>, vector<2x256xf32>
    %cst_39 = arith.constant 0.000000e+00 : f32
    %117 = vector.broadcast %cst_39 : f32 to vector<2x15xf32>
    %118 = vector.extract_strided_slice %78 {offsets = [0, 15], sizes = [2, 241], strides = [1, 1]} : vector<2x256xf32> to vector<2x241xf32>
    %119 = tpu.concatenate %118, %117 in 1 : vector<2x241xf32>, vector<2x15xf32> -> vector<2x256xf32>
    %cst_40 = arith.constant 0.000000e+00 : f32
    %120 = vector.shape_cast %83 : vector<1x256xi1> to vector<1x256xi1>
    %121 = vector.broadcast %120 : vector<1x256xi1> to vector<2x256xi1>
    %122 = vector.broadcast %cst_40 : f32 to vector<2x256xf32>
    %123 = arith.select %121, %119, %122 : vector<2x256xi1>, vector<2x256xf32>
    %cst_41 = arith.constant 0.000000e+00 : f32
    %124 = vector.broadcast %cst_41 : f32 to vector<2x16xf32>
    %125 = vector.extract_strided_slice %78 {offsets = [0, 16], sizes = [2, 240], strides = [1, 1]} : vector<2x256xf32> to vector<2x240xf32>
    %126 = tpu.concatenate %125, %124 in 1 : vector<2x240xf32>, vector<2x16xf32> -> vector<2x256xf32>
    %cst_42 = arith.constant 0.000000e+00 : f32
    %127 = vector.broadcast %cst_42 : f32 to vector<2x17xf32>
    %128 = vector.extract_strided_slice %78 {offsets = [0, 17], sizes = [2, 239], strides = [1, 1]} : vector<2x256xf32> to vector<2x239xf32>
    %129 = tpu.concatenate %128, %127 in 1 : vector<2x239xf32>, vector<2x17xf32> -> vector<2x256xf32>
    %cst_43 = arith.constant 0.000000e+00 : f32
    %130 = vector.shape_cast %85 : vector<1x256xi1> to vector<1x256xi1>
    %131 = vector.broadcast %130 : vector<1x256xi1> to vector<2x256xi1>
    %132 = vector.broadcast %cst_43 : f32 to vector<2x256xf32>
    %133 = arith.select %131, %129, %132 : vector<2x256xi1>, vector<2x256xf32>
    %134 = tpu.concatenate %92, %95, %102, %109, %78, %116, %123, %126, %133 in 0 : vector<2x256xf32>, vector<2x256xf32>, vector<2x256xf32>, vector<2x256xf32>, vector<2x256xf32>, vector<2x256xf32>, vector<2x256xf32>, vector<2x256xf32>, vector<2x256xf32> -> vector<18x256xf32>
    %c0_44 = arith.constant 0 : index
    %c0_45 = arith.constant 0 : index
    %135 = vector.load %arg4[%c0_44, %c0_45] : memref<4x18xf32, #tpu.memory_space<vmem>>, vector<4x18xf32>
    %cst_46 = arith.constant dense<0.000000e+00> : vector<4x256xf32>
    %136 = tpu.matmul %135, %134, %cst_46 {dimension_numbers = #tpu.dot_dimension_numbers<[1], [0], [0], [1], [0, 0, 1, 1], [], []>} : vector<4x18xf32>, vector<18x256xf32>, vector<4x256xf32> -> vector<4x256xf32>
    %c0_47 = arith.constant 0 : index
    %c0_48 = arith.constant 0 : index
    %137 = vector.load %arg5[%c0_47, %c0_48] : memref<4x1xf32, #tpu.memory_space<vmem>>, vector<4x1xf32>
    %138 = vector.broadcast %137 : vector<4x1xf32> to vector<4x256xf32>
    %139 = arith.addf %136, %138 : vector<4x256xf32>
    %cst_49 = arith.constant 0.000000e+00 : f32
    %140 = vector.broadcast %cst_49 : f32 to vector<4x256xf32>
    %141 = arith.maximumf %139, %140 : vector<4x256xf32>
    %cst_50 = arith.constant 0.000000e+00 : f32
    %142 = vector.broadcast %cst_50 : f32 to vector<4x1xf32>
    %143 = vector.extract_strided_slice %141 {offsets = [0, 1], sizes = [4, 255], strides = [1, 1]} : vector<4x256xf32> to vector<4x255xf32>
    %144 = tpu.concatenate %143, %142 in 1 : vector<4x255xf32>, vector<4x1xf32> -> vector<4x256xf32>
    %145 = arith.maximumf %141, %144 : vector<4x256xf32>
    %cst_51 = arith.constant 0.000000e+00 : f32
    %146 = vector.broadcast %cst_51 : f32 to vector<4x16xf32>
    %147 = vector.extract_strided_slice %141 {offsets = [0, 16], sizes = [4, 240], strides = [1, 1]} : vector<4x256xf32> to vector<4x240xf32>
    %148 = tpu.concatenate %147, %146 in 1 : vector<4x240xf32>, vector<4x16xf32> -> vector<4x256xf32>
    %149 = arith.maximumf %145, %148 : vector<4x256xf32>
    %cst_52 = arith.constant 0.000000e+00 : f32
    %150 = vector.broadcast %cst_52 : f32 to vector<4x17xf32>
    %151 = vector.extract_strided_slice %141 {offsets = [0, 17], sizes = [4, 239], strides = [1, 1]} : vector<4x256xf32> to vector<4x239xf32>
    %152 = tpu.concatenate %151, %150 in 1 : vector<4x239xf32>, vector<4x17xf32> -> vector<4x256xf32>
    %153 = arith.maximumf %149, %152 : vector<4x256xf32>
    %c0_53 = arith.constant 0 : index
    %c0_54 = arith.constant 0 : index
    %154 = vector.load %arg32[%c0_53, %c0_54] : memref<256x64xf32, #tpu.memory_space<vmem>>, vector<256x64xf32>
    %cst_55 = arith.constant dense<0.000000e+00> : vector<4x64xf32>
    %155 = tpu.matmul %153, %154, %cst_55 {dimension_numbers = #tpu.dot_dimension_numbers<[1], [0], [0], [1], [0, 0, 1, 1], [], []>} : vector<4x256xf32>, vector<256x64xf32>, vector<4x64xf32> -> vector<4x64xf32>
    %156 = tpu.iota {dimensions = array<i32: 1>} : vector<1x64xi32>
    %c7_i32 = arith.constant 7 : i32
    %157 = vector.broadcast %c7_i32 : i32 to vector<1x64xi32>
    %158 = arith.andi %156, %157 : vector<1x64xi32>
    %c0_i32_56 = arith.constant 0 : i32
    %159 = vector.broadcast %c0_i32_56 : i32 to vector<1x64xi32>
    %160 = arith.cmpi sgt, %158, %159 : vector<1x64xi32>
    %c7_i32_57 = arith.constant 7 : i32
    %161 = vector.broadcast %c7_i32_57 : i32 to vector<1x64xi32>
    %162 = arith.cmpi slt, %158, %161 : vector<1x64xi32>
    %cst_58 = arith.constant 0.000000e+00 : f32
    %163 = vector.broadcast %cst_58 : f32 to vector<4x9xf32>
    %164 = vector.extract_strided_slice %155 {offsets = [0, 0], sizes = [4, 55], strides = [1, 1]} : vector<4x64xf32> to vector<4x55xf32>
    %165 = tpu.concatenate %163, %164 in 1 : vector<4x9xf32>, vector<4x55xf32> -> vector<4x64xf32>
    %cst_59 = arith.constant 0.000000e+00 : f32
    %166 = vector.shape_cast %160 : vector<1x64xi1> to vector<1x64xi1>
    %167 = vector.broadcast %166 : vector<1x64xi1> to vector<4x64xi1>
    %168 = vector.broadcast %cst_59 : f32 to vector<4x64xf32>
    %169 = arith.select %167, %165, %168 : vector<4x64xi1>, vector<4x64xf32>
    %cst_60 = arith.constant 0.000000e+00 : f32
    %170 = vector.broadcast %cst_60 : f32 to vector<4x8xf32>
    %171 = vector.extract_strided_slice %155 {offsets = [0, 0], sizes = [4, 56], strides = [1, 1]} : vector<4x64xf32> to vector<4x56xf32>
    %172 = tpu.concatenate %170, %171 in 1 : vector<4x8xf32>, vector<4x56xf32> -> vector<4x64xf32>
    %cst_61 = arith.constant 0.000000e+00 : f32
    %173 = vector.broadcast %cst_61 : f32 to vector<4x7xf32>
    %174 = vector.extract_strided_slice %155 {offsets = [0, 0], sizes = [4, 57], strides = [1, 1]} : vector<4x64xf32> to vector<4x57xf32>
    %175 = tpu.concatenate %173, %174 in 1 : vector<4x7xf32>, vector<4x57xf32> -> vector<4x64xf32>
    %cst_62 = arith.constant 0.000000e+00 : f32
    %176 = vector.shape_cast %162 : vector<1x64xi1> to vector<1x64xi1>
    %177 = vector.broadcast %176 : vector<1x64xi1> to vector<4x64xi1>
    %178 = vector.broadcast %cst_62 : f32 to vector<4x64xf32>
    %179 = arith.select %177, %175, %178 : vector<4x64xi1>, vector<4x64xf32>
    %cst_63 = arith.constant 0.000000e+00 : f32
    %180 = vector.broadcast %cst_63 : f32 to vector<4x1xf32>
    %181 = vector.extract_strided_slice %155 {offsets = [0, 0], sizes = [4, 63], strides = [1, 1]} : vector<4x64xf32> to vector<4x63xf32>
    %182 = tpu.concatenate %180, %181 in 1 : vector<4x1xf32>, vector<4x63xf32> -> vector<4x64xf32>
    %cst_64 = arith.constant 0.000000e+00 : f32
    %183 = vector.shape_cast %160 : vector<1x64xi1> to vector<1x64xi1>
    %184 = vector.broadcast %183 : vector<1x64xi1> to vector<4x64xi1>
    %185 = vector.broadcast %cst_64 : f32 to vector<4x64xf32>
    %186 = arith.select %184, %182, %185 : vector<4x64xi1>, vector<4x64xf32>
    %cst_65 = arith.constant 0.000000e+00 : f32
    %187 = vector.broadcast %cst_65 : f32 to vector<4x1xf32>
    %188 = vector.extract_strided_slice %155 {offsets = [0, 1], sizes = [4, 63], strides = [1, 1]} : vector<4x64xf32> to vector<4x63xf32>
    %189 = tpu.concatenate %188, %187 in 1 : vector<4x63xf32>, vector<4x1xf32> -> vector<4x64xf32>
    %cst_66 = arith.constant 0.000000e+00 : f32
    %190 = vector.shape_cast %162 : vector<1x64xi1> to vector<1x64xi1>
    %191 = vector.broadcast %190 : vector<1x64xi1> to vector<4x64xi1>
    %192 = vector.broadcast %cst_66 : f32 to vector<4x64xf32>
    %193 = arith.select %191, %189, %192 : vector<4x64xi1>, vector<4x64xf32>
    %cst_67 = arith.constant 0.000000e+00 : f32
    %194 = vector.broadcast %cst_67 : f32 to vector<4x7xf32>
    %195 = vector.extract_strided_slice %155 {offsets = [0, 7], sizes = [4, 57], strides = [1, 1]} : vector<4x64xf32> to vector<4x57xf32>
    %196 = tpu.concatenate %195, %194 in 1 : vector<4x57xf32>, vector<4x7xf32> -> vector<4x64xf32>
    %cst_68 = arith.constant 0.000000e+00 : f32
    %197 = vector.shape_cast %160 : vector<1x64xi1> to vector<1x64xi1>
    %198 = vector.broadcast %197 : vector<1x64xi1> to vector<4x64xi1>
    %199 = vector.broadcast %cst_68 : f32 to vector<4x64xf32>
    %200 = arith.select %198, %196, %199 : vector<4x64xi1>, vector<4x64xf32>
    %cst_69 = arith.constant 0.000000e+00 : f32
    %201 = vector.broadcast %cst_69 : f32 to vector<4x8xf32>
    %202 = vector.extract_strided_slice %155 {offsets = [0, 8], sizes = [4, 56], strides = [1, 1]} : vector<4x64xf32> to vector<4x56xf32>
    %203 = tpu.concatenate %202, %201 in 1 : vector<4x56xf32>, vector<4x8xf32> -> vector<4x64xf32>
    %cst_70 = arith.constant 0.000000e+00 : f32
    %204 = vector.broadcast %cst_70 : f32 to vector<4x9xf32>
    %205 = vector.extract_strided_slice %155 {offsets = [0, 9], sizes = [4, 55], strides = [1, 1]} : vector<4x64xf32> to vector<4x55xf32>
    %206 = tpu.concatenate %205, %204 in 1 : vector<4x55xf32>, vector<4x9xf32> -> vector<4x64xf32>
    %cst_71 = arith.constant 0.000000e+00 : f32
    %207 = vector.shape_cast %162 : vector<1x64xi1> to vector<1x64xi1>
    %208 = vector.broadcast %207 : vector<1x64xi1> to vector<4x64xi1>
    %209 = vector.broadcast %cst_71 : f32 to vector<4x64xf32>
    %210 = arith.select %208, %206, %209 : vector<4x64xi1>, vector<4x64xf32>
    %211 = tpu.concatenate %169, %172, %179, %186, %155, %193, %200, %203, %210 in 0 : vector<4x64xf32>, vector<4x64xf32>, vector<4x64xf32>, vector<4x64xf32>, vector<4x64xf32>, vector<4x64xf32>, vector<4x64xf32>, vector<4x64xf32>, vector<4x64xf32> -> vector<36x64xf32>
    %c0_72 = arith.constant 0 : index
    %c0_73 = arith.constant 0 : index
    %212 = vector.load %arg6[%c0_72, %c0_73] : memref<8x36xf32, #tpu.memory_space<vmem>>, vector<8x36xf32>
    %cst_74 = arith.constant dense<0.000000e+00> : vector<8x64xf32>
    %213 = tpu.matmul %212, %211, %cst_74 {dimension_numbers = #tpu.dot_dimension_numbers<[1], [0], [0], [1], [0, 0, 1, 1], [], []>} : vector<8x36xf32>, vector<36x64xf32>, vector<8x64xf32> -> vector<8x64xf32>
    %c0_75 = arith.constant 0 : index
    %c0_76 = arith.constant 0 : index
    %214 = vector.load %arg7[%c0_75, %c0_76] : memref<8x1xf32, #tpu.memory_space<vmem>>, vector<8x1xf32>
    %215 = vector.broadcast %214 : vector<8x1xf32> to vector<8x64xf32>
    %216 = arith.addf %213, %215 : vector<8x64xf32>
    %cst_77 = arith.constant 0.000000e+00 : f32
    %217 = vector.broadcast %cst_77 : f32 to vector<8x64xf32>
    %218 = arith.maximumf %216, %217 : vector<8x64xf32>
    %cst_78 = arith.constant 0.000000e+00 : f32
    %219 = vector.broadcast %cst_78 : f32 to vector<8x1xf32>
    %220 = vector.extract_strided_slice %218 {offsets = [0, 1], sizes = [8, 63], strides = [1, 1]} : vector<8x64xf32> to vector<8x63xf32>
    %221 = tpu.concatenate %220, %219 in 1 : vector<8x63xf32>, vector<8x1xf32> -> vector<8x64xf32>
    %222 = arith.maximumf %218, %221 : vector<8x64xf32>
    %cst_79 = arith.constant 0.000000e+00 : f32
    %223 = vector.broadcast %cst_79 : f32 to vector<8x8xf32>
    %224 = vector.extract_strided_slice %218 {offsets = [0, 8], sizes = [8, 56], strides = [1, 1]} : vector<8x64xf32> to vector<8x56xf32>
    %225 = tpu.concatenate %224, %223 in 1 : vector<8x56xf32>, vector<8x8xf32> -> vector<8x64xf32>
    %226 = arith.maximumf %222, %225 : vector<8x64xf32>
    %cst_80 = arith.constant 0.000000e+00 : f32
    %227 = vector.broadcast %cst_80 : f32 to vector<8x9xf32>
    %228 = vector.extract_strided_slice %218 {offsets = [0, 9], sizes = [8, 55], strides = [1, 1]} : vector<8x64xf32> to vector<8x55xf32>
    %229 = tpu.concatenate %228, %227 in 1 : vector<8x55xf32>, vector<8x9xf32> -> vector<8x64xf32>
    %230 = arith.maximumf %226, %229 : vector<8x64xf32>
    %c0_81 = arith.constant 0 : index
    %c0_82 = arith.constant 0 : index
    %231 = vector.load %arg33[%c0_81, %c0_82] : memref<64x16xf32, #tpu.memory_space<vmem>>, vector<64x16xf32>
    %cst_83 = arith.constant dense<0.000000e+00> : vector<8x16xf32>
    %232 = tpu.matmul %230, %231, %cst_83 {dimension_numbers = #tpu.dot_dimension_numbers<[1], [0], [0], [1], [0, 0, 1, 1], [], []>} : vector<8x64xf32>, vector<64x16xf32>, vector<8x16xf32> -> vector<8x16xf32>
    %233 = tpu.iota {dimensions = array<i32: 1>} : vector<1x16xi32>
    %c3_i32 = arith.constant 3 : i32
    %234 = vector.broadcast %c3_i32 : i32 to vector<1x16xi32>
    %235 = arith.andi %233, %234 : vector<1x16xi32>
    %c0_i32_84 = arith.constant 0 : i32
    %236 = vector.broadcast %c0_i32_84 : i32 to vector<1x16xi32>
    %237 = arith.cmpi sgt, %235, %236 : vector<1x16xi32>
    %c3_i32_85 = arith.constant 3 : i32
    %238 = vector.broadcast %c3_i32_85 : i32 to vector<1x16xi32>
    %239 = arith.cmpi slt, %235, %238 : vector<1x16xi32>
    %cst_86 = arith.constant 0.000000e+00 : f32
    %240 = vector.broadcast %cst_86 : f32 to vector<8x5xf32>
    %241 = vector.extract_strided_slice %232 {offsets = [0, 0], sizes = [8, 11], strides = [1, 1]} : vector<8x16xf32> to vector<8x11xf32>
    %242 = tpu.concatenate %240, %241 in 1 : vector<8x5xf32>, vector<8x11xf32> -> vector<8x16xf32>
    %cst_87 = arith.constant 0.000000e+00 : f32
    %243 = vector.shape_cast %237 : vector<1x16xi1> to vector<1x16xi1>
    %244 = vector.broadcast %243 : vector<1x16xi1> to vector<8x16xi1>
    %245 = vector.broadcast %cst_87 : f32 to vector<8x16xf32>
    %246 = arith.select %244, %242, %245 : vector<8x16xi1>, vector<8x16xf32>
    %cst_88 = arith.constant 0.000000e+00 : f32
    %247 = vector.broadcast %cst_88 : f32 to vector<8x4xf32>
    %248 = vector.extract_strided_slice %232 {offsets = [0, 0], sizes = [8, 12], strides = [1, 1]} : vector<8x16xf32> to vector<8x12xf32>
    %249 = tpu.concatenate %247, %248 in 1 : vector<8x4xf32>, vector<8x12xf32> -> vector<8x16xf32>
    %cst_89 = arith.constant 0.000000e+00 : f32
    %250 = vector.broadcast %cst_89 : f32 to vector<8x3xf32>
    %251 = vector.extract_strided_slice %232 {offsets = [0, 0], sizes = [8, 13], strides = [1, 1]} : vector<8x16xf32> to vector<8x13xf32>
    %252 = tpu.concatenate %250, %251 in 1 : vector<8x3xf32>, vector<8x13xf32> -> vector<8x16xf32>
    %cst_90 = arith.constant 0.000000e+00 : f32
    %253 = vector.shape_cast %239 : vector<1x16xi1> to vector<1x16xi1>
    %254 = vector.broadcast %253 : vector<1x16xi1> to vector<8x16xi1>
    %255 = vector.broadcast %cst_90 : f32 to vector<8x16xf32>
    %256 = arith.select %254, %252, %255 : vector<8x16xi1>, vector<8x16xf32>
    %cst_91 = arith.constant 0.000000e+00 : f32
    %257 = vector.broadcast %cst_91 : f32 to vector<8x1xf32>
    %258 = vector.extract_strided_slice %232 {offsets = [0, 0], sizes = [8, 15], strides = [1, 1]} : vector<8x16xf32> to vector<8x15xf32>
    %259 = tpu.concatenate %257, %258 in 1 : vector<8x1xf32>, vector<8x15xf32> -> vector<8x16xf32>
    %cst_92 = arith.constant 0.000000e+00 : f32
    %260 = vector.shape_cast %237 : vector<1x16xi1> to vector<1x16xi1>
    %261 = vector.broadcast %260 : vector<1x16xi1> to vector<8x16xi1>
    %262 = vector.broadcast %cst_92 : f32 to vector<8x16xf32>
    %263 = arith.select %261, %259, %262 : vector<8x16xi1>, vector<8x16xf32>
    %cst_93 = arith.constant 0.000000e+00 : f32
    %264 = vector.broadcast %cst_93 : f32 to vector<8x1xf32>
    %265 = vector.extract_strided_slice %232 {offsets = [0, 1], sizes = [8, 15], strides = [1, 1]} : vector<8x16xf32> to vector<8x15xf32>
    %266 = tpu.concatenate %265, %264 in 1 : vector<8x15xf32>, vector<8x1xf32> -> vector<8x16xf32>
    %cst_94 = arith.constant 0.000000e+00 : f32
    %267 = vector.shape_cast %239 : vector<1x16xi1> to vector<1x16xi1>
    %268 = vector.broadcast %267 : vector<1x16xi1> to vector<8x16xi1>
    %269 = vector.broadcast %cst_94 : f32 to vector<8x16xf32>
    %270 = arith.select %268, %266, %269 : vector<8x16xi1>, vector<8x16xf32>
    %cst_95 = arith.constant 0.000000e+00 : f32
    %271 = vector.broadcast %cst_95 : f32 to vector<8x3xf32>
    %272 = vector.extract_strided_slice %232 {offsets = [0, 3], sizes = [8, 13], strides = [1, 1]} : vector<8x16xf32> to vector<8x13xf32>
    %273 = tpu.concatenate %272, %271 in 1 : vector<8x13xf32>, vector<8x3xf32> -> vector<8x16xf32>
    %cst_96 = arith.constant 0.000000e+00 : f32
    %274 = vector.shape_cast %237 : vector<1x16xi1> to vector<1x16xi1>
    %275 = vector.broadcast %274 : vector<1x16xi1> to vector<8x16xi1>
    %276 = vector.broadcast %cst_96 : f32 to vector<8x16xf32>
    %277 = arith.select %275, %273, %276 : vector<8x16xi1>, vector<8x16xf32>
    %cst_97 = arith.constant 0.000000e+00 : f32
    %278 = vector.broadcast %cst_97 : f32 to vector<8x4xf32>
    %279 = vector.extract_strided_slice %232 {offsets = [0, 4], sizes = [8, 12], strides = [1, 1]} : vector<8x16xf32> to vector<8x12xf32>
    %280 = tpu.concatenate %279, %278 in 1 : vector<8x12xf32>, vector<8x4xf32> -> vector<8x16xf32>
    %cst_98 = arith.constant 0.000000e+00 : f32
    %281 = vector.broadcast %cst_98 : f32 to vector<8x5xf32>
    %282 = vector.extract_strided_slice %232 {offsets = [0, 5], sizes = [8, 11], strides = [1, 1]} : vector<8x16xf32> to vector<8x11xf32>
    %283 = tpu.concatenate %282, %281 in 1 : vector<8x11xf32>, vector<8x5xf32> -> vector<8x16xf32>
    %cst_99 = arith.constant 0.000000e+00 : f32
    %284 = vector.shape_cast %239 : vector<1x16xi1> to vector<1x16xi1>
    %285 = vector.broadcast %284 : vector<1x16xi1> to vector<8x16xi1>
    %286 = vector.broadcast %cst_99 : f32 to vector<8x16xf32>
    %287 = arith.select %285, %283, %286 : vector<8x16xi1>, vector<8x16xf32>
    %288 = tpu.concatenate %246, %249, %256, %263, %232, %270, %277, %280, %287 in 0 : vector<8x16xf32>, vector<8x16xf32>, vector<8x16xf32>, vector<8x16xf32>, vector<8x16xf32>, vector<8x16xf32>, vector<8x16xf32>, vector<8x16xf32>, vector<8x16xf32> -> vector<72x16xf32>
    %c0_100 = arith.constant 0 : index
    %c0_101 = arith.constant 0 : index
    %289 = vector.load %arg8[%c0_100, %c0_101] : memref<16x72xf32, #tpu.memory_space<vmem>>, vector<16x72xf32>
    %cst_102 = arith.constant dense<0.000000e+00> : vector<16x16xf32>
    %290 = tpu.matmul %289, %288, %cst_102 {dimension_numbers = #tpu.dot_dimension_numbers<[1], [0], [0], [1], [0, 0, 1, 1], [], []>} : vector<16x72xf32>, vector<72x16xf32>, vector<16x16xf32> -> vector<16x16xf32>
    %c0_103 = arith.constant 0 : index
    %c0_104 = arith.constant 0 : index
    %291 = vector.load %arg9[%c0_103, %c0_104] : memref<16x1xf32, #tpu.memory_space<vmem>>, vector<16x1xf32>
    %292 = vector.broadcast %291 : vector<16x1xf32> to vector<16x16xf32>
    %293 = arith.addf %290, %292 : vector<16x16xf32>
    %cst_105 = arith.constant 0.000000e+00 : f32
    %294 = vector.broadcast %cst_105 : f32 to vector<16x16xf32>
    %295 = arith.maximumf %293, %294 : vector<16x16xf32>
    %cst_106 = arith.constant 0.000000e+00 : f32
    %296 = vector.broadcast %cst_106 : f32 to vector<16x1xf32>
    %297 = vector.extract_strided_slice %295 {offsets = [0, 1], sizes = [16, 15], strides = [1, 1]} : vector<16x16xf32> to vector<16x15xf32>
    %298 = tpu.concatenate %297, %296 in 1 : vector<16x15xf32>, vector<16x1xf32> -> vector<16x16xf32>
    %299 = arith.maximumf %295, %298 : vector<16x16xf32>
    %cst_107 = arith.constant 0.000000e+00 : f32
    %300 = vector.broadcast %cst_107 : f32 to vector<16x4xf32>
    %301 = vector.extract_strided_slice %295 {offsets = [0, 4], sizes = [16, 12], strides = [1, 1]} : vector<16x16xf32> to vector<16x12xf32>
    %302 = tpu.concatenate %301, %300 in 1 : vector<16x12xf32>, vector<16x4xf32> -> vector<16x16xf32>
    %303 = arith.maximumf %299, %302 : vector<16x16xf32>
    %cst_108 = arith.constant 0.000000e+00 : f32
    %304 = vector.broadcast %cst_108 : f32 to vector<16x5xf32>
    %305 = vector.extract_strided_slice %295 {offsets = [0, 5], sizes = [16, 11], strides = [1, 1]} : vector<16x16xf32> to vector<16x11xf32>
    %306 = tpu.concatenate %305, %304 in 1 : vector<16x11xf32>, vector<16x5xf32> -> vector<16x16xf32>
    %307 = arith.maximumf %303, %306 : vector<16x16xf32>
    %c0_109 = arith.constant 0 : index
    %c0_110 = arith.constant 0 : index
    %308 = vector.load %arg34[%c0_109, %c0_110] : memref<16x4xf32, #tpu.memory_space<vmem>>, vector<16x4xf32>
    %cst_111 = arith.constant dense<0.000000e+00> : vector<16x4xf32>
    %309 = tpu.matmul %307, %308, %cst_111 {dimension_numbers = #tpu.dot_dimension_numbers<[1], [0], [0], [1], [0, 0, 1, 1], [], []>} : vector<16x16xf32>, vector<16x4xf32>, vector<16x4xf32> -> vector<16x4xf32>
    %310 = tpu.iota {dimensions = array<i32: 1>} : vector<1x4xi32>
    %c1_i32 = arith.constant 1 : i32
    %311 = vector.broadcast %c1_i32 : i32 to vector<1x4xi32>
    %312 = arith.andi %310, %311 : vector<1x4xi32>
    %c0_i32_112 = arith.constant 0 : i32
    %313 = vector.broadcast %c0_i32_112 : i32 to vector<1x4xi32>
    %314 = arith.cmpi sgt, %312, %313 : vector<1x4xi32>
    %c1_i32_113 = arith.constant 1 : i32
    %315 = vector.broadcast %c1_i32_113 : i32 to vector<1x4xi32>
    %316 = arith.cmpi slt, %312, %315 : vector<1x4xi32>
    %cst_114 = arith.constant 0.000000e+00 : f32
    %317 = vector.broadcast %cst_114 : f32 to vector<16x3xf32>
    %318 = vector.extract_strided_slice %309 {offsets = [0, 0], sizes = [16, 1], strides = [1, 1]} : vector<16x4xf32> to vector<16x1xf32>
    %319 = tpu.concatenate %317, %318 in 1 : vector<16x3xf32>, vector<16x1xf32> -> vector<16x4xf32>
    %cst_115 = arith.constant 0.000000e+00 : f32
    %320 = vector.shape_cast %314 : vector<1x4xi1> to vector<1x4xi1>
    %321 = vector.broadcast %320 : vector<1x4xi1> to vector<16x4xi1>
    %322 = vector.broadcast %cst_115 : f32 to vector<16x4xf32>
    %323 = arith.select %321, %319, %322 : vector<16x4xi1>, vector<16x4xf32>
    %cst_116 = arith.constant 0.000000e+00 : f32
    %324 = vector.broadcast %cst_116 : f32 to vector<16x2xf32>
    %325 = vector.extract_strided_slice %309 {offsets = [0, 0], sizes = [16, 2], strides = [1, 1]} : vector<16x4xf32> to vector<16x2xf32>
    %326 = tpu.concatenate %324, %325 in 1 : vector<16x2xf32>, vector<16x2xf32> -> vector<16x4xf32>
    %cst_117 = arith.constant 0.000000e+00 : f32
    %327 = vector.broadcast %cst_117 : f32 to vector<16x1xf32>
    %328 = vector.extract_strided_slice %309 {offsets = [0, 0], sizes = [16, 3], strides = [1, 1]} : vector<16x4xf32> to vector<16x3xf32>
    %329 = tpu.concatenate %327, %328 in 1 : vector<16x1xf32>, vector<16x3xf32> -> vector<16x4xf32>
    %cst_118 = arith.constant 0.000000e+00 : f32
    %330 = vector.shape_cast %316 : vector<1x4xi1> to vector<1x4xi1>
    %331 = vector.broadcast %330 : vector<1x4xi1> to vector<16x4xi1>
    %332 = vector.broadcast %cst_118 : f32 to vector<16x4xf32>
    %333 = arith.select %331, %329, %332 : vector<16x4xi1>, vector<16x4xf32>
    %cst_119 = arith.constant 0.000000e+00 : f32
    %334 = vector.broadcast %cst_119 : f32 to vector<16x1xf32>
    %335 = vector.extract_strided_slice %309 {offsets = [0, 0], sizes = [16, 3], strides = [1, 1]} : vector<16x4xf32> to vector<16x3xf32>
    %336 = tpu.concatenate %334, %335 in 1 : vector<16x1xf32>, vector<16x3xf32> -> vector<16x4xf32>
    %cst_120 = arith.constant 0.000000e+00 : f32
    %337 = vector.shape_cast %314 : vector<1x4xi1> to vector<1x4xi1>
    %338 = vector.broadcast %337 : vector<1x4xi1> to vector<16x4xi1>
    %339 = vector.broadcast %cst_120 : f32 to vector<16x4xf32>
    %340 = arith.select %338, %336, %339 : vector<16x4xi1>, vector<16x4xf32>
    %cst_121 = arith.constant 0.000000e+00 : f32
    %341 = vector.broadcast %cst_121 : f32 to vector<16x1xf32>
    %342 = vector.extract_strided_slice %309 {offsets = [0, 1], sizes = [16, 3], strides = [1, 1]} : vector<16x4xf32> to vector<16x3xf32>
    %343 = tpu.concatenate %342, %341 in 1 : vector<16x3xf32>, vector<16x1xf32> -> vector<16x4xf32>
    %cst_122 = arith.constant 0.000000e+00 : f32
    %344 = vector.shape_cast %316 : vector<1x4xi1> to vector<1x4xi1>
    %345 = vector.broadcast %344 : vector<1x4xi1> to vector<16x4xi1>
    %346 = vector.broadcast %cst_122 : f32 to vector<16x4xf32>
    %347 = arith.select %345, %343, %346 : vector<16x4xi1>, vector<16x4xf32>
    %cst_123 = arith.constant 0.000000e+00 : f32
    %348 = vector.broadcast %cst_123 : f32 to vector<16x1xf32>
    %349 = vector.extract_strided_slice %309 {offsets = [0, 1], sizes = [16, 3], strides = [1, 1]} : vector<16x4xf32> to vector<16x3xf32>
    %350 = tpu.concatenate %349, %348 in 1 : vector<16x3xf32>, vector<16x1xf32> -> vector<16x4xf32>
    %cst_124 = arith.constant 0.000000e+00 : f32
    %351 = vector.shape_cast %314 : vector<1x4xi1> to vector<1x4xi1>
    %352 = vector.broadcast %351 : vector<1x4xi1> to vector<16x4xi1>
    %353 = vector.broadcast %cst_124 : f32 to vector<16x4xf32>
    %354 = arith.select %352, %350, %353 : vector<16x4xi1>, vector<16x4xf32>
    %cst_125 = arith.constant 0.000000e+00 : f32
    %355 = vector.broadcast %cst_125 : f32 to vector<16x2xf32>
    %356 = vector.extract_strided_slice %309 {offsets = [0, 2], sizes = [16, 2], strides = [1, 1]} : vector<16x4xf32> to vector<16x2xf32>
    %357 = tpu.concatenate %356, %355 in 1 : vector<16x2xf32>, vector<16x2xf32> -> vector<16x4xf32>
    %cst_126 = arith.constant 0.000000e+00 : f32
    %358 = vector.broadcast %cst_126 : f32 to vector<16x3xf32>
    %359 = vector.extract_strided_slice %309 {offsets = [0, 3], sizes = [16, 1], strides = [1, 1]} : vector<16x4xf32> to vector<16x1xf32>
    %360 = tpu.concatenate %359, %358 in 1 : vector<16x1xf32>, vector<16x3xf32> -> vector<16x4xf32>
    %cst_127 = arith.constant 0.000000e+00 : f32
    %361 = vector.shape_cast %316 : vector<1x4xi1> to vector<1x4xi1>
    %362 = vector.broadcast %361 : vector<1x4xi1> to vector<16x4xi1>
    %363 = vector.broadcast %cst_127 : f32 to vector<16x4xf32>
    %364 = arith.select %362, %360, %363 : vector<16x4xi1>, vector<16x4xf32>
    %365 = tpu.concatenate %323, %326, %333, %340, %309, %347, %354, %357, %364 in 0 : vector<16x4xf32>, vector<16x4xf32>, vector<16x4xf32>, vector<16x4xf32>, vector<16x4xf32>, vector<16x4xf32>, vector<16x4xf32>, vector<16x4xf32>, vector<16x4xf32> -> vector<144x4xf32>
    %c0_128 = arith.constant 0 : index
    %c0_129 = arith.constant 0 : index
    %366 = vector.load %arg10[%c0_128, %c0_129] : memref<16x144xf32, #tpu.memory_space<vmem>>, vector<16x144xf32>
    %cst_130 = arith.constant dense<0.000000e+00> : vector<16x4xf32>
    %367 = tpu.matmul %366, %365, %cst_130 {dimension_numbers = #tpu.dot_dimension_numbers<[1], [0], [0], [1], [0, 0, 1, 1], [], []>} : vector<16x144xf32>, vector<144x4xf32>, vector<16x4xf32> -> vector<16x4xf32>
    %c0_131 = arith.constant 0 : index
    %c0_132 = arith.constant 0 : index
    %368 = vector.load %arg11[%c0_131, %c0_132] : memref<16x1xf32, #tpu.memory_space<vmem>>, vector<16x1xf32>
    %369 = vector.broadcast %368 : vector<16x1xf32> to vector<16x4xf32>
    %370 = arith.addf %367, %369 : vector<16x4xf32>
    %cst_133 = arith.constant 0.000000e+00 : f32
    %371 = vector.broadcast %cst_133 : f32 to vector<16x4xf32>
    %372 = arith.maximumf %370, %371 : vector<16x4xf32>
    %373 = tpu.iota {dimensions = array<i32: 1>} : vector<1x4xi32>
    %c1_i32_134 = arith.constant 1 : i32
    %374 = vector.broadcast %c1_i32_134 : i32 to vector<1x4xi32>
    %375 = arith.andi %373, %374 : vector<1x4xi32>
    %c0_i32_135 = arith.constant 0 : i32
    %376 = vector.broadcast %c0_i32_135 : i32 to vector<1x4xi32>
    %377 = arith.cmpi sgt, %375, %376 : vector<1x4xi32>
    %c1_i32_136 = arith.constant 1 : i32
    %378 = vector.broadcast %c1_i32_136 : i32 to vector<1x4xi32>
    %379 = arith.cmpi slt, %375, %378 : vector<1x4xi32>
    %cst_137 = arith.constant 0.000000e+00 : f32
    %380 = vector.broadcast %cst_137 : f32 to vector<16x3xf32>
    %381 = vector.extract_strided_slice %372 {offsets = [0, 0], sizes = [16, 1], strides = [1, 1]} : vector<16x4xf32> to vector<16x1xf32>
    %382 = tpu.concatenate %380, %381 in 1 : vector<16x3xf32>, vector<16x1xf32> -> vector<16x4xf32>
    %cst_138 = arith.constant 0.000000e+00 : f32
    %383 = vector.shape_cast %377 : vector<1x4xi1> to vector<1x4xi1>
    %384 = vector.broadcast %383 : vector<1x4xi1> to vector<16x4xi1>
    %385 = vector.broadcast %cst_138 : f32 to vector<16x4xf32>
    %386 = arith.select %384, %382, %385 : vector<16x4xi1>, vector<16x4xf32>
    %cst_139 = arith.constant 0.000000e+00 : f32
    %387 = vector.broadcast %cst_139 : f32 to vector<16x2xf32>
    %388 = vector.extract_strided_slice %372 {offsets = [0, 0], sizes = [16, 2], strides = [1, 1]} : vector<16x4xf32> to vector<16x2xf32>
    %389 = tpu.concatenate %387, %388 in 1 : vector<16x2xf32>, vector<16x2xf32> -> vector<16x4xf32>
    %cst_140 = arith.constant 0.000000e+00 : f32
    %390 = vector.broadcast %cst_140 : f32 to vector<16x1xf32>
    %391 = vector.extract_strided_slice %372 {offsets = [0, 0], sizes = [16, 3], strides = [1, 1]} : vector<16x4xf32> to vector<16x3xf32>
    %392 = tpu.concatenate %390, %391 in 1 : vector<16x1xf32>, vector<16x3xf32> -> vector<16x4xf32>
    %cst_141 = arith.constant 0.000000e+00 : f32
    %393 = vector.shape_cast %379 : vector<1x4xi1> to vector<1x4xi1>
    %394 = vector.broadcast %393 : vector<1x4xi1> to vector<16x4xi1>
    %395 = vector.broadcast %cst_141 : f32 to vector<16x4xf32>
    %396 = arith.select %394, %392, %395 : vector<16x4xi1>, vector<16x4xf32>
    %cst_142 = arith.constant 0.000000e+00 : f32
    %397 = vector.broadcast %cst_142 : f32 to vector<16x1xf32>
    %398 = vector.extract_strided_slice %372 {offsets = [0, 0], sizes = [16, 3], strides = [1, 1]} : vector<16x4xf32> to vector<16x3xf32>
    %399 = tpu.concatenate %397, %398 in 1 : vector<16x1xf32>, vector<16x3xf32> -> vector<16x4xf32>
    %cst_143 = arith.constant 0.000000e+00 : f32
    %400 = vector.shape_cast %377 : vector<1x4xi1> to vector<1x4xi1>
    %401 = vector.broadcast %400 : vector<1x4xi1> to vector<16x4xi1>
    %402 = vector.broadcast %cst_143 : f32 to vector<16x4xf32>
    %403 = arith.select %401, %399, %402 : vector<16x4xi1>, vector<16x4xf32>
    %cst_144 = arith.constant 0.000000e+00 : f32
    %404 = vector.broadcast %cst_144 : f32 to vector<16x1xf32>
    %405 = vector.extract_strided_slice %372 {offsets = [0, 1], sizes = [16, 3], strides = [1, 1]} : vector<16x4xf32> to vector<16x3xf32>
    %406 = tpu.concatenate %405, %404 in 1 : vector<16x3xf32>, vector<16x1xf32> -> vector<16x4xf32>
    %cst_145 = arith.constant 0.000000e+00 : f32
    %407 = vector.shape_cast %379 : vector<1x4xi1> to vector<1x4xi1>
    %408 = vector.broadcast %407 : vector<1x4xi1> to vector<16x4xi1>
    %409 = vector.broadcast %cst_145 : f32 to vector<16x4xf32>
    %410 = arith.select %408, %406, %409 : vector<16x4xi1>, vector<16x4xf32>
    %cst_146 = arith.constant 0.000000e+00 : f32
    %411 = vector.broadcast %cst_146 : f32 to vector<16x1xf32>
    %412 = vector.extract_strided_slice %372 {offsets = [0, 1], sizes = [16, 3], strides = [1, 1]} : vector<16x4xf32> to vector<16x3xf32>
    %413 = tpu.concatenate %412, %411 in 1 : vector<16x3xf32>, vector<16x1xf32> -> vector<16x4xf32>
    %cst_147 = arith.constant 0.000000e+00 : f32
    %414 = vector.shape_cast %377 : vector<1x4xi1> to vector<1x4xi1>
    %415 = vector.broadcast %414 : vector<1x4xi1> to vector<16x4xi1>
    %416 = vector.broadcast %cst_147 : f32 to vector<16x4xf32>
    %417 = arith.select %415, %413, %416 : vector<16x4xi1>, vector<16x4xf32>
    %cst_148 = arith.constant 0.000000e+00 : f32
    %418 = vector.broadcast %cst_148 : f32 to vector<16x2xf32>
    %419 = vector.extract_strided_slice %372 {offsets = [0, 2], sizes = [16, 2], strides = [1, 1]} : vector<16x4xf32> to vector<16x2xf32>
    %420 = tpu.concatenate %419, %418 in 1 : vector<16x2xf32>, vector<16x2xf32> -> vector<16x4xf32>
    %cst_149 = arith.constant 0.000000e+00 : f32
    %421 = vector.broadcast %cst_149 : f32 to vector<16x3xf32>
    %422 = vector.extract_strided_slice %372 {offsets = [0, 3], sizes = [16, 1], strides = [1, 1]} : vector<16x4xf32> to vector<16x1xf32>
    %423 = tpu.concatenate %422, %421 in 1 : vector<16x1xf32>, vector<16x3xf32> -> vector<16x4xf32>
    %cst_150 = arith.constant 0.000000e+00 : f32
    %424 = vector.shape_cast %379 : vector<1x4xi1> to vector<1x4xi1>
    %425 = vector.broadcast %424 : vector<1x4xi1> to vector<16x4xi1>
    %426 = vector.broadcast %cst_150 : f32 to vector<16x4xf32>
    %427 = arith.select %425, %423, %426 : vector<16x4xi1>, vector<16x4xf32>
    %428 = tpu.concatenate %386, %389, %396, %403, %372, %410, %417, %420, %427 in 0 : vector<16x4xf32>, vector<16x4xf32>, vector<16x4xf32>, vector<16x4xf32>, vector<16x4xf32>, vector<16x4xf32>, vector<16x4xf32>, vector<16x4xf32>, vector<16x4xf32> -> vector<144x4xf32>
    %c0_151 = arith.constant 0 : index
    %c0_152 = arith.constant 0 : index
    %429 = vector.load %arg12[%c0_151, %c0_152] : memref<16x144xf32, #tpu.memory_space<vmem>>, vector<16x144xf32>
    %cst_153 = arith.constant dense<0.000000e+00> : vector<16x4xf32>
    %430 = tpu.matmul %429, %428, %cst_153 {dimension_numbers = #tpu.dot_dimension_numbers<[1], [0], [0], [1], [0, 0, 1, 1], [], []>} : vector<16x144xf32>, vector<144x4xf32>, vector<16x4xf32> -> vector<16x4xf32>
    %c0_154 = arith.constant 0 : index
    %c0_155 = arith.constant 0 : index
    %431 = vector.load %arg13[%c0_154, %c0_155] : memref<16x1xf32, #tpu.memory_space<vmem>>, vector<16x1xf32>
    %432 = vector.broadcast %431 : vector<16x1xf32> to vector<16x4xf32>
    %433 = arith.addf %430, %432 : vector<16x4xf32>
    %434 = arith.addf %309, %433 : vector<16x4xf32>
    %cst_156 = arith.constant 0.000000e+00 : f32
    %435 = vector.broadcast %cst_156 : f32 to vector<16x4xf32>
    %436 = arith.maximumf %434, %435 : vector<16x4xf32>
    %437 = tpu.iota {dimensions = array<i32: 1>} : vector<1x4xi32>
    %c1_i32_157 = arith.constant 1 : i32
    %438 = vector.broadcast %c1_i32_157 : i32 to vector<1x4xi32>
    %439 = arith.andi %437, %438 : vector<1x4xi32>
    %c0_i32_158 = arith.constant 0 : i32
    %440 = vector.broadcast %c0_i32_158 : i32 to vector<1x4xi32>
    %441 = arith.cmpi sgt, %439, %440 : vector<1x4xi32>
    %c1_i32_159 = arith.constant 1 : i32
    %442 = vector.broadcast %c1_i32_159 : i32 to vector<1x4xi32>
    %443 = arith.cmpi slt, %439, %442 : vector<1x4xi32>
    %cst_160 = arith.constant 0.000000e+00 : f32
    %444 = vector.broadcast %cst_160 : f32 to vector<16x3xf32>
    %445 = vector.extract_strided_slice %436 {offsets = [0, 0], sizes = [16, 1], strides = [1, 1]} : vector<16x4xf32> to vector<16x1xf32>
    %446 = tpu.concatenate %444, %445 in 1 : vector<16x3xf32>, vector<16x1xf32> -> vector<16x4xf32>
    %cst_161 = arith.constant 0.000000e+00 : f32
    %447 = vector.shape_cast %441 : vector<1x4xi1> to vector<1x4xi1>
    %448 = vector.broadcast %447 : vector<1x4xi1> to vector<16x4xi1>
    %449 = vector.broadcast %cst_161 : f32 to vector<16x4xf32>
    %450 = arith.select %448, %446, %449 : vector<16x4xi1>, vector<16x4xf32>
    %cst_162 = arith.constant 0.000000e+00 : f32
    %451 = vector.broadcast %cst_162 : f32 to vector<16x2xf32>
    %452 = vector.extract_strided_slice %436 {offsets = [0, 0], sizes = [16, 2], strides = [1, 1]} : vector<16x4xf32> to vector<16x2xf32>
    %453 = tpu.concatenate %451, %452 in 1 : vector<16x2xf32>, vector<16x2xf32> -> vector<16x4xf32>
    %cst_163 = arith.constant 0.000000e+00 : f32
    %454 = vector.broadcast %cst_163 : f32 to vector<16x1xf32>
    %455 = vector.extract_strided_slice %436 {offsets = [0, 0], sizes = [16, 3], strides = [1, 1]} : vector<16x4xf32> to vector<16x3xf32>
    %456 = tpu.concatenate %454, %455 in 1 : vector<16x1xf32>, vector<16x3xf32> -> vector<16x4xf32>
    %cst_164 = arith.constant 0.000000e+00 : f32
    %457 = vector.shape_cast %443 : vector<1x4xi1> to vector<1x4xi1>
    %458 = vector.broadcast %457 : vector<1x4xi1> to vector<16x4xi1>
    %459 = vector.broadcast %cst_164 : f32 to vector<16x4xf32>
    %460 = arith.select %458, %456, %459 : vector<16x4xi1>, vector<16x4xf32>
    %cst_165 = arith.constant 0.000000e+00 : f32
    %461 = vector.broadcast %cst_165 : f32 to vector<16x1xf32>
    %462 = vector.extract_strided_slice %436 {offsets = [0, 0], sizes = [16, 3], strides = [1, 1]} : vector<16x4xf32> to vector<16x3xf32>
    %463 = tpu.concatenate %461, %462 in 1 : vector<16x1xf32>, vector<16x3xf32> -> vector<16x4xf32>
    %cst_166 = arith.constant 0.000000e+00 : f32
    %464 = vector.shape_cast %441 : vector<1x4xi1> to vector<1x4xi1>
    %465 = vector.broadcast %464 : vector<1x4xi1> to vector<16x4xi1>
    %466 = vector.broadcast %cst_166 : f32 to vector<16x4xf32>
    %467 = arith.select %465, %463, %466 : vector<16x4xi1>, vector<16x4xf32>
    %cst_167 = arith.constant 0.000000e+00 : f32
    %468 = vector.broadcast %cst_167 : f32 to vector<16x1xf32>
    %469 = vector.extract_strided_slice %436 {offsets = [0, 1], sizes = [16, 3], strides = [1, 1]} : vector<16x4xf32> to vector<16x3xf32>
    %470 = tpu.concatenate %469, %468 in 1 : vector<16x3xf32>, vector<16x1xf32> -> vector<16x4xf32>
    %cst_168 = arith.constant 0.000000e+00 : f32
    %471 = vector.shape_cast %443 : vector<1x4xi1> to vector<1x4xi1>
    %472 = vector.broadcast %471 : vector<1x4xi1> to vector<16x4xi1>
    %473 = vector.broadcast %cst_168 : f32 to vector<16x4xf32>
    %474 = arith.select %472, %470, %473 : vector<16x4xi1>, vector<16x4xf32>
    %cst_169 = arith.constant 0.000000e+00 : f32
    %475 = vector.broadcast %cst_169 : f32 to vector<16x1xf32>
    %476 = vector.extract_strided_slice %436 {offsets = [0, 1], sizes = [16, 3], strides = [1, 1]} : vector<16x4xf32> to vector<16x3xf32>
    %477 = tpu.concatenate %476, %475 in 1 : vector<16x3xf32>, vector<16x1xf32> -> vector<16x4xf32>
    %cst_170 = arith.constant 0.000000e+00 : f32
    %478 = vector.shape_cast %441 : vector<1x4xi1> to vector<1x4xi1>
    %479 = vector.broadcast %478 : vector<1x4xi1> to vector<16x4xi1>
    %480 = vector.broadcast %cst_170 : f32 to vector<16x4xf32>
    %481 = arith.select %479, %477, %480 : vector<16x4xi1>, vector<16x4xf32>
    %cst_171 = arith.constant 0.000000e+00 : f32
    %482 = vector.broadcast %cst_171 : f32 to vector<16x2xf32>
    %483 = vector.extract_strided_slice %436 {offsets = [0, 2], sizes = [16, 2], strides = [1, 1]} : vector<16x4xf32> to vector<16x2xf32>
    %484 = tpu.concatenate %483, %482 in 1 : vector<16x2xf32>, vector<16x2xf32> -> vector<16x4xf32>
    %cst_172 = arith.constant 0.000000e+00 : f32
    %485 = vector.broadcast %cst_172 : f32 to vector<16x3xf32>
    %486 = vector.extract_strided_slice %436 {offsets = [0, 3], sizes = [16, 1], strides = [1, 1]} : vector<16x4xf32> to vector<16x1xf32>
    %487 = tpu.concatenate %486, %485 in 1 : vector<16x1xf32>, vector<16x3xf32> -> vector<16x4xf32>
    %cst_173 = arith.constant 0.000000e+00 : f32
    %488 = vector.shape_cast %443 : vector<1x4xi1> to vector<1x4xi1>
    %489 = vector.broadcast %488 : vector<1x4xi1> to vector<16x4xi1>
    %490 = vector.broadcast %cst_173 : f32 to vector<16x4xf32>
    %491 = arith.select %489, %487, %490 : vector<16x4xi1>, vector<16x4xf32>
    %492 = tpu.concatenate %450, %453, %460, %467, %436, %474, %481, %484, %491 in 0 : vector<16x4xf32>, vector<16x4xf32>, vector<16x4xf32>, vector<16x4xf32>, vector<16x4xf32>, vector<16x4xf32>, vector<16x4xf32>, vector<16x4xf32>, vector<16x4xf32> -> vector<144x4xf32>
    %c0_174 = arith.constant 0 : index
    %c0_175 = arith.constant 0 : index
    %493 = vector.load %arg14[%c0_174, %c0_175] : memref<16x144xf32, #tpu.memory_space<vmem>>, vector<16x144xf32>
    %cst_176 = arith.constant dense<0.000000e+00> : vector<16x4xf32>
    %494 = tpu.matmul %493, %492, %cst_176 {dimension_numbers = #tpu.dot_dimension_numbers<[1], [0], [0], [1], [0, 0, 1, 1], [], []>} : vector<16x144xf32>, vector<144x4xf32>, vector<16x4xf32> -> vector<16x4xf32>
    %c0_177 = arith.constant 0 : index
    %c0_178 = arith.constant 0 : index
    %495 = vector.load %arg15[%c0_177, %c0_178] : memref<16x1xf32, #tpu.memory_space<vmem>>, vector<16x1xf32>
    %496 = vector.broadcast %495 : vector<16x1xf32> to vector<16x4xf32>
    %497 = arith.addf %494, %496 : vector<16x4xf32>
    %cst_179 = arith.constant 0.000000e+00 : f32
    %498 = vector.broadcast %cst_179 : f32 to vector<16x4xf32>
    %499 = arith.maximumf %497, %498 : vector<16x4xf32>
    %500 = tpu.iota {dimensions = array<i32: 1>} : vector<1x4xi32>
    %c1_i32_180 = arith.constant 1 : i32
    %501 = vector.broadcast %c1_i32_180 : i32 to vector<1x4xi32>
    %502 = arith.andi %500, %501 : vector<1x4xi32>
    %c0_i32_181 = arith.constant 0 : i32
    %503 = vector.broadcast %c0_i32_181 : i32 to vector<1x4xi32>
    %504 = arith.cmpi sgt, %502, %503 : vector<1x4xi32>
    %c1_i32_182 = arith.constant 1 : i32
    %505 = vector.broadcast %c1_i32_182 : i32 to vector<1x4xi32>
    %506 = arith.cmpi slt, %502, %505 : vector<1x4xi32>
    %cst_183 = arith.constant 0.000000e+00 : f32
    %507 = vector.broadcast %cst_183 : f32 to vector<16x3xf32>
    %508 = vector.extract_strided_slice %499 {offsets = [0, 0], sizes = [16, 1], strides = [1, 1]} : vector<16x4xf32> to vector<16x1xf32>
    %509 = tpu.concatenate %507, %508 in 1 : vector<16x3xf32>, vector<16x1xf32> -> vector<16x4xf32>
    %cst_184 = arith.constant 0.000000e+00 : f32
    %510 = vector.shape_cast %504 : vector<1x4xi1> to vector<1x4xi1>
    %511 = vector.broadcast %510 : vector<1x4xi1> to vector<16x4xi1>
    %512 = vector.broadcast %cst_184 : f32 to vector<16x4xf32>
    %513 = arith.select %511, %509, %512 : vector<16x4xi1>, vector<16x4xf32>
    %cst_185 = arith.constant 0.000000e+00 : f32
    %514 = vector.broadcast %cst_185 : f32 to vector<16x2xf32>
    %515 = vector.extract_strided_slice %499 {offsets = [0, 0], sizes = [16, 2], strides = [1, 1]} : vector<16x4xf32> to vector<16x2xf32>
    %516 = tpu.concatenate %514, %515 in 1 : vector<16x2xf32>, vector<16x2xf32> -> vector<16x4xf32>
    %cst_186 = arith.constant 0.000000e+00 : f32
    %517 = vector.broadcast %cst_186 : f32 to vector<16x1xf32>
    %518 = vector.extract_strided_slice %499 {offsets = [0, 0], sizes = [16, 3], strides = [1, 1]} : vector<16x4xf32> to vector<16x3xf32>
    %519 = tpu.concatenate %517, %518 in 1 : vector<16x1xf32>, vector<16x3xf32> -> vector<16x4xf32>
    %cst_187 = arith.constant 0.000000e+00 : f32
    %520 = vector.shape_cast %506 : vector<1x4xi1> to vector<1x4xi1>
    %521 = vector.broadcast %520 : vector<1x4xi1> to vector<16x4xi1>
    %522 = vector.broadcast %cst_187 : f32 to vector<16x4xf32>
    %523 = arith.select %521, %519, %522 : vector<16x4xi1>, vector<16x4xf32>
    %cst_188 = arith.constant 0.000000e+00 : f32
    %524 = vector.broadcast %cst_188 : f32 to vector<16x1xf32>
    %525 = vector.extract_strided_slice %499 {offsets = [0, 0], sizes = [16, 3], strides = [1, 1]} : vector<16x4xf32> to vector<16x3xf32>
    %526 = tpu.concatenate %524, %525 in 1 : vector<16x1xf32>, vector<16x3xf32> -> vector<16x4xf32>
    %cst_189 = arith.constant 0.000000e+00 : f32
    %527 = vector.shape_cast %504 : vector<1x4xi1> to vector<1x4xi1>
    %528 = vector.broadcast %527 : vector<1x4xi1> to vector<16x4xi1>
    %529 = vector.broadcast %cst_189 : f32 to vector<16x4xf32>
    %530 = arith.select %528, %526, %529 : vector<16x4xi1>, vector<16x4xf32>
    %cst_190 = arith.constant 0.000000e+00 : f32
    %531 = vector.broadcast %cst_190 : f32 to vector<16x1xf32>
    %532 = vector.extract_strided_slice %499 {offsets = [0, 1], sizes = [16, 3], strides = [1, 1]} : vector<16x4xf32> to vector<16x3xf32>
    %533 = tpu.concatenate %532, %531 in 1 : vector<16x3xf32>, vector<16x1xf32> -> vector<16x4xf32>
    %cst_191 = arith.constant 0.000000e+00 : f32
    %534 = vector.shape_cast %506 : vector<1x4xi1> to vector<1x4xi1>
    %535 = vector.broadcast %534 : vector<1x4xi1> to vector<16x4xi1>
    %536 = vector.broadcast %cst_191 : f32 to vector<16x4xf32>
    %537 = arith.select %535, %533, %536 : vector<16x4xi1>, vector<16x4xf32>
    %cst_192 = arith.constant 0.000000e+00 : f32
    %538 = vector.broadcast %cst_192 : f32 to vector<16x1xf32>
    %539 = vector.extract_strided_slice %499 {offsets = [0, 1], sizes = [16, 3], strides = [1, 1]} : vector<16x4xf32> to vector<16x3xf32>
    %540 = tpu.concatenate %539, %538 in 1 : vector<16x3xf32>, vector<16x1xf32> -> vector<16x4xf32>
    %cst_193 = arith.constant 0.000000e+00 : f32
    %541 = vector.shape_cast %504 : vector<1x4xi1> to vector<1x4xi1>
    %542 = vector.broadcast %541 : vector<1x4xi1> to vector<16x4xi1>
    %543 = vector.broadcast %cst_193 : f32 to vector<16x4xf32>
    %544 = arith.select %542, %540, %543 : vector<16x4xi1>, vector<16x4xf32>
    %cst_194 = arith.constant 0.000000e+00 : f32
    %545 = vector.broadcast %cst_194 : f32 to vector<16x2xf32>
    %546 = vector.extract_strided_slice %499 {offsets = [0, 2], sizes = [16, 2], strides = [1, 1]} : vector<16x4xf32> to vector<16x2xf32>
    %547 = tpu.concatenate %546, %545 in 1 : vector<16x2xf32>, vector<16x2xf32> -> vector<16x4xf32>
    %cst_195 = arith.constant 0.000000e+00 : f32
    %548 = vector.broadcast %cst_195 : f32 to vector<16x3xf32>
    %549 = vector.extract_strided_slice %499 {offsets = [0, 3], sizes = [16, 1], strides = [1, 1]} : vector<16x4xf32> to vector<16x1xf32>
    %550 = tpu.concatenate %549, %548 in 1 : vector<16x1xf32>, vector<16x3xf32> -> vector<16x4xf32>
    %cst_196 = arith.constant 0.000000e+00 : f32
    %551 = vector.shape_cast %506 : vector<1x4xi1> to vector<1x4xi1>
    %552 = vector.broadcast %551 : vector<1x4xi1> to vector<16x4xi1>
    %553 = vector.broadcast %cst_196 : f32 to vector<16x4xf32>
    %554 = arith.select %552, %550, %553 : vector<16x4xi1>, vector<16x4xf32>
    %555 = tpu.concatenate %513, %516, %523, %530, %499, %537, %544, %547, %554 in 0 : vector<16x4xf32>, vector<16x4xf32>, vector<16x4xf32>, vector<16x4xf32>, vector<16x4xf32>, vector<16x4xf32>, vector<16x4xf32>, vector<16x4xf32>, vector<16x4xf32> -> vector<144x4xf32>
    %c0_197 = arith.constant 0 : index
    %c0_198 = arith.constant 0 : index
    %556 = vector.load %arg16[%c0_197, %c0_198] : memref<16x144xf32, #tpu.memory_space<vmem>>, vector<16x144xf32>
    %cst_199 = arith.constant dense<0.000000e+00> : vector<16x4xf32>
    %557 = tpu.matmul %556, %555, %cst_199 {dimension_numbers = #tpu.dot_dimension_numbers<[1], [0], [0], [1], [0, 0, 1, 1], [], []>} : vector<16x144xf32>, vector<144x4xf32>, vector<16x4xf32> -> vector<16x4xf32>
    %c0_200 = arith.constant 0 : index
    %c0_201 = arith.constant 0 : index
    %558 = vector.load %arg17[%c0_200, %c0_201] : memref<16x1xf32, #tpu.memory_space<vmem>>, vector<16x1xf32>
    %559 = vector.broadcast %558 : vector<16x1xf32> to vector<16x4xf32>
    %560 = arith.addf %557, %559 : vector<16x4xf32>
    %561 = arith.addf %436, %560 : vector<16x4xf32>
    %cst_202 = arith.constant 0.000000e+00 : f32
    %562 = vector.broadcast %cst_202 : f32 to vector<16x4xf32>
    %563 = arith.maximumf %561, %562 : vector<16x4xf32>
    %564 = tpu.iota {dimensions = array<i32: 1>} : vector<1x4xi32>
    %c1_i32_203 = arith.constant 1 : i32
    %565 = vector.broadcast %c1_i32_203 : i32 to vector<1x4xi32>
    %566 = arith.andi %564, %565 : vector<1x4xi32>
    %c0_i32_204 = arith.constant 0 : i32
    %567 = vector.broadcast %c0_i32_204 : i32 to vector<1x4xi32>
    %568 = arith.cmpi sgt, %566, %567 : vector<1x4xi32>
    %c1_i32_205 = arith.constant 1 : i32
    %569 = vector.broadcast %c1_i32_205 : i32 to vector<1x4xi32>
    %570 = arith.cmpi slt, %566, %569 : vector<1x4xi32>
    %cst_206 = arith.constant 0.000000e+00 : f32
    %571 = vector.broadcast %cst_206 : f32 to vector<16x3xf32>
    %572 = vector.extract_strided_slice %563 {offsets = [0, 0], sizes = [16, 1], strides = [1, 1]} : vector<16x4xf32> to vector<16x1xf32>
    %573 = tpu.concatenate %571, %572 in 1 : vector<16x3xf32>, vector<16x1xf32> -> vector<16x4xf32>
    %cst_207 = arith.constant 0.000000e+00 : f32
    %574 = vector.shape_cast %568 : vector<1x4xi1> to vector<1x4xi1>
    %575 = vector.broadcast %574 : vector<1x4xi1> to vector<16x4xi1>
    %576 = vector.broadcast %cst_207 : f32 to vector<16x4xf32>
    %577 = arith.select %575, %573, %576 : vector<16x4xi1>, vector<16x4xf32>
    %cst_208 = arith.constant 0.000000e+00 : f32
    %578 = vector.broadcast %cst_208 : f32 to vector<16x2xf32>
    %579 = vector.extract_strided_slice %563 {offsets = [0, 0], sizes = [16, 2], strides = [1, 1]} : vector<16x4xf32> to vector<16x2xf32>
    %580 = tpu.concatenate %578, %579 in 1 : vector<16x2xf32>, vector<16x2xf32> -> vector<16x4xf32>
    %cst_209 = arith.constant 0.000000e+00 : f32
    %581 = vector.broadcast %cst_209 : f32 to vector<16x1xf32>
    %582 = vector.extract_strided_slice %563 {offsets = [0, 0], sizes = [16, 3], strides = [1, 1]} : vector<16x4xf32> to vector<16x3xf32>
    %583 = tpu.concatenate %581, %582 in 1 : vector<16x1xf32>, vector<16x3xf32> -> vector<16x4xf32>
    %cst_210 = arith.constant 0.000000e+00 : f32
    %584 = vector.shape_cast %570 : vector<1x4xi1> to vector<1x4xi1>
    %585 = vector.broadcast %584 : vector<1x4xi1> to vector<16x4xi1>
    %586 = vector.broadcast %cst_210 : f32 to vector<16x4xf32>
    %587 = arith.select %585, %583, %586 : vector<16x4xi1>, vector<16x4xf32>
    %cst_211 = arith.constant 0.000000e+00 : f32
    %588 = vector.broadcast %cst_211 : f32 to vector<16x1xf32>
    %589 = vector.extract_strided_slice %563 {offsets = [0, 0], sizes = [16, 3], strides = [1, 1]} : vector<16x4xf32> to vector<16x3xf32>
    %590 = tpu.concatenate %588, %589 in 1 : vector<16x1xf32>, vector<16x3xf32> -> vector<16x4xf32>
    %cst_212 = arith.constant 0.000000e+00 : f32
    %591 = vector.shape_cast %568 : vector<1x4xi1> to vector<1x4xi1>
    %592 = vector.broadcast %591 : vector<1x4xi1> to vector<16x4xi1>
    %593 = vector.broadcast %cst_212 : f32 to vector<16x4xf32>
    %594 = arith.select %592, %590, %593 : vector<16x4xi1>, vector<16x4xf32>
    %cst_213 = arith.constant 0.000000e+00 : f32
    %595 = vector.broadcast %cst_213 : f32 to vector<16x1xf32>
    %596 = vector.extract_strided_slice %563 {offsets = [0, 1], sizes = [16, 3], strides = [1, 1]} : vector<16x4xf32> to vector<16x3xf32>
    %597 = tpu.concatenate %596, %595 in 1 : vector<16x3xf32>, vector<16x1xf32> -> vector<16x4xf32>
    %cst_214 = arith.constant 0.000000e+00 : f32
    %598 = vector.shape_cast %570 : vector<1x4xi1> to vector<1x4xi1>
    %599 = vector.broadcast %598 : vector<1x4xi1> to vector<16x4xi1>
    %600 = vector.broadcast %cst_214 : f32 to vector<16x4xf32>
    %601 = arith.select %599, %597, %600 : vector<16x4xi1>, vector<16x4xf32>
    %cst_215 = arith.constant 0.000000e+00 : f32
    %602 = vector.broadcast %cst_215 : f32 to vector<16x1xf32>
    %603 = vector.extract_strided_slice %563 {offsets = [0, 1], sizes = [16, 3], strides = [1, 1]} : vector<16x4xf32> to vector<16x3xf32>
    %604 = tpu.concatenate %603, %602 in 1 : vector<16x3xf32>, vector<16x1xf32> -> vector<16x4xf32>
    %cst_216 = arith.constant 0.000000e+00 : f32
    %605 = vector.shape_cast %568 : vector<1x4xi1> to vector<1x4xi1>
    %606 = vector.broadcast %605 : vector<1x4xi1> to vector<16x4xi1>
    %607 = vector.broadcast %cst_216 : f32 to vector<16x4xf32>
    %608 = arith.select %606, %604, %607 : vector<16x4xi1>, vector<16x4xf32>
    %cst_217 = arith.constant 0.000000e+00 : f32
    %609 = vector.broadcast %cst_217 : f32 to vector<16x2xf32>
    %610 = vector.extract_strided_slice %563 {offsets = [0, 2], sizes = [16, 2], strides = [1, 1]} : vector<16x4xf32> to vector<16x2xf32>
    %611 = tpu.concatenate %610, %609 in 1 : vector<16x2xf32>, vector<16x2xf32> -> vector<16x4xf32>
    %cst_218 = arith.constant 0.000000e+00 : f32
    %612 = vector.broadcast %cst_218 : f32 to vector<16x3xf32>
    %613 = vector.extract_strided_slice %563 {offsets = [0, 3], sizes = [16, 1], strides = [1, 1]} : vector<16x4xf32> to vector<16x1xf32>
    %614 = tpu.concatenate %613, %612 in 1 : vector<16x1xf32>, vector<16x3xf32> -> vector<16x4xf32>
    %cst_219 = arith.constant 0.000000e+00 : f32
    %615 = vector.shape_cast %570 : vector<1x4xi1> to vector<1x4xi1>
    %616 = vector.broadcast %615 : vector<1x4xi1> to vector<16x4xi1>
    %617 = vector.broadcast %cst_219 : f32 to vector<16x4xf32>
    %618 = arith.select %616, %614, %617 : vector<16x4xi1>, vector<16x4xf32>
    %619 = tpu.concatenate %577, %580, %587, %594, %563, %601, %608, %611, %618 in 0 : vector<16x4xf32>, vector<16x4xf32>, vector<16x4xf32>, vector<16x4xf32>, vector<16x4xf32>, vector<16x4xf32>, vector<16x4xf32>, vector<16x4xf32>, vector<16x4xf32> -> vector<144x4xf32>
    %c0_220 = arith.constant 0 : index
    %c0_221 = arith.constant 0 : index
    %620 = vector.load %arg18[%c0_220, %c0_221] : memref<16x144xf32, #tpu.memory_space<vmem>>, vector<16x144xf32>
    %cst_222 = arith.constant dense<0.000000e+00> : vector<16x4xf32>
    %621 = tpu.matmul %620, %619, %cst_222 {dimension_numbers = #tpu.dot_dimension_numbers<[1], [0], [0], [1], [0, 0, 1, 1], [], []>} : vector<16x144xf32>, vector<144x4xf32>, vector<16x4xf32> -> vector<16x4xf32>
    %c0_223 = arith.constant 0 : index
    %c0_224 = arith.constant 0 : index
    %622 = vector.load %arg19[%c0_223, %c0_224] : memref<16x1xf32, #tpu.memory_space<vmem>>, vector<16x1xf32>
    %623 = vector.broadcast %622 : vector<16x1xf32> to vector<16x4xf32>
    %624 = arith.addf %621, %623 : vector<16x4xf32>
    %cst_225 = arith.constant 0.000000e+00 : f32
    %625 = vector.broadcast %cst_225 : f32 to vector<16x4xf32>
    %626 = arith.maximumf %624, %625 : vector<16x4xf32>
    %627 = tpu.iota {dimensions = array<i32: 1>} : vector<1x4xi32>
    %c1_i32_226 = arith.constant 1 : i32
    %628 = vector.broadcast %c1_i32_226 : i32 to vector<1x4xi32>
    %629 = arith.andi %627, %628 : vector<1x4xi32>
    %c0_i32_227 = arith.constant 0 : i32
    %630 = vector.broadcast %c0_i32_227 : i32 to vector<1x4xi32>
    %631 = arith.cmpi sgt, %629, %630 : vector<1x4xi32>
    %c1_i32_228 = arith.constant 1 : i32
    %632 = vector.broadcast %c1_i32_228 : i32 to vector<1x4xi32>
    %633 = arith.cmpi slt, %629, %632 : vector<1x4xi32>
    %cst_229 = arith.constant 0.000000e+00 : f32
    %634 = vector.broadcast %cst_229 : f32 to vector<16x3xf32>
    %635 = vector.extract_strided_slice %626 {offsets = [0, 0], sizes = [16, 1], strides = [1, 1]} : vector<16x4xf32> to vector<16x1xf32>
    %636 = tpu.concatenate %634, %635 in 1 : vector<16x3xf32>, vector<16x1xf32> -> vector<16x4xf32>
    %cst_230 = arith.constant 0.000000e+00 : f32
    %637 = vector.shape_cast %631 : vector<1x4xi1> to vector<1x4xi1>
    %638 = vector.broadcast %637 : vector<1x4xi1> to vector<16x4xi1>
    %639 = vector.broadcast %cst_230 : f32 to vector<16x4xf32>
    %640 = arith.select %638, %636, %639 : vector<16x4xi1>, vector<16x4xf32>
    %cst_231 = arith.constant 0.000000e+00 : f32
    %641 = vector.broadcast %cst_231 : f32 to vector<16x2xf32>
    %642 = vector.extract_strided_slice %626 {offsets = [0, 0], sizes = [16, 2], strides = [1, 1]} : vector<16x4xf32> to vector<16x2xf32>
    %643 = tpu.concatenate %641, %642 in 1 : vector<16x2xf32>, vector<16x2xf32> -> vector<16x4xf32>
    %cst_232 = arith.constant 0.000000e+00 : f32
    %644 = vector.broadcast %cst_232 : f32 to vector<16x1xf32>
    %645 = vector.extract_strided_slice %626 {offsets = [0, 0], sizes = [16, 3], strides = [1, 1]} : vector<16x4xf32> to vector<16x3xf32>
    %646 = tpu.concatenate %644, %645 in 1 : vector<16x1xf32>, vector<16x3xf32> -> vector<16x4xf32>
    %cst_233 = arith.constant 0.000000e+00 : f32
    %647 = vector.shape_cast %633 : vector<1x4xi1> to vector<1x4xi1>
    %648 = vector.broadcast %647 : vector<1x4xi1> to vector<16x4xi1>
    %649 = vector.broadcast %cst_233 : f32 to vector<16x4xf32>
    %650 = arith.select %648, %646, %649 : vector<16x4xi1>, vector<16x4xf32>
    %cst_234 = arith.constant 0.000000e+00 : f32
    %651 = vector.broadcast %cst_234 : f32 to vector<16x1xf32>
    %652 = vector.extract_strided_slice %626 {offsets = [0, 0], sizes = [16, 3], strides = [1, 1]} : vector<16x4xf32> to vector<16x3xf32>
    %653 = tpu.concatenate %651, %652 in 1 : vector<16x1xf32>, vector<16x3xf32> -> vector<16x4xf32>
    %cst_235 = arith.constant 0.000000e+00 : f32
    %654 = vector.shape_cast %631 : vector<1x4xi1> to vector<1x4xi1>
    %655 = vector.broadcast %654 : vector<1x4xi1> to vector<16x4xi1>
    %656 = vector.broadcast %cst_235 : f32 to vector<16x4xf32>
    %657 = arith.select %655, %653, %656 : vector<16x4xi1>, vector<16x4xf32>
    %cst_236 = arith.constant 0.000000e+00 : f32
    %658 = vector.broadcast %cst_236 : f32 to vector<16x1xf32>
    %659 = vector.extract_strided_slice %626 {offsets = [0, 1], sizes = [16, 3], strides = [1, 1]} : vector<16x4xf32> to vector<16x3xf32>
    %660 = tpu.concatenate %659, %658 in 1 : vector<16x3xf32>, vector<16x1xf32> -> vector<16x4xf32>
    %cst_237 = arith.constant 0.000000e+00 : f32
    %661 = vector.shape_cast %633 : vector<1x4xi1> to vector<1x4xi1>
    %662 = vector.broadcast %661 : vector<1x4xi1> to vector<16x4xi1>
    %663 = vector.broadcast %cst_237 : f32 to vector<16x4xf32>
    %664 = arith.select %662, %660, %663 : vector<16x4xi1>, vector<16x4xf32>
    %cst_238 = arith.constant 0.000000e+00 : f32
    %665 = vector.broadcast %cst_238 : f32 to vector<16x1xf32>
    %666 = vector.extract_strided_slice %626 {offsets = [0, 1], sizes = [16, 3], strides = [1, 1]} : vector<16x4xf32> to vector<16x3xf32>
    %667 = tpu.concatenate %666, %665 in 1 : vector<16x3xf32>, vector<16x1xf32> -> vector<16x4xf32>
    %cst_239 = arith.constant 0.000000e+00 : f32
    %668 = vector.shape_cast %631 : vector<1x4xi1> to vector<1x4xi1>
    %669 = vector.broadcast %668 : vector<1x4xi1> to vector<16x4xi1>
    %670 = vector.broadcast %cst_239 : f32 to vector<16x4xf32>
    %671 = arith.select %669, %667, %670 : vector<16x4xi1>, vector<16x4xf32>
    %cst_240 = arith.constant 0.000000e+00 : f32
    %672 = vector.broadcast %cst_240 : f32 to vector<16x2xf32>
    %673 = vector.extract_strided_slice %626 {offsets = [0, 2], sizes = [16, 2], strides = [1, 1]} : vector<16x4xf32> to vector<16x2xf32>
    %674 = tpu.concatenate %673, %672 in 1 : vector<16x2xf32>, vector<16x2xf32> -> vector<16x4xf32>
    %cst_241 = arith.constant 0.000000e+00 : f32
    %675 = vector.broadcast %cst_241 : f32 to vector<16x3xf32>
    %676 = vector.extract_strided_slice %626 {offsets = [0, 3], sizes = [16, 1], strides = [1, 1]} : vector<16x4xf32> to vector<16x1xf32>
    %677 = tpu.concatenate %676, %675 in 1 : vector<16x1xf32>, vector<16x3xf32> -> vector<16x4xf32>
    %cst_242 = arith.constant 0.000000e+00 : f32
    %678 = vector.shape_cast %633 : vector<1x4xi1> to vector<1x4xi1>
    %679 = vector.broadcast %678 : vector<1x4xi1> to vector<16x4xi1>
    %680 = vector.broadcast %cst_242 : f32 to vector<16x4xf32>
    %681 = arith.select %679, %677, %680 : vector<16x4xi1>, vector<16x4xf32>
    %682 = tpu.concatenate %640, %643, %650, %657, %626, %664, %671, %674, %681 in 0 : vector<16x4xf32>, vector<16x4xf32>, vector<16x4xf32>, vector<16x4xf32>, vector<16x4xf32>, vector<16x4xf32>, vector<16x4xf32>, vector<16x4xf32>, vector<16x4xf32> -> vector<144x4xf32>
    %c0_243 = arith.constant 0 : index
    %c0_244 = arith.constant 0 : index
    %683 = vector.load %arg20[%c0_243, %c0_244] : memref<16x144xf32, #tpu.memory_space<vmem>>, vector<16x144xf32>
    %cst_245 = arith.constant dense<0.000000e+00> : vector<16x4xf32>
    %684 = tpu.matmul %683, %682, %cst_245 {dimension_numbers = #tpu.dot_dimension_numbers<[1], [0], [0], [1], [0, 0, 1, 1], [], []>} : vector<16x144xf32>, vector<144x4xf32>, vector<16x4xf32> -> vector<16x4xf32>
    %c0_246 = arith.constant 0 : index
    %c0_247 = arith.constant 0 : index
    %685 = vector.load %arg21[%c0_246, %c0_247] : memref<16x1xf32, #tpu.memory_space<vmem>>, vector<16x1xf32>
    %686 = vector.broadcast %685 : vector<16x1xf32> to vector<16x4xf32>
    %687 = arith.addf %684, %686 : vector<16x4xf32>
    %688 = arith.addf %563, %687 : vector<16x4xf32>
    %cst_248 = arith.constant 0.000000e+00 : f32
    %689 = vector.broadcast %cst_248 : f32 to vector<16x4xf32>
    %690 = arith.maximumf %688, %689 : vector<16x4xf32>
    %c0_249 = arith.constant 0 : index
    %c0_250 = arith.constant 0 : index
    %691 = vector.load %arg22[%c0_249, %c0_250] : memref<2x16xf32, #tpu.memory_space<vmem>>, vector<2x16xf32>
    %cst_251 = arith.constant dense<0.000000e+00> : vector<2x4xf32>
    %692 = tpu.matmul %691, %690, %cst_251 {dimension_numbers = #tpu.dot_dimension_numbers<[1], [0], [0], [1], [0, 0, 1, 1], [], []>} : vector<2x16xf32>, vector<16x4xf32>, vector<2x4xf32> -> vector<2x4xf32>
    %c0_252 = arith.constant 0 : index
    %c0_253 = arith.constant 0 : index
    %693 = vector.load %arg23[%c0_252, %c0_253] : memref<2x1xf32, #tpu.memory_space<vmem>>, vector<2x1xf32>
    %694 = vector.broadcast %693 : vector<2x1xf32> to vector<2x4xf32>
    %695 = arith.addf %692, %694 : vector<2x4xf32>
    %c0_254 = arith.constant 0 : index
    %c0_255 = arith.constant 0 : index
    %696 = vector.load %arg24[%c0_254, %c0_255] : memref<2x16xf32, #tpu.memory_space<vmem>>, vector<2x16xf32>
    %cst_256 = arith.constant dense<0.000000e+00> : vector<2x4xf32>
    %697 = tpu.matmul %696, %690, %cst_256 {dimension_numbers = #tpu.dot_dimension_numbers<[1], [0], [0], [1], [0, 0, 1, 1], [], []>} : vector<2x16xf32>, vector<16x4xf32>, vector<2x4xf32> -> vector<2x4xf32>
    %c0_257 = arith.constant 0 : index
    %c0_258 = arith.constant 0 : index
    %698 = vector.load %arg25[%c0_257, %c0_258] : memref<2x1xf32, #tpu.memory_space<vmem>>, vector<2x1xf32>
    %699 = vector.broadcast %698 : vector<2x1xf32> to vector<2x4xf32>
    %700 = arith.addf %697, %699 : vector<2x4xf32>
    %c0_259 = arith.constant 0 : index
    %c0_260 = arith.constant 0 : index
    %701 = vector.load %arg26[%c0_259, %c0_260] : memref<16x16xf32, #tpu.memory_space<vmem>>, vector<16x16xf32>
    %cst_261 = arith.constant dense<0.000000e+00> : vector<16x4xf32>
    %702 = tpu.matmul %701, %690, %cst_261 {dimension_numbers = #tpu.dot_dimension_numbers<[1], [0], [0], [1], [0, 0, 1, 1], [], []>} : vector<16x16xf32>, vector<16x4xf32>, vector<16x4xf32> -> vector<16x4xf32>
    %c0_262 = arith.constant 0 : index
    %c0_263 = arith.constant 0 : index
    %703 = vector.load %arg27[%c0_262, %c0_263] : memref<16x1xf32, #tpu.memory_space<vmem>>, vector<16x1xf32>
    %704 = vector.broadcast %703 : vector<16x1xf32> to vector<16x4xf32>
    %705 = arith.addf %702, %704 : vector<16x4xf32>
    %706 = tpu.transpose %695, [1, 0] : vector<2x4xf32> -> vector<4x2xf32>
    %cst_264 = arith.constant dense<0.000000e+00> : vector<4x4xf32>
    %707 = tpu.matmul %706, %700, %cst_264 {dimension_numbers = #tpu.dot_dimension_numbers<[1], [0], [0], [1], [0, 0, 1, 1], [], []>} : vector<4x2xf32>, vector<2x4xf32>, vector<4x4xf32> -> vector<4x4xf32>
    %cst_265 = arith.constant 0.707106769 : f32
    %708 = vector.broadcast %cst_265 : f32 to vector<4x4xf32>
    %709 = arith.mulf %707, %708 : vector<4x4xf32>
    %cst_266 = arith.constant dense<0xFF800000> : vector<4xf32>
    %710 = vector.multi_reduction <maximumf>, %709, %cst_266 [1] : vector<4x4xf32> to vector<4xf32>
    %711 = vector.shape_cast %710 : vector<4xf32> to vector<4x1xf32>
    %712 = vector.broadcast %711 : vector<4x1xf32> to vector<4x4xf32>
    %713 = arith.subf %709, %712 : vector<4x4xf32>
    %714 = math.exp %713 : vector<4x4xf32>
    %cst_267 = arith.constant dense<0.000000e+00> : vector<4xf32>
    %715 = vector.multi_reduction <add>, %714, %cst_267 [1] : vector<4x4xf32> to vector<4xf32>
    %716 = vector.shape_cast %715 : vector<4xf32> to vector<4x1xf32>
    %717 = vector.broadcast %716 : vector<4x1xf32> to vector<4x4xf32>
    %718 = arith.divf %714, %717 : vector<4x4xf32>
    %719 = tpu.transpose %718, [1, 0] : vector<4x4xf32> -> vector<4x4xf32>
    %cst_268 = arith.constant dense<0.000000e+00> : vector<16x4xf32>
    %720 = tpu.matmul %705, %719, %cst_268 {dimension_numbers = #tpu.dot_dimension_numbers<[1], [0], [0], [1], [0, 0, 1, 1], [], []>} : vector<16x4xf32>, vector<4x4xf32>, vector<16x4xf32> -> vector<16x4xf32>
    %c0_269 = arith.constant 0 : index
    %c0_270 = arith.constant 0 : index
    %721 = vector.load %arg28[%c0_269, %c0_270] : memref<1x1xf32, #tpu.memory_space<vmem>>, vector<1x1xf32>
    %722 = vector.broadcast %721 : vector<1x1xf32> to vector<16x4xf32>
    %723 = arith.mulf %722, %720 : vector<16x4xf32>
    %724 = arith.addf %723, %690 : vector<16x4xf32>
    %c0_271 = arith.constant 0 : index
    %c0_272 = arith.constant 0 : index
    %725 = vector.load %arg29[%c0_271, %c0_272] : memref<24x16xf32, #tpu.memory_space<vmem>>, vector<24x16xf32>
    %cst_273 = arith.constant dense<0.000000e+00> : vector<24x4xf32>
    %726 = tpu.matmul %725, %724, %cst_273 {dimension_numbers = #tpu.dot_dimension_numbers<[1], [0], [0], [1], [0, 0, 1, 1], [], []>} : vector<24x16xf32>, vector<16x4xf32>, vector<24x4xf32> -> vector<24x4xf32>
    %c0_274 = arith.constant 0 : index
    %c0_275 = arith.constant 0 : index
    %727 = vector.load %arg30[%c0_274, %c0_275] : memref<24x1xf32, #tpu.memory_space<vmem>>, vector<24x1xf32>
    %728 = vector.broadcast %727 : vector<24x1xf32> to vector<24x4xf32>
    %729 = arith.addf %726, %728 : vector<24x4xf32>
    %c0_276 = arith.constant 0 : index
    %c0_277 = arith.constant 0 : index
    %c0_278 = arith.constant 0 : index
    %730 = vector.load %arg35[%c0_276, %c0_277, %c0_278] : memref<1x24x4xf32, #tpu.memory_space<vmem>>, vector<1x24x4xf32>
    %731 = vector.shape_cast %730 : vector<1x24x4xf32> to vector<24x4xf32>
    %732 = vector.shape_cast %729 : vector<24x4xf32> to vector<1x24x4xf32>
    tpu.vector_store %arg35[%c0_276, %c0_277, %c0_278], %732 {strides = array<i32>} : memref<1x24x4xf32, #tpu.memory_space<vmem>>, vector<1x24x4xf32>,
    return
  }
  func.func @transform_0(%arg0: i32) -> (i32, i32, i32) {
    %c0_i32 = arith.constant 0 : i32
    %c0_i32_0 = arith.constant 0 : i32
    %c0_i32_1 = arith.constant 0 : i32
    return %arg0, %c0_i32, %c0_i32_0 : i32, i32, i32
  }
  func.func @transform_1(%arg0: i32) -> (i32, i32) {
    %c0_i32 = arith.constant 0 : i32
    %c0_i32_0 = arith.constant 0 : i32
    %c0_i32_1 = arith.constant 0 : i32
    return %c0_i32, %c0_i32_0 : i32, i32
  }
  func.func @transform_2(%arg0: i32) -> (i32, i32) {
    %c0_i32 = arith.constant 0 : i32
    %c0_i32_0 = arith.constant 0 : i32
    %c0_i32_1 = arith.constant 0 : i32
    return %c0_i32, %c0_i32_0 : i32, i32
  }
  func.func @transform_3(%arg0: i32) -> (i32, i32) {
    %c0_i32 = arith.constant 0 : i32
    %c0_i32_0 = arith.constant 0 : i32
    %c0_i32_1 = arith.constant 0 : i32
    return %c0_i32, %c0_i32_0 : i32, i32
  }
  func.func @transform_4(%arg0: i32) -> (i32, i32) {
    %c0_i32 = arith.constant 0 : i32
    %c0_i32_0 = arith.constant 0 : i32
    %c0_i32_1 = arith.constant 0 : i32
    return %c0_i32, %c0_i32_0 : i32, i32
  }
  func.func @transform_5(%arg0: i32) -> (i32, i32) {
    %c0_i32 = arith.constant 0 : i32
    %c0_i32_0 = arith.constant 0 : i32
    %c0_i32_1 = arith.constant 0 : i32
    return %c0_i32, %c0_i32_0 : i32, i32
  }
  func.func @transform_6(%arg0: i32) -> (i32, i32) {
    %c0_i32 = arith.constant 0 : i32
    %c0_i32_0 = arith.constant 0 : i32
    %c0_i32_1 = arith.constant 0 : i32
    return %c0_i32, %c0_i32_0 : i32, i32
  }
  func.func @transform_7(%arg0: i32) -> (i32, i32) {
    %c0_i32 = arith.constant 0 : i32
    %c0_i32_0 = arith.constant 0 : i32
    %c0_i32_1 = arith.constant 0 : i32
    return %c0_i32, %c0_i32_0 : i32, i32
  }
  func.func @transform_8(%arg0: i32) -> (i32, i32) {
    %c0_i32 = arith.constant 0 : i32
    %c0_i32_0 = arith.constant 0 : i32
    %c0_i32_1 = arith.constant 0 : i32
    return %c0_i32, %c0_i32_0 : i32, i32
  }
  func.func @transform_9(%arg0: i32) -> (i32, i32) {
    %c0_i32 = arith.constant 0 : i32
    %c0_i32_0 = arith.constant 0 : i32
    %c0_i32_1 = arith.constant 0 : i32
    return %c0_i32, %c0_i32_0 : i32, i32
  }
  func.func @transform_10(%arg0: i32) -> (i32, i32) {
    %c0_i32 = arith.constant 0 : i32
    %c0_i32_0 = arith.constant 0 : i32
    %c0_i32_1 = arith.constant 0 : i32
    return %c0_i32, %c0_i32_0 : i32, i32
  }
  func.func @transform_11(%arg0: i32) -> (i32, i32) {
    %c0_i32 = arith.constant 0 : i32
    %c0_i32_0 = arith.constant 0 : i32
    %c0_i32_1 = arith.constant 0 : i32
    return %c0_i32, %c0_i32_0 : i32, i32
  }
  func.func @transform_12(%arg0: i32) -> (i32, i32) {
    %c0_i32 = arith.constant 0 : i32
    %c0_i32_0 = arith.constant 0 : i32
    %c0_i32_1 = arith.constant 0 : i32
    return %c0_i32, %c0_i32_0 : i32, i32
  }
  func.func @transform_13(%arg0: i32) -> (i32, i32) {
    %c0_i32 = arith.constant 0 : i32
    %c0_i32_0 = arith.constant 0 : i32
    %c0_i32_1 = arith.constant 0 : i32
    return %c0_i32, %c0_i32_0 : i32, i32
  }
  func.func @transform_14(%arg0: i32) -> (i32, i32) {
    %c0_i32 = arith.constant 0 : i32
    %c0_i32_0 = arith.constant 0 : i32
    %c0_i32_1 = arith.constant 0 : i32
    return %c0_i32, %c0_i32_0 : i32, i32
  }
  func.func @transform_15(%arg0: i32) -> (i32, i32) {
    %c0_i32 = arith.constant 0 : i32
    %c0_i32_0 = arith.constant 0 : i32
    %c0_i32_1 = arith.constant 0 : i32
    return %c0_i32, %c0_i32_0 : i32, i32
  }
  func.func @transform_16(%arg0: i32) -> (i32, i32) {
    %c0_i32 = arith.constant 0 : i32
    %c0_i32_0 = arith.constant 0 : i32
    %c0_i32_1 = arith.constant 0 : i32
    return %c0_i32, %c0_i32_0 : i32, i32
  }
  func.func @transform_17(%arg0: i32) -> (i32, i32) {
    %c0_i32 = arith.constant 0 : i32
    %c0_i32_0 = arith.constant 0 : i32
    %c0_i32_1 = arith.constant 0 : i32
    return %c0_i32, %c0_i32_0 : i32, i32
  }
  func.func @transform_18(%arg0: i32) -> (i32, i32) {
    %c0_i32 = arith.constant 0 : i32
    %c0_i32_0 = arith.constant 0 : i32
    %c0_i32_1 = arith.constant 0 : i32
    return %c0_i32, %c0_i32_0 : i32, i32
  }
  func.func @transform_19(%arg0: i32) -> (i32, i32) {
    %c0_i32 = arith.constant 0 : i32
    %c0_i32_0 = arith.constant 0 : i32
    %c0_i32_1 = arith.constant 0 : i32
    return %c0_i32, %c0_i32_0 : i32, i32
  }
  func.func @transform_20(%arg0: i32) -> (i32, i32) {
    %c0_i32 = arith.constant 0 : i32
    %c0_i32_0 = arith.constant 0 : i32
    %c0_i32_1 = arith.constant 0 : i32
    return %c0_i32, %c0_i32_0 : i32, i32
  }
  func.func @transform_21(%arg0: i32) -> (i32, i32) {
    %c0_i32 = arith.constant 0 : i32
    %c0_i32_0 = arith.constant 0 : i32
    %c0_i32_1 = arith.constant 0 : i32
    return %c0_i32, %c0_i32_0 : i32, i32
  }
  func.func @transform_22(%arg0: i32) -> (i32, i32) {
    %c0_i32 = arith.constant 0 : i32
    %c0_i32_0 = arith.constant 0 : i32
    %c0_i32_1 = arith.constant 0 : i32
    return %c0_i32, %c0_i32_0 : i32, i32
  }
  func.func @transform_23(%arg0: i32) -> (i32, i32) {
    %c0_i32 = arith.constant 0 : i32
    %c0_i32_0 = arith.constant 0 : i32
    %c0_i32_1 = arith.constant 0 : i32
    return %c0_i32, %c0_i32_0 : i32, i32
  }
  func.func @transform_24(%arg0: i32) -> (i32, i32) {
    %c0_i32 = arith.constant 0 : i32
    %c0_i32_0 = arith.constant 0 : i32
    %c0_i32_1 = arith.constant 0 : i32
    return %c0_i32, %c0_i32_0 : i32, i32
  }
  func.func @transform_25(%arg0: i32) -> (i32, i32) {
    %c0_i32 = arith.constant 0 : i32
    %c0_i32_0 = arith.constant 0 : i32
    %c0_i32_1 = arith.constant 0 : i32
    return %c0_i32, %c0_i32_0 : i32, i32
  }
  func.func @transform_26(%arg0: i32) -> (i32, i32) {
    %c0_i32 = arith.constant 0 : i32
    %c0_i32_0 = arith.constant 0 : i32
    %c0_i32_1 = arith.constant 0 : i32
    return %c0_i32, %c0_i32_0 : i32, i32
  }
  func.func @transform_27(%arg0: i32) -> (i32, i32) {
    %c0_i32 = arith.constant 0 : i32
    %c0_i32_0 = arith.constant 0 : i32
    %c0_i32_1 = arith.constant 0 : i32
    return %c0_i32, %c0_i32_0 : i32, i32
  }
  func.func @transform_28(%arg0: i32) -> (i32, i32) {
    %c0_i32 = arith.constant 0 : i32
    %c0_i32_0 = arith.constant 0 : i32
    %c0_i32_1 = arith.constant 0 : i32
    return %c0_i32, %c0_i32_0 : i32, i32
  }
  func.func @transform_29(%arg0: i32) -> (i32, i32) {
    %c0_i32 = arith.constant 0 : i32
    %c0_i32_0 = arith.constant 0 : i32
    %c0_i32_1 = arith.constant 0 : i32
    return %c0_i32, %c0_i32_0 : i32, i32
  }
  func.func @transform_30(%arg0: i32) -> (i32, i32) {
    %c0_i32 = arith.constant 0 : i32
    %c0_i32_0 = arith.constant 0 : i32
    %c0_i32_1 = arith.constant 0 : i32
    return %c0_i32, %c0_i32_0 : i32, i32
  }
  func.func @transform_31(%arg0: i32) -> (i32, i32) {
    %c0_i32 = arith.constant 0 : i32
    %c0_i32_0 = arith.constant 0 : i32
    %c0_i32_1 = arith.constant 0 : i32
    return %c0_i32, %c0_i32_0 : i32, i32
  }
  func.func @transform_32(%arg0: i32) -> (i32, i32) {
    %c0_i32 = arith.constant 0 : i32
    %c0_i32_0 = arith.constant 0 : i32
    %c0_i32_1 = arith.constant 0 : i32
    return %c0_i32, %c0_i32_0 : i32, i32
  }
  func.func @transform_33(%arg0: i32) -> (i32, i32) {
    %c0_i32 = arith.constant 0 : i32
    %c0_i32_0 = arith.constant 0 : i32
    %c0_i32_1 = arith.constant 0 : i32
    return %c0_i32, %c0_i32_0 : i32, i32
  }
  func.func @transform_34(%arg0: i32) -> (i32, i32, i32) {
    %c0_i32 = arith.constant 0 : i32
    %c0_i32_0 = arith.constant 0 : i32
    %c0_i32_1 = arith.constant 0 : i32
    return %arg0, %c0_i32, %c0_i32_0 : i32, i32, i32
  }
}

module attributes {stable_mosaic.version = 11 : i64} {
  func.func @_fullres_kernel(%arg0: i32, %arg1: i32, %arg2: memref<1x3x256xf32, #tpu.memory_space<vmem>>, %arg3: memref<1x12x8xf32, #tpu.memory_space<vmem>>, %arg4: memref<16x3xf32, #tpu.memory_space<vmem>>, %arg5: memref<16x1xf32, #tpu.memory_space<vmem>>, %arg6: memref<1x16xf32, #tpu.memory_space<vmem>>, %arg7: memref<1x1xf32, #tpu.memory_space<vmem>>, %arg8: memref<1x3x256xf32, #tpu.memory_space<vmem>>, %arg9: memref<1x1x256xf32, #tpu.memory_space<vmem>>) attributes {dimension_semantics = [#tpu.dimension_semantics<parallel>, #tpu.dimension_semantics<parallel>], iteration_bounds = array<i64: 2, 1>, scalar_prefetch = 0 : i64, scratch_operands = 0 : i64, tpu.core_type = #tpu.core_type<tc>, window_params = [{transform_indices = @transform_0, window_bounds = array<i64: 1, 3, 256>}, {transform_indices = @transform_1, window_bounds = array<i64: 1, 12, 8>}, {pipeline_mode = #tpu.pipeline_mode<synchronous>, transform_indices = @transform_2, window_bounds = array<i64: 16, 3>}, {pipeline_mode = #tpu.pipeline_mode<synchronous>, transform_indices = @transform_3, window_bounds = array<i64: 16, 1>}, {pipeline_mode = #tpu.pipeline_mode<synchronous>, transform_indices = @transform_4, window_bounds = array<i64: 1, 16>}, {pipeline_mode = #tpu.pipeline_mode<synchronous>, transform_indices = @transform_5, window_bounds = array<i64: 1, 1>}, {transform_indices = @transform_6, window_bounds = array<i64: 1, 3, 256>}, {transform_indices = @transform_7, window_bounds = array<i64: 1, 1, 256>}]} {
    %c0 = arith.constant 0 : index
    %c0_0 = arith.constant 0 : index
    %c0_1 = arith.constant 0 : index
    %0 = vector.load %arg2[%c0, %c0_0, %c0_1] : memref<1x3x256xf32, #tpu.memory_space<vmem>>, vector<1x3x256xf32>
    %1 = vector.shape_cast %0 : vector<1x3x256xf32> to vector<3x256xf32>
    %c0_2 = arith.constant 0 : index
    %c0_3 = arith.constant 0 : index
    %2 = vector.load %arg4[%c0_2, %c0_3] : memref<16x3xf32, #tpu.memory_space<vmem>>, vector<16x3xf32>
    %cst = arith.constant dense<0.000000e+00> : vector<16x256xf32>
    %3 = tpu.matmul %2, %1, %cst {dimension_numbers = #tpu.dot_dimension_numbers<[1], [0], [0], [1], [0, 0, 1, 1], [], []>} : vector<16x3xf32>, vector<3x256xf32>, vector<16x256xf32> -> vector<16x256xf32>
    %c0_4 = arith.constant 0 : index
    %c0_5 = arith.constant 0 : index
    %4 = vector.load %arg5[%c0_4, %c0_5] : memref<16x1xf32, #tpu.memory_space<vmem>>, vector<16x1xf32>
    %5 = vector.broadcast %4 : vector<16x1xf32> to vector<16x256xf32>
    %6 = arith.addf %3, %5 : vector<16x256xf32>
    %cst_6 = arith.constant 0.000000e+00 : f32
    %7 = vector.broadcast %cst_6 : f32 to vector<16x256xf32>
    %8 = arith.maximumf %6, %7 : vector<16x256xf32>
    %c0_7 = arith.constant 0 : index
    %c0_8 = arith.constant 0 : index
    %9 = vector.load %arg6[%c0_7, %c0_8] : memref<1x16xf32, #tpu.memory_space<vmem>>, vector<1x16xf32>
    %cst_9 = arith.constant dense<0.000000e+00> : vector<1x256xf32>
    %10 = tpu.matmul %9, %8, %cst_9 {dimension_numbers = #tpu.dot_dimension_numbers<[1], [0], [0], [1], [0, 0, 1, 1], [], []>} : vector<1x16xf32>, vector<16x256xf32>, vector<1x256xf32> -> vector<1x256xf32>
    %c0_10 = arith.constant 0 : index
    %c0_11 = arith.constant 0 : index
    %11 = vector.load %arg7[%c0_10, %c0_11] : memref<1x1xf32, #tpu.memory_space<vmem>>, vector<1x1xf32>
    %12 = vector.broadcast %11 : vector<1x1xf32> to vector<1x256xf32>
    %13 = arith.addf %10, %12 : vector<1x256xf32>
    %14 = math.tanh %13 : vector<1x256xf32>
    %c0_12 = arith.constant 0 : index
    %c0_13 = arith.constant 0 : index
    %c0_14 = arith.constant 0 : index
    %15 = vector.load %arg9[%c0_12, %c0_13, %c0_14] : memref<1x1x256xf32, #tpu.memory_space<vmem>>, vector<1x1x256xf32>
    %16 = vector.shape_cast %15 : vector<1x1x256xf32> to vector<1x256xf32>
    %17 = vector.shape_cast %14 : vector<1x256xf32> to vector<1x1x256xf32>
    tpu.vector_store %arg9[%c0_12, %c0_13, %c0_14], %17 {strides = array<i32>} : memref<1x1x256xf32, #tpu.memory_space<vmem>>, vector<1x1x256xf32>,
    %18 = tpu.iota {dimensions = array<i32: 1>} : vector<1x256xi32>
    %c256_i32 = arith.constant 256 : i32
    %19 = arith.muli %arg1, %c256_i32 : i32
    %20 = vector.broadcast %19 : i32 to vector<1x256xi32>
    %21 = arith.addi %18, %20 : vector<1x256xi32>
    %c4_i32 = arith.constant 4 : i32
    %22 = vector.broadcast %c4_i32 : i32 to vector<1x256xi32>
    %23 = arith.shrsi %21, %22 : vector<1x256xi32>
    %24 = arith.sitofp %23 : vector<1x256xi32> to vector<1x256xf32>
    %c15_i32 = arith.constant 15 : i32
    %25 = vector.broadcast %c15_i32 : i32 to vector<1x256xi32>
    %26 = arith.andi %21, %25 : vector<1x256xi32>
    %27 = arith.sitofp %26 : vector<1x256xi32> to vector<1x256xf32>
    %cst_15 = arith.constant 0.0666666701 : f32
    %28 = vector.broadcast %cst_15 : f32 to vector<1x256xf32>
    %29 = arith.mulf %24, %28 : vector<1x256xf32>
    %cst_16 = arith.constant 0.0666666701 : f32
    %30 = vector.broadcast %cst_16 : f32 to vector<1x256xf32>
    %31 = arith.mulf %27, %30 : vector<1x256xf32>
    %cst_17 = arith.constant 1.000000e+00 : f32
    %32 = vector.broadcast %cst_17 : f32 to vector<1x256xf32>
    %33 = arith.addf %14, %32 : vector<1x256xf32>
    %cst_18 = arith.constant 5.000000e-01 : f32
    %34 = vector.broadcast %cst_18 : f32 to vector<1x256xf32>
    %35 = arith.mulf %33, %34 : vector<1x256xf32>
    %cst_19 = arith.constant 0.000000e+00 : f32
    %36 = vector.broadcast %cst_19 : f32 to vector<1x256xf32>
    %37 = arith.subf %35, %36 : vector<1x256xf32>
    %38 = math.absf %37 : vector<1x256xf32>
    %cst_20 = arith.constant 1.000000e+00 : f32
    %39 = vector.broadcast %cst_20 : f32 to vector<1x256xf32>
    %40 = arith.subf %39, %38 : vector<1x256xf32>
    %cst_21 = arith.constant 0.000000e+00 : f32
    %41 = vector.broadcast %cst_21 : f32 to vector<1x256xf32>
    %42 = arith.maximumf %40, %41 : vector<1x256xf32>
    %cst_22 = arith.constant 0.000000e+00 : f32
    %43 = vector.broadcast %cst_22 : f32 to vector<1x256xf32>
    %44 = arith.subf %31, %43 : vector<1x256xf32>
    %45 = math.absf %44 : vector<1x256xf32>
    %cst_23 = arith.constant 1.000000e+00 : f32
    %46 = vector.broadcast %cst_23 : f32 to vector<1x256xf32>
    %47 = arith.subf %46, %45 : vector<1x256xf32>
    %cst_24 = arith.constant 0.000000e+00 : f32
    %48 = vector.broadcast %cst_24 : f32 to vector<1x256xf32>
    %49 = arith.maximumf %47, %48 : vector<1x256xf32>
    %cst_25 = arith.constant 0.000000e+00 : f32
    %50 = vector.broadcast %cst_25 : f32 to vector<1x256xf32>
    %51 = arith.subf %29, %50 : vector<1x256xf32>
    %52 = math.absf %51 : vector<1x256xf32>
    %cst_26 = arith.constant 1.000000e+00 : f32
    %53 = vector.broadcast %cst_26 : f32 to vector<1x256xf32>
    %54 = arith.subf %53, %52 : vector<1x256xf32>
    %cst_27 = arith.constant 0.000000e+00 : f32
    %55 = vector.broadcast %cst_27 : f32 to vector<1x256xf32>
    %56 = arith.maximumf %54, %55 : vector<1x256xf32>
    %57 = arith.mulf %42, %49 : vector<1x256xf32>
    %58 = arith.mulf %57, %56 : vector<1x256xf32>
    %cst_28 = arith.constant 1.000000e+00 : f32
    %59 = vector.broadcast %cst_28 : f32 to vector<1x256xf32>
    %60 = arith.subf %29, %59 : vector<1x256xf32>
    %61 = math.absf %60 : vector<1x256xf32>
    %cst_29 = arith.constant 1.000000e+00 : f32
    %62 = vector.broadcast %cst_29 : f32 to vector<1x256xf32>
    %63 = arith.subf %62, %61 : vector<1x256xf32>
    %cst_30 = arith.constant 0.000000e+00 : f32
    %64 = vector.broadcast %cst_30 : f32 to vector<1x256xf32>
    %65 = arith.maximumf %63, %64 : vector<1x256xf32>
    %66 = arith.mulf %42, %49 : vector<1x256xf32>
    %67 = arith.mulf %66, %65 : vector<1x256xf32>
    %cst_31 = arith.constant 1.000000e+00 : f32
    %68 = vector.broadcast %cst_31 : f32 to vector<1x256xf32>
    %69 = arith.subf %31, %68 : vector<1x256xf32>
    %70 = math.absf %69 : vector<1x256xf32>
    %cst_32 = arith.constant 1.000000e+00 : f32
    %71 = vector.broadcast %cst_32 : f32 to vector<1x256xf32>
    %72 = arith.subf %71, %70 : vector<1x256xf32>
    %cst_33 = arith.constant 0.000000e+00 : f32
    %73 = vector.broadcast %cst_33 : f32 to vector<1x256xf32>
    %74 = arith.maximumf %72, %73 : vector<1x256xf32>
    %cst_34 = arith.constant 0.000000e+00 : f32
    %75 = vector.broadcast %cst_34 : f32 to vector<1x256xf32>
    %76 = arith.subf %29, %75 : vector<1x256xf32>
    %77 = math.absf %76 : vector<1x256xf32>
    %cst_35 = arith.constant 1.000000e+00 : f32
    %78 = vector.broadcast %cst_35 : f32 to vector<1x256xf32>
    %79 = arith.subf %78, %77 : vector<1x256xf32>
    %cst_36 = arith.constant 0.000000e+00 : f32
    %80 = vector.broadcast %cst_36 : f32 to vector<1x256xf32>
    %81 = arith.maximumf %79, %80 : vector<1x256xf32>
    %82 = arith.mulf %42, %74 : vector<1x256xf32>
    %83 = arith.mulf %82, %81 : vector<1x256xf32>
    %cst_37 = arith.constant 1.000000e+00 : f32
    %84 = vector.broadcast %cst_37 : f32 to vector<1x256xf32>
    %85 = arith.subf %29, %84 : vector<1x256xf32>
    %86 = math.absf %85 : vector<1x256xf32>
    %cst_38 = arith.constant 1.000000e+00 : f32
    %87 = vector.broadcast %cst_38 : f32 to vector<1x256xf32>
    %88 = arith.subf %87, %86 : vector<1x256xf32>
    %cst_39 = arith.constant 0.000000e+00 : f32
    %89 = vector.broadcast %cst_39 : f32 to vector<1x256xf32>
    %90 = arith.maximumf %88, %89 : vector<1x256xf32>
    %91 = arith.mulf %42, %74 : vector<1x256xf32>
    %92 = arith.mulf %91, %90 : vector<1x256xf32>
    %cst_40 = arith.constant 1.000000e+00 : f32
    %93 = vector.broadcast %cst_40 : f32 to vector<1x256xf32>
    %94 = arith.subf %35, %93 : vector<1x256xf32>
    %95 = math.absf %94 : vector<1x256xf32>
    %cst_41 = arith.constant 1.000000e+00 : f32
    %96 = vector.broadcast %cst_41 : f32 to vector<1x256xf32>
    %97 = arith.subf %96, %95 : vector<1x256xf32>
    %cst_42 = arith.constant 0.000000e+00 : f32
    %98 = vector.broadcast %cst_42 : f32 to vector<1x256xf32>
    %99 = arith.maximumf %97, %98 : vector<1x256xf32>
    %cst_43 = arith.constant 0.000000e+00 : f32
    %100 = vector.broadcast %cst_43 : f32 to vector<1x256xf32>
    %101 = arith.subf %31, %100 : vector<1x256xf32>
    %102 = math.absf %101 : vector<1x256xf32>
    %cst_44 = arith.constant 1.000000e+00 : f32
    %103 = vector.broadcast %cst_44 : f32 to vector<1x256xf32>
    %104 = arith.subf %103, %102 : vector<1x256xf32>
    %cst_45 = arith.constant 0.000000e+00 : f32
    %105 = vector.broadcast %cst_45 : f32 to vector<1x256xf32>
    %106 = arith.maximumf %104, %105 : vector<1x256xf32>
    %cst_46 = arith.constant 0.000000e+00 : f32
    %107 = vector.broadcast %cst_46 : f32 to vector<1x256xf32>
    %108 = arith.subf %29, %107 : vector<1x256xf32>
    %109 = math.absf %108 : vector<1x256xf32>
    %cst_47 = arith.constant 1.000000e+00 : f32
    %110 = vector.broadcast %cst_47 : f32 to vector<1x256xf32>
    %111 = arith.subf %110, %109 : vector<1x256xf32>
    %cst_48 = arith.constant 0.000000e+00 : f32
    %112 = vector.broadcast %cst_48 : f32 to vector<1x256xf32>
    %113 = arith.maximumf %111, %112 : vector<1x256xf32>
    %114 = arith.mulf %99, %106 : vector<1x256xf32>
    %115 = arith.mulf %114, %113 : vector<1x256xf32>
    %cst_49 = arith.constant 1.000000e+00 : f32
    %116 = vector.broadcast %cst_49 : f32 to vector<1x256xf32>
    %117 = arith.subf %29, %116 : vector<1x256xf32>
    %118 = math.absf %117 : vector<1x256xf32>
    %cst_50 = arith.constant 1.000000e+00 : f32
    %119 = vector.broadcast %cst_50 : f32 to vector<1x256xf32>
    %120 = arith.subf %119, %118 : vector<1x256xf32>
    %cst_51 = arith.constant 0.000000e+00 : f32
    %121 = vector.broadcast %cst_51 : f32 to vector<1x256xf32>
    %122 = arith.maximumf %120, %121 : vector<1x256xf32>
    %123 = arith.mulf %99, %106 : vector<1x256xf32>
    %124 = arith.mulf %123, %122 : vector<1x256xf32>
    %cst_52 = arith.constant 1.000000e+00 : f32
    %125 = vector.broadcast %cst_52 : f32 to vector<1x256xf32>
    %126 = arith.subf %31, %125 : vector<1x256xf32>
    %127 = math.absf %126 : vector<1x256xf32>
    %cst_53 = arith.constant 1.000000e+00 : f32
    %128 = vector.broadcast %cst_53 : f32 to vector<1x256xf32>
    %129 = arith.subf %128, %127 : vector<1x256xf32>
    %cst_54 = arith.constant 0.000000e+00 : f32
    %130 = vector.broadcast %cst_54 : f32 to vector<1x256xf32>
    %131 = arith.maximumf %129, %130 : vector<1x256xf32>
    %cst_55 = arith.constant 0.000000e+00 : f32
    %132 = vector.broadcast %cst_55 : f32 to vector<1x256xf32>
    %133 = arith.subf %29, %132 : vector<1x256xf32>
    %134 = math.absf %133 : vector<1x256xf32>
    %cst_56 = arith.constant 1.000000e+00 : f32
    %135 = vector.broadcast %cst_56 : f32 to vector<1x256xf32>
    %136 = arith.subf %135, %134 : vector<1x256xf32>
    %cst_57 = arith.constant 0.000000e+00 : f32
    %137 = vector.broadcast %cst_57 : f32 to vector<1x256xf32>
    %138 = arith.maximumf %136, %137 : vector<1x256xf32>
    %139 = arith.mulf %99, %131 : vector<1x256xf32>
    %140 = arith.mulf %139, %138 : vector<1x256xf32>
    %cst_58 = arith.constant 1.000000e+00 : f32
    %141 = vector.broadcast %cst_58 : f32 to vector<1x256xf32>
    %142 = arith.subf %29, %141 : vector<1x256xf32>
    %143 = math.absf %142 : vector<1x256xf32>
    %cst_59 = arith.constant 1.000000e+00 : f32
    %144 = vector.broadcast %cst_59 : f32 to vector<1x256xf32>
    %145 = arith.subf %144, %143 : vector<1x256xf32>
    %cst_60 = arith.constant 0.000000e+00 : f32
    %146 = vector.broadcast %cst_60 : f32 to vector<1x256xf32>
    %147 = arith.maximumf %145, %146 : vector<1x256xf32>
    %148 = arith.mulf %99, %131 : vector<1x256xf32>
    %149 = arith.mulf %148, %147 : vector<1x256xf32>
    %150 = tpu.concatenate %58, %67, %83, %92, %115, %124, %140, %149 in 0 : vector<1x256xf32>, vector<1x256xf32>, vector<1x256xf32>, vector<1x256xf32>, vector<1x256xf32>, vector<1x256xf32>, vector<1x256xf32>, vector<1x256xf32> -> vector<8x256xf32>
    %c0_61 = arith.constant 0 : index
    %c0_62 = arith.constant 0 : index
    %c0_63 = arith.constant 0 : index
    %151 = vector.load %arg3[%c0_61, %c0_62, %c0_63] : memref<1x12x8xf32, #tpu.memory_space<vmem>>, vector<1x12x8xf32>
    %152 = vector.shape_cast %151 : vector<1x12x8xf32> to vector<12x8xf32>
    %cst_64 = arith.constant dense<0.000000e+00> : vector<12x256xf32>
    %153 = tpu.matmul %152, %150, %cst_64 {dimension_numbers = #tpu.dot_dimension_numbers<[1], [0], [0], [1], [0, 0, 1, 1], [], []>} : vector<12x8xf32>, vector<8x256xf32>, vector<12x256xf32> -> vector<12x256xf32>
    %154 = vector.extract_strided_slice %1 {offsets = [0, 0], sizes = [1, 256], strides = [1, 1]} : vector<3x256xf32> to vector<1x256xf32>
    %cst_65 = arith.constant 2.290000e-01 : f32
    %155 = vector.broadcast %cst_65 : f32 to vector<1x256xf32>
    %156 = arith.mulf %154, %155 : vector<1x256xf32>
    %cst_66 = arith.constant 4.850000e-01 : f32
    %157 = vector.broadcast %cst_66 : f32 to vector<1x256xf32>
    %158 = arith.addf %156, %157 : vector<1x256xf32>
    %159 = vector.extract_strided_slice %1 {offsets = [1, 0], sizes = [1, 256], strides = [1, 1]} : vector<3x256xf32> to vector<1x256xf32>
    %cst_67 = arith.constant 2.240000e-01 : f32
    %160 = vector.broadcast %cst_67 : f32 to vector<1x256xf32>
    %161 = arith.mulf %159, %160 : vector<1x256xf32>
    %cst_68 = arith.constant 4.560000e-01 : f32
    %162 = vector.broadcast %cst_68 : f32 to vector<1x256xf32>
    %163 = arith.addf %161, %162 : vector<1x256xf32>
    %164 = vector.extract_strided_slice %1 {offsets = [2, 0], sizes = [1, 256], strides = [1, 1]} : vector<3x256xf32> to vector<1x256xf32>
    %cst_69 = arith.constant 2.250000e-01 : f32
    %165 = vector.broadcast %cst_69 : f32 to vector<1x256xf32>
    %166 = arith.mulf %164, %165 : vector<1x256xf32>
    %cst_70 = arith.constant 4.060000e-01 : f32
    %167 = vector.broadcast %cst_70 : f32 to vector<1x256xf32>
    %168 = arith.addf %166, %167 : vector<1x256xf32>
    %169 = vector.extract_strided_slice %153 {offsets = [0, 0], sizes = [1, 256], strides = [1, 1]} : vector<12x256xf32> to vector<1x256xf32>
    %170 = arith.mulf %169, %158 : vector<1x256xf32>
    %171 = vector.extract_strided_slice %153 {offsets = [1, 0], sizes = [1, 256], strides = [1, 1]} : vector<12x256xf32> to vector<1x256xf32>
    %172 = arith.mulf %171, %163 : vector<1x256xf32>
    %173 = arith.addf %170, %172 : vector<1x256xf32>
    %174 = vector.extract_strided_slice %153 {offsets = [2, 0], sizes = [1, 256], strides = [1, 1]} : vector<12x256xf32> to vector<1x256xf32>
    %175 = arith.mulf %174, %168 : vector<1x256xf32>
    %176 = arith.addf %173, %175 : vector<1x256xf32>
    %177 = vector.extract_strided_slice %153 {offsets = [3, 0], sizes = [1, 256], strides = [1, 1]} : vector<12x256xf32> to vector<1x256xf32>
    %178 = arith.addf %176, %177 : vector<1x256xf32>
    %179 = vector.extract_strided_slice %153 {offsets = [4, 0], sizes = [1, 256], strides = [1, 1]} : vector<12x256xf32> to vector<1x256xf32>
    %180 = arith.mulf %179, %158 : vector<1x256xf32>
    %181 = vector.extract_strided_slice %153 {offsets = [5, 0], sizes = [1, 256], strides = [1, 1]} : vector<12x256xf32> to vector<1x256xf32>
    %182 = arith.mulf %181, %163 : vector<1x256xf32>
    %183 = arith.addf %180, %182 : vector<1x256xf32>
    %184 = vector.extract_strided_slice %153 {offsets = [6, 0], sizes = [1, 256], strides = [1, 1]} : vector<12x256xf32> to vector<1x256xf32>
    %185 = arith.mulf %184, %168 : vector<1x256xf32>
    %186 = arith.addf %183, %185 : vector<1x256xf32>
    %187 = vector.extract_strided_slice %153 {offsets = [7, 0], sizes = [1, 256], strides = [1, 1]} : vector<12x256xf32> to vector<1x256xf32>
    %188 = arith.addf %186, %187 : vector<1x256xf32>
    %189 = vector.extract_strided_slice %153 {offsets = [8, 0], sizes = [1, 256], strides = [1, 1]} : vector<12x256xf32> to vector<1x256xf32>
    %190 = arith.mulf %189, %158 : vector<1x256xf32>
    %191 = vector.extract_strided_slice %153 {offsets = [9, 0], sizes = [1, 256], strides = [1, 1]} : vector<12x256xf32> to vector<1x256xf32>
    %192 = arith.mulf %191, %163 : vector<1x256xf32>
    %193 = arith.addf %190, %192 : vector<1x256xf32>
    %194 = vector.extract_strided_slice %153 {offsets = [10, 0], sizes = [1, 256], strides = [1, 1]} : vector<12x256xf32> to vector<1x256xf32>
    %195 = arith.mulf %194, %168 : vector<1x256xf32>
    %196 = arith.addf %193, %195 : vector<1x256xf32>
    %197 = vector.extract_strided_slice %153 {offsets = [11, 0], sizes = [1, 256], strides = [1, 1]} : vector<12x256xf32> to vector<1x256xf32>
    %198 = arith.addf %196, %197 : vector<1x256xf32>
    %199 = arith.negf %178 : vector<1x256xf32>
    %200 = math.exp %199 : vector<1x256xf32>
    %cst_71 = arith.constant 1.000000e+00 : f32
    %201 = vector.broadcast %cst_71 : f32 to vector<1x256xf32>
    %202 = arith.addf %201, %200 : vector<1x256xf32>
    %203 = arith.divf %201, %202 : vector<1x256xf32>
    %cst_72 = arith.constant -2.11790395 : f32
    %cst_73 = arith.constant 2.24890828 : f32
    %204 = vector.broadcast %cst_72 : f32 to vector<1x256xf32>
    %205 = arith.maximumf %204, %203 : vector<1x256xf32>
    %206 = vector.broadcast %cst_73 : f32 to vector<1x256xf32>
    %207 = arith.minimumf %206, %205 : vector<1x256xf32>
    %208 = arith.negf %188 : vector<1x256xf32>
    %209 = math.exp %208 : vector<1x256xf32>
    %cst_74 = arith.constant 1.000000e+00 : f32
    %210 = vector.broadcast %cst_74 : f32 to vector<1x256xf32>
    %211 = arith.addf %210, %209 : vector<1x256xf32>
    %212 = arith.divf %210, %211 : vector<1x256xf32>
    %cst_75 = arith.constant -2.03571439 : f32
    %cst_76 = arith.constant 2.42857146 : f32
    %213 = vector.broadcast %cst_75 : f32 to vector<1x256xf32>
    %214 = arith.maximumf %213, %212 : vector<1x256xf32>
    %215 = vector.broadcast %cst_76 : f32 to vector<1x256xf32>
    %216 = arith.minimumf %215, %214 : vector<1x256xf32>
    %217 = arith.negf %198 : vector<1x256xf32>
    %218 = math.exp %217 : vector<1x256xf32>
    %cst_77 = arith.constant 1.000000e+00 : f32
    %219 = vector.broadcast %cst_77 : f32 to vector<1x256xf32>
    %220 = arith.addf %219, %218 : vector<1x256xf32>
    %221 = arith.divf %219, %220 : vector<1x256xf32>
    %cst_78 = arith.constant -1.80444443 : f32
    %cst_79 = arith.constant 2.640000e+00 : f32
    %222 = vector.broadcast %cst_78 : f32 to vector<1x256xf32>
    %223 = arith.maximumf %222, %221 : vector<1x256xf32>
    %224 = vector.broadcast %cst_79 : f32 to vector<1x256xf32>
    %225 = arith.minimumf %224, %223 : vector<1x256xf32>
    %226 = tpu.concatenate %207, %216, %225 in 0 : vector<1x256xf32>, vector<1x256xf32>, vector<1x256xf32> -> vector<3x256xf32>
    %c0_80 = arith.constant 0 : index
    %c0_81 = arith.constant 0 : index
    %c0_82 = arith.constant 0 : index
    %227 = vector.load %arg8[%c0_80, %c0_81, %c0_82] : memref<1x3x256xf32, #tpu.memory_space<vmem>>, vector<1x3x256xf32>
    %228 = vector.shape_cast %227 : vector<1x3x256xf32> to vector<3x256xf32>
    %229 = vector.shape_cast %226 : vector<3x256xf32> to vector<1x3x256xf32>
    tpu.vector_store %arg8[%c0_80, %c0_81, %c0_82], %229 {strides = array<i32>} : memref<1x3x256xf32, #tpu.memory_space<vmem>>, vector<1x3x256xf32>,
    return
  }
  func.func @transform_0(%arg0: i32, %arg1: i32) -> (i32, i32, i32) {
    %c0_i32 = arith.constant 0 : i32
    %c0_i32_0 = arith.constant 0 : i32
    return %arg0, %c0_i32, %arg1 : i32, i32, i32
  }
  func.func @transform_1(%arg0: i32, %arg1: i32) -> (i32, i32, i32) {
    %c0_i32 = arith.constant 0 : i32
    %c0_i32_0 = arith.constant 0 : i32
    %c0_i32_1 = arith.constant 0 : i32
    return %arg0, %c0_i32, %c0_i32_0 : i32, i32, i32
  }
  func.func @transform_2(%arg0: i32, %arg1: i32) -> (i32, i32) {
    %c0_i32 = arith.constant 0 : i32
    %c0_i32_0 = arith.constant 0 : i32
    %c0_i32_1 = arith.constant 0 : i32
    return %c0_i32, %c0_i32_0 : i32, i32
  }
  func.func @transform_3(%arg0: i32, %arg1: i32) -> (i32, i32) {
    %c0_i32 = arith.constant 0 : i32
    %c0_i32_0 = arith.constant 0 : i32
    %c0_i32_1 = arith.constant 0 : i32
    return %c0_i32, %c0_i32_0 : i32, i32
  }
  func.func @transform_4(%arg0: i32, %arg1: i32) -> (i32, i32) {
    %c0_i32 = arith.constant 0 : i32
    %c0_i32_0 = arith.constant 0 : i32
    %c0_i32_1 = arith.constant 0 : i32
    return %c0_i32, %c0_i32_0 : i32, i32
  }
  func.func @transform_5(%arg0: i32, %arg1: i32) -> (i32, i32) {
    %c0_i32 = arith.constant 0 : i32
    %c0_i32_0 = arith.constant 0 : i32
    %c0_i32_1 = arith.constant 0 : i32
    return %c0_i32, %c0_i32_0 : i32, i32
  }
  func.func @transform_6(%arg0: i32, %arg1: i32) -> (i32, i32, i32) {
    %c0_i32 = arith.constant 0 : i32
    %c0_i32_0 = arith.constant 0 : i32
    return %arg0, %c0_i32, %arg1 : i32, i32, i32
  }
  func.func @transform_7(%arg0: i32, %arg1: i32) -> (i32, i32, i32) {
    %c0_i32 = arith.constant 0 : i32
    %c0_i32_0 = arith.constant 0 : i32
    return %arg0, %c0_i32, %arg1 : i32, i32, i32
  }
}

</mosaic_0001>

<llo_original>
// kernel: hdr_forward.3
$region0: #{hdr_forward.3}
  #allocation0 [shape = 'u32[]', space=smem, size = 0x4, offset = 0x4, fixed_abs, tag = 'smem constant byte address 0x4 - core index']
  #allocation1 [shape = 'u32[144,128]{1,0:T(1,128)}', space=vmem, size = 0x12000, scoped, tag = 'internal scratch']
  #allocation2 [shape = 'f32[1,1]{1,0:T(1,128)S(1)}', space=vmem, size = 0x200, scoped, tag = 'scoped memory for hdr_forward.3']
  %s0 = inlined_call_operand.vmem [shape: f32[2,3,256], index: 0, kind: input, shape index: {}]
  %s1 = inlined_call_operand.vmem [shape: f32[2,12,8], index: 1, kind: input, shape index: {}]
  %s2 = inlined_call_operand.vmem [shape: f32[16,3], index: 2, kind: input, shape index: {}]
  %s3 = inlined_call_operand.vmem [shape: f32[16,1], index: 3, kind: input, shape index: {}]
  %s4 = inlined_call_operand.vmem [shape: f32[1,16], index: 4, kind: input, shape index: {}]
  %s5 = inlined_call_operand.<no memory space> [shape: f32[1,1], index: 5, kind: input, shape index: {}]
  %s6 = inlined_call_operand.vmem [shape: f32[2,3,256], index: 6, kind: output, shape index: {0}]
  %s7 = inlined_call_operand.vmem [shape: f32[2,1,256], index: 7, kind: output, shape index: {1}]
  %8 = xla_tuple %s6, %s7
  %s9 = sld [smem:[#allocation0]]
  $region65: #{hdr_forward.3} parent=0
    _
  %s11 = ssub.s32 1, %s9
  %s12 = scalar_select 0, %s11, %s9
  %v13 = vstv %s5
  %14 = vst [vmem:[#allocation2] sm:$0x1] %v13
  loop: start=0, step=1, limit=4
  $region2: #{hdr_forward.3} parent=0 // loop_pre_header
    _
  $region3: #{hdr_forward.3} parent=0 // loop_header
    %s16 = sphi 0, %s20
    %p17 = scmp.ge.s32.totalorder %s16, 4
    %s23 = sphi 0, %s35
    %s24 = sphi 0, %s31
    %s25 = sphi 0, %s23
    %s26 = sphi 0, %s24
    %s27 = sphi 0, %s25
    %s28 = sphi 0, %s26
    %s40 = sphi 0, %s42
    %s43 = sphi 0, %s40
    %s44 = sphi 0, %s43
    %s60 = sphi 0, %s44
    %s66 = sphi 0, %s68
    %s69 = sphi 0, %s66
    %s70 = sphi 0, %s69
    %s86 = sphi 0, %s70
    %s90 = sphi 0, %s90
    %s92 = sphi 0, %s90
    %s93 = sphi 0, %s92
    %s107 = sphi 0, %s93
    %s111 = sphi 0, %s111
    %s113 = sphi 0, %s111
    %s114 = sphi 0, %s113
    %s128 = sphi 0, %s114
    %s132 = sphi 0, %s132
    %s134 = sphi 0, %s132
    %s135 = sphi 0, %s134
    %s149 = sphi 0, %s135
    %s153 = sphi 0, %s153
    %s155 = sphi 0, %s153
    %s156 = sphi 0, %s155
    %s170 = sphi 0, %s156
    %s178 = sphi 0, %s180
    %s181 = sphi 0, %s178
    %s182 = sphi 0, %s181
    %s198 = sphi 0, %s182
    %s206 = sphi 0, %s208
    %s209 = sphi 0, %s206
    %s210 = sphi 0, %s209
    %s226 = sphi 0, %s210
  $region4: #{hdr_forward.3} parent=0 // loop_header_branch
    %19 = sbr.rel (%p17) target = $region8
  $region5: #{hdr_forward.3} parent=0 // loop_body
    %s21 = ssub.s32 %s16, 1
    %s22 = ssub.s32 %s16, 2
    %s29 = sadd.s32 1, %s24
    %p30 = scmp.ge.s32.totalorder %s29, 1
    %s31 = scalar_select %p30, 0, %s29
    %s32 = sadd.s32 1, %s23
    %s33 = scalar_select %p30, %s32, %s23
    %p34 = scmp.ge.s32.totalorder %s33, 2
    %s35 = scalar_select %p34, 0, %s33
    %s36 = ssub.s32 %s23, %s35
    %s37 = ssub.s32 %s24, %s31
    %s38 = sor.u32 %s36, %s37
    %p39 = scmp.eq.s32.totalorder %s38, 0
    %s41 = sadd.s32 %s40, 1
    %s42 = scalar_select %p39, %s40, %s41
    %p45 = pneg %p39
    %p46 = scmp.eq.s32.totalorder %s16, 1
    %p47 = por %p45, %p46
    %p48 = scmp.ne.s32.totalorder %s40, %s43
    %p49 = scmp.eq.s32.totalorder %s16, 0
    %p50 = por %p48, %p49
    %p51 = scmp.ne.s32.totalorder %s40, %s43
    %p52 = scmp.eq.s32.totalorder %s21, 1
    %p53 = por %p51, %p52
    %p54 = scmp.ne.s32.totalorder %s43, %s44
    %p55 = scmp.eq.s32.totalorder %s21, 0
    %p56 = por %p54, %p55
    %p57 = scmp.ne.s32.totalorder %s43, %s44
    %p58 = scmp.eq.s32.totalorder %s22, 1
    %p59 = por %p57, %p58
    %p61 = scmp.ne.s32.totalorder %s44, %s60
    %p62 = scmp.eq.s32.totalorder %s22, 0
    %p63 = por %p61, %p62
    %s64 = ssub.s32 %s23, %s35
    %p65 = scmp.eq.s32.totalorder %s64, 0
    %s67 = sadd.s32 %s66, 1
    %s68 = scalar_select %p65, %s66, %s67
    %p71 = pneg %p65
    %p72 = scmp.eq.s32.totalorder %s16, 1
    %p73 = por %p71, %p72
    %p74 = scmp.ne.s32.totalorder %s66, %s69
    %p75 = scmp.eq.s32.totalorder %s16, 0
    %p76 = por %p74, %p75
    %p77 = scmp.ne.s32.totalorder %s66, %s69
    %p78 = scmp.eq.s32.totalorder %s21, 1
    %p79 = por %p77, %p78
    %p80 = scmp.ne.s32.totalorder %s69, %s70
    %p81 = scmp.eq.s32.totalorder %s21, 0
    %p82 = por %p80, %p81
    %p83 = scmp.ne.s32.totalorder %s69, %s70
    %p84 = scmp.eq.s32.totalorder %s22, 1
    %p85 = por %p83, %p84
    %p87 = scmp.ne.s32.totalorder %s70, %s86
    %p88 = scmp.eq.s32.totalorder %s22, 0
    %p89 = por %p87, %p88
    %s91 = sadd.s32 %s90, 1
    %p94 = scmp.eq.s32.totalorder %s16, 1
    %p95 = scmp.ne.s32.totalorder %s90, %s92
    %p96 = scmp.eq.s32.totalorder %s16, 0
    %p97 = por %p95, %p96
    %p98 = scmp.ne.s32.totalorder %s90, %s92
    %p99 = scmp.eq.s32.totalorder %s21, 1
    %p100 = por %p98, %p99
    %p101 = scmp.ne.s32.totalorder %s92, %s93
    %p102 = scmp.eq.s32.totalorder %s21, 0
    %p103 = por %p101, %p102
    %p104 = scmp.ne.s32.totalorder %s92, %s93
    %p105 = scmp.eq.s32.totalorder %s22, 1
    %p106 = por %p104, %p105
    %p108 = scmp.ne.s32.totalorder %s93, %s107
    %p109 = scmp.eq.s32.totalorder %s22, 0
    %p110 = por %p108, %p109
    %s112 = sadd.s32 %s111, 1
    %p115 = scmp.eq.s32.totalorder %s16, 1
    %p116 = scmp.ne.s32.totalorder %s111, %s113
    %p117 = scmp.eq.s32.totalorder %s16, 0
    %p118 = por %p116, %p117
    %p119 = scmp.ne.s32.totalorder %s111, %s113
    %p120 = scmp.eq.s32.totalorder %s21, 1
    %p121 = por %p119, %p120
    %p122 = scmp.ne.s32.totalorder %s113, %s114
    %p123 = scmp.eq.s32.totalorder %s21, 0
    %p124 = por %p122, %p123
    %p125 = scmp.ne.s32.totalorder %s113, %s114
    %p126 = scmp.eq.s32.totalorder %s22, 1
    %p127 = por %p125, %p126
    %p129 = scmp.ne.s32.totalorder %s114, %s128
    %p130 = scmp.eq.s32.totalorder %s22, 0
    %p131 = por %p129, %p130
    %s133 = sadd.s32 %s132, 1
    %p136 = scmp.eq.s32.totalorder %s16, 1
    %p137 = scmp.ne.s32.totalorder %s132, %s134
    %p138 = scmp.eq.s32.totalorder %s16, 0
    %p139 = por %p137, %p138
    %p140 = scmp.ne.s32.totalorder %s132, %s134
    %p141 = scmp.eq.s32.totalorder %s21, 1
    %p142 = por %p140, %p141
    %p143 = scmp.ne.s32.totalorder %s134, %s135
    %p144 = scmp.eq.s32.totalorder %s21, 0
    %p145 = por %p143, %p144
    %p146 = scmp.ne.s32.totalorder %s134, %s135
    %p147 = scmp.eq.s32.totalorder %s22, 1
    %p148 = por %p146, %p147
    %p150 = scmp.ne.s32.totalorder %s135, %s149
    %p151 = scmp.eq.s32.totalorder %s22, 0
    %p152 = por %p150, %p151
    %s154 = sadd.s32 %s153, 1
    %p157 = scmp.eq.s32.totalorder %s16, 1
    %p158 = scmp.ne.s32.totalorder %s153, %s155
    %p159 = scmp.eq.s32.totalorder %s16, 0
    %p160 = por %p158, %p159
    %p161 = scmp.ne.s32.totalorder %s153, %s155
    %p162 = scmp.eq.s32.totalorder %s21, 1
    %p163 = por %p161, %p162
    %p164 = scmp.ne.s32.totalorder %s155, %s156
    %p165 = scmp.eq.s32.totalorder %s21, 0
    %p166 = por %p164, %p165
    %p167 = scmp.ne.s32.totalorder %s155, %s156
    %p168 = scmp.eq.s32.totalorder %s22, 1
    %p169 = por %p167, %p168
    %p171 = scmp.ne.s32.totalorder %s156, %s170
    %p172 = scmp.eq.s32.totalorder %s22, 0
    %p173 = por %p171, %p172
    %s174 = ssub.s32 %s23, %s35
    %s175 = ssub.s32 %s24, %s31
    %s176 = sor.u32 %s174, %s175
    %p177 = scmp.eq.s32.totalorder %s176, 0
    %s179 = sadd.s32 %s178, 1
    %s180 = scalar_select %p177, %s178, %s179
    %p183 = pneg %p177
    %p184 = scmp.eq.s32.totalorder %s16, 1
    %p185 = por %p183, %p184
    %p186 = scmp.ne.s32.totalorder %s178, %s181
    %p187 = scmp.eq.s32.totalorder %s16, 0
    %p188 = por %p186, %p187
    %p189 = scmp.ne.s32.totalorder %s178, %s181
    %p190 = scmp.eq.s32.totalorder %s21, 1
    %p191 = por %p189, %p190
    %p192 = scmp.ne.s32.totalorder %s181, %s182
    %p193 = scmp.eq.s32.totalorder %s21, 0
    %p194 = por %p192, %p193
    %p195 = scmp.ne.s32.totalorder %s181, %s182
    %p196 = scmp.eq.s32.totalorder %s22, 1
    %p197 = por %p195, %p196
    %p199 = scmp.ne.s32.totalorder %s182, %s198
    %p200 = scmp.eq.s32.totalorder %s22, 0
    %p201 = por %p199, %p200
    %s202 = ssub.s32 %s23, %s35
    %s203 = ssub.s32 %s24, %s31
    %s204 = sor.u32 %s202, %s203
    %p205 = scmp.eq.s32.totalorder %s204, 0
    %s207 = sadd.s32 %s206, 1
    %s208 = scalar_select %p205, %s206, %s207
    %p211 = pneg %p205
    %p212 = scmp.eq.s32.totalorder %s16, 1
    %p213 = por %p211, %p212
    %p214 = scmp.ne.s32.totalorder %s206, %s209
    %p215 = scmp.eq.s32.totalorder %s16, 0
    %p216 = por %p214, %p215
    %p217 = scmp.ne.s32.totalorder %s206, %s209
    %p218 = scmp.eq.s32.totalorder %s21, 1
    %p219 = por %p217, %p218
    %p220 = scmp.ne.s32.totalorder %s209, %s210
    %p221 = scmp.eq.s32.totalorder %s21, 0
    %p222 = por %p220, %p221
    %p223 = scmp.ne.s32.totalorder %s209, %s210
    %p224 = scmp.eq.s32.totalorder %s22, 1
    %p225 = por %p223, %p224
    %p227 = scmp.ne.s32.totalorder %s210, %s226
    %p228 = scmp.eq.s32.totalorder %s22, 0
    %p229 = por %p227, %p228
    %p230 = scmp.le.s32.totalorder 1, %s16
    %p231 = scmp.lt.s32.totalorder %s16, 3
    %p232 = pnand %p230, %p231
    %p233 = pneg %p232
    // Predicated region
    $region9: #{hdr_forward.3} parent=5 // pred_check
      _
    $region10: #{hdr_forward.3} parent=5 // pred_check_branch
      %235 = sbr.rel (%p232) target = $region12
    $region11: #{hdr_forward.3} parent=5 // pred_region
      %s236 = ssub.s32 %s16, 1
      // Predicated region
      $region13: #{hdr_forward.3} parent=11 // pred_check
        %p237 = pneg %p103
      $region14: #{hdr_forward.3} parent=11 // pred_check_branch
        %239 = sbr.rel (%p237) target = $region16
      $region15: #{hdr_forward.3} parent=11 // pred_region
        _
      $region16: #{hdr_forward.3} parent=11 // pred_fallthru
        _
      // Predicated region
      $region17: #{hdr_forward.3} parent=11 // pred_check
        %p240 = pneg %p124
      $region18: #{hdr_forward.3} parent=11 // pred_check_branch
        %242 = sbr.rel (%p240) target = $region20
      $region19: #{hdr_forward.3} parent=11 // pred_region
        _
      $region20: #{hdr_forward.3} parent=11 // pred_fallthru
        _
      // Predicated region
      $region21: #{hdr_forward.3} parent=11 // pred_check
        %p243 = pneg %p145
      $region22: #{hdr_forward.3} parent=11 // pred_check_branch
        %245 = sbr.rel (%p243) target = $region24
      $region23: #{hdr_forward.3} parent=11 // pred_region
        _
      $region24: #{hdr_forward.3} parent=11 // pred_fallthru
        _
      // Predicated region
      $region25: #{hdr_forward.3} parent=11 // pred_check
        %p246 = pneg %p166
      $region26: #{hdr_forward.3} parent=11 // pred_check_branch
        %248 = sbr.rel (%p246) target = $region28
      $region27: #{hdr_forward.3} parent=11 // pred_region
        _
      $region28: #{hdr_forward.3} parent=11 // pred_fallthru
        _
    $region12: #{hdr_forward.3} parent=5 // pred_fallthru
      _
    %p249 = scmp.lt.s32.totalorder %s16, 2
    // Predicated region
    $region29: #{hdr_forward.3} parent=5 // pred_check
      %p250 = pneg %p249
    $region30: #{hdr_forward.3} parent=5 // pred_check_branch
      %252 = sbr.rel (%p250) target = $region32
    $region31: #{hdr_forward.3} parent=5 // pred_region
      // Predicated region
      $region33: #{hdr_forward.3} parent=31 // pred_check
        %p253 = pneg %p50
      $region34: #{hdr_forward.3} parent=31 // pred_check_branch
        %255 = sbr.rel (%p253) target = $region36
      $region35: #{hdr_forward.3} parent=31 // pred_region
        %s256 = smul.u32 2, %s24
        %p257 = scmp.lt.s32.totalorder %s23, 1
        %s258 = scalar_select %p257, %s23, 1
        %p259 = scmp.lt.s32.totalorder %s256, 1
        %s260 = scalar_select %p259, %s256, 1
        %s261 = smul.addr %s258, 2
        %s262 = sadd.s32 %s260, %s261
        %s263 = smul.addr %s262, 4
        %s264 = scalar_lea.vmem %s0, %s263
        %s265 = smul.u32 2, %s24
      $region36: #{hdr_forward.3} parent=31 // pred_fallthru
        _
      // Predicated region
      $region37: #{hdr_forward.3} parent=31 // pred_check
        %p266 = pneg %p76
      $region38: #{hdr_forward.3} parent=31 // pred_check_branch
        %268 = sbr.rel (%p266) target = $region40
      $region39: #{hdr_forward.3} parent=31 // pred_region
        %p269 = scmp.lt.s32.totalorder %s23, 1
        %s270 = scalar_select %p269, %s23, 1
        %s271 = smul.addr %s270, 2
        %s272 = smul.addr %s271, 8
        %s273 = scalar_lea.vmem %s1, %s272
      $region40: #{hdr_forward.3} parent=31 // pred_fallthru
        _
    $region32: #{hdr_forward.3} parent=5 // pred_fallthru
      _
    %p274 = scmp.le.s32.totalorder 1, %s16
    %p275 = scmp.lt.s32.totalorder %s16, 3
    %p276 = pnand %p274, %p275
    %p277 = pneg %p276
    // Predicated region
    $region41: #{hdr_forward.3} parent=5 // pred_check
      _
    $region42: #{hdr_forward.3} parent=5 // pred_check_branch
      %279 = sbr.rel (%p276) target = $region44
    $region43: #{hdr_forward.3} parent=5 // pred_region
      %s280 = ssub.s32 %s16, 1
      %s281 = smul.u32 2, %s26
      %p282 = scmp.lt.s32.totalorder %s25, 1
      %s283 = scalar_select %p282, %s25, 1
      %p284 = scmp.lt.s32.totalorder %s281, 1
      %s285 = scalar_select %p284, %s281, 1
      %s286 = smul.addr %s283, 2
      %s287 = sadd.s32 %s285, %s286
      %s288 = smul.addr %s287, 4
      %s289 = scalar_lea.vmem %s0, %s288
      %p290 = pneg %p56
      %p291 = pneg %p53
      %p292 = scmp.lt.s32.totalorder %s25, 1
      %s293 = scalar_select %p292, %s25, 1
      %s294 = smul.addr %s293, 2
      %s295 = smul.addr %s294, 8
      %s296 = scalar_lea.vmem %s1, %s295
      %p297 = pneg %p82
      %p298 = pneg %p79
      %p299 = pneg %p103
      %p300 = pneg %p100
      %p301 = pneg %p124
      %p302 = pneg %p121
      %p303 = pneg %p145
      %p304 = pneg %p142
      %p305 = pneg %p166
      %p306 = pneg %p163
      %p307 = pneg %p194
      %p308 = pneg %p191
      %s309 = smul.u32 2, %s26
      %p310 = scmp.lt.s32.totalorder %s25, 1
      %s311 = scalar_select %p310, %s25, 1
      %p312 = scmp.lt.s32.totalorder %s309, 1
      %s313 = scalar_select %p312, %s309, 1
      %s314 = smul.addr %s311, 2
      %s315 = sadd.s32 %s313, %s314
      %s316 = smul.addr %s315, 4
      %s317 = scalar_lea.vmem %s6, %s316
      %p318 = pneg %p222
      %p319 = pneg %p219
      %s320 = smul.u32 2, %s26
      %p321 = scmp.lt.s32.totalorder %s25, 1
      %s322 = scalar_select %p321, %s25, 1
      %p323 = scmp.lt.s32.totalorder %s320, 1
      %s324 = scalar_select %p323, %s320, 1
      %s325 = smul.addr %s322, 2
      %s326 = sadd.s32 %s324, %s325
      %s327 = scalar_lea.vmem %s7, %s326
      %s328 = smul.u32 2, %s26
      %p329 = scmp.lt.s32.totalorder %s25, 1
      %s330 = scalar_select %p329, %s25, 1
      %p331 = scmp.lt.s32.totalorder %s328, 1
      %s332 = scalar_select %p331, %s328, 1
      %s333 = smul.addr %s330, 2
      %s334 = sadd.s32 %s332, %s333
      %s335 = smul.addr %s334, 4
      %s336 = scalar_lea.vmem %s0, %s335
      %s337 = smul.u32 2, %s26
      %p338 = scmp.lt.s32.totalorder %s25, 1
      %s339 = scalar_select %p338, %s25, 1
      %s340 = smul.addr %s339, 2
      %s341 = smul.addr %s340, 8
      %s342 = scalar_lea.vmem %s1, %s341
      %s343 = smul.u32 2, %s26
      %p344 = scmp.lt.s32.totalorder %s25, 1
      %s345 = scalar_select %p344, %s25, 1
      %p346 = scmp.lt.s32.totalorder %s343, 1
      %s347 = scalar_select %p346, %s343, 1
      %s348 = smul.addr %s345, 2
      %s349 = sadd.s32 %s347, %s348
      %s350 = smul.addr %s349, 4
      %s351 = scalar_lea.vmem %s6, %s350
      %s352 = smul.u32 2, %s26
      %s353 = smul.u32 2, %s26
      %p354 = scmp.lt.s32.totalorder %s25, 1
      %s355 = scalar_select %p354, %s25, 1
      %p356 = scmp.lt.s32.totalorder %s353, 1
      %s357 = scalar_select %p356, %s353, 1
      %s358 = smul.addr %s355, 2
      %s359 = sadd.s32 %s357, %s358
      %s360 = scalar_lea.vmem %s7, %s359
      %s361 = smul.u32 2, %s26
      %v362 = vld [vmem:[%s336] sm:$0x77]
      %v363 = vld [vmem:[%s2] sm:$0xff]
      %v364 = vld [vmem:[%s2 + $0x8] sm:$0xff]
      %v365 = vld [vmem:[%s3] sm:$0xff]
      %v366 = vld [vmem:[%s3 + $0x8] sm:$0xff]
      %368 = vset.pattern.permute.xlu0 0
      %369 = vperm.xlu0 %368, %v365
      %v370 = vpop.permute.xlu0 %369
      %373 = vset.pattern.permute.xlu0 0
      %374 = vperm.xlu0 %373, %v366
      %v375 = vpop.permute.xlu0 %374
      %v378 = vcombine.high %v362, %v362
      %vm379 = vcmask 23552
      %v381 = vsel %vm379, %v363, 0
      %v384 = vsel %vm379, %v364, 0
      %vm386 = vcmask 1042432
      %v387 = vsel %vm386, %v362, 0
      %v389 = vsel %vm386, %v378, 0
      %391 = vmatprep.subr.mxu0 0.0
      %392 = vmatpush1.msra.mxu0 0.0
      %393 = vmatprep.subr.mxu0 0.0
      %394 = vmatpush1.msra.mxu0 0.0
      %395 = vmatprep.subr.mxu0 0.0
      %396 = vmatpush1.msra.mxu0 0.0
      %397 = vmatprep.subr.mxu0 0.0
      %398 = vmatpush1.msra.mxu0 0.0
      %399 = vmatprep.subr.mxu0 0.0
      %400 = vmatpush1.msra.mxu0 0.0
      %401 = vmatprep.subr.mxu0 0.0
      %402 = vmatpush1.msra.mxu0 0.0
      %403 = vmatprep.subr.mxu0 0.0
      %404 = vmatpush1.msra.mxu0 0.0
      %405 = vmatprep.subr.mxu0 0.0
      %406 = vmatpush1.msra.mxu0 0.0
      %407 = vmatprep.subr.mxu0 0.0
      %408 = vmatpush1.msra.mxu0 0.0
      %409 = vmatprep.subr.mxu0 0.0
      %410 = vmatpush1.msra.mxu0 0.0
      %411 = vmatprep.subr.mxu0 0.0
      %412 = vmatpush1.msra.mxu0 0.0
      %413 = vmatprep.subr.mxu0 0.0
      %414 = vmatpush1.msra.mxu0 0.0
      %415 = vmatprep.subr.mxu0 0.0
      %416 = vmatpush1.msra.mxu0 0.0
      %417 = vmatprep.subr.mxu0 0.0
      %418 = vmatpush1.msra.mxu0 0.0
      %419 = vmatprep.subr.mxu0 0.0
      %420 = vmatpush1.msra.mxu0 0.0
      %421 = vmatprep.subr.mxu0 %v389
      %422 = vmatpush1.msra.mxu0 %v387
      %423 = vmatprep.subr.mxu0 0.0
      %424 = vmatpush2.msra.mxu0 0.0
      %425 = vmatprep.subr.mxu0 0.0
      %426 = vmatpush2.msra.mxu0 0.0
      %427 = vmatprep.subr.mxu0 0.0
      %428 = vmatpush2.msra.mxu0 0.0
      %429 = vmatprep.subr.mxu0 0.0
      %430 = vmatpush2.msra.mxu0 0.0
      %431 = vmatprep.subr.mxu0 0.0
      %432 = vmatpush2.msra.mxu0 0.0
      %433 = vmatprep.subr.mxu0 0.0
      %434 = vmatpush2.msra.mxu0 0.0
      %435 = vmatprep.subr.mxu0 0.0
      %436 = vmatpush2.msra.mxu0 0.0
      %437 = vmatprep.subr.mxu0 0.0
      %438 = vmatpush2.msra.mxu0 0.0
      %439 = vmatprep.subr.mxu0 0.0
      %440 = vmatpush2.msra.mxu0 0.0
      %441 = vmatprep.subr.mxu0 0.0
      %442 = vmatpush2.msra.mxu0 0.0
      %443 = vmatprep.subr.mxu0 0.0
      %444 = vmatpush2.msra.mxu0 0.0
      %445 = vmatprep.subr.mxu0 0.0
      %446 = vmatpush2.msra.mxu0 0.0
      %447 = vmatprep.subr.mxu0 0.0
      %448 = vmatpush2.msra.mxu0 0.0
      %449 = vmatprep.subr.mxu0 0.0
      %450 = vmatpush2.msra.mxu0 0.0
      %451 = vmatprep.subr.mxu0 0.0
      %452 = vmatpush2.msra.mxu0 0.0
      %453 = vmatprep.subr.mxu0 0.0
      %454 = vmatpush2.msra.mxu0 0.0
      %455 = vmatprep.mubr.f32.mxu0 0.0
      %456 = vmatmul.mubr.f32.gmra.mxu0 %v381
      %v457 = vpop.f32.mrf.mxu0
      %v458 = vadd.f32 %v370, %v457
      %v459 = vpop.f32.mrf.mxu0
      %v460 = vadd.f32 %v370, %v459
      %461 = vmatprep.mubr.f32.mxu0 0.0
      %462 = vmatmul.mubr.f32.gmra.mxu0 %v384
      %v463 = vpop.f32.mrf.mxu0
      %v464 = vadd.f32 %v375, %v463
      %v465 = vpop.f32.mrf.mxu0
      %v466 = vadd.f32 %v375, %v465
      %467 = vdwg.mxu0
      %v468 = vmax.f32 %v458, 0.0
      %v469 = vmax.f32 %v460, 0.0
      %v470 = vmax.f32 %v464, 0.0
      %v471 = vmax.f32 %v466, 0.0
      %v472 = vld [vmem:[%s4] sm:$0x1]
      %v473 = vld [vmem:[#allocation2] sm:$0x1]
      %475 = vset.pattern.permute.xlu0 0
      %476 = vperm.xlu0 %475, %v473
      %v477 = vpop.permute.xlu0 %476
      %v479 = vlaneseq
      %v480 = vshrl.u32 %v479, 7
      %v481 = vsub.s32 0, %v480
      %v482 = vrot.slane %v477, %v481
      %vm483 = vcmask 130048
      %v485 = vsel %vm483, %v472, 0
      %487 = vmatprep.subr.mxu0 0.0
      %488 = vmatpush1.msra.mxu0 0.0
      %489 = vmatprep.subr.mxu0 0.0
      %490 = vmatpush1.msra.mxu0 0.0
      %491 = vmatprep.subr.mxu0 0.0
      %492 = vmatpush1.msra.mxu0 0.0
      %493 = vmatprep.subr.mxu0 0.0
      %494 = vmatpush1.msra.mxu0 0.0
      %495 = vmatprep.subr.mxu0 0.0
      %496 = vmatpush1.msra.mxu0 0.0
      %497 = vmatprep.subr.mxu0 0.0
      %498 = vmatpush1.msra.mxu0 0.0
      %499 = vmatprep.subr.mxu0 0.0
      %500 = vmatpush1.msra.mxu0 0.0
      %501 = vmatprep.subr.mxu0 0.0
      %502 = vmatpush1.msra.mxu0 0.0
      %503 = vmatprep.subr.mxu0 0.0
      %504 = vmatpush1.msra.mxu0 0.0
      %505 = vmatprep.subr.mxu0 0.0
      %506 = vmatpush1.msra.mxu0 0.0
      %507 = vmatprep.subr.mxu0 0.0
      %508 = vmatpush1.msra.mxu0 0.0
      %509 = vmatprep.subr.mxu0 0.0
      %510 = vmatpush1.msra.mxu0 0.0
      %511 = vmatprep.subr.mxu0 0.0
      %512 = vmatpush1.msra.mxu0 0.0
      %513 = vmatprep.subr.mxu0 0.0
      %514 = vmatpush1.msra.mxu0 0.0
      %515 = vmatprep.subr.mxu0 %v471
      %516 = vmatpush1.msra.mxu0 %v470
      %517 = vmatprep.subr.mxu0 %v469
      %518 = vmatpush1.msra.mxu0 %v468
      %519 = vmatprep.subr.mxu0 0.0
      %520 = vmatpush2.msra.mxu0 0.0
      %521 = vmatprep.subr.mxu0 0.0
      %522 = vmatpush2.msra.mxu0 0.0
      %523 = vmatprep.subr.mxu0 0.0
      %524 = vmatpush2.msra.mxu0 0.0
      %525 = vmatprep.subr.mxu0 0.0
      %526 = vmatpush2.msra.mxu0 0.0
      %527 = vmatprep.subr.mxu0 0.0
      %528 = vmatpush2.msra.mxu0 0.0
      %529 = vmatprep.subr.mxu0 0.0
      %530 = vmatpush2.msra.mxu0 0.0
      %531 = vmatprep.subr.mxu0 0.0
      %532 = vmatpush2.msra.mxu0 0.0
      %533 = vmatprep.subr.mxu0 0.0
      %534 = vmatpush2.msra.mxu0 0.0
      %535 = vmatprep.subr.mxu0 0.0
      %536 = vmatpush2.msra.mxu0 0.0
      %537 = vmatprep.subr.mxu0 0.0
      %538 = vmatpush2.msra.mxu0 0.0
      %539 = vmatprep.subr.mxu0 0.0
      %540 = vmatpush2.msra.mxu0 0.0
      %541 = vmatprep.subr.mxu0 0.0
      %542 = vmatpush2.msra.mxu0 0.0
      %543 = vmatprep.subr.mxu0 0.0
      %544 = vmatpush2.msra.mxu0 0.0
      %545 = vmatprep.subr.mxu0 0.0
      %546 = vmatpush2.msra.mxu0 0.0
      %547 = vmatprep.subr.mxu0 0.0
      %548 = vmatpush2.msra.mxu0 0.0
      %549 = vmatprep.subr.mxu0 0.0
      %550 = vmatpush2.msra.mxu0 0.0
      %551 = vmatprep.mubr.f32.mxu0 0.0
      %552 = vmatmul.mubr.f32.gmra.mxu0 %v485
      %v553 = vpop.f32.mrf.mxu0
      %v554 = vadd.f32 %v482, %v553
      %v555 = vpop.f32.mrf.mxu0
      %v556 = vadd.f32 %v482, %v555
      %557 = vdwg.mxu0
      %v558 = vtanh.pop %v554
      %v559 = vtanh.pop %v556
      %v562 = vcombine.low %v558, %v559
      %v564 = vunpack.c.l.s4 1966171168
      %v565 = vunpack.c.0.s8 %v564
      %v566 = vlaneseq
      %v567 = vshrl.u32 %v566, 7
      %v568 = vsub.s32 %v565, %v567
      %v569 = vrot.slane %v562, %v568
      %v571 = vunpack.c.l.s4 1966171168
      %v572 = vunpack.c.0.s8 %v571
      %v573 = vlaneseq
      %v574 = vshrl.u32 %v573, 7
      %v575 = vsub.s32 %v572, %v574
      %v576 = vrot.slane %v569, %v575
      %v578 = vlaneseq
      %vm579 = vcmp.ge.s32.totalorder %v578, 0
      %vm580 = vcmp.lt.s32.totalorder %v578, 256
      %vm581 = vmand %vm579, %vm580
      %582 = vst.msk [vmem:[%s360] sm:$0x3] %vm581, %v576
      %v583 = vlaneseq
      %v584 = vand.u32 %v583, 127
      %v585 = vadd.s32 %v584, 128
      %s586 = smul.u32 %s26, 256
      %v587 = vstv %s586
      %v588 = vadd.s32 %v584, %v587
      %v589 = vadd.s32 %v585, %v587
      %v590 = vshra.s32 %v588, 4
      %v591 = vshra.s32 %v589, 4
      %v592 = vcvt.s32.f32 %v590
      %v593 = vcvt.s32.f32 %v591
      %v594 = vand.u32 %v588, 15
      %v595 = vand.u32 %v589, 15
      %v596 = vcvt.s32.f32 %v594
      %v597 = vcvt.s32.f32 %v595
      %v598 = vmul.f32 %v592, 0.06666667
      %v599 = vmul.f32 %v593, 0.06666667
      %v600 = vmul.f32 %v596, 0.06666667
      %v601 = vmul.f32 %v597, 0.06666667
      %v602 = vadd.f32 %v558, 1.0
      %v603 = vadd.f32 %v559, 1.0
      %v604 = vmul.f32 %v602, 0.5
      %v605 = vmul.f32 %v603, 0.5
      %v606 = vand.u32 2147483647, %v604
      %v607 = vand.u32 2147483647, %v605
      %v608 = vsub.f32 1.0, %v606
      %v609 = vsub.f32 1.0, %v607
      %v610 = vmax.f32 %v608, 0.0
      %v611 = vmax.f32 %v609, 0.0
      %v612 = vand.u32 2147483647, %v600
      %v613 = vand.u32 2147483647, %v601
      %v614 = vsub.f32 1.0, %v612
      %v615 = vsub.f32 1.0, %v613
      %v616 = vmax.f32 %v614, 0.0
      %v617 = vmax.f32 %v615, 0.0
      %v618 = vand.u32 2147483647, %v598
      %v619 = vand.u32 2147483647, %v599
      %v620 = vsub.f32 1.0, %v618
      %v621 = vsub.f32 1.0, %v619
      %v622 = vmax.f32 %v620, 0.0
      %v623 = vmax.f32 %v621, 0.0
      %v624 = vmul.f32 %v610, %v616
      %v625 = vmul.f32 %v611, %v617
      %v626 = vmul.f32 %v624, %v622
      %v627 = vmul.f32 %v625, %v623
      %v628 = vsub.f32 %v598, 1.0
      %v629 = vsub.f32 %v599, 1.0
      %v630 = vand.u32 2147483647, %v628
      %v631 = vand.u32 2147483647, %v629
      %v632 = vsub.f32 1.0, %v630
      %v633 = vsub.f32 1.0, %v631
      %v634 = vmax.f32 %v632, 0.0
      %v635 = vmax.f32 %v633, 0.0
      %v636 = vmul.f32 %v624, %v634
      %v637 = vmul.f32 %v625, %v635
      %v638 = vsub.f32 %v600, 1.0
      %v639 = vsub.f32 %v601, 1.0
      %v640 = vand.u32 2147483647, %v638
      %v641 = vand.u32 2147483647, %v639
      %v642 = vsub.f32 1.0, %v640
      %v643 = vsub.f32 1.0, %v641
      %v644 = vmax.f32 %v642, 0.0
      %v645 = vmax.f32 %v643, 0.0
      %v646 = vmul.f32 %v610, %v644
      %v647 = vmul.f32 %v611, %v645
      %v648 = vmul.f32 %v646, %v622
      %v649 = vmul.f32 %v647, %v623
      %v650 = vmul.f32 %v646, %v634
      %v651 = vmul.f32 %v647, %v635
      %v652 = vsub.f32 %v604, 1.0
      %v653 = vsub.f32 %v605, 1.0
      %v654 = vand.u32 2147483647, %v652
      %v655 = vand.u32 2147483647, %v653
      %v656 = vsub.f32 1.0, %v654
      %v657 = vsub.f32 1.0, %v655
      %v658 = vmax.f32 %v656, 0.0
      %v659 = vmax.f32 %v657, 0.0
      %v660 = vmul.f32 %v658, %v616
      %v661 = vmul.f32 %v659, %v617
      %v662 = vmul.f32 %v660, %v622
      %v663 = vmul.f32 %v661, %v623
      %v664 = vmul.f32 %v660, %v634
      %v665 = vmul.f32 %v661, %v635
      %v666 = vmul.f32 %v658, %v644
      %v667 = vmul.f32 %v659, %v645
      %v668 = vmul.f32 %v666, %v622
      %v669 = vmul.f32 %v667, %v623
      %v670 = vmul.f32 %v666, %v634
      %v671 = vmul.f32 %v667, %v635
      %v674 = vrot.slane %v636, 7
      %v675 = vrot.slane %v637, 7
      %v680 = vrot.slane %v648, 6
      %v681 = vrot.slane %v649, 6
      %v686 = vrot.slane %v650, 5
      %v687 = vrot.slane %v651, 5
      %v692 = vrot.slane %v662, 4
      %v693 = vrot.slane %v663, 4
      %v698 = vrot.slane %v664, 3
      %v699 = vrot.slane %v665, 3
      %v704 = vrot.slane %v668, 2
      %v705 = vrot.slane %v669, 2
      %v710 = vrot.slane %v670, 1
      %v711 = vrot.slane %v671, 1
      %vm714 = vcmask 1040384
      %v715 = vsel %vm714, %v626, %v674
      %v716 = vsel %vm714, %v627, %v675
      %vm717 = vcmask 1041408
      %v718 = vsel %vm717, %v715, %v680
      %v719 = vsel %vm717, %v716, %v681
      %v720 = vsel %vm386, %v718, %v686
      %v721 = vsel %vm386, %v719, %v687
      %vm722 = vcmask 1043456
      %v723 = vsel %vm722, %v720, %v692
      %v724 = vsel %vm722, %v721, %v693
      %vm725 = vcmask 1044480
      %v726 = vsel %vm725, %v723, %v698
      %v727 = vsel %vm725, %v724, %v699
      %vm728 = vcmask 1045504
      %v729 = vsel %vm728, %v726, %v704
      %v730 = vsel %vm728, %v727, %v705
      %vm731 = vcmask 1046528
      %v732 = vsel %vm731, %v729, %v710
      %v733 = vsel %vm731, %v730, %v711
      %v734 = vld [vmem:[%s342] sm:$0xff]
      %v735 = vld [vmem:[%s342 + $0x8] sm:$0xf]
      %vm736 = vcmask 64512
      %v738 = vsel %vm736, %v734, 0
      %v741 = vsel %vm736, %v735, 0
      %743 = vmatprep.subr.mxu0 0.0
      %744 = vmatpush1.msra.mxu0 0.0
      %745 = vmatprep.subr.mxu0 0.0
      %746 = vmatpush1.msra.mxu0 0.0
      %747 = vmatprep.subr.mxu0 0.0
      %748 = vmatpush1.msra.mxu0 0.0
      %749 = vmatprep.subr.mxu0 0.0
      %750 = vmatpush1.msra.mxu0 0.0
      %751 = vmatprep.subr.mxu0 0.0
      %752 = vmatpush1.msra.mxu0 0.0
      %753 = vmatprep.subr.mxu0 0.0
      %754 = vmatpush1.msra.mxu0 0.0
      %755 = vmatprep.subr.mxu0 0.0
      %756 = vmatpush1.msra.mxu0 0.0
      %757 = vmatprep.subr.mxu0 0.0
      %758 = vmatpush1.msra.mxu0 0.0
      %759 = vmatprep.subr.mxu0 0.0
      %760 = vmatpush1.msra.mxu0 0.0
      %761 = vmatprep.subr.mxu0 0.0
      %762 = vmatpush1.msra.mxu0 0.0
      %763 = vmatprep.subr.mxu0 0.0
      %764 = vmatpush1.msra.mxu0 0.0
      %765 = vmatprep.subr.mxu0 0.0
      %766 = vmatpush1.msra.mxu0 0.0
      %767 = vmatprep.subr.mxu0 0.0
      %768 = vmatpush1.msra.mxu0 0.0
      %769 = vmatprep.subr.mxu0 0.0
      %770 = vmatpush1.msra.mxu0 0.0
      %771 = vmatprep.subr.mxu0 0.0
      %772 = vmatpush1.msra.mxu0 0.0
      %773 = vmatprep.subr.mxu0 %v733
      %774 = vmatpush1.msra.mxu0 %v732
      %775 = vmatprep.subr.mxu0 0.0
      %776 = vmatpush2.msra.mxu0 0.0
      %777 = vmatprep.subr.mxu0 0.0
      %778 = vmatpush2.msra.mxu0 0.0
      %779 = vmatprep.subr.mxu0 0.0
      %780 = vmatpush2.msra.mxu0 0.0
      %781 = vmatprep.subr.mxu0 0.0
      %782 = vmatpush2.msra.mxu0 0.0
      %783 = vmatprep.subr.mxu0 0.0
      %784 = vmatpush2.msra.mxu0 0.0
      %785 = vmatprep.subr.mxu0 0.0
      %786 = vmatpush2.msra.mxu0 0.0
      %787 = vmatprep.subr.mxu0 0.0
      %788 = vmatpush2.msra.mxu0 0.0
      %789 = vmatprep.subr.mxu0 0.0
      %790 = vmatpush2.msra.mxu0 0.0
      %791 = vmatprep.subr.mxu0 0.0
      %792 = vmatpush2.msra.mxu0 0.0
      %793 = vmatprep.subr.mxu0 0.0
      %794 = vmatpush2.msra.mxu0 0.0
      %795 = vmatprep.subr.mxu0 0.0
      %796 = vmatpush2.msra.mxu0 0.0
      %797 = vmatprep.subr.mxu0 0.0
      %798 = vmatpush2.msra.mxu0 0.0
      %799 = vmatprep.subr.mxu0 0.0
      %800 = vmatpush2.msra.mxu0 0.0
      %801 = vmatprep.subr.mxu0 0.0
      %802 = vmatpush2.msra.mxu0 0.0
      %803 = vmatprep.subr.mxu0 0.0
      %804 = vmatpush2.msra.mxu0 0.0
      %805 = vmatprep.subr.mxu0 0.0
      %806 = vmatpush2.msra.mxu0 0.0
      %807 = vmatprep.mubr.f32.mxu0 0.0
      %808 = vmatmul.mubr.f32.gmra.mxu0 %v738
      %v809 = vpop.f32.mrf.mxu0
      %v810 = vadd.f32 0.0, %v809
      %v811 = vpop.f32.mrf.mxu0
      %v812 = vadd.f32 0.0, %v811
      %813 = vmatprep.mubr.f32.mxu0 0.0
      %814 = vmatmul.mubr.f32.gmra.mxu0 %v741
      %v815 = vpop.f32.mrf.mxu0
      %v816 = vadd.f32 0.0, %v815
      %v817 = vpop.f32.mrf.mxu0
      %v818 = vadd.f32 0.0, %v817
      %819 = vdwg.mxu0
      %v820 = vmul.f32 %v362, 0.229
      %v821 = vadd.f32 %v820, 0.485
      %v822 = vmul.f32 %v362, 0.224
      %v823 = vadd.f32 %v822, 0.456
      %v824 = vmul.f32 %v362, 0.225
      %v825 = vadd.f32 %v824, 0.406
      %v827 = vlaneseq
      %v828 = vshrl.u32 %v827, 7
      %v829 = vsub.s32 0, %v828
      %v830 = vrot.slane %v821, %v829
      %v831 = vlaneseq
      %v832 = vshrl.u32 %v831, 7
      %v833 = vsub.s32 4, %v832
      %v834 = vrot.slane %v821, %v833
      %v837 = vmul.f32 %v810, %v830
      %v838 = vmul.f32 %v812, %v834
      %v840 = vlaneseq
      %v841 = vshrl.u32 %v840, 7
      %v842 = vsub.s32 1, %v841
      %v843 = vrot.slane %v823, %v842
      %v844 = vlaneseq
      %v845 = vshrl.u32 %v844, 7
      %v846 = vsub.s32 5, %v845
      %v847 = vrot.slane %v823, %v846
      %v850 = vmul.f32 %v810, %v843
      %v851 = vmul.f32 %v812, %v847
      %v854 = vrot.slane %v850, 1
      %v855 = vrot.slane %v851, 1
      %v858 = vadd.f32 %v837, %v854
      %v859 = vadd.f32 %v838, %v855
      %v861 = vlaneseq
      %v862 = vshrl.u32 %v861, 7
      %v863 = vsub.s32 2, %v862
      %v864 = vrot.slane %v825, %v863
      %v865 = vlaneseq
      %v866 = vshrl.u32 %v865, 7
      %v867 = vsub.s32 6, %v866
      %v868 = vrot.slane %v825, %v867
      %v871 = vmul.f32 %v810, %v864
      %v872 = vmul.f32 %v812, %v868
      %v875 = vrot.slane %v871, 2
      %v876 = vrot.slane %v872, 2
      %v879 = vadd.f32 %v858, %v875
      %v880 = vadd.f32 %v859, %v876
      %v883 = vrot.slane %v810, 3
      %v884 = vrot.slane %v812, 3
      %v887 = vadd.f32 %v879, %v883
      %v888 = vadd.f32 %v880, %v884
      %v889 = vmul.f32 %v816, %v830
      %v890 = vmul.f32 %v818, %v834
      %v891 = vmul.f32 %v816, %v843
      %v892 = vmul.f32 %v818, %v847
      %v895 = vrot.slane %v891, 1
      %v896 = vrot.slane %v892, 1
      %v899 = vadd.f32 %v889, %v895
      %v900 = vadd.f32 %v890, %v896
      %v901 = vmul.f32 %v816, %v864
      %v902 = vmul.f32 %v818, %v868
      %v905 = vrot.slane %v901, 2
      %v906 = vrot.slane %v902, 2
      %v909 = vadd.f32 %v899, %v905
      %v910 = vadd.f32 %v900, %v906
      %v913 = vrot.slane %v816, 3
      %v914 = vrot.slane %v818, 3
      %v917 = vadd.f32 %v909, %v913
      %v918 = vadd.f32 %v910, %v914
      %v919 = vxor.u32 %v887, 2147483648
      %v920 = vxor.u32 %v888, 2147483648
      %v921 = vmul.f32 %v919, 1.442695
      %v922 = vpow.pop %v921
      %v923 = vmul.f32 %v920, 1.442695
      %v924 = vpow.pop %v923
      %v925 = vadd.f32 %v922, 1.0
      %v926 = vadd.f32 %v924, 1.0
      %v927 = vrcp.pop %v925
      %v928 = vmul.f32 1.0, %v927
      %v929 = vrcp.pop %v926
      %v930 = vmul.f32 1.0, %v929
      %v931 = vmax.f32 %v928, -2.117904
      %v932 = vmax.f32 %v930, -2.117904
      %v933 = vmin.f32 %v931, 2.2489083
      %v934 = vmin.f32 %v932, 2.2489083
      %v935 = vmax.f32 %v928, -2.0357144
      %v936 = vmax.f32 %v930, -2.0357144
      %v937 = vmin.f32 %v935, 2.4285715
      %v938 = vmin.f32 %v936, 2.4285715
      %v939 = vxor.u32 %v917, 2147483648
      %v940 = vxor.u32 %v918, 2147483648
      %v941 = vmul.f32 %v939, 1.442695
      %v942 = vpow.pop %v941
      %v943 = vmul.f32 %v940, 1.442695
      %v944 = vpow.pop %v943
      %v945 = vadd.f32 %v942, 1.0
      %v946 = vadd.f32 %v944, 1.0
      %v947 = vrcp.pop %v945
      %v948 = vmul.f32 1.0, %v947
      %v949 = vrcp.pop %v946
      %v950 = vmul.f32 1.0, %v949
      %v951 = vmax.f32 %v948, -1.8044444
      %v952 = vmax.f32 %v950, -1.8044444
      %v953 = vmin.f32 %v951, 2.64
      %v954 = vmin.f32 %v952, 2.64
      %v957 = vrot.slane %v937, 3
      %v958 = vrot.slane %v938, 3
      %v963 = vrot.slane %v953, 6
      %v964 = vrot.slane %v954, 6
      %v967 = vsel %vm714, %v933, %v957
      %v968 = vsel %vm714, %v934, %v958
      %v969 = vsel %vm717, %v967, %v963
      %v970 = vsel %vm717, %v968, %v964
      %v973 = vcombine.low %v969, %v970
      %975 = vst [vmem:[%s351] sm:$0x77] %v973
      %s976 = smul.u32 2, %s26
      %p977 = scmp.lt.s32.totalorder %s25, 1
      %s978 = scalar_select %p977, %s25, 1
      %p979 = scmp.lt.s32.totalorder %s976, 1
      %s980 = scalar_select %p979, %s976, 1
      %s981 = smul.addr %s978, 2
      %s982 = sadd.s32 %s980, %s981
      %s983 = smul.addr %s982, 4
      %s984 = scalar_lea.vmem %s6, %s983
      %s985 = smul.u32 2, %s26
      %p986 = scmp.lt.s32.totalorder %s25, 1
      %s987 = scalar_select %p986, %s25, 1
      %p988 = scmp.lt.s32.totalorder %s985, 1
      %s989 = scalar_select %p988, %s985, 1
      %s990 = smul.addr %s987, 2
      %s991 = sadd.s32 %s989, %s990
      %s992 = scalar_lea.vmem %s7, %s991
      // Predicated region
      $region45: #{hdr_forward.3} parent=43 // pred_check
        %p993 = pneg %p191
      $region46: #{hdr_forward.3} parent=43 // pred_check_branch
        %995 = sbr.rel (%p993) target = $region48
      $region47: #{hdr_forward.3} parent=43 // pred_region
        %s996 = smul.u32 2, %s26
      $region48: #{hdr_forward.3} parent=43 // pred_fallthru
        _
      // Predicated region
      $region49: #{hdr_forward.3} parent=43 // pred_check
        %p997 = pneg %p219
      $region50: #{hdr_forward.3} parent=43 // pred_check_branch
        %999 = sbr.rel (%p997) target = $region52
      $region51: #{hdr_forward.3} parent=43 // pred_region
        %s1000 = smul.u32 2, %s26
      $region52: #{hdr_forward.3} parent=43 // pred_fallthru
        _
    $region44: #{hdr_forward.3} parent=5 // pred_fallthru
      _
    %p1001 = scmp.le.s32.totalorder 2, %s16
    // Predicated region
    $region53: #{hdr_forward.3} parent=5 // pred_check
      %p1002 = pneg %p1001
    $region54: #{hdr_forward.3} parent=5 // pred_check_branch
      %1004 = sbr.rel (%p1002) target = $region56
    $region55: #{hdr_forward.3} parent=5 // pred_region
      %s1005 = ssub.s32 %s16, 2
      // Predicated region
      $region57: #{hdr_forward.3} parent=55 // pred_check
        %p1006 = pneg %p197
      $region58: #{hdr_forward.3} parent=55 // pred_check_branch
        %1008 = sbr.rel (%p1006) target = $region60
      $region59: #{hdr_forward.3} parent=55 // pred_region
        %s1009 = smul.u32 2, %s28
        %p1010 = scmp.lt.s32.totalorder %s27, 1
        %s1011 = scalar_select %p1010, %s27, 1
        %p1012 = scmp.lt.s32.totalorder %s1009, 1
        %s1013 = scalar_select %p1012, %s1009, 1
        %s1014 = smul.addr %s1011, 2
        %s1015 = sadd.s32 %s1013, %s1014
        %s1016 = smul.addr %s1015, 4
        %s1017 = scalar_lea.vmem %s6, %s1016
      $region60: #{hdr_forward.3} parent=55 // pred_fallthru
        _
      // Predicated region
      $region61: #{hdr_forward.3} parent=55 // pred_check
        %p1018 = pneg %p225
      $region62: #{hdr_forward.3} parent=55 // pred_check_branch
        %1020 = sbr.rel (%p1018) target = $region64
      $region63: #{hdr_forward.3} parent=55 // pred_region
        %s1021 = smul.u32 2, %s28
        %p1022 = scmp.lt.s32.totalorder %s27, 1
        %s1023 = scalar_select %p1022, %s27, 1
        %p1024 = scmp.lt.s32.totalorder %s1021, 1
        %s1025 = scalar_select %p1024, %s1021, 1
        %s1026 = smul.addr %s1023, 2
        %s1027 = sadd.s32 %s1025, %s1026
        %s1028 = scalar_lea.vmem %s7, %s1027
      $region64: #{hdr_forward.3} parent=55 // pred_fallthru
        _
    $region56: #{hdr_forward.3} parent=5 // pred_fallthru
      _
  $region6: #{hdr_forward.3} parent=0 // loop_footer
    %s20 = sadd.s32 1, %s16
  $region7: #{hdr_forward.3} parent=0 // loop_footer_branch
    %15 = sbr.rel target = $region3
  $region8: #{hdr_forward.3} parent=0 // loop_exit
    _

// kernel: hdr_forward.2
$region0: #{hdr_forward.2}
  #allocation0 [shape = 'u32[]', space=smem, size = 0x4, offset = 0x4, fixed_abs, tag = 'smem constant byte address 0x4 - core index']
  #allocation1 [shape = 'u32[144,128]{1,0:T(1,128)}', space=vmem, size = 0x12000, scoped, tag = 'internal scratch']
  #allocation2 [shape = 'f32[1,1]{1,0:T(1,128)S(1)}', space=vmem, size = 0x200, scoped, tag = 'scoped memory for hdr_forward.2']
  %s0 = inlined_call_operand.smem [shape: u32[35], index: -1, kind: input, shape index: {}]
  %s1 = sld [smem:[%s0]]
  %s2 = scalar_lea.smem %s0, 1
  %s3 = sld [smem:[%s2]]
  %s4 = scalar_lea.smem %s0, 2
  %s5 = sld [smem:[%s4]]
  %s6 = scalar_lea.smem %s0, 3
  %s7 = sld [smem:[%s6]]
  %s8 = scalar_lea.smem %s0, 4
  %s9 = sld [smem:[%s8]]
  %s10 = scalar_lea.smem %s0, 5
  %s11 = sld [smem:[%s10]]
  %s12 = scalar_lea.smem %s0, 6
  %s13 = sld [smem:[%s12]]
  %s14 = scalar_lea.smem %s0, 7
  %s15 = sld [smem:[%s14]]
  %s16 = scalar_lea.smem %s0, 8
  %s17 = sld [smem:[%s16]]
  %s18 = scalar_lea.smem %s0, 9
  %s19 = sld [smem:[%s18]]
  %s20 = scalar_lea.smem %s0, 10
  %s21 = sld [smem:[%s20]]
  %s22 = scalar_lea.smem %s0, 11
  %s23 = sld [smem:[%s22]]
  %s24 = scalar_lea.smem %s0, 12
  %s25 = sld [smem:[%s24]]
  %s26 = scalar_lea.smem %s0, 13
  %s27 = sld [smem:[%s26]]
  %s28 = scalar_lea.smem %s0, 14
  %s29 = sld [smem:[%s28]]
  %s30 = scalar_lea.smem %s0, 15
  %s31 = sld [smem:[%s30]]
  %s32 = scalar_lea.smem %s0, 16
  %s33 = sld [smem:[%s32]]
  %s34 = scalar_lea.smem %s0, 17
  %s35 = sld [smem:[%s34]]
  %s36 = scalar_lea.smem %s0, 18
  %s37 = sld [smem:[%s36]]
  %s38 = scalar_lea.smem %s0, 19
  %s39 = sld [smem:[%s38]]
  %s40 = scalar_lea.smem %s0, 20
  %s41 = sld [smem:[%s40]]
  %s42 = scalar_lea.smem %s0, 21
  %s43 = sld [smem:[%s42]]
  %s44 = scalar_lea.smem %s0, 22
  %s45 = sld [smem:[%s44]]
  %s46 = scalar_lea.smem %s0, 23
  %s47 = sld [smem:[%s46]]
  %s48 = scalar_lea.smem %s0, 24
  %s49 = sld [smem:[%s48]]
  %s50 = scalar_lea.smem %s0, 25
  %s51 = sld [smem:[%s50]]
  %s52 = scalar_lea.smem %s0, 26
  %s53 = sld [smem:[%s52]]
  %s54 = scalar_lea.smem %s0, 27
  %s55 = sld [smem:[%s54]]
  %s56 = scalar_lea.smem %s0, 28
  %s57 = sld [smem:[%s56]]
  %s58 = scalar_lea.smem %s0, 29
  %s59 = sld [smem:[%s58]]
  %s60 = scalar_lea.smem %s0, 30
  %s61 = sld [smem:[%s60]]
  %s62 = scalar_lea.smem %s0, 31
  %s63 = sld [smem:[%s62]]
  %s64 = scalar_lea.smem %s0, 32
  %s65 = sld [smem:[%s64]]
  %s66 = scalar_lea.smem %s0, 33
  %s67 = sld [smem:[%s66]]
  %s68 = scalar_lea.smem %s0, 34
  %s69 = sld [smem:[%s68]]
  %s70 = sld [smem:[#allocation0]]
  $region277: #{hdr_forward.2} parent=0
    _
  %s72 = ssub.s32 1, %s70
  %s73 = scalar_select 0, %s72, %s70
  %v74 = vstv %s55
  %75 = vst [vmem:[#allocation2] sm:$0x1] %v74
  $region1: #{hdr_forward.2} parent=0
    #allocation3 [shape = 'u8[2048]{0}', space=vmem, size = 0x800, scoped, tag = 'input window, operand 4, single buffered']
    #allocation4 [shape = 's32[2]{0}', space=sflag, size = 0x8, scoped, tag = 'scoped memory for hdr_forward.2']
    #allocation5 [shape = 'u8[4096]{0}', space=vmem, size = 0x1000, scoped, tag = 'input window, operand 5, single buffered']
    #allocation6 [shape = 's32[1]{0}', space=sflag, size = 0x4, scoped, tag = 'scoped memory for hdr_forward.2']
    #allocation7 [shape = 'u8[4096]{0}', space=vmem, size = 0x1000, scoped, tag = 'input window, operand 6, single buffered']
    #allocation8 [shape = 'u8[8192]{0}', space=vmem, size = 0x2000, scoped, tag = 'input window, operand 7, single buffered']
    #allocation9 [shape = 's32[1]{0}', space=sflag, size = 0x4, scoped, tag = 'scoped memory for hdr_forward.2']
    #allocation10 [shape = 'u8[8192]{0}', space=vmem, size = 0x2000, scoped, tag = 'input window, operand 8, single buffered']
    #allocation11 [shape = 'u8[16384]{0}', space=vmem, size = 0x4000, scoped, tag = 'input window, operand 9, single buffered']
    #allocation12 [shape = 's32[1]{0}', space=sflag, size = 0x4, scoped, tag = 'scoped memory for hdr_forward.2']
    #allocation13 [shape = 'u8[8192]{0}', space=vmem, size = 0x2000, scoped, tag = 'input window, operand 10, single buffered']
    #allocation14 [shape = 'u8[16384]{0}', space=vmem, size = 0x4000, scoped, tag = 'input window, operand 11, single buffered']
    #allocation15 [shape = 's32[1]{0}', space=sflag, size = 0x4, scoped, tag = 'scoped memory for hdr_forward.2']
    #allocation16 [shape = 'u8[8192]{0}', space=vmem, size = 0x2000, scoped, tag = 'input window, operand 12, single buffered']
    #allocation17 [shape = 'u8[16384]{0}', space=vmem, size = 0x4000, scoped, tag = 'input window, operand 13, single buffered']
    #allocation18 [shape = 's32[1]{0}', space=sflag, size = 0x4, scoped, tag = 'scoped memory for hdr_forward.2']
    #allocation19 [shape = 'u8[8192]{0}', space=vmem, size = 0x2000, scoped, tag = 'input window, operand 14, single buffered']
    #allocation20 [shape = 'u8[16384]{0}', space=vmem, size = 0x4000, scoped, tag = 'input window, operand 15, single buffered']
    #allocation21 [shape = 's32[1]{0}', space=sflag, size = 0x4, scoped, tag = 'scoped memory for hdr_forward.2']
    #allocation22 [shape = 'u8[8192]{0}', space=vmem, size = 0x2000, scoped, tag = 'input window, operand 16, single buffered']
    #allocation23 [shape = 'u8[16384]{0}', space=vmem, size = 0x4000, scoped, tag = 'input window, operand 17, single buffered']
    #allocation24 [shape = 's32[1]{0}', space=sflag, size = 0x4, scoped, tag = 'scoped memory for hdr_forward.2']
    #allocation25 [shape = 'u8[8192]{0}', space=vmem, size = 0x2000, scoped, tag = 'input window, operand 18, single buffered']
    #allocation26 [shape = 'u8[16384]{0}', space=vmem, size = 0x4000, scoped, tag = 'input window, operand 19, single buffered']
    #allocation27 [shape = 's32[1]{0}', space=sflag, size = 0x4, scoped, tag = 'scoped memory for hdr_forward.2']
    #allocation28 [shape = 'u8[8192]{0}', space=vmem, size = 0x2000, scoped, tag = 'input window, operand 20, single buffered']
    #allocation29 [shape = 'u8[1024]{0}', space=vmem, size = 0x400, scoped, tag = 'input window, operand 21, single buffered']
    #allocation30 [shape = 's32[1]{0}', space=sflag, size = 0x4, scoped, tag = 'scoped memory for hdr_forward.2']
    #allocation31 [shape = 'u8[1024]{0}', space=vmem, size = 0x400, scoped, tag = 'input window, operand 22, single buffered']
    #allocation32 [shape = 'u8[1024]{0}', space=vmem, size = 0x400, scoped, tag = 'input window, operand 23, single buffered']
    #allocation33 [shape = 's32[1]{0}', space=sflag, size = 0x4, scoped, tag = 'scoped memory for hdr_forward.2']
    #allocation34 [shape = 'u8[1024]{0}', space=vmem, size = 0x400, scoped, tag = 'input window, operand 24, single buffered']
    #allocation35 [shape = 'u8[8192]{0}', space=vmem, size = 0x2000, scoped, tag = 'input window, operand 25, single buffered']
    #allocation36 [shape = 's32[1]{0}', space=sflag, size = 0x4, scoped, tag = 'scoped memory for hdr_forward.2']
    #allocation37 [shape = 'u8[8192]{0}', space=vmem, size = 0x2000, scoped, tag = 'input window, operand 26, single buffered']
    #allocation38 [shape = 'u8[12288]{0}', space=vmem, size = 0x3000, scoped, tag = 'input window, operand 28, single buffered']
    #allocation39 [shape = 's32[1]{0}', space=sflag, size = 0x4, scoped, tag = 'scoped memory for hdr_forward.2']
    #allocation40 [shape = 'u8[12288]{0}', space=vmem, size = 0x3000, scoped, tag = 'input window, operand 29, single buffered']
    #allocation41 [shape = 'u8[1048576]{0}', space=vmem, size = 0x100000, scoped, tag = 'input window, operand 30, single buffered']
    #allocation42 [shape = 's32[1]{0}', space=sflag, size = 0x4, scoped, tag = 'scoped memory for hdr_forward.2']
    #allocation43 [shape = 'u8[8192]{0}', space=vmem, size = 0x2000, scoped, tag = 'input window, operand 33, single buffered']
    %76 = vsyncpa [#allocation4], 0
    %77 = vsyncpa [#allocation6], 0
    %78 = vsyncpa [#allocation9], 0
    %79 = vsyncpa [#allocation12], 0
    %80 = vsyncpa [#allocation15], 0
    %81 = vsyncpa [#allocation18], 0
    %82 = vsyncpa [#allocation21], 0
    %83 = vsyncpa [#allocation24], 0
    %84 = vsyncpa [#allocation27], 0
    %85 = vsyncpa [#allocation30], 0
    %86 = vsyncpa [#allocation33], 0
    %87 = vsyncpa [#allocation36], 0
    %88 = vsyncpa [#allocation39], 0
    %89 = vsyncpa [#allocation42], 0
    loop: start=0, step=1, limit=4
    $region2: #{hdr_forward.2} parent=1 // loop_pre_header
      _
    $region3: #{hdr_forward.2} parent=1 // loop_header
      %s91 = sphi 0, %s95
      %p92 = scmp.ge.s32.totalorder %s91, 4
      %s101 = sphi 0, %s103
      %s104 = sphi 0, %s101
      %s105 = sphi 0, %s104
      %s121 = sphi 0, %s105
      %s125 = sphi 0, %s125
      %s127 = sphi 0, %s125
      %s128 = sphi 0, %s127
      %s142 = sphi 0, %s128
      %s146 = sphi 0, %s146
      %s148 = sphi 0, %s146
      %s149 = sphi 0, %s148
      %s163 = sphi 0, %s149
      %s167 = sphi 0, %s167
      %s169 = sphi 0, %s167
      %s170 = sphi 0, %s169
      %s184 = sphi 0, %s170
      %s188 = sphi 0, %s188
      %s190 = sphi 0, %s188
      %s191 = sphi 0, %s190
      %s205 = sphi 0, %s191
      %s209 = sphi 0, %s209
      %s211 = sphi 0, %s209
      %s212 = sphi 0, %s211
      %s226 = sphi 0, %s212
      %s230 = sphi 0, %s230
      %s232 = sphi 0, %s230
      %s233 = sphi 0, %s232
      %s247 = sphi 0, %s233
      %s251 = sphi 0, %s251
      %s253 = sphi 0, %s251
      %s254 = sphi 0, %s253
      %s268 = sphi 0, %s254
      %s272 = sphi 0, %s272
      %s274 = sphi 0, %s272
      %s275 = sphi 0, %s274
      %s289 = sphi 0, %s275
      %s293 = sphi 0, %s293
      %s295 = sphi 0, %s293
      %s296 = sphi 0, %s295
      %s310 = sphi 0, %s296
      %s314 = sphi 0, %s314
      %s316 = sphi 0, %s314
      %s317 = sphi 0, %s316
      %s331 = sphi 0, %s317
      %s335 = sphi 0, %s335
      %s337 = sphi 0, %s335
      %s338 = sphi 0, %s337
      %s352 = sphi 0, %s338
      %s356 = sphi 0, %s356
      %s358 = sphi 0, %s356
      %s359 = sphi 0, %s358
      %s373 = sphi 0, %s359
      %s377 = sphi 0, %s377
      %s379 = sphi 0, %s377
      %s380 = sphi 0, %s379
      %s394 = sphi 0, %s380
      %s398 = sphi 0, %s398
      %s400 = sphi 0, %s398
      %s401 = sphi 0, %s400
      %s415 = sphi 0, %s401
      %s419 = sphi 0, %s419
      %s421 = sphi 0, %s419
      %s422 = sphi 0, %s421
      %s436 = sphi 0, %s422
      %s440 = sphi 0, %s440
      %s442 = sphi 0, %s440
      %s443 = sphi 0, %s442
      %s457 = sphi 0, %s443
      %s461 = sphi 0, %s461
      %s463 = sphi 0, %s461
      %s464 = sphi 0, %s463
      %s478 = sphi 0, %s464
      %s482 = sphi 0, %s482
      %s484 = sphi 0, %s482
      %s485 = sphi 0, %s484
      %s499 = sphi 0, %s485
      %s503 = sphi 0, %s503
      %s505 = sphi 0, %s503
      %s506 = sphi 0, %s505
      %s520 = sphi 0, %s506
      %s524 = sphi 0, %s524
      %s526 = sphi 0, %s524
      %s527 = sphi 0, %s526
      %s541 = sphi 0, %s527
      %s545 = sphi 0, %s545
      %s547 = sphi 0, %s545
      %s548 = sphi 0, %s547
      %s562 = sphi 0, %s548
      %s566 = sphi 0, %s566
      %s568 = sphi 0, %s566
      %s569 = sphi 0, %s568
      %s583 = sphi 0, %s569
      %s587 = sphi 0, %s587
      %s589 = sphi 0, %s587
      %s590 = sphi 0, %s589
      %s604 = sphi 0, %s590
      %s608 = sphi 0, %s608
      %s610 = sphi 0, %s608
      %s611 = sphi 0, %s610
      %s625 = sphi 0, %s611
      %s629 = sphi 0, %s629
      %s631 = sphi 0, %s629
      %s632 = sphi 0, %s631
      %s646 = sphi 0, %s632
      %s650 = sphi 0, %s650
      %s652 = sphi 0, %s650
      %s653 = sphi 0, %s652
      %s667 = sphi 0, %s653
      %s671 = sphi 0, %s671
      %s673 = sphi 0, %s671
      %s674 = sphi 0, %s673
      %s688 = sphi 0, %s674
      %s692 = sphi 0, %s692
      %s694 = sphi 0, %s692
      %s695 = sphi 0, %s694
      %s709 = sphi 0, %s695
      %s713 = sphi 0, %s713
      %s715 = sphi 0, %s713
      %s716 = sphi 0, %s715
      %s730 = sphi 0, %s716
      %s734 = sphi 0, %s734
      %s736 = sphi 0, %s734
      %s737 = sphi 0, %s736
      %s751 = sphi 0, %s737
      %s755 = sphi 0, %s755
      %s757 = sphi 0, %s755
      %s758 = sphi 0, %s757
      %s772 = sphi 0, %s758
      %s776 = sphi 0, %s776
      %s778 = sphi 0, %s776
      %s779 = sphi 0, %s778
      %s793 = sphi 0, %s779
      %s797 = sphi 0, %s797
      %s799 = sphi 0, %s797
      %s800 = sphi 0, %s799
      %s814 = sphi 0, %s800
      %s820 = sphi 0, %s822
      %s823 = sphi 0, %s820
      %s824 = sphi 0, %s823
      %s840 = sphi 0, %s824
    $region4: #{hdr_forward.2} parent=1 // loop_header_branch
      %94 = sbr.rel (%p92) target = $region8
    $region5: #{hdr_forward.2} parent=1 // loop_body
      %s96 = ssub.s32 %s91, 1
      %s97 = ssub.s32 %s91, 2
      %s98 = sadd.s32 %s91, 1
      %s99 = ssub.s32 %s91, %s98
      %p100 = scmp.eq.s32.totalorder %s99, 0
      %s102 = sadd.s32 %s101, 1
      %s103 = scalar_select %p100, %s101, %s102
      %p106 = pneg %p100
      %p107 = scmp.eq.s32.totalorder %s91, 1
      %p108 = por %p106, %p107
      %p109 = scmp.ne.s32.totalorder %s101, %s104
      %p110 = scmp.eq.s32.totalorder %s91, 0
      %p111 = por %p109, %p110
      %p112 = scmp.ne.s32.totalorder %s101, %s104
      %p113 = scmp.eq.s32.totalorder %s96, 1
      %p114 = por %p112, %p113
      %p115 = scmp.ne.s32.totalorder %s104, %s105
      %p116 = scmp.eq.s32.totalorder %s96, 0
      %p117 = por %p115, %p116
      %p118 = scmp.ne.s32.totalorder %s104, %s105
      %p119 = scmp.eq.s32.totalorder %s97, 1
      %p120 = por %p118, %p119
      %p122 = scmp.ne.s32.totalorder %s105, %s121
      %p123 = scmp.eq.s32.totalorder %s97, 0
      %p124 = por %p122, %p123
      %s126 = sadd.s32 %s125, 1
      %p129 = scmp.eq.s32.totalorder %s91, 1
      %p130 = scmp.ne.s32.totalorder %s125, %s127
      %p131 = scmp.eq.s32.totalorder %s91, 0
      %p132 = por %p130, %p131
      %p133 = scmp.ne.s32.totalorder %s125, %s127
      %p134 = scmp.eq.s32.totalorder %s96, 1
      %p135 = por %p133, %p134
      %p136 = scmp.ne.s32.totalorder %s127, %s128
      %p137 = scmp.eq.s32.totalorder %s96, 0
      %p138 = por %p136, %p137
      %p139 = scmp.ne.s32.totalorder %s127, %s128
      %p140 = scmp.eq.s32.totalorder %s97, 1
      %p141 = por %p139, %p140
      %p143 = scmp.ne.s32.totalorder %s128, %s142
      %p144 = scmp.eq.s32.totalorder %s97, 0
      %p145 = por %p143, %p144
      %s147 = sadd.s32 %s146, 1
      %p150 = scmp.eq.s32.totalorder %s91, 1
      %p151 = scmp.ne.s32.totalorder %s146, %s148
      %p152 = scmp.eq.s32.totalorder %s91, 0
      %p153 = por %p151, %p152
      %p154 = scmp.ne.s32.totalorder %s146, %s148
      %p155 = scmp.eq.s32.totalorder %s96, 1
      %p156 = por %p154, %p155
      %p157 = scmp.ne.s32.totalorder %s148, %s149
      %p158 = scmp.eq.s32.totalorder %s96, 0
      %p159 = por %p157, %p158
      %p160 = scmp.ne.s32.totalorder %s148, %s149
      %p161 = scmp.eq.s32.totalorder %s97, 1
      %p162 = por %p160, %p161
      %p164 = scmp.ne.s32.totalorder %s149, %s163
      %p165 = scmp.eq.s32.totalorder %s97, 0
      %p166 = por %p164, %p165
      %s168 = sadd.s32 %s167, 1
      %p171 = scmp.eq.s32.totalorder %s91, 1
      %p172 = scmp.ne.s32.totalorder %s167, %s169
      %p173 = scmp.eq.s32.totalorder %s91, 0
      %p174 = por %p172, %p173
      %p175 = scmp.ne.s32.totalorder %s167, %s169
      %p176 = scmp.eq.s32.totalorder %s96, 1
      %p177 = por %p175, %p176
      %p178 = scmp.ne.s32.totalorder %s169, %s170
      %p179 = scmp.eq.s32.totalorder %s96, 0
      %p180 = por %p178, %p179
      %p181 = scmp.ne.s32.totalorder %s169, %s170
      %p182 = scmp.eq.s32.totalorder %s97, 1
      %p183 = por %p181, %p182
      %p185 = scmp.ne.s32.totalorder %s170, %s184
      %p186 = scmp.eq.s32.totalorder %s97, 0
      %p187 = por %p185, %p186
      %s189 = sadd.s32 %s188, 1
      %p192 = scmp.eq.s32.totalorder %s91, 1
      %p193 = scmp.ne.s32.totalorder %s188, %s190
      %p194 = scmp.eq.s32.totalorder %s91, 0
      %p195 = por %p193, %p194
      %p196 = scmp.ne.s32.totalorder %s188, %s190
      %p197 = scmp.eq.s32.totalorder %s96, 1
      %p198 = por %p196, %p197
      %p199 = scmp.ne.s32.totalorder %s190, %s191
      %p200 = scmp.eq.s32.totalorder %s96, 0
      %p201 = por %p199, %p200
      %p202 = scmp.ne.s32.totalorder %s190, %s191
      %p203 = scmp.eq.s32.totalorder %s97, 1
      %p204 = por %p202, %p203
      %p206 = scmp.ne.s32.totalorder %s191, %s205
      %p207 = scmp.eq.s32.totalorder %s97, 0
      %p208 = por %p206, %p207
      %s210 = sadd.s32 %s209, 1
      %p213 = scmp.eq.s32.totalorder %s91, 1
      %p214 = scmp.ne.s32.totalorder %s209, %s211
      %p215 = scmp.eq.s32.totalorder %s91, 0
      %p216 = por %p214, %p215
      %p217 = scmp.ne.s32.totalorder %s209, %s211
      %p218 = scmp.eq.s32.totalorder %s96, 1
      %p219 = por %p217, %p218
      %p220 = scmp.ne.s32.totalorder %s211, %s212
      %p221 = scmp.eq.s32.totalorder %s96, 0
      %p222 = por %p220, %p221
      %p223 = scmp.ne.s32.totalorder %s211, %s212
      %p224 = scmp.eq.s32.totalorder %s97, 1
      %p225 = por %p223, %p224
      %p227 = scmp.ne.s32.totalorder %s212, %s226
      %p228 = scmp.eq.s32.totalorder %s97, 0
      %p229 = por %p227, %p228
      %s231 = sadd.s32 %s230, 1
      %p234 = scmp.eq.s32.totalorder %s91, 1
      %p235 = scmp.ne.s32.totalorder %s230, %s232
      %p236 = scmp.eq.s32.totalorder %s91, 0
      %p237 = por %p235, %p236
      %p238 = scmp.ne.s32.totalorder %s230, %s232
      %p239 = scmp.eq.s32.totalorder %s96, 1
      %p240 = por %p238, %p239
      %p241 = scmp.ne.s32.totalorder %s232, %s233
      %p242 = scmp.eq.s32.totalorder %s96, 0
      %p243 = por %p241, %p242
      %p244 = scmp.ne.s32.totalorder %s232, %s233
      %p245 = scmp.eq.s32.totalorder %s97, 1
      %p246 = por %p244, %p245
      %p248 = scmp.ne.s32.totalorder %s233, %s247
      %p249 = scmp.eq.s32.totalorder %s97, 0
      %p250 = por %p248, %p249
      %s252 = sadd.s32 %s251, 1
      %p255 = scmp.eq.s32.totalorder %s91, 1
      %p256 = scmp.ne.s32.totalorder %s251, %s253
      %p257 = scmp.eq.s32.totalorder %s91, 0
      %p258 = por %p256, %p257
      %p259 = scmp.ne.s32.totalorder %s251, %s253
      %p260 = scmp.eq.s32.totalorder %s96, 1
      %p261 = por %p259, %p260
      %p262 = scmp.ne.s32.totalorder %s253, %s254
      %p263 = scmp.eq.s32.totalorder %s96, 0
      %p264 = por %p262, %p263
      %p265 = scmp.ne.s32.totalorder %s253, %s254
      %p266 = scmp.eq.s32.totalorder %s97, 1
      %p267 = por %p265, %p266
      %p269 = scmp.ne.s32.totalorder %s254, %s268
      %p270 = scmp.eq.s32.totalorder %s97, 0
      %p271 = por %p269, %p270
      %s273 = sadd.s32 %s272, 1
      %p276 = scmp.eq.s32.totalorder %s91, 1
      %p277 = scmp.ne.s32.totalorder %s272, %s274
      %p278 = scmp.eq.s32.totalorder %s91, 0
      %p279 = por %p277, %p278
      %p280 = scmp.ne.s32.totalorder %s272, %s274
      %p281 = scmp.eq.s32.totalorder %s96, 1
      %p282 = por %p280, %p281
      %p283 = scmp.ne.s32.totalorder %s274, %s275
      %p284 = scmp.eq.s32.totalorder %s96, 0
      %p285 = por %p283, %p284
      %p286 = scmp.ne.s32.totalorder %s274, %s275
      %p287 = scmp.eq.s32.totalorder %s97, 1
      %p288 = por %p286, %p287
      %p290 = scmp.ne.s32.totalorder %s275, %s289
      %p291 = scmp.eq.s32.totalorder %s97, 0
      %p292 = por %p290, %p291
      %s294 = sadd.s32 %s293, 1
      %p297 = scmp.eq.s32.totalorder %s91, 1
      %p298 = scmp.ne.s32.totalorder %s293, %s295
      %p299 = scmp.eq.s32.totalorder %s91, 0
      %p300 = por %p298, %p299
      %p301 = scmp.ne.s32.totalorder %s293, %s295
      %p302 = scmp.eq.s32.totalorder %s96, 1
      %p303 = por %p301, %p302
      %p304 = scmp.ne.s32.totalorder %s295, %s296
      %p305 = scmp.eq.s32.totalorder %s96, 0
      %p306 = por %p304, %p305
      %p307 = scmp.ne.s32.totalorder %s295, %s296
      %p308 = scmp.eq.s32.totalorder %s97, 1
      %p309 = por %p307, %p308
      %p311 = scmp.ne.s32.totalorder %s296, %s310
      %p312 = scmp.eq.s32.totalorder %s97, 0
      %p313 = por %p311, %p312
      %s315 = sadd.s32 %s314, 1
      %p318 = scmp.eq.s32.totalorder %s91, 1
      %p319 = scmp.ne.s32.totalorder %s314, %s316
      %p320 = scmp.eq.s32.totalorder %s91, 0
      %p321 = por %p319, %p320
      %p322 = scmp.ne.s32.totalorder %s314, %s316
      %p323 = scmp.eq.s32.totalorder %s96, 1
      %p324 = por %p322, %p323
      %p325 = scmp.ne.s32.totalorder %s316, %s317
      %p326 = scmp.eq.s32.totalorder %s96, 0
      %p327 = por %p325, %p326
      %p328 = scmp.ne.s32.totalorder %s316, %s317
      %p329 = scmp.eq.s32.totalorder %s97, 1
      %p330 = por %p328, %p329
      %p332 = scmp.ne.s32.totalorder %s317, %s331
      %p333 = scmp.eq.s32.totalorder %s97, 0
      %p334 = por %p332, %p333
      %s336 = sadd.s32 %s335, 1
      %p339 = scmp.eq.s32.totalorder %s91, 1
      %p340 = scmp.ne.s32.totalorder %s335, %s337
      %p341 = scmp.eq.s32.totalorder %s91, 0
      %p342 = por %p340, %p341
      %p343 = scmp.ne.s32.totalorder %s335, %s337
      %p344 = scmp.eq.s32.totalorder %s96, 1
      %p345 = por %p343, %p344
      %p346 = scmp.ne.s32.totalorder %s337, %s338
      %p347 = scmp.eq.s32.totalorder %s96, 0
      %p348 = por %p346, %p347
      %p349 = scmp.ne.s32.totalorder %s337, %s338
      %p350 = scmp.eq.s32.totalorder %s97, 1
      %p351 = por %p349, %p350
      %p353 = scmp.ne.s32.totalorder %s338, %s352
      %p354 = scmp.eq.s32.totalorder %s97, 0
      %p355 = por %p353, %p354
      %s357 = sadd.s32 %s356, 1
      %p360 = scmp.eq.s32.totalorder %s91, 1
      %p361 = scmp.ne.s32.totalorder %s356, %s358
      %p362 = scmp.eq.s32.totalorder %s91, 0
      %p363 = por %p361, %p362
      %p364 = scmp.ne.s32.totalorder %s356, %s358
      %p365 = scmp.eq.s32.totalorder %s96, 1
      %p366 = por %p364, %p365
      %p367 = scmp.ne.s32.totalorder %s358, %s359
      %p368 = scmp.eq.s32.totalorder %s96, 0
      %p369 = por %p367, %p368
      %p370 = scmp.ne.s32.totalorder %s358, %s359
      %p371 = scmp.eq.s32.totalorder %s97, 1
      %p372 = por %p370, %p371
      %p374 = scmp.ne.s32.totalorder %s359, %s373
      %p375 = scmp.eq.s32.totalorder %s97, 0
      %p376 = por %p374, %p375
      %s378 = sadd.s32 %s377, 1
      %p381 = scmp.eq.s32.totalorder %s91, 1
      %p382 = scmp.ne.s32.totalorder %s377, %s379
      %p383 = scmp.eq.s32.totalorder %s91, 0
      %p384 = por %p382, %p383
      %p385 = scmp.ne.s32.totalorder %s377, %s379
      %p386 = scmp.eq.s32.totalorder %s96, 1
      %p387 = por %p385, %p386
      %p388 = scmp.ne.s32.totalorder %s379, %s380
      %p389 = scmp.eq.s32.totalorder %s96, 0
      %p390 = por %p388, %p389
      %p391 = scmp.ne.s32.totalorder %s379, %s380
      %p392 = scmp.eq.s32.totalorder %s97, 1
      %p393 = por %p391, %p392
      %p395 = scmp.ne.s32.totalorder %s380, %s394
      %p396 = scmp.eq.s32.totalorder %s97, 0
      %p397 = por %p395, %p396
      %s399 = sadd.s32 %s398, 1
      %p402 = scmp.eq.s32.totalorder %s91, 1
      %p403 = scmp.ne.s32.totalorder %s398, %s400
      %p404 = scmp.eq.s32.totalorder %s91, 0
      %p405 = por %p403, %p404
      %p406 = scmp.ne.s32.totalorder %s398, %s400
      %p407 = scmp.eq.s32.totalorder %s96, 1
      %p408 = por %p406, %p407
      %p409 = scmp.ne.s32.totalorder %s400, %s401
      %p410 = scmp.eq.s32.totalorder %s96, 0
      %p411 = por %p409, %p410
      %p412 = scmp.ne.s32.totalorder %s400, %s401
      %p413 = scmp.eq.s32.totalorder %s97, 1
      %p414 = por %p412, %p413
      %p416 = scmp.ne.s32.totalorder %s401, %s415
      %p417 = scmp.eq.s32.totalorder %s97, 0
      %p418 = por %p416, %p417
      %s420 = sadd.s32 %s419, 1
      %p423 = scmp.eq.s32.totalorder %s91, 1
      %p424 = scmp.ne.s32.totalorder %s419, %s421
      %p425 = scmp.eq.s32.totalorder %s91, 0
      %p426 = por %p424, %p425
      %p427 = scmp.ne.s32.totalorder %s419, %s421
      %p428 = scmp.eq.s32.totalorder %s96, 1
      %p429 = por %p427, %p428
      %p430 = scmp.ne.s32.totalorder %s421, %s422
      %p431 = scmp.eq.s32.totalorder %s96, 0
      %p432 = por %p430, %p431
      %p433 = scmp.ne.s32.totalorder %s421, %s422
      %p434 = scmp.eq.s32.totalorder %s97, 1
      %p435 = por %p433, %p434
      %p437 = scmp.ne.s32.totalorder %s422, %s436
      %p438 = scmp.eq.s32.totalorder %s97, 0
      %p439 = por %p437, %p438
      %s441 = sadd.s32 %s440, 1
      %p444 = scmp.eq.s32.totalorder %s91, 1
      %p445 = scmp.ne.s32.totalorder %s440, %s442
      %p446 = scmp.eq.s32.totalorder %s91, 0
      %p447 = por %p445, %p446
      %p448 = scmp.ne.s32.totalorder %s440, %s442
      %p449 = scmp.eq.s32.totalorder %s96, 1
      %p450 = por %p448, %p449
      %p451 = scmp.ne.s32.totalorder %s442, %s443
      %p452 = scmp.eq.s32.totalorder %s96, 0
      %p453 = por %p451, %p452
      %p454 = scmp.ne.s32.totalorder %s442, %s443
      %p455 = scmp.eq.s32.totalorder %s97, 1
      %p456 = por %p454, %p455
      %p458 = scmp.ne.s32.totalorder %s443, %s457
      %p459 = scmp.eq.s32.totalorder %s97, 0
      %p460 = por %p458, %p459
      %s462 = sadd.s32 %s461, 1
      %p465 = scmp.eq.s32.totalorder %s91, 1
      %p466 = scmp.ne.s32.totalorder %s461, %s463
      %p467 = scmp.eq.s32.totalorder %s91, 0
      %p468 = por %p466, %p467
      %p469 = scmp.ne.s32.totalorder %s461, %s463
      %p470 = scmp.eq.s32.totalorder %s96, 1
      %p471 = por %p469, %p470
      %p472 = scmp.ne.s32.totalorder %s463, %s464
      %p473 = scmp.eq.s32.totalorder %s96, 0
      %p474 = por %p472, %p473
      %p475 = scmp.ne.s32.totalorder %s463, %s464
      %p476 = scmp.eq.s32.totalorder %s97, 1
      %p477 = por %p475, %p476
      %p479 = scmp.ne.s32.totalorder %s464, %s478
      %p480 = scmp.eq.s32.totalorder %s97, 0
      %p481 = por %p479, %p480
      %s483 = sadd.s32 %s482, 1
      %p486 = scmp.eq.s32.totalorder %s91, 1
      %p487 = scmp.ne.s32.totalorder %s482, %s484
      %p488 = scmp.eq.s32.totalorder %s91, 0
      %p489 = por %p487, %p488
      %p490 = scmp.ne.s32.totalorder %s482, %s484
      %p491 = scmp.eq.s32.totalorder %s96, 1
      %p492 = por %p490, %p491
      %p493 = scmp.ne.s32.totalorder %s484, %s485
      %p494 = scmp.eq.s32.totalorder %s96, 0
      %p495 = por %p493, %p494
      %p496 = scmp.ne.s32.totalorder %s484, %s485
      %p497 = scmp.eq.s32.totalorder %s97, 1
      %p498 = por %p496, %p497
      %p500 = scmp.ne.s32.totalorder %s485, %s499
      %p501 = scmp.eq.s32.totalorder %s97, 0
      %p502 = por %p500, %p501
      %s504 = sadd.s32 %s503, 1
      %p507 = scmp.eq.s32.totalorder %s91, 1
      %p508 = scmp.ne.s32.totalorder %s503, %s505
      %p509 = scmp.eq.s32.totalorder %s91, 0
      %p510 = por %p508, %p509
      %p511 = scmp.ne.s32.totalorder %s503, %s505
      %p512 = scmp.eq.s32.totalorder %s96, 1
      %p513 = por %p511, %p512
      %p514 = scmp.ne.s32.totalorder %s505, %s506
      %p515 = scmp.eq.s32.totalorder %s96, 0
      %p516 = por %p514, %p515
      %p517 = scmp.ne.s32.totalorder %s505, %s506
      %p518 = scmp.eq.s32.totalorder %s97, 1
      %p519 = por %p517, %p518
      %p521 = scmp.ne.s32.totalorder %s506, %s520
      %p522 = scmp.eq.s32.totalorder %s97, 0
      %p523 = por %p521, %p522
      %s525 = sadd.s32 %s524, 1
      %p528 = scmp.eq.s32.totalorder %s91, 1
      %p529 = scmp.ne.s32.totalorder %s524, %s526
      %p530 = scmp.eq.s32.totalorder %s91, 0
      %p531 = por %p529, %p530
      %p532 = scmp.ne.s32.totalorder %s524, %s526
      %p533 = scmp.eq.s32.totalorder %s96, 1
      %p534 = por %p532, %p533
      %p535 = scmp.ne.s32.totalorder %s526, %s527
      %p536 = scmp.eq.s32.totalorder %s96, 0
      %p537 = por %p535, %p536
      %p538 = scmp.ne.s32.totalorder %s526, %s527
      %p539 = scmp.eq.s32.totalorder %s97, 1
      %p540 = por %p538, %p539
      %p542 = scmp.ne.s32.totalorder %s527, %s541
      %p543 = scmp.eq.s32.totalorder %s97, 0
      %p544 = por %p542, %p543
      %s546 = sadd.s32 %s545, 1
      %p549 = scmp.eq.s32.totalorder %s91, 1
      %p550 = scmp.ne.s32.totalorder %s545, %s547
      %p551 = scmp.eq.s32.totalorder %s91, 0
      %p552 = por %p550, %p551
      %p553 = scmp.ne.s32.totalorder %s545, %s547
      %p554 = scmp.eq.s32.totalorder %s96, 1
      %p555 = por %p553, %p554
      %p556 = scmp.ne.s32.totalorder %s547, %s548
      %p557 = scmp.eq.s32.totalorder %s96, 0
      %p558 = por %p556, %p557
      %p559 = scmp.ne.s32.totalorder %s547, %s548
      %p560 = scmp.eq.s32.totalorder %s97, 1
      %p561 = por %p559, %p560
      %p563 = scmp.ne.s32.totalorder %s548, %s562
      %p564 = scmp.eq.s32.totalorder %s97, 0
      %p565 = por %p563, %p564
      %s567 = sadd.s32 %s566, 1
      %p570 = scmp.eq.s32.totalorder %s91, 1
      %p571 = scmp.ne.s32.totalorder %s566, %s568
      %p572 = scmp.eq.s32.totalorder %s91, 0
      %p573 = por %p571, %p572
      %p574 = scmp.ne.s32.totalorder %s566, %s568
      %p575 = scmp.eq.s32.totalorder %s96, 1
      %p576 = por %p574, %p575
      %p577 = scmp.ne.s32.totalorder %s568, %s569
      %p578 = scmp.eq.s32.totalorder %s96, 0
      %p579 = por %p577, %p578
      %p580 = scmp.ne.s32.totalorder %s568, %s569
      %p581 = scmp.eq.s32.totalorder %s97, 1
      %p582 = por %p580, %p581
      %p584 = scmp.ne.s32.totalorder %s569, %s583
      %p585 = scmp.eq.s32.totalorder %s97, 0
      %p586 = por %p584, %p585
      %s588 = sadd.s32 %s587, 1
      %p591 = scmp.eq.s32.totalorder %s91, 1
      %p592 = scmp.ne.s32.totalorder %s587, %s589
      %p593 = scmp.eq.s32.totalorder %s91, 0
      %p594 = por %p592, %p593
      %p595 = scmp.ne.s32.totalorder %s587, %s589
      %p596 = scmp.eq.s32.totalorder %s96, 1
      %p597 = por %p595, %p596
      %p598 = scmp.ne.s32.totalorder %s589, %s590
      %p599 = scmp.eq.s32.totalorder %s96, 0
      %p600 = por %p598, %p599
      %p601 = scmp.ne.s32.totalorder %s589, %s590
      %p602 = scmp.eq.s32.totalorder %s97, 1
      %p603 = por %p601, %p602
      %p605 = scmp.ne.s32.totalorder %s590, %s604
      %p606 = scmp.eq.s32.totalorder %s97, 0
      %p607 = por %p605, %p606
      %s609 = sadd.s32 %s608, 1
      %p612 = scmp.eq.s32.totalorder %s91, 1
      %p613 = scmp.ne.s32.totalorder %s608, %s610
      %p614 = scmp.eq.s32.totalorder %s91, 0
      %p615 = por %p613, %p614
      %p616 = scmp.ne.s32.totalorder %s608, %s610
      %p617 = scmp.eq.s32.totalorder %s96, 1
      %p618 = por %p616, %p617
      %p619 = scmp.ne.s32.totalorder %s610, %s611
      %p620 = scmp.eq.s32.totalorder %s96, 0
      %p621 = por %p619, %p620
      %p622 = scmp.ne.s32.totalorder %s610, %s611
      %p623 = scmp.eq.s32.totalorder %s97, 1
      %p624 = por %p622, %p623
      %p626 = scmp.ne.s32.totalorder %s611, %s625
      %p627 = scmp.eq.s32.totalorder %s97, 0
      %p628 = por %p626, %p627
      %s630 = sadd.s32 %s629, 1
      %p633 = scmp.eq.s32.totalorder %s91, 1
      %p634 = scmp.ne.s32.totalorder %s629, %s631
      %p635 = scmp.eq.s32.totalorder %s91, 0
      %p636 = por %p634, %p635
      %p637 = scmp.ne.s32.totalorder %s629, %s631
      %p638 = scmp.eq.s32.totalorder %s96, 1
      %p639 = por %p637, %p638
      %p640 = scmp.ne.s32.totalorder %s631, %s632
      %p641 = scmp.eq.s32.totalorder %s96, 0
      %p642 = por %p640, %p641
      %p643 = scmp.ne.s32.totalorder %s631, %s632
      %p644 = scmp.eq.s32.totalorder %s97, 1
      %p645 = por %p643, %p644
      %p647 = scmp.ne.s32.totalorder %s632, %s646
      %p648 = scmp.eq.s32.totalorder %s97, 0
      %p649 = por %p647, %p648
      %s651 = sadd.s32 %s650, 1
      %p654 = scmp.eq.s32.totalorder %s91, 1
      %p655 = scmp.ne.s32.totalorder %s650, %s652
      %p656 = scmp.eq.s32.totalorder %s91, 0
      %p657 = por %p655, %p656
      %p658 = scmp.ne.s32.totalorder %s650, %s652
      %p659 = scmp.eq.s32.totalorder %s96, 1
      %p660 = por %p658, %p659
      %p661 = scmp.ne.s32.totalorder %s652, %s653
      %p662 = scmp.eq.s32.totalorder %s96, 0
      %p663 = por %p661, %p662
      %p664 = scmp.ne.s32.totalorder %s652, %s653
      %p665 = scmp.eq.s32.totalorder %s97, 1
      %p666 = por %p664, %p665
      %p668 = scmp.ne.s32.totalorder %s653, %s667
      %p669 = scmp.eq.s32.totalorder %s97, 0
      %p670 = por %p668, %p669
      %s672 = sadd.s32 %s671, 1
      %p675 = scmp.eq.s32.totalorder %s91, 1
      %p676 = scmp.ne.s32.totalorder %s671, %s673
      %p677 = scmp.eq.s32.totalorder %s91, 0
      %p678 = por %p676, %p677
      %p679 = scmp.ne.s32.totalorder %s671, %s673
      %p680 = scmp.eq.s32.totalorder %s96, 1
      %p681 = por %p679, %p680
      %p682 = scmp.ne.s32.totalorder %s673, %s674
      %p683 = scmp.eq.s32.totalorder %s96, 0
      %p684 = por %p682, %p683
      %p685 = scmp.ne.s32.totalorder %s673, %s674
      %p686 = scmp.eq.s32.totalorder %s97, 1
      %p687 = por %p685, %p686
      %p689 = scmp.ne.s32.totalorder %s674, %s688
      %p690 = scmp.eq.s32.totalorder %s97, 0
      %p691 = por %p689, %p690
      %s693 = sadd.s32 %s692, 1
      %p696 = scmp.eq.s32.totalorder %s91, 1
      %p697 = scmp.ne.s32.totalorder %s692, %s694
      %p698 = scmp.eq.s32.totalorder %s91, 0
      %p699 = por %p697, %p698
      %p700 = scmp.ne.s32.totalorder %s692, %s694
      %p701 = scmp.eq.s32.totalorder %s96, 1
      %p702 = por %p700, %p701
      %p703 = scmp.ne.s32.totalorder %s694, %s695
      %p704 = scmp.eq.s32.totalorder %s96, 0
      %p705 = por %p703, %p704
      %p706 = scmp.ne.s32.totalorder %s694, %s695
      %p707 = scmp.eq.s32.totalorder %s97, 1
      %p708 = por %p706, %p707
      %p710 = scmp.ne.s32.totalorder %s695, %s709
      %p711 = scmp.eq.s32.totalorder %s97, 0
      %p712 = por %p710, %p711
      %s714 = sadd.s32 %s713, 1
      %p717 = scmp.eq.s32.totalorder %s91, 1
      %p718 = scmp.ne.s32.totalorder %s713, %s715
      %p719 = scmp.eq.s32.totalorder %s91, 0
      %p720 = por %p718, %p719
      %p721 = scmp.ne.s32.totalorder %s713, %s715
      %p722 = scmp.eq.s32.totalorder %s96, 1
      %p723 = por %p721, %p722
      %p724 = scmp.ne.s32.totalorder %s715, %s716
      %p725 = scmp.eq.s32.totalorder %s96, 0
      %p726 = por %p724, %p725
      %p727 = scmp.ne.s32.totalorder %s715, %s716
      %p728 = scmp.eq.s32.totalorder %s97, 1
      %p729 = por %p727, %p728
      %p731 = scmp.ne.s32.totalorder %s716, %s730
      %p732 = scmp.eq.s32.totalorder %s97, 0
      %p733 = por %p731, %p732
      %s735 = sadd.s32 %s734, 1
      %p738 = scmp.eq.s32.totalorder %s91, 1
      %p739 = scmp.ne.s32.totalorder %s734, %s736
      %p740 = scmp.eq.s32.totalorder %s91, 0
      %p741 = por %p739, %p740
      %p742 = scmp.ne.s32.totalorder %s734, %s736
      %p743 = scmp.eq.s32.totalorder %s96, 1
      %p744 = por %p742, %p743
      %p745 = scmp.ne.s32.totalorder %s736, %s737
      %p746 = scmp.eq.s32.totalorder %s96, 0
      %p747 = por %p745, %p746
      %p748 = scmp.ne.s32.totalorder %s736, %s737
      %p749 = scmp.eq.s32.totalorder %s97, 1
      %p750 = por %p748, %p749
      %p752 = scmp.ne.s32.totalorder %s737, %s751
      %p753 = scmp.eq.s32.totalorder %s97, 0
      %p754 = por %p752, %p753
      %s756 = sadd.s32 %s755, 1
      %p759 = scmp.eq.s32.totalorder %s91, 1
      %p760 = scmp.ne.s32.totalorder %s755, %s757
      %p761 = scmp.eq.s32.totalorder %s91, 0
      %p762 = por %p760, %p761
      %p763 = scmp.ne.s32.totalorder %s755, %s757
      %p764 = scmp.eq.s32.totalorder %s96, 1
      %p765 = por %p763, %p764
      %p766 = scmp.ne.s32.totalorder %s757, %s758
      %p767 = scmp.eq.s32.totalorder %s96, 0
      %p768 = por %p766, %p767
      %p769 = scmp.ne.s32.totalorder %s757, %s758
      %p770 = scmp.eq.s32.totalorder %s97, 1
      %p771 = por %p769, %p770
      %p773 = scmp.ne.s32.totalorder %s758, %s772
      %p774 = scmp.eq.s32.totalorder %s97, 0
      %p775 = por %p773, %p774
      %s777 = sadd.s32 %s776, 1
      %p780 = scmp.eq.s32.totalorder %s91, 1
      %p781 = scmp.ne.s32.totalorder %s776, %s778
      %p782 = scmp.eq.s32.totalorder %s91, 0
      %p783 = por %p781, %p782
      %p784 = scmp.ne.s32.totalorder %s776, %s778
      %p785 = scmp.eq.s32.totalorder %s96, 1
      %p786 = por %p784, %p785
      %p787 = scmp.ne.s32.totalorder %s778, %s779
      %p788 = scmp.eq.s32.totalorder %s96, 0
      %p789 = por %p787, %p788
      %p790 = scmp.ne.s32.totalorder %s778, %s779
      %p791 = scmp.eq.s32.totalorder %s97, 1
      %p792 = por %p790, %p791
      %p794 = scmp.ne.s32.totalorder %s779, %s793
      %p795 = scmp.eq.s32.totalorder %s97, 0
      %p796 = por %p794, %p795
      %s798 = sadd.s32 %s797, 1
      %p801 = scmp.eq.s32.totalorder %s91, 1
      %p802 = scmp.ne.s32.totalorder %s797, %s799
      %p803 = scmp.eq.s32.totalorder %s91, 0
      %p804 = por %p802, %p803
      %p805 = scmp.ne.s32.totalorder %s797, %s799
      %p806 = scmp.eq.s32.totalorder %s96, 1
      %p807 = por %p805, %p806
      %p808 = scmp.ne.s32.totalorder %s799, %s800
      %p809 = scmp.eq.s32.totalorder %s96, 0
      %p810 = por %p808, %p809
      %p811 = scmp.ne.s32.totalorder %s799, %s800
      %p812 = scmp.eq.s32.totalorder %s97, 1
      %p813 = por %p811, %p812
      %p815 = scmp.ne.s32.totalorder %s800, %s814
      %p816 = scmp.eq.s32.totalorder %s97, 0
      %p817 = por %p815, %p816
      %s818 = ssub.s32 %s91, %s98
      %p819 = scmp.eq.s32.totalorder %s818, 0
      %s821 = sadd.s32 %s820, 1
      %s822 = scalar_select %p819, %s820, %s821
      %p825 = pneg %p819
      %p826 = scmp.eq.s32.totalorder %s91, 1
      %p827 = por %p825, %p826
      %p828 = scmp.ne.s32.totalorder %s820, %s823
      %p829 = scmp.eq.s32.totalorder %s91, 0
      %p830 = por %p828, %p829
      %p831 = scmp.ne.s32.totalorder %s820, %s823
      %p832 = scmp.eq.s32.totalorder %s96, 1
      %p833 = por %p831, %p832
      %p834 = scmp.ne.s32.totalorder %s823, %s824
      %p835 = scmp.eq.s32.totalorder %s96, 0
      %p836 = por %p834, %p835
      %p837 = scmp.ne.s32.totalorder %s823, %s824
      %p838 = scmp.eq.s32.totalorder %s97, 1
      %p839 = por %p837, %p838
      %p841 = scmp.ne.s32.totalorder %s824, %s840
      %p842 = scmp.eq.s32.totalorder %s97, 0
      %p843 = por %p841, %p842
      %p844 = scmp.le.s32.totalorder 1, %s91
      %p845 = scmp.lt.s32.totalorder %s91, 3
      %p846 = pnand %p844, %p845
      %p847 = pneg %p846
      // Predicated region
      $region9: #{hdr_forward.2} parent=5 // pred_check
        _
      $region10: #{hdr_forward.2} parent=5 // pred_check_branch
        %849 = sbr.rel (%p846) target = $region12
      $region11: #{hdr_forward.2} parent=5 // pred_region
        %s850 = ssub.s32 %s91, 1
        // Predicated region
        $region13: #{hdr_forward.2} parent=11 // pred_check
          %p851 = pneg %p138
        $region14: #{hdr_forward.2} parent=11 // pred_check_branch
          %853 = sbr.rel (%p851) target = $region16
        $region15: #{hdr_forward.2} parent=11 // pred_region
          _
        $region16: #{hdr_forward.2} parent=11 // pred_fallthru
          _
        // Predicated region
        $region17: #{hdr_forward.2} parent=11 // pred_check
          %p854 = pneg %p159
        $region18: #{hdr_forward.2} parent=11 // pred_check_branch
          %856 = sbr.rel (%p854) target = $region20
        $region19: #{hdr_forward.2} parent=11 // pred_region
          _
        $region20: #{hdr_forward.2} parent=11 // pred_fallthru
          _
        // Predicated region
        $region21: #{hdr_forward.2} parent=11 // pred_check
          %p857 = pneg %p180
        $region22: #{hdr_forward.2} parent=11 // pred_check_branch
          %859 = sbr.rel (%p857) target = $region24
        $region23: #{hdr_forward.2} parent=11 // pred_region
          _
        $region24: #{hdr_forward.2} parent=11 // pred_fallthru
          _
        // Predicated region
        $region25: #{hdr_forward.2} parent=11 // pred_check
          %p860 = pneg %p201
        $region26: #{hdr_forward.2} parent=11 // pred_check_branch
          %862 = sbr.rel (%p860) target = $region28
        $region27: #{hdr_forward.2} parent=11 // pred_region
          %s864 = ssub.s32 64, 64
          %865 = vsyncadd [#allocation4], %s864
          %s867 = sshll.u32 [#allocation3], 4
          %s868 = int_to_ptr.vmem [resolvable:$true] %s867
          %870 = dma.hbm_to_vmem [thread:$0]  %s9, 64, %s868, [#allocation4]
        $region28: #{hdr_forward.2} parent=11 // pred_fallthru
          _
        // Predicated region
        $region29: #{hdr_forward.2} parent=11 // pred_check
          %p871 = pneg %p222
        $region30: #{hdr_forward.2} parent=11 // pred_check_branch
          %873 = sbr.rel (%p871) target = $region32
        $region31: #{hdr_forward.2} parent=11 // pred_region
          %s875 = ssub.s32 128, 128
          %876 = vsyncadd [#allocation6], %s875
          %s878 = sshll.u32 [#allocation5], 4
          %s879 = int_to_ptr.vmem [resolvable:$true] %s878
          %881 = dma.hbm_to_vmem [thread:$0]  %s11, 128, %s879, [#allocation6]
        $region32: #{hdr_forward.2} parent=11 // pred_fallthru
          _
        // Predicated region
        $region33: #{hdr_forward.2} parent=11 // pred_check
          %p882 = pneg %p243
        $region34: #{hdr_forward.2} parent=11 // pred_check_branch
          %884 = sbr.rel (%p882) target = $region36
        $region35: #{hdr_forward.2} parent=11 // pred_region
          %s886 = ssub.s32 128, 128
          %887 = vsyncadd [#allocation6], %s886
          %s889 = sshll.u32 [#allocation7], 4
          %s890 = int_to_ptr.vmem [resolvable:$true] %s889
          %892 = dma.hbm_to_vmem [thread:$0]  %s13, 128, %s890, [#allocation6]
        $region36: #{hdr_forward.2} parent=11 // pred_fallthru
          _
        // Predicated region
        $region37: #{hdr_forward.2} parent=11 // pred_check
          %p893 = pneg %p264
        $region38: #{hdr_forward.2} parent=11 // pred_check_branch
          %895 = sbr.rel (%p893) target = $region40
        $region39: #{hdr_forward.2} parent=11 // pred_region
          %s897 = ssub.s32 256, 256
          %898 = vsyncadd [#allocation9], %s897
          %s899 = sshll.u32 [#allocation8], 4
          %s900 = int_to_ptr.vmem [resolvable:$true] %s899
          %905 = dma.hbm_to_vmem [thread:$0]  %s15, 256, %s900, [#allocation9], 128, 128, 8
        $region40: #{hdr_forward.2} parent=11 // pred_fallthru
          _
        // Predicated region
        $region41: #{hdr_forward.2} parent=11 // pred_check
          %p906 = pneg %p285
        $region42: #{hdr_forward.2} parent=11 // pred_check_branch
          %908 = sbr.rel (%p906) target = $region44
        $region43: #{hdr_forward.2} parent=11 // pred_region
          %s910 = ssub.s32 256, 256
          %911 = vsyncadd [#allocation9], %s910
          %s912 = sshll.u32 [#allocation10], 4
          %s913 = int_to_ptr.vmem [resolvable:$true] %s912
          %918 = dma.hbm_to_vmem [thread:$0]  %s17, 256, %s913, [#allocation9], 128, 128, 8
        $region44: #{hdr_forward.2} parent=11 // pred_fallthru
          _
        // Predicated region
        $region45: #{hdr_forward.2} parent=11 // pred_check
          %p919 = pneg %p306
        $region46: #{hdr_forward.2} parent=11 // pred_check_branch
          %921 = sbr.rel (%p919) target = $region48
        $region47: #{hdr_forward.2} parent=11 // pred_region
          %s923 = ssub.s32 512, 512
          %924 = vsyncadd [#allocation12], %s923
          %s925 = sshll.u32 [#allocation11], 4
          %s926 = int_to_ptr.vmem [resolvable:$true] %s925
          %931 = dma.hbm_to_vmem [thread:$0]  %s19, 512, %s926, [#allocation12], 256, 256, 16
        $region48: #{hdr_forward.2} parent=11 // pred_fallthru
          _
        // Predicated region
        $region49: #{hdr_forward.2} parent=11 // pred_check
          %p932 = pneg %p327
        $region50: #{hdr_forward.2} parent=11 // pred_check_branch
          %934 = sbr.rel (%p932) target = $region52
        $region51: #{hdr_forward.2} parent=11 // pred_region
          %s936 = ssub.s32 256, 256
          %937 = vsyncadd [#allocation12], %s936
          %s938 = sshll.u32 [#allocation13], 4
          %s939 = int_to_ptr.vmem [resolvable:$true] %s938
          %944 = dma.hbm_to_vmem [thread:$0]  %s21, 256, %s939, [#allocation12], 128, 128, 8
        $region52: #{hdr_forward.2} parent=11 // pred_fallthru
          _
        // Predicated region
        $region53: #{hdr_forward.2} parent=11 // pred_check
          %p945 = pneg %p348
        $region54: #{hdr_forward.2} parent=11 // pred_check_branch
          %947 = sbr.rel (%p945) target = $region56
        $region55: #{hdr_forward.2} parent=11 // pred_region
          %s949 = ssub.s32 512, 512
          %950 = vsyncadd [#allocation15], %s949
          %s951 = sshll.u32 [#allocation14], 4
          %s952 = int_to_ptr.vmem [resolvable:$true] %s951
          %957 = dma.hbm_to_vmem [thread:$0]  %s23, 512, %s952, [#allocation15], 256, 256, 16
        $region56: #{hdr_forward.2} parent=11 // pred_fallthru
          _
        // Predicated region
        $region57: #{hdr_forward.2} parent=11 // pred_check
          %p958 = pneg %p369
        $region58: #{hdr_forward.2} parent=11 // pred_check_branch
          %960 = sbr.rel (%p958) target = $region60
        $region59: #{hdr_forward.2} parent=11 // pred_region
          %s962 = ssub.s32 256, 256
          %963 = vsyncadd [#allocation15], %s962
          %s964 = sshll.u32 [#allocation16], 4
          %s965 = int_to_ptr.vmem [resolvable:$true] %s964
          %970 = dma.hbm_to_vmem [thread:$0]  %s25, 256, %s965, [#allocation15], 128, 128, 8
        $region60: #{hdr_forward.2} parent=11 // pred_fallthru
          _
        // Predicated region
        $region61: #{hdr_forward.2} parent=11 // pred_check
          %p971 = pneg %p390
        $region62: #{hdr_forward.2} parent=11 // pred_check_branch
          %973 = sbr.rel (%p971) target = $region64
        $region63: #{hdr_forward.2} parent=11 // pred_region
          %s975 = ssub.s32 512, 512
          %976 = vsyncadd [#allocation18], %s975
          %s977 = sshll.u32 [#allocation17], 4
          %s978 = int_to_ptr.vmem [resolvable:$true] %s977
          %983 = dma.hbm_to_vmem [thread:$0]  %s27, 512, %s978, [#allocation18], 256, 256, 16
        $region64: #{hdr_forward.2} parent=11 // pred_fallthru
          _
        // Predicated region
        $region65: #{hdr_forward.2} parent=11 // pred_check
          %p984 = pneg %p411
        $region66: #{hdr_forward.2} parent=11 // pred_check_branch
          %986 = sbr.rel (%p984) target = $region68
        $region67: #{hdr_forward.2} parent=11 // pred_region
          %s988 = ssub.s32 256, 256
          %989 = vsyncadd [#allocation18], %s988
          %s990 = sshll.u32 [#allocation19], 4
          %s991 = int_to_ptr.vmem [resolvable:$true] %s990
          %996 = dma.hbm_to_vmem [thread:$0]  %s29, 256, %s991, [#allocation18], 128, 128, 8
        $region68: #{hdr_forward.2} parent=11 // pred_fallthru
          _
        // Predicated region
        $region69: #{hdr_forward.2} parent=11 // pred_check
          %p997 = pneg %p432
        $region70: #{hdr_forward.2} parent=11 // pred_check_branch
          %999 = sbr.rel (%p997) target = $region72
        $region71: #{hdr_forward.2} parent=11 // pred_region
          %s1001 = ssub.s32 512, 512
          %1002 = vsyncadd [#allocation21], %s1001
          %s1003 = sshll.u32 [#allocation20], 4
          %s1004 = int_to_ptr.vmem [resolvable:$true] %s1003
          %1009 = dma.hbm_to_vmem [thread:$0]  %s31, 512, %s1004, [#allocation21], 256, 256, 16
        $region72: #{hdr_forward.2} parent=11 // pred_fallthru
          _
        // Predicated region
        $region73: #{hdr_forward.2} parent=11 // pred_check
          %p1010 = pneg %p453
        $region74: #{hdr_forward.2} parent=11 // pred_check_branch
          %1012 = sbr.rel (%p1010) target = $region76
        $region75: #{hdr_forward.2} parent=11 // pred_region
          %s1014 = ssub.s32 256, 256
          %1015 = vsyncadd [#allocation21], %s1014
          %s1016 = sshll.u32 [#allocation22], 4
          %s1017 = int_to_ptr.vmem [resolvable:$true] %s1016
          %1022 = dma.hbm_to_vmem [thread:$0]  %s33, 256, %s1017, [#allocation21], 128, 128, 8
        $region76: #{hdr_forward.2} parent=11 // pred_fallthru
          _
        // Predicated region
        $region77: #{hdr_forward.2} parent=11 // pred_check
          %p1023 = pneg %p474
        $region78: #{hdr_forward.2} parent=11 // pred_check_branch
          %1025 = sbr.rel (%p1023) target = $region80
        $region79: #{hdr_forward.2} parent=11 // pred_region
          %s1027 = ssub.s32 512, 512
          %1028 = vsyncadd [#allocation24], %s1027
          %s1029 = sshll.u32 [#allocation23], 4
          %s1030 = int_to_ptr.vmem [resolvable:$true] %s1029
          %1035 = dma.hbm_to_vmem [thread:$0]  %s35, 512, %s1030, [#allocation24], 256, 256, 16
        $region80: #{hdr_forward.2} parent=11 // pred_fallthru
          _
        // Predicated region
        $region81: #{hdr_forward.2} parent=11 // pred_check
          %p1036 = pneg %p495
        $region82: #{hdr_forward.2} parent=11 // pred_check_branch
          %1038 = sbr.rel (%p1036) target = $region84
        $region83: #{hdr_forward.2} parent=11 // pred_region
          %s1040 = ssub.s32 256, 256
          %1041 = vsyncadd [#allocation24], %s1040
          %s1042 = sshll.u32 [#allocation25], 4
          %s1043 = int_to_ptr.vmem [resolvable:$true] %s1042
          %1048 = dma.hbm_to_vmem [thread:$0]  %s37, 256, %s1043, [#allocation24], 128, 128, 8
        $region84: #{hdr_forward.2} parent=11 // pred_fallthru
          _
        // Predicated region
        $region85: #{hdr_forward.2} parent=11 // pred_check
          %p1049 = pneg %p516
        $region86: #{hdr_forward.2} parent=11 // pred_check_branch
          %1051 = sbr.rel (%p1049) target = $region88
        $region87: #{hdr_forward.2} parent=11 // pred_region
          %s1053 = ssub.s32 512, 512
          %1054 = vsyncadd [#allocation27], %s1053
          %s1055 = sshll.u32 [#allocation26], 4
          %s1056 = int_to_ptr.vmem [resolvable:$true] %s1055
          %1061 = dma.hbm_to_vmem [thread:$0]  %s39, 512, %s1056, [#allocation27], 256, 256, 16
        $region88: #{hdr_forward.2} parent=11 // pred_fallthru
          _
        // Predicated region
        $region89: #{hdr_forward.2} parent=11 // pred_check
          %p1062 = pneg %p537
        $region90: #{hdr_forward.2} parent=11 // pred_check_branch
          %1064 = sbr.rel (%p1062) target = $region92
        $region91: #{hdr_forward.2} parent=11 // pred_region
          %s1066 = ssub.s32 256, 256
          %1067 = vsyncadd [#allocation27], %s1066
          %s1068 = sshll.u32 [#allocation28], 4
          %s1069 = int_to_ptr.vmem [resolvable:$true] %s1068
          %1074 = dma.hbm_to_vmem [thread:$0]  %s41, 256, %s1069, [#allocation27], 128, 128, 8
        $region92: #{hdr_forward.2} parent=11 // pred_fallthru
          _
        // Predicated region
        $region93: #{hdr_forward.2} parent=11 // pred_check
          %p1075 = pneg %p558
        $region94: #{hdr_forward.2} parent=11 // pred_check_branch
          %1077 = sbr.rel (%p1075) target = $region96
        $region95: #{hdr_forward.2} parent=11 // pred_region
          %s1079 = ssub.s32 32, 32
          %1080 = vsyncadd [#allocation30], %s1079
          %s1082 = sshll.u32 [#allocation29], 4
          %s1083 = int_to_ptr.vmem [resolvable:$true] %s1082
          %1085 = dma.hbm_to_vmem [thread:$0]  %s43, 32, %s1083, [#allocation30]
        $region96: #{hdr_forward.2} parent=11 // pred_fallthru
          _
        // Predicated region
        $region97: #{hdr_forward.2} parent=11 // pred_check
          %p1086 = pneg %p579
        $region98: #{hdr_forward.2} parent=11 // pred_check_branch
          %1088 = sbr.rel (%p1086) target = $region100
        $region99: #{hdr_forward.2} parent=11 // pred_region
          %s1090 = ssub.s32 32, 32
          %1091 = vsyncadd [#allocation30], %s1090
          %s1093 = sshll.u32 [#allocation31], 4
          %s1094 = int_to_ptr.vmem [resolvable:$true] %s1093
          %1096 = dma.hbm_to_vmem [thread:$0]  %s45, 32, %s1094, [#allocation30]
        $region100: #{hdr_forward.2} parent=11 // pred_fallthru
          _
        // Predicated region
        $region101: #{hdr_forward.2} parent=11 // pred_check
          %p1097 = pneg %p600
        $region102: #{hdr_forward.2} parent=11 // pred_check_branch
          %1099 = sbr.rel (%p1097) target = $region104
        $region103: #{hdr_forward.2} parent=11 // pred_region
          %s1101 = ssub.s32 32, 32
          %1102 = vsyncadd [#allocation33], %s1101
          %s1104 = sshll.u32 [#allocation32], 4
          %s1105 = int_to_ptr.vmem [resolvable:$true] %s1104
          %1107 = dma.hbm_to_vmem [thread:$0]  %s47, 32, %s1105, [#allocation33]
        $region104: #{hdr_forward.2} parent=11 // pred_fallthru
          _
        // Predicated region
        $region105: #{hdr_forward.2} parent=11 // pred_check
          %p1108 = pneg %p621
        $region106: #{hdr_forward.2} parent=11 // pred_check_branch
          %1110 = sbr.rel (%p1108) target = $region108
        $region107: #{hdr_forward.2} parent=11 // pred_region
          %s1112 = ssub.s32 32, 32
          %1113 = vsyncadd [#allocation33], %s1112
          %s1115 = sshll.u32 [#allocation34], 4
          %s1116 = int_to_ptr.vmem [resolvable:$true] %s1115
          %1118 = dma.hbm_to_vmem [thread:$0]  %s49, 32, %s1116, [#allocation33]
        $region108: #{hdr_forward.2} parent=11 // pred_fallthru
          _
        // Predicated region
        $region109: #{hdr_forward.2} parent=11 // pred_check
          %p1119 = pneg %p642
        $region110: #{hdr_forward.2} parent=11 // pred_check_branch
          %1121 = sbr.rel (%p1119) target = $region112
        $region111: #{hdr_forward.2} parent=11 // pred_region
          %s1123 = ssub.s32 256, 256
          %1124 = vsyncadd [#allocation36], %s1123
          %s1125 = sshll.u32 [#allocation35], 4
          %s1126 = int_to_ptr.vmem [resolvable:$true] %s1125
          %1131 = dma.hbm_to_vmem [thread:$0]  %s51, 256, %s1126, [#allocation36], 128, 128, 8
        $region112: #{hdr_forward.2} parent=11 // pred_fallthru
          _
        // Predicated region
        $region113: #{hdr_forward.2} parent=11 // pred_check
          %p1132 = pneg %p663
        $region114: #{hdr_forward.2} parent=11 // pred_check_branch
          %1134 = sbr.rel (%p1132) target = $region116
        $region115: #{hdr_forward.2} parent=11 // pred_region
          %s1136 = ssub.s32 256, 256
          %1137 = vsyncadd [#allocation36], %s1136
          %s1138 = sshll.u32 [#allocation37], 4
          %s1139 = int_to_ptr.vmem [resolvable:$true] %s1138
          %1144 = dma.hbm_to_vmem [thread:$0]  %s53, 256, %s1139, [#allocation36], 128, 128, 8
        $region116: #{hdr_forward.2} parent=11 // pred_fallthru
          _
        // Predicated region
        $region117: #{hdr_forward.2} parent=11 // pred_check
          %p1145 = pneg %p684
        $region118: #{hdr_forward.2} parent=11 // pred_check_branch
          %1147 = sbr.rel (%p1145) target = $region120
        $region119: #{hdr_forward.2} parent=11 // pred_region
          _
        $region120: #{hdr_forward.2} parent=11 // pred_fallthru
          _
        // Predicated region
        $region121: #{hdr_forward.2} parent=11 // pred_check
          %p1148 = pneg %p705
        $region122: #{hdr_forward.2} parent=11 // pred_check_branch
          %1150 = sbr.rel (%p1148) target = $region124
        $region123: #{hdr_forward.2} parent=11 // pred_region
          %s1152 = ssub.s32 384, 384
          %1153 = vsyncadd [#allocation39], %s1152
          %s1154 = sshll.u32 [#allocation38], 4
          %s1155 = int_to_ptr.vmem [resolvable:$true] %s1154
          %1160 = dma.hbm_to_vmem [thread:$0]  %s57, 384, %s1155, [#allocation39], 128, 128, 8
        $region124: #{hdr_forward.2} parent=11 // pred_fallthru
          _
        // Predicated region
        $region125: #{hdr_forward.2} parent=11 // pred_check
          %p1161 = pneg %p726
        $region126: #{hdr_forward.2} parent=11 // pred_check_branch
          %1163 = sbr.rel (%p1161) target = $region128
        $region127: #{hdr_forward.2} parent=11 // pred_region
          %s1165 = ssub.s32 384, 384
          %1166 = vsyncadd [#allocation39], %s1165
          %s1167 = sshll.u32 [#allocation40], 4
          %s1168 = int_to_ptr.vmem [resolvable:$true] %s1167
          %1173 = dma.hbm_to_vmem [thread:$0]  %s59, 384, %s1168, [#allocation39], 128, 128, 8
        $region128: #{hdr_forward.2} parent=11 // pred_fallthru
          _
        // Predicated region
        $region129: #{hdr_forward.2} parent=11 // pred_check
          %p1174 = pneg %p747
        $region130: #{hdr_forward.2} parent=11 // pred_check_branch
          %1176 = sbr.rel (%p1174) target = $region132
        $region131: #{hdr_forward.2} parent=11 // pred_region
          %s1178 = ssub.s32 32768, 32768
          %1179 = vsyncadd [#allocation42], %s1178
          %s1180 = sshll.u32 [#allocation41], 4
          %s1181 = int_to_ptr.vmem [resolvable:$true] %s1180
          %1186 = dma.hbm_to_vmem [thread:$0]  %s61, 32768, %s1181, [#allocation42], 256, 256, 16
        $region132: #{hdr_forward.2} parent=11 // pred_fallthru
          _
        // Predicated region
        $region133: #{hdr_forward.2} parent=11 // pred_check
          %p1187 = pneg %p768
        $region134: #{hdr_forward.2} parent=11 // pred_check_branch
          %1189 = sbr.rel (%p1187) target = $region136
        $region135: #{hdr_forward.2} parent=11 // pred_region
          _
        $region136: #{hdr_forward.2} parent=11 // pred_fallthru
          _
        // Predicated region
        $region137: #{hdr_forward.2} parent=11 // pred_check
          %p1190 = pneg %p789
        $region138: #{hdr_forward.2} parent=11 // pred_check_branch
          %1192 = sbr.rel (%p1190) target = $region140
        $region139: #{hdr_forward.2} parent=11 // pred_region
          _
        $region140: #{hdr_forward.2} parent=11 // pred_fallthru
          _
        // Predicated region
        $region141: #{hdr_forward.2} parent=11 // pred_check
          %p1193 = pneg %p810
        $region142: #{hdr_forward.2} parent=11 // pred_check_branch
          %1195 = sbr.rel (%p1193) target = $region144
        $region143: #{hdr_forward.2} parent=11 // pred_region
          %s1197 = ssub.s32 256, 256
          %1198 = vsyncadd [#allocation42], %s1197
          %s1199 = sshll.u32 [#allocation43], 4
          %s1200 = int_to_ptr.vmem [resolvable:$true] %s1199
          %1205 = dma.hbm_to_vmem [thread:$0]  %s67, 256, %s1200, [#allocation42], 128, 128, 8
        $region144: #{hdr_forward.2} parent=11 // pred_fallthru
          _
      $region12: #{hdr_forward.2} parent=5 // pred_fallthru
        _
      %p1206 = scmp.lt.s32.totalorder %s91, 2
      // Predicated region
      $region145: #{hdr_forward.2} parent=5 // pred_check
        %p1207 = pneg %p1206
      $region146: #{hdr_forward.2} parent=5 // pred_check_branch
        %1209 = sbr.rel (%p1207) target = $region148
      $region147: #{hdr_forward.2} parent=5 // pred_region
        // Predicated region
        $region149: #{hdr_forward.2} parent=147 // pred_check
          %p1210 = pneg %p111
        $region150: #{hdr_forward.2} parent=147 // pred_check_branch
          %1212 = sbr.rel (%p1210) target = $region152
        $region151: #{hdr_forward.2} parent=147 // pred_region
          %p1213 = scmp.lt.s32.totalorder %s91, 1
          %s1214 = scalar_select %p1213, %s91, 1
          %s1215 = smul.addr %s1214, 8
          %s1216 = smul.addr %s1215, 4
          %s1217 = scalar_lea.vmem %s1, %s1216
        $region152: #{hdr_forward.2} parent=147 // pred_fallthru
          _
      $region148: #{hdr_forward.2} parent=5 // pred_fallthru
        _
      %p1218 = scmp.le.s32.totalorder 1, %s91
      %p1219 = scmp.lt.s32.totalorder %s91, 3
      %p1220 = pnand %p1218, %p1219
      %p1221 = pneg %p1220
      // Predicated region
      $region153: #{hdr_forward.2} parent=5 // pred_check
        _
      $region154: #{hdr_forward.2} parent=5 // pred_check_branch
        %1223 = sbr.rel (%p1220) target = $region156
      $region155: #{hdr_forward.2} parent=5 // pred_region
        %s1224 = ssub.s32 %s91, 1
        // Predicated region
        $region157: #{hdr_forward.2} parent=155 // pred_check
          %p1225 = pneg %p201
        $region158: #{hdr_forward.2} parent=155 // pred_check_branch
          %1227 = sbr.rel (%p1225) target = $region160
        $region159: #{hdr_forward.2} parent=155 // pred_region
          %1228 = dma.done [#allocation4], 64
        $region160: #{hdr_forward.2} parent=155 // pred_fallthru
          _
        // Predicated region
        $region161: #{hdr_forward.2} parent=155 // pred_check
          %p1229 = pneg %p222
        $region162: #{hdr_forward.2} parent=155 // pred_check_branch
          %1231 = sbr.rel (%p1229) target = $region164
        $region163: #{hdr_forward.2} parent=155 // pred_region
          %1232 = dma.done [#allocation6], 128
        $region164: #{hdr_forward.2} parent=155 // pred_fallthru
          _
        // Predicated region
        $region165: #{hdr_forward.2} parent=155 // pred_check
          %p1233 = pneg %p243
        $region166: #{hdr_forward.2} parent=155 // pred_check_branch
          %1235 = sbr.rel (%p1233) target = $region168
        $region167: #{hdr_forward.2} parent=155 // pred_region
          %1236 = dma.done [#allocation6], 128
        $region168: #{hdr_forward.2} parent=155 // pred_fallthru
          _
        // Predicated region
        $region169: #{hdr_forward.2} parent=155 // pred_check
          %p1237 = pneg %p264
        $region170: #{hdr_forward.2} parent=155 // pred_check_branch
          %1239 = sbr.rel (%p1237) target = $region172
        $region171: #{hdr_forward.2} parent=155 // pred_region
          %1240 = dma.done [#allocation9], 256
        $region172: #{hdr_forward.2} parent=155 // pred_fallthru
          _
        // Predicated region
        $region173: #{hdr_forward.2} parent=155 // pred_check
          %p1241 = pneg %p285
        $region174: #{hdr_forward.2} parent=155 // pred_check_branch
          %1243 = sbr.rel (%p1241) target = $region176
        $region175: #{hdr_forward.2} parent=155 // pred_region
          %1244 = dma.done [#allocation9], 256
        $region176: #{hdr_forward.2} parent=155 // pred_fallthru
          _
        // Predicated region
        $region177: #{hdr_forward.2} parent=155 // pred_check
          %p1245 = pneg %p306
        $region178: #{hdr_forward.2} parent=155 // pred_check_branch
          %1247 = sbr.rel (%p1245) target = $region180
        $region179: #{hdr_forward.2} parent=155 // pred_region
          %1248 = dma.done [#allocation12], 512
        $region180: #{hdr_forward.2} parent=155 // pred_fallthru
          _
        // Predicated region
        $region181: #{hdr_forward.2} parent=155 // pred_check
          %p1249 = pneg %p327
        $region182: #{hdr_forward.2} parent=155 // pred_check_branch
          %1251 = sbr.rel (%p1249) target = $region184
        $region183: #{hdr_forward.2} parent=155 // pred_region
          %1252 = dma.done [#allocation12], 256
        $region184: #{hdr_forward.2} parent=155 // pred_fallthru
          _
        // Predicated region
        $region185: #{hdr_forward.2} parent=155 // pred_check
          %p1253 = pneg %p348
        $region186: #{hdr_forward.2} parent=155 // pred_check_branch
          %1255 = sbr.rel (%p1253) target = $region188
        $region187: #{hdr_forward.2} parent=155 // pred_region
          %1256 = dma.done [#allocation15], 512
        $region188: #{hdr_forward.2} parent=155 // pred_fallthru
          _
        // Predicated region
        $region189: #{hdr_forward.2} parent=155 // pred_check
          %p1257 = pneg %p369
        $region190: #{hdr_forward.2} parent=155 // pred_check_branch
          %1259 = sbr.rel (%p1257) target = $region192
        $region191: #{hdr_forward.2} parent=155 // pred_region
          %1260 = dma.done [#allocation15], 256
        $region192: #{hdr_forward.2} parent=155 // pred_fallthru
          _
        // Predicated region
        $region193: #{hdr_forward.2} parent=155 // pred_check
          %p1261 = pneg %p390
        $region194: #{hdr_forward.2} parent=155 // pred_check_branch
          %1263 = sbr.rel (%p1261) target = $region196
        $region195: #{hdr_forward.2} parent=155 // pred_region
          %1264 = dma.done [#allocation18], 512
        $region196: #{hdr_forward.2} parent=155 // pred_fallthru
          _
        // Predicated region
        $region197: #{hdr_forward.2} parent=155 // pred_check
          %p1265 = pneg %p411
        $region198: #{hdr_forward.2} parent=155 // pred_check_branch
          %1267 = sbr.rel (%p1265) target = $region200
        $region199: #{hdr_forward.2} parent=155 // pred_region
          %1268 = dma.done [#allocation18], 256
        $region200: #{hdr_forward.2} parent=155 // pred_fallthru
          _
        // Predicated region
        $region201: #{hdr_forward.2} parent=155 // pred_check
          %p1269 = pneg %p432
        $region202: #{hdr_forward.2} parent=155 // pred_check_branch
          %1271 = sbr.rel (%p1269) target = $region204
        $region203: #{hdr_forward.2} parent=155 // pred_region
          %1272 = dma.done [#allocation21], 512
        $region204: #{hdr_forward.2} parent=155 // pred_fallthru
          _
        // Predicated region
        $region205: #{hdr_forward.2} parent=155 // pred_check
          %p1273 = pneg %p453
        $region206: #{hdr_forward.2} parent=155 // pred_check_branch
          %1275 = sbr.rel (%p1273) target = $region208
        $region207: #{hdr_forward.2} parent=155 // pred_region
          %1276 = dma.done [#allocation21], 256
        $region208: #{hdr_forward.2} parent=155 // pred_fallthru
          _
        // Predicated region
        $region209: #{hdr_forward.2} parent=155 // pred_check
          %p1277 = pneg %p474
        $region210: #{hdr_forward.2} parent=155 // pred_check_branch
          %1279 = sbr.rel (%p1277) target = $region212
        $region211: #{hdr_forward.2} parent=155 // pred_region
          %1280 = dma.done [#allocation24], 512
        $region212: #{hdr_forward.2} parent=155 // pred_fallthru
          _
        // Predicated region
        $region213: #{hdr_forward.2} parent=155 // pred_check
          %p1281 = pneg %p495
        $region214: #{hdr_forward.2} parent=155 // pred_check_branch
          %1283 = sbr.rel (%p1281) target = $region216
        $region215: #{hdr_forward.2} parent=155 // pred_region
          %1284 = dma.done [#allocation24], 256
        $region216: #{hdr_forward.2} parent=155 // pred_fallthru
          _
        // Predicated region
        $region217: #{hdr_forward.2} parent=155 // pred_check
          %p1285 = pneg %p516
        $region218: #{hdr_forward.2} parent=155 // pred_check_branch
          %1287 = sbr.rel (%p1285) target = $region220
        $region219: #{hdr_forward.2} parent=155 // pred_region
          %1288 = dma.done [#allocation27], 512
        $region220: #{hdr_forward.2} parent=155 // pred_fallthru
          _
        // Predicated region
        $region221: #{hdr_forward.2} parent=155 // pred_check
          %p1289 = pneg %p537
        $region222: #{hdr_forward.2} parent=155 // pred_check_branch
          %1291 = sbr.rel (%p1289) target = $region224
        $region223: #{hdr_forward.2} parent=155 // pred_region
          %1292 = dma.done [#allocation27], 256
        $region224: #{hdr_forward.2} parent=155 // pred_fallthru
          _
        // Predicated region
        $region225: #{hdr_forward.2} parent=155 // pred_check
          %p1293 = pneg %p558
        $region226: #{hdr_forward.2} parent=155 // pred_check_branch
          %1295 = sbr.rel (%p1293) target = $region228
        $region227: #{hdr_forward.2} parent=155 // pred_region
          %1296 = dma.done [#allocation30], 32
        $region228: #{hdr_forward.2} parent=155 // pred_fallthru
          _
        // Predicated region
        $region229: #{hdr_forward.2} parent=155 // pred_check
          %p1297 = pneg %p579
        $region230: #{hdr_forward.2} parent=155 // pred_check_branch
          %1299 = sbr.rel (%p1297) target = $region232
        $region231: #{hdr_forward.2} parent=155 // pred_region
          %1300 = dma.done [#allocation30], 32
        $region232: #{hdr_forward.2} parent=155 // pred_fallthru
          _
        // Predicated region
        $region233: #{hdr_forward.2} parent=155 // pred_check
          %p1301 = pneg %p600
        $region234: #{hdr_forward.2} parent=155 // pred_check_branch
          %1303 = sbr.rel (%p1301) target = $region236
        $region235: #{hdr_forward.2} parent=155 // pred_region
          %1304 = dma.done [#allocation33], 32
        $region236: #{hdr_forward.2} parent=155 // pred_fallthru
          _
        // Predicated region
        $region237: #{hdr_forward.2} parent=155 // pred_check
          %p1305 = pneg %p621
        $region238: #{hdr_forward.2} parent=155 // pred_check_branch
          %1307 = sbr.rel (%p1305) target = $region240
        $region239: #{hdr_forward.2} parent=155 // pred_region
          %1308 = dma.done [#allocation33], 32
        $region240: #{hdr_forward.2} parent=155 // pred_fallthru
          _
        // Predicated region
        $region241: #{hdr_forward.2} parent=155 // pred_check
          %p1309 = pneg %p642
        $region242: #{hdr_forward.2} parent=155 // pred_check_branch
          %1311 = sbr.rel (%p1309) target = $region244
        $region243: #{hdr_forward.2} parent=155 // pred_region
          %1312 = dma.done [#allocation36], 256
        $region244: #{hdr_forward.2} parent=155 // pred_fallthru
          _
        // Predicated region
        $region245: #{hdr_forward.2} parent=155 // pred_check
          %p1313 = pneg %p663
        $region246: #{hdr_forward.2} parent=155 // pred_check_branch
          %1315 = sbr.rel (%p1313) target = $region248
        $region247: #{hdr_forward.2} parent=155 // pred_region
          %1316 = dma.done [#allocation36], 256
        $region248: #{hdr_forward.2} parent=155 // pred_fallthru
          _
        // Predicated region
        $region249: #{hdr_forward.2} parent=155 // pred_check
          %p1317 = pneg %p705
        $region250: #{hdr_forward.2} parent=155 // pred_check_branch
          %1319 = sbr.rel (%p1317) target = $region252
        $region251: #{hdr_forward.2} parent=155 // pred_region
          %1320 = dma.done [#allocation39], 384
        $region252: #{hdr_forward.2} parent=155 // pred_fallthru
          _
        // Predicated region
        $region253: #{hdr_forward.2} parent=155 // pred_check
          %p1321 = pneg %p726
        $region254: #{hdr_forward.2} parent=155 // pred_check_branch
          %1323 = sbr.rel (%p1321) target = $region256
        $region255: #{hdr_forward.2} parent=155 // pred_region
          %1324 = dma.done [#allocation39], 384
        $region256: #{hdr_forward.2} parent=155 // pred_fallthru
          _
        // Predicated region
        $region257: #{hdr_forward.2} parent=155 // pred_check
          %p1325 = pneg %p747
        $region258: #{hdr_forward.2} parent=155 // pred_check_branch
          %1327 = sbr.rel (%p1325) target = $region260
        $region259: #{hdr_forward.2} parent=155 // pred_region
          %1328 = dma.done [#allocation42], 32768
        $region260: #{hdr_forward.2} parent=155 // pred_fallthru
          _
        // Predicated region
        $region261: #{hdr_forward.2} parent=155 // pred_check
          %p1329 = pneg %p810
        $region262: #{hdr_forward.2} parent=155 // pred_check_branch
          %1331 = sbr.rel (%p1329) target = $region264
        $region263: #{hdr_forward.2} parent=155 // pred_region
          %1332 = dma.done [#allocation42], 256
        $region264: #{hdr_forward.2} parent=155 // pred_fallthru
          _
        %p1333 = scmp.lt.s32.totalorder %s96, 1
        %s1334 = scalar_select %p1333, %s96, 1
        %s1335 = smul.addr %s1334, 8
        %s1336 = smul.addr %s1335, 4
        %s1337 = scalar_lea.vmem %s1, %s1336
        %p1338 = pneg %p117
        %p1339 = pneg %p114
        %p1340 = pneg %p138
        %p1341 = pneg %p135
        %p1342 = pneg %p159
        %p1343 = pneg %p156
        %p1344 = pneg %p180
        %p1345 = pneg %p177
        %p1346 = pneg %p201
        %p1347 = pneg %p198
        %p1348 = pneg %p222
        %p1349 = pneg %p219
        %p1350 = pneg %p243
        %p1351 = pneg %p240
        %p1352 = pneg %p264
        %p1353 = pneg %p261
        %p1354 = pneg %p285
        %p1355 = pneg %p282
        %p1356 = pneg %p306
        %p1357 = pneg %p303
        %p1358 = pneg %p327
        %p1359 = pneg %p324
        %p1360 = pneg %p348
        %p1361 = pneg %p345
        %p1362 = pneg %p369
        %p1363 = pneg %p366
        %p1364 = pneg %p390
        %p1365 = pneg %p387
        %p1366 = pneg %p411
        %p1367 = pneg %p408
        %p1368 = pneg %p432
        %p1369 = pneg %p429
        %p1370 = pneg %p453
        %p1371 = pneg %p450
        %p1372 = pneg %p474
        %p1373 = pneg %p471
        %p1374 = pneg %p495
        %p1375 = pneg %p492
        %p1376 = pneg %p516
        %p1377 = pneg %p513
        %p1378 = pneg %p537
        %p1379 = pneg %p534
        %p1380 = pneg %p558
        %p1381 = pneg %p555
        %p1382 = pneg %p579
        %p1383 = pneg %p576
        %p1384 = pneg %p600
        %p1385 = pneg %p597
        %p1386 = pneg %p621
        %p1387 = pneg %p618
        %p1388 = pneg %p642
        %p1389 = pneg %p639
        %p1390 = pneg %p663
        %p1391 = pneg %p660
        %p1392 = pneg %p684
        %p1393 = pneg %p681
        %p1394 = pneg %p705
        %p1395 = pneg %p702
        %p1396 = pneg %p726
        %p1397 = pneg %p723
        %p1398 = pneg %p747
        %p1399 = pneg %p744
        %p1400 = pneg %p768
        %p1401 = pneg %p765
        %p1402 = pneg %p789
        %p1403 = pneg %p786
        %p1404 = pneg %p810
        %p1405 = pneg %p807
        %p1406 = pneg %p836
        %p1407 = pneg %p833
        %p1408 = scmp.lt.s32.totalorder %s96, 1
        %s1409 = scalar_select %p1408, %s96, 1
        %s1410 = smul.addr %s1409, 3
        %s1411 = smul.addr %s1410, 8
        %s1412 = scalar_lea.vmem %s69, %s1411
        %p1413 = scmp.lt.s32.totalorder %s96, 1
        %s1414 = scalar_select %p1413, %s96, 1
        %s1415 = smul.addr %s1414, 8
        %s1416 = smul.addr %s1415, 4
        %s1417 = scalar_lea.vmem %s1, %s1416
        %p1418 = scmp.lt.s32.totalorder %s96, 1
        %s1419 = scalar_select %p1418, %s96, 1
        %s1420 = smul.addr %s1419, 3
        %s1421 = smul.addr %s1420, 8
        %s1422 = scalar_lea.vmem %s69, %s1421
        %v1423 = vld [vmem:[%s1417] sm:$0x77]
        %v1424 = vld [vmem:[%s1417 + $0x8] sm:$0x77]
        %v1425 = vld [vmem:[%s1417 + $0x10] sm:$0x77]
        %v1426 = vld [vmem:[%s1417 + $0x18] sm:$0x77]
        %v1427 = vlaneseq
        %v1428 = vand.u32 %v1427, 127
        %v1429 = vadd.s32 %v1428, 128
        %v1430 = vadd.s32 %v1428, 256
        %v1431 = vadd.s32 %v1428, 384
        %v1432 = vadd.s32 %v1428, 512
        %v1433 = vadd.s32 %v1428, 640
        %v1434 = vadd.s32 %v1428, 768
        %v1435 = vadd.s32 %v1428, 896
        %v1436 = vand.u32 %v1428, 31
        %v1437 = vand.u32 %v1429, 31
        %v1438 = vand.u32 %v1430, 31
        %v1439 = vand.u32 %v1431, 31
        %v1440 = vand.u32 %v1432, 31
        %v1441 = vand.u32 %v1433, 31
        %v1442 = vand.u32 %v1434, 31
        %v1443 = vand.u32 %v1435, 31
        %vm1444 = vcmp.gt.s32.totalorder %v1436, 0
        %vm1445 = vcmp.gt.s32.totalorder %v1437, 0
        %vm1446 = vcmp.gt.s32.totalorder %v1438, 0
        %vm1447 = vcmp.gt.s32.totalorder %v1439, 0
        %vm1448 = vcmp.gt.s32.totalorder %v1440, 0
        %vm1449 = vcmp.gt.s32.totalorder %v1441, 0
        %vm1450 = vcmp.gt.s32.totalorder %v1442, 0
        %vm1451 = vcmp.gt.s32.totalorder %v1443, 0
        %vm1452 = vcmp.lt.s32.totalorder %v1436, 31
        %vm1453 = vcmp.lt.s32.totalorder %v1437, 31
        %vm1454 = vcmp.lt.s32.totalorder %v1438, 31
        %vm1455 = vcmp.lt.s32.totalorder %v1439, 31
        %vm1456 = vcmp.lt.s32.totalorder %v1440, 31
        %vm1457 = vcmp.lt.s32.totalorder %v1441, 31
        %vm1458 = vcmp.lt.s32.totalorder %v1442, 31
        %vm1459 = vcmp.lt.s32.totalorder %v1443, 31
        %v1464 = vcombine.high %v1423, %v1423
        %v1465 = vcombine.high %v1424, %v1424
        %v1466 = vcombine.high %v1425, %v1425
        %v1467 = vcombine.high %v1426, %v1426
        %1468 = vrot.lane.b32.xlu0 %v1423, 33
        %v1469 = vpop.permute.xlu0 %1468
        %1470 = vrot.lane.b32.xlu0 %v1464, 33
        %v1471 = vpop.permute.xlu0 %1470
        %1472 = vrot.lane.b32.xlu0 %v1424, 33
        %v1473 = vpop.permute.xlu0 %1472
        %1474 = vrot.lane.b32.xlu0 %v1465, 33
        %v1475 = vpop.permute.xlu0 %1474
        %1476 = vrot.lane.b32.xlu0 %v1425, 33
        %v1477 = vpop.permute.xlu0 %1476
        %1478 = vrot.lane.b32.xlu0 %v1466, 33
        %v1479 = vpop.permute.xlu0 %1478
        %1480 = vrot.lane.b32.xlu0 %v1426, 33
        %v1481 = vpop.permute.xlu0 %1480
        %1482 = vrot.lane.b32.xlu0 %v1467, 33
        %v1483 = vpop.permute.xlu0 %1482
        %vm1484 = vcmask 269312
        %v1485 = vsel %vm1484, %v1469, %v1471
        %v1486 = vsel %vm1484, %v1471, %v1473
        %v1487 = vsel %vm1484, %v1473, %v1475
        %v1488 = vsel %vm1484, %v1475, %v1477
        %v1489 = vsel %vm1484, %v1477, %v1479
        %v1490 = vsel %vm1484, %v1479, %v1481
        %v1491 = vsel %vm1484, %v1481, %v1483
        %v1500 = vsel %vm1484, 0.0, %v1469
        %v1501 = vsel %vm1444, 1, 0
        %v1502 = vsel %vm1445, 1, 0
        %v1503 = vsel %vm1446, 1, 0
        %v1504 = vsel %vm1447, 1, 0
        %v1505 = vsel %vm1448, 1, 0
        %v1506 = vsel %vm1449, 1, 0
        %v1507 = vsel %vm1450, 1, 0
        %v1508 = vsel %vm1451, 1, 0
        %vm1509 = vcmp.eq.s32.totalorder %v1501, 1
        %vm1510 = vcmp.eq.s32.totalorder %v1502, 1
        %vm1511 = vcmp.eq.s32.totalorder %v1503, 1
        %vm1512 = vcmp.eq.s32.totalorder %v1504, 1
        %vm1513 = vcmp.eq.s32.totalorder %v1505, 1
        %vm1514 = vcmp.eq.s32.totalorder %v1506, 1
        %vm1515 = vcmp.eq.s32.totalorder %v1507, 1
        %vm1516 = vcmp.eq.s32.totalorder %v1508, 1
        %v1517 = vsel %vm1509, %v1500, 0.0
        %v1518 = vsel %vm1510, %v1485, 0.0
        %v1519 = vsel %vm1511, %v1486, 0.0
        %v1520 = vsel %vm1512, %v1487, 0.0
        %v1521 = vsel %vm1513, %v1488, 0.0
        %v1522 = vsel %vm1514, %v1489, 0.0
        %v1523 = vsel %vm1515, %v1490, 0.0
        %v1524 = vsel %vm1516, %v1491, 0.0
        %1525 = vrot.lane.b32.xlu0 %v1423, 32
        %v1526 = vpop.permute.xlu0 %1525
        %1527 = vrot.lane.b32.xlu0 %v1464, 32
        %v1528 = vpop.permute.xlu0 %1527
        %1529 = vrot.lane.b32.xlu0 %v1424, 32
        %v1530 = vpop.permute.xlu0 %1529
        %1531 = vrot.lane.b32.xlu0 %v1465, 32
        %v1532 = vpop.permute.xlu0 %1531
        %1533 = vrot.lane.b32.xlu0 %v1425, 32
        %v1534 = vpop.permute.xlu0 %1533
        %1535 = vrot.lane.b32.xlu0 %v1466, 32
        %v1536 = vpop.permute.xlu0 %1535
        %1537 = vrot.lane.b32.xlu0 %v1426, 32
        %v1538 = vpop.permute.xlu0 %1537
        %1539 = vrot.lane.b32.xlu0 %v1467, 32
        %v1540 = vpop.permute.xlu0 %1539
        %vm1541 = vcmask 261120
        %v1542 = vsel %vm1541, %v1526, %v1528
        %v1543 = vsel %vm1541, %v1528, %v1530
        %v1544 = vsel %vm1541, %v1530, %v1532
        %v1545 = vsel %vm1541, %v1532, %v1534
        %v1546 = vsel %vm1541, %v1534, %v1536
        %v1547 = vsel %vm1541, %v1536, %v1538
        %v1548 = vsel %vm1541, %v1538, %v1540
        %v1550 = vsel %vm1541, 0.0, %v1526
        %1551 = vrot.lane.b32.xlu0 %v1423, 31
        %v1552 = vpop.permute.xlu0 %1551
        %1553 = vrot.lane.b32.xlu0 %v1464, 31
        %v1554 = vpop.permute.xlu0 %1553
        %1555 = vrot.lane.b32.xlu0 %v1424, 31
        %v1556 = vpop.permute.xlu0 %1555
        %1557 = vrot.lane.b32.xlu0 %v1465, 31
        %v1558 = vpop.permute.xlu0 %1557
        %1559 = vrot.lane.b32.xlu0 %v1425, 31
        %v1560 = vpop.permute.xlu0 %1559
        %1561 = vrot.lane.b32.xlu0 %v1466, 31
        %v1562 = vpop.permute.xlu0 %1561
        %1563 = vrot.lane.b32.xlu0 %v1426, 31
        %v1564 = vpop.permute.xlu0 %1563
        %1565 = vrot.lane.b32.xlu0 %v1467, 31
        %v1566 = vpop.permute.xlu0 %1565
        %vm1567 = vcmask 252928
        %v1568 = vsel %vm1567, %v1552, %v1554
        %v1569 = vsel %vm1567, %v1554, %v1556
        %v1570 = vsel %vm1567, %v1556, %v1558
        %v1571 = vsel %vm1567, %v1558, %v1560
        %v1572 = vsel %vm1567, %v1560, %v1562
        %v1573 = vsel %vm1567, %v1562, %v1564
        %v1574 = vsel %vm1567, %v1564, %v1566
        %v1583 = vsel %vm1567, 0.0, %v1552
        %v1584 = vsel %vm1452, 1, 0
        %v1585 = vsel %vm1453, 1, 0
        %v1586 = vsel %vm1454, 1, 0
        %v1587 = vsel %vm1455, 1, 0
        %v1588 = vsel %vm1456, 1, 0
        %v1589 = vsel %vm1457, 1, 0
        %v1590 = vsel %vm1458, 1, 0
        %v1591 = vsel %vm1459, 1, 0
        %vm1592 = vcmp.eq.s32.totalorder %v1584, 1
        %vm1593 = vcmp.eq.s32.totalorder %v1585, 1
        %vm1594 = vcmp.eq.s32.totalorder %v1586, 1
        %vm1595 = vcmp.eq.s32.totalorder %v1587, 1
        %vm1596 = vcmp.eq.s32.totalorder %v1588, 1
        %vm1597 = vcmp.eq.s32.totalorder %v1589, 1
        %vm1598 = vcmp.eq.s32.totalorder %v1590, 1
        %vm1599 = vcmp.eq.s32.totalorder %v1591, 1
        %v1600 = vsel %vm1592, %v1583, 0.0
        %v1601 = vsel %vm1593, %v1568, 0.0
        %v1602 = vsel %vm1594, %v1569, 0.0
        %v1603 = vsel %vm1595, %v1570, 0.0
        %v1604 = vsel %vm1596, %v1571, 0.0
        %v1605 = vsel %vm1597, %v1572, 0.0
        %v1606 = vsel %vm1598, %v1573, 0.0
        %v1607 = vsel %vm1599, %v1574, 0.0
        %1608 = vrot.lane.b32.xlu0 %v1423, 1
        %v1609 = vpop.permute.xlu0 %1608
        %1610 = vrot.lane.b32.xlu0 %v1464, 1
        %v1611 = vpop.permute.xlu0 %1610
        %1612 = vrot.lane.b32.xlu0 %v1424, 1
        %v1613 = vpop.permute.xlu0 %1612
        %1614 = vrot.lane.b32.xlu0 %v1465, 1
        %v1615 = vpop.permute.xlu0 %1614
        %1616 = vrot.lane.b32.xlu0 %v1425, 1
        %v1617 = vpop.permute.xlu0 %1616
        %1618 = vrot.lane.b32.xlu0 %v1466, 1
        %v1619 = vpop.permute.xlu0 %1618
        %1620 = vrot.lane.b32.xlu0 %v1426, 1
        %v1621 = vpop.permute.xlu0 %1620
        %1622 = vrot.lane.b32.xlu0 %v1467, 1
        %v1623 = vpop.permute.xlu0 %1622
        %vm1624 = vcmask 7168
        %v1625 = vsel %vm1624, %v1609, %v1611
        %v1626 = vsel %vm1624, %v1611, %v1613
        %v1627 = vsel %vm1624, %v1613, %v1615
        %v1628 = vsel %vm1624, %v1615, %v1617
        %v1629 = vsel %vm1624, %v1617, %v1619
        %v1630 = vsel %vm1624, %v1619, %v1621
        %v1631 = vsel %vm1624, %v1621, %v1623
        %v1640 = vsel %vm1624, 0.0, %v1609
        %v1641 = vsel %vm1509, %v1640, 0.0
        %v1642 = vsel %vm1510, %v1625, 0.0
        %v1643 = vsel %vm1511, %v1626, 0.0
        %v1644 = vsel %vm1512, %v1627, 0.0
        %v1645 = vsel %vm1513, %v1628, 0.0
        %v1646 = vsel %vm1514, %v1629, 0.0
        %v1647 = vsel %vm1515, %v1630, 0.0
        %v1648 = vsel %vm1516, %v1631, 0.0
        %1649 = vrot.lane.b32.xlu0 %v1423, 127
        %v1650 = vpop.permute.xlu0 %1649
        %1651 = vrot.lane.b32.xlu0 %v1464, 127
        %v1652 = vpop.permute.xlu0 %1651
        %1653 = vrot.lane.b32.xlu0 %v1424, 127
        %v1654 = vpop.permute.xlu0 %1653
        %1655 = vrot.lane.b32.xlu0 %v1465, 127
        %v1656 = vpop.permute.xlu0 %1655
        %1657 = vrot.lane.b32.xlu0 %v1425, 127
        %v1658 = vpop.permute.xlu0 %1657
        %1659 = vrot.lane.b32.xlu0 %v1466, 127
        %v1660 = vpop.permute.xlu0 %1659
        %1661 = vrot.lane.b32.xlu0 %v1426, 127
        %v1662 = vpop.permute.xlu0 %1661
        %1663 = vrot.lane.b32.xlu0 %v1467, 127
        %v1664 = vpop.permute.xlu0 %1663
        %vm1665 = vcmask 1039360
        %v1666 = vsel %vm1665, %v1650, %v1652
        %v1667 = vsel %vm1665, %v1652, %v1654
        %v1668 = vsel %vm1665, %v1654, %v1656
        %v1669 = vsel %vm1665, %v1656, %v1658
        %v1670 = vsel %vm1665, %v1658, %v1660
        %v1671 = vsel %vm1665, %v1660, %v1662
        %v1672 = vsel %vm1665, %v1662, %v1664
        %v1681 = vsel %vm1665, %v1664, 0.0
        %v1682 = vsel %vm1592, %v1666, 0.0
        %v1683 = vsel %vm1593, %v1667, 0.0
        %v1684 = vsel %vm1594, %v1668, 0.0
        %v1685 = vsel %vm1595, %v1669, 0.0
        %v1686 = vsel %vm1596, %v1670, 0.0
        %v1687 = vsel %vm1597, %v1671, 0.0
        %v1688 = vsel %vm1598, %v1672, 0.0
        %v1689 = vsel %vm1599, %v1681, 0.0
        %1690 = vrot.lane.b32.xlu0 %v1423, 97
        %v1691 = vpop.permute.xlu0 %1690
        %1692 = vrot.lane.b32.xlu0 %v1464, 97
        %v1693 = vpop.permute.xlu0 %1692
        %1694 = vrot.lane.b32.xlu0 %v1424, 97
        %v1695 = vpop.permute.xlu0 %1694
        %1696 = vrot.lane.b32.xlu0 %v1465, 97
        %v1697 = vpop.permute.xlu0 %1696
        %1698 = vrot.lane.b32.xlu0 %v1425, 97
        %v1699 = vpop.permute.xlu0 %1698
        %1700 = vrot.lane.b32.xlu0 %v1466, 97
        %v1701 = vpop.permute.xlu0 %1700
        %1702 = vrot.lane.b32.xlu0 %v1426, 97
        %v1703 = vpop.permute.xlu0 %1702
        %1704 = vrot.lane.b32.xlu0 %v1467, 97
        %v1705 = vpop.permute.xlu0 %1704
        %vm1706 = vcmask 793600
        %v1707 = vsel %vm1706, %v1691, %v1693
        %v1708 = vsel %vm1706, %v1693, %v1695
        %v1709 = vsel %vm1706, %v1695, %v1697
        %v1710 = vsel %vm1706, %v1697, %v1699
        %v1711 = vsel %vm1706, %v1699, %v1701
        %v1712 = vsel %vm1706, %v1701, %v1703
        %v1713 = vsel %vm1706, %v1703, %v1705
        %v1722 = vsel %vm1706, %v1705, 0.0
        %v1723 = vsel %vm1509, %v1707, 0.0
        %v1724 = vsel %vm1510, %v1708, 0.0
        %v1725 = vsel %vm1511, %v1709, 0.0
        %v1726 = vsel %vm1512, %v1710, 0.0
        %v1727 = vsel %vm1513, %v1711, 0.0
        %v1728 = vsel %vm1514, %v1712, 0.0
        %v1729 = vsel %vm1515, %v1713, 0.0
        %v1730 = vsel %vm1516, %v1722, 0.0
        %1731 = vrot.lane.b32.xlu0 %v1423, 96
        %v1732 = vpop.permute.xlu0 %1731
        %1733 = vrot.lane.b32.xlu0 %v1464, 96
        %v1734 = vpop.permute.xlu0 %1733
        %1735 = vrot.lane.b32.xlu0 %v1424, 96
        %v1736 = vpop.permute.xlu0 %1735
        %1737 = vrot.lane.b32.xlu0 %v1465, 96
        %v1738 = vpop.permute.xlu0 %1737
        %1739 = vrot.lane.b32.xlu0 %v1425, 96
        %v1740 = vpop.permute.xlu0 %1739
        %1741 = vrot.lane.b32.xlu0 %v1466, 96
        %v1742 = vpop.permute.xlu0 %1741
        %1743 = vrot.lane.b32.xlu0 %v1426, 96
        %v1744 = vpop.permute.xlu0 %1743
        %1745 = vrot.lane.b32.xlu0 %v1467, 96
        %v1746 = vpop.permute.xlu0 %1745
        %vm1747 = vcmask 785408
        %v1748 = vsel %vm1747, %v1732, %v1734
        %v1749 = vsel %vm1747, %v1734, %v1736
        %v1750 = vsel %vm1747, %v1736, %v1738
        %v1751 = vsel %vm1747, %v1738, %v1740
        %v1752 = vsel %vm1747, %v1740, %v1742
        %v1753 = vsel %vm1747, %v1742, %v1744
        %v1754 = vsel %vm1747, %v1744, %v1746
        %v1756 = vsel %vm1747, %v1746, 0.0
        %1757 = vrot.lane.b32.xlu0 %v1423, 95
        %v1758 = vpop.permute.xlu0 %1757
        %1759 = vrot.lane.b32.xlu0 %v1464, 95
        %v1760 = vpop.permute.xlu0 %1759
        %1761 = vrot.lane.b32.xlu0 %v1424, 95
        %v1762 = vpop.permute.xlu0 %1761
        %1763 = vrot.lane.b32.xlu0 %v1465, 95
        %v1764 = vpop.permute.xlu0 %1763
        %1765 = vrot.lane.b32.xlu0 %v1425, 95
        %v1766 = vpop.permute.xlu0 %1765
        %1767 = vrot.lane.b32.xlu0 %v1466, 95
        %v1768 = vpop.permute.xlu0 %1767
        %1769 = vrot.lane.b32.xlu0 %v1426, 95
        %v1770 = vpop.permute.xlu0 %1769
        %1771 = vrot.lane.b32.xlu0 %v1467, 95
        %v1772 = vpop.permute.xlu0 %1771
        %vm1773 = vcmask 777216
        %v1774 = vsel %vm1773, %v1758, %v1760
        %v1775 = vsel %vm1773, %v1760, %v1762
        %v1776 = vsel %vm1773, %v1762, %v1764
        %v1777 = vsel %vm1773, %v1764, %v1766
        %v1778 = vsel %vm1773, %v1766, %v1768
        %v1779 = vsel %vm1773, %v1768, %v1770
        %v1780 = vsel %vm1773, %v1770, %v1772
        %v1789 = vsel %vm1773, %v1772, 0.0
        %v1790 = vsel %vm1592, %v1774, 0.0
        %v1791 = vsel %vm1593, %v1775, 0.0
        %v1792 = vsel %vm1594, %v1776, 0.0
        %v1793 = vsel %vm1595, %v1777, 0.0
        %v1794 = vsel %vm1596, %v1778, 0.0
        %v1795 = vsel %vm1597, %v1779, 0.0
        %v1796 = vsel %vm1598, %v1780, 0.0
        %v1797 = vsel %vm1599, %v1789, 0.0
        %v1799 = vrot.slane %v1550, 5
        %v1800 = vrot.slane %v1542, 5
        %v1801 = vrot.slane %v1543, 5
        %v1802 = vrot.slane %v1544, 5
        %v1803 = vrot.slane %v1545, 5
        %v1804 = vrot.slane %v1546, 5
        %v1805 = vrot.slane %v1547, 5
        %v1806 = vrot.slane %v1548, 5
        %v1823 = vrot.slane %v1600, 2
        %v1824 = vrot.slane %v1601, 2
        %v1825 = vrot.slane %v1602, 2
        %v1826 = vrot.slane %v1603, 2
        %v1827 = vrot.slane %v1604, 2
        %v1828 = vrot.slane %v1605, 2
        %v1829 = vrot.slane %v1606, 2
        %v1830 = vrot.slane %v1607, 2
        %v1847 = vrot.slane %v1641, 7
        %v1848 = vrot.slane %v1642, 7
        %v1849 = vrot.slane %v1643, 7
        %v1850 = vrot.slane %v1644, 7
        %v1851 = vrot.slane %v1645, 7
        %v1852 = vrot.slane %v1646, 7
        %v1853 = vrot.slane %v1647, 7
        %v1854 = vrot.slane %v1648, 7
        %v1863 = vcombine.low %v1423, %v1423
        %v1864 = vcombine.low %v1424, %v1424
        %v1865 = vcombine.low %v1425, %v1425
        %v1866 = vcombine.low %v1426, %v1426
        %v1879 = vrot.slane %v1682, 1
        %v1880 = vrot.slane %v1683, 1
        %v1881 = vrot.slane %v1684, 1
        %v1882 = vrot.slane %v1685, 1
        %v1883 = vrot.slane %v1686, 1
        %v1884 = vrot.slane %v1687, 1
        %v1885 = vrot.slane %v1688, 1
        %v1886 = vrot.slane %v1689, 1
        %v1903 = vrot.slane %v1723, 6
        %v1904 = vrot.slane %v1724, 6
        %v1905 = vrot.slane %v1725, 6
        %v1906 = vrot.slane %v1726, 6
        %v1907 = vrot.slane %v1727, 6
        %v1908 = vrot.slane %v1728, 6
        %v1909 = vrot.slane %v1729, 6
        %v1910 = vrot.slane %v1730, 6
        %v1920 = vrot.slane %v1748, 3
        %v1921 = vrot.slane %v1749, 3
        %v1922 = vrot.slane %v1750, 3
        %v1923 = vrot.slane %v1751, 3
        %v1924 = vrot.slane %v1752, 3
        %v1925 = vrot.slane %v1753, 3
        %v1926 = vrot.slane %v1754, 3
        %v1927 = vrot.slane %v1756, 3
        %vm1936 = vcmask 1042432
        %v1937 = vsel %vm1936, %v1517, %v1799
        %v1938 = vsel %vm1936, %v1518, %v1800
        %v1939 = vsel %vm1936, %v1519, %v1801
        %v1940 = vsel %vm1936, %v1520, %v1802
        %v1941 = vsel %vm1936, %v1521, %v1803
        %v1942 = vsel %vm1936, %v1522, %v1804
        %v1943 = vsel %vm1936, %v1523, %v1805
        %v1944 = vsel %vm1936, %v1524, %v1806
        %vm1945 = vcmask 1045504
        %v1946 = vsel %vm1945, %v1937, %v1823
        %v1947 = vsel %vm1945, %v1938, %v1824
        %v1948 = vsel %vm1945, %v1939, %v1825
        %v1949 = vsel %vm1945, %v1940, %v1826
        %v1950 = vsel %vm1945, %v1941, %v1827
        %v1951 = vsel %vm1945, %v1942, %v1828
        %v1952 = vsel %vm1945, %v1943, %v1829
        %v1953 = vsel %vm1945, %v1944, %v1830
        %vm1954 = vcmask 1040384
        %v1955 = vsel %vm1954, %v1823, %v1847
        %v1956 = vsel %vm1954, %v1824, %v1848
        %v1957 = vsel %vm1954, %v1825, %v1849
        %v1958 = vsel %vm1954, %v1826, %v1850
        %v1959 = vsel %vm1954, %v1827, %v1851
        %v1960 = vsel %vm1954, %v1828, %v1852
        %v1961 = vsel %vm1954, %v1829, %v1853
        %v1962 = vsel %vm1954, %v1830, %v1854
        %vm1963 = vcmask 1043456
        %v1964 = vsel %vm1963, %v1955, %v1863
        %v1965 = vsel %vm1963, %v1956, %v1423
        %v1966 = vsel %vm1963, %v1957, %v1864
        %v1967 = vsel %vm1963, %v1958, %v1424
        %v1968 = vsel %vm1963, %v1959, %v1865
        %v1969 = vsel %vm1963, %v1960, %v1425
        %v1970 = vsel %vm1963, %v1961, %v1866
        %v1971 = vsel %vm1963, %v1962, %v1426
        %vm1972 = vcmask 1046528
        %v1973 = vsel %vm1972, %v1964, %v1879
        %v1974 = vsel %vm1972, %v1965, %v1880
        %v1975 = vsel %vm1972, %v1966, %v1881
        %v1976 = vsel %vm1972, %v1967, %v1882
        %v1977 = vsel %vm1972, %v1968, %v1883
        %v1978 = vsel %vm1972, %v1969, %v1884
        %v1979 = vsel %vm1972, %v1970, %v1885
        %v1980 = vsel %vm1972, %v1971, %v1886
        %vm1981 = vcmask 1041408
        %v1982 = vsel %vm1981, %v1879, %v1903
        %v1983 = vsel %vm1981, %v1880, %v1904
        %v1984 = vsel %vm1981, %v1881, %v1905
        %v1985 = vsel %vm1981, %v1882, %v1906
        %v1986 = vsel %vm1981, %v1883, %v1907
        %v1987 = vsel %vm1981, %v1884, %v1908
        %v1988 = vsel %vm1981, %v1885, %v1909
        %v1989 = vsel %vm1981, %v1886, %v1910
        %vm1990 = vcmask 1044480
        %v1991 = vsel %vm1990, %v1982, %v1920
        %v1992 = vsel %vm1990, %v1983, %v1921
        %v1993 = vsel %vm1990, %v1984, %v1922
        %v1994 = vsel %vm1990, %v1985, %v1923
        %v1995 = vsel %vm1990, %v1986, %v1924
        %v1996 = vsel %vm1990, %v1987, %v1925
        %v1997 = vsel %vm1990, %v1988, %v1926
        %v1998 = vsel %vm1990, %v1989, %v1927
        %v1999 = vld [vmem:[%s3] sm:$0x3]
        %v2000 = vld [vmem:[%s5] sm:$0x3]
        %2002 = vset.pattern.permute.xlu0 0
        %2003 = vperm.xlu0 %2002, %v2000
        %v2004 = vpop.permute.xlu0 %2003
        %vm2006 = vcmask 220160
        %v2008 = vsel %vm2006, %v1999, 0
        %v2011 = vsel %vm1936, %v1790, 0
        %v2014 = vsel %vm1936, %v1791, 0
        %v2017 = vsel %vm1936, %v1792, 0
        %v2020 = vsel %vm1936, %v1793, 0
        %v2023 = vsel %vm1936, %v1794, 0
        %v2026 = vsel %vm1936, %v1795, 0
        %v2029 = vsel %vm1936, %v1796, 0
        %v2032 = vsel %vm1936, %v1797, 0
        %2034 = vmatprep.subr.mxu0 0.0
        %2035 = vmatpush1.msra.mxu0 0.0
        %2036 = vmatprep.subr.mxu0 0.0
        %2037 = vmatpush1.msra.mxu0 0.0
        %2038 = vmatprep.subr.mxu0 0.0
        %2039 = vmatpush1.msra.mxu0 0.0
        %2040 = vmatprep.subr.mxu0 0.0
        %2041 = vmatpush1.msra.mxu0 0.0
        %2042 = vmatprep.subr.mxu0 0.0
        %2043 = vmatpush1.msra.mxu0 0.0
        %2044 = vmatprep.subr.mxu0 0.0
        %2045 = vmatpush1.msra.mxu0 0.0
        %2046 = vmatprep.subr.mxu0 0.0
        %2047 = vmatpush1.msra.mxu0 0.0
        %2048 = vmatprep.subr.mxu0 0.0
        %2049 = vmatpush1.msra.mxu0 0.0
        %2050 = vmatprep.subr.mxu0 0.0
        %2051 = vmatpush1.msra.mxu0 0.0
        %2052 = vmatprep.subr.mxu0 0.0
        %2053 = vmatpush1.msra.mxu0 0.0
        %2054 = vmatprep.subr.mxu0 0.0
        %2055 = vmatpush1.msra.mxu0 0.0
        %2056 = vmatprep.subr.mxu0 0.0
        %2057 = vmatpush1.msra.mxu0 0.0
        %2058 = vmatprep.subr.mxu0 %v2014
        %2059 = vmatpush1.msra.mxu0 %v2011
        %2060 = vmatprep.subr.mxu0 %v1992
        %2061 = vmatpush1.msra.mxu0 %v1991
        %2062 = vmatprep.subr.mxu0 %v1974
        %2063 = vmatpush1.msra.mxu0 %v1973
        %2064 = vmatprep.subr.mxu0 %v1947
        %2065 = vmatpush1.msra.mxu0 %v1946
        %2066 = vmatprep.subr.mxu0 0.0
        %2067 = vmatpush2.msra.mxu0 0.0
        %2068 = vmatprep.subr.mxu0 0.0
        %2069 = vmatpush2.msra.mxu0 0.0
        %2070 = vmatprep.subr.mxu0 0.0
        %2071 = vmatpush2.msra.mxu0 0.0
        %2072 = vmatprep.subr.mxu0 0.0
        %2073 = vmatpush2.msra.mxu0 0.0
        %2074 = vmatprep.subr.mxu0 0.0
        %2075 = vmatpush2.msra.mxu0 0.0
        %2076 = vmatprep.subr.mxu0 0.0
        %2077 = vmatpush2.msra.mxu0 0.0
        %2078 = vmatprep.subr.mxu0 0.0
        %2079 = vmatpush2.msra.mxu0 0.0
        %2080 = vmatprep.subr.mxu0 0.0
        %2081 = vmatpush2.msra.mxu0 0.0
        %2082 = vmatprep.subr.mxu0 0.0
        %2083 = vmatpush2.msra.mxu0 0.0
        %2084 = vmatprep.subr.mxu0 0.0
        %2085 = vmatpush2.msra.mxu0 0.0
        %2086 = vmatprep.subr.mxu0 0.0
        %2087 = vmatpush2.msra.mxu0 0.0
        %2088 = vmatprep.subr.mxu0 0.0
        %2089 = vmatpush2.msra.mxu0 0.0
        %2090 = vmatprep.subr.mxu0 0.0
        %2091 = vmatpush2.msra.mxu0 0.0
        %2092 = vmatprep.subr.mxu0 0.0
        %2093 = vmatpush2.msra.mxu0 0.0
        %2094 = vmatprep.subr.mxu0 0.0
        %2095 = vmatpush2.msra.mxu0 0.0
        %2096 = vmatprep.subr.mxu0 0.0
        %2097 = vmatpush2.msra.mxu0 0.0
        %2098 = vmatprep.mubr.f32.mxu0 0.0
        %2099 = vmatmul.mubr.f32.gmra.mxu0 %v2008
        %v2100 = vpop.f32.mrf.mxu0
        %v2101 = vadd.f32 %v2004, %v2100
        %v2102 = vpop.f32.mrf.mxu0
        %v2103 = vadd.f32 %v2004, %v2102
        %2104 = vdwg.mxu0
        %2105 = vmatprep.subr.mxu0 0.0
        %2106 = vmatpush1.msra.mxu0 0.0
        %2107 = vmatprep.subr.mxu0 0.0
        %2108 = vmatpush1.msra.mxu0 0.0
        %2109 = vmatprep.subr.mxu0 0.0
        %2110 = vmatpush1.msra.mxu0 0.0
        %2111 = vmatprep.subr.mxu0 0.0
        %2112 = vmatpush1.msra.mxu0 0.0
        %2113 = vmatprep.subr.mxu0 0.0
        %2114 = vmatpush1.msra.mxu0 0.0
        %2115 = vmatprep.subr.mxu0 0.0
        %2116 = vmatpush1.msra.mxu0 0.0
        %2117 = vmatprep.subr.mxu0 0.0
        %2118 = vmatpush1.msra.mxu0 0.0
        %2119 = vmatprep.subr.mxu0 0.0
        %2120 = vmatpush1.msra.mxu0 0.0
        %2121 = vmatprep.subr.mxu0 0.0
        %2122 = vmatpush1.msra.mxu0 0.0
        %2123 = vmatprep.subr.mxu0 0.0
        %2124 = vmatpush1.msra.mxu0 0.0
        %2125 = vmatprep.subr.mxu0 0.0
        %2126 = vmatpush1.msra.mxu0 0.0
        %2127 = vmatprep.subr.mxu0 0.0
        %2128 = vmatpush1.msra.mxu0 0.0
        %2129 = vmatprep.subr.mxu0 %v2020
        %2130 = vmatpush1.msra.mxu0 %v2017
        %2131 = vmatprep.subr.mxu0 %v1994
        %2132 = vmatpush1.msra.mxu0 %v1993
        %2133 = vmatprep.subr.mxu0 %v1976
        %2134 = vmatpush1.msra.mxu0 %v1975
        %2135 = vmatprep.subr.mxu0 %v1949
        %2136 = vmatpush1.msra.mxu0 %v1948
        %2137 = vmatprep.subr.mxu0 0.0
        %2138 = vmatpush2.msra.mxu0 0.0
        %2139 = vmatprep.subr.mxu0 0.0
        %2140 = vmatpush2.msra.mxu0 0.0
        %2141 = vmatprep.subr.mxu0 0.0
        %2142 = vmatpush2.msra.mxu0 0.0
        %2143 = vmatprep.subr.mxu0 0.0
        %2144 = vmatpush2.msra.mxu0 0.0
        %2145 = vmatprep.subr.mxu0 0.0
        %2146 = vmatpush2.msra.mxu0 0.0
        %2147 = vmatprep.subr.mxu0 0.0
        %2148 = vmatpush2.msra.mxu0 0.0
        %2149 = vmatprep.subr.mxu0 0.0
        %2150 = vmatpush2.msra.mxu0 0.0
        %2151 = vmatprep.subr.mxu0 0.0
        %2152 = vmatpush2.msra.mxu0 0.0
        %2153 = vmatprep.subr.mxu0 0.0
        %2154 = vmatpush2.msra.mxu0 0.0
        %2155 = vmatprep.subr.mxu0 0.0
        %2156 = vmatpush2.msra.mxu0 0.0
        %2157 = vmatprep.subr.mxu0 0.0
        %2158 = vmatpush2.msra.mxu0 0.0
        %2159 = vmatprep.subr.mxu0 0.0
        %2160 = vmatpush2.msra.mxu0 0.0
        %2161 = vmatprep.subr.mxu0 0.0
        %2162 = vmatpush2.msra.mxu0 0.0
        %2163 = vmatprep.subr.mxu0 0.0
        %2164 = vmatpush2.msra.mxu0 0.0
        %2165 = vmatprep.subr.mxu0 0.0
        %2166 = vmatpush2.msra.mxu0 0.0
        %2167 = vmatprep.subr.mxu0 0.0
        %2168 = vmatpush2.msra.mxu0 0.0
        %2169 = vmatprep.mubr.f32.mxu0 0.0
        %2170 = vmatmul.mubr.f32.gmra.mxu0 %v2008
        %v2171 = vpop.f32.mrf.mxu0
        %v2172 = vadd.f32 %v2004, %v2171
        %v2173 = vpop.f32.mrf.mxu0
        %v2174 = vadd.f32 %v2004, %v2173
        %2175 = vdwg.mxu0
        %2176 = vmatprep.subr.mxu0 0.0
        %2177 = vmatpush1.msra.mxu0 0.0
        %2178 = vmatprep.subr.mxu0 0.0
        %2179 = vmatpush1.msra.mxu0 0.0
        %2180 = vmatprep.subr.mxu0 0.0
        %2181 = vmatpush1.msra.mxu0 0.0
        %2182 = vmatprep.subr.mxu0 0.0
        %2183 = vmatpush1.msra.mxu0 0.0
        %2184 = vmatprep.subr.mxu0 0.0
        %2185 = vmatpush1.msra.mxu0 0.0
        %2186 = vmatprep.subr.mxu0 0.0
        %2187 = vmatpush1.msra.mxu0 0.0
        %2188 = vmatprep.subr.mxu0 0.0
        %2189 = vmatpush1.msra.mxu0 0.0
        %2190 = vmatprep.subr.mxu0 0.0
        %2191 = vmatpush1.msra.mxu0 0.0
        %2192 = vmatprep.subr.mxu0 0.0
        %2193 = vmatpush1.msra.mxu0 0.0
        %2194 = vmatprep.subr.mxu0 0.0
        %2195 = vmatpush1.msra.mxu0 0.0
        %2196 = vmatprep.subr.mxu0 0.0
        %2197 = vmatpush1.msra.mxu0 0.0
        %2198 = vmatprep.subr.mxu0 0.0
        %2199 = vmatpush1.msra.mxu0 0.0
        %2200 = vmatprep.subr.mxu0 %v2026
        %2201 = vmatpush1.msra.mxu0 %v2023
        %2202 = vmatprep.subr.mxu0 %v1996
        %2203 = vmatpush1.msra.mxu0 %v1995
        %2204 = vmatprep.subr.mxu0 %v1978
        %2205 = vmatpush1.msra.mxu0 %v1977
        %2206 = vmatprep.subr.mxu0 %v1951
        %2207 = vmatpush1.msra.mxu0 %v1950
        %2208 = vmatprep.subr.mxu0 0.0
        %2209 = vmatpush2.msra.mxu0 0.0
        %2210 = vmatprep.subr.mxu0 0.0
        %2211 = vmatpush2.msra.mxu0 0.0
        %2212 = vmatprep.subr.mxu0 0.0
        %2213 = vmatpush2.msra.mxu0 0.0
        %2214 = vmatprep.subr.mxu0 0.0
        %2215 = vmatpush2.msra.mxu0 0.0
        %2216 = vmatprep.subr.mxu0 0.0
        %2217 = vmatpush2.msra.mxu0 0.0
        %2218 = vmatprep.subr.mxu0 0.0
        %2219 = vmatpush2.msra.mxu0 0.0
        %2220 = vmatprep.subr.mxu0 0.0
        %2221 = vmatpush2.msra.mxu0 0.0
        %2222 = vmatprep.subr.mxu0 0.0
        %2223 = vmatpush2.msra.mxu0 0.0
        %2224 = vmatprep.subr.mxu0 0.0
        %2225 = vmatpush2.msra.mxu0 0.0
        %2226 = vmatprep.subr.mxu0 0.0
        %2227 = vmatpush2.msra.mxu0 0.0
        %2228 = vmatprep.subr.mxu0 0.0
        %2229 = vmatpush2.msra.mxu0 0.0
        %2230 = vmatprep.subr.mxu0 0.0
        %2231 = vmatpush2.msra.mxu0 0.0
        %2232 = vmatprep.subr.mxu0 0.0
        %2233 = vmatpush2.msra.mxu0 0.0
        %2234 = vmatprep.subr.mxu0 0.0
        %2235 = vmatpush2.msra.mxu0 0.0
        %2236 = vmatprep.subr.mxu0 0.0
        %2237 = vmatpush2.msra.mxu0 0.0
        %2238 = vmatprep.subr.mxu0 0.0
        %2239 = vmatpush2.msra.mxu0 0.0
        %2240 = vmatprep.mubr.f32.mxu0 0.0
        %2241 = vmatmul.mubr.f32.gmra.mxu0 %v2008
        %v2242 = vpop.f32.mrf.mxu0
        %v2243 = vadd.f32 %v2004, %v2242
        %v2244 = vpop.f32.mrf.mxu0
        %v2245 = vadd.f32 %v2004, %v2244
        %2246 = vdwg.mxu0
        %2247 = vmatprep.subr.mxu0 0.0
        %2248 = vmatpush1.msra.mxu0 0.0
        %2249 = vmatprep.subr.mxu0 0.0
        %2250 = vmatpush1.msra.mxu0 0.0
        %2251 = vmatprep.subr.mxu0 0.0
        %2252 = vmatpush1.msra.mxu0 0.0
        %2253 = vmatprep.subr.mxu0 0.0
        %2254 = vmatpush1.msra.mxu0 0.0
        %2255 = vmatprep.subr.mxu0 0.0
        %2256 = vmatpush1.msra.mxu0 0.0
        %2257 = vmatprep.subr.mxu0 0.0
        %2258 = vmatpush1.msra.mxu0 0.0
        %2259 = vmatprep.subr.mxu0 0.0
        %2260 = vmatpush1.msra.mxu0 0.0
        %2261 = vmatprep.subr.mxu0 0.0
        %2262 = vmatpush1.msra.mxu0 0.0
        %2263 = vmatprep.subr.mxu0 0.0
        %2264 = vmatpush1.msra.mxu0 0.0
        %2265 = vmatprep.subr.mxu0 0.0
        %2266 = vmatpush1.msra.mxu0 0.0
        %2267 = vmatprep.subr.mxu0 0.0
        %2268 = vmatpush1.msra.mxu0 0.0
        %2269 = vmatprep.subr.mxu0 0.0
        %2270 = vmatpush1.msra.mxu0 0.0
        %2271 = vmatprep.subr.mxu0 %v2032
        %2272 = vmatpush1.msra.mxu0 %v2029
        %2273 = vmatprep.subr.mxu0 %v1998
        %2274 = vmatpush1.msra.mxu0 %v1997
        %2275 = vmatprep.subr.mxu0 %v1980
        %2276 = vmatpush1.msra.mxu0 %v1979
        %2277 = vmatprep.subr.mxu0 %v1953
        %2278 = vmatpush1.msra.mxu0 %v1952
        %2279 = vmatprep.subr.mxu0 0.0
        %2280 = vmatpush2.msra.mxu0 0.0
        %2281 = vmatprep.subr.mxu0 0.0
        %2282 = vmatpush2.msra.mxu0 0.0
        %2283 = vmatprep.subr.mxu0 0.0
        %2284 = vmatpush2.msra.mxu0 0.0
        %2285 = vmatprep.subr.mxu0 0.0
        %2286 = vmatpush2.msra.mxu0 0.0
        %2287 = vmatprep.subr.mxu0 0.0
        %2288 = vmatpush2.msra.mxu0 0.0
        %2289 = vmatprep.subr.mxu0 0.0
        %2290 = vmatpush2.msra.mxu0 0.0
        %2291 = vmatprep.subr.mxu0 0.0
        %2292 = vmatpush2.msra.mxu0 0.0
        %2293 = vmatprep.subr.mxu0 0.0
        %2294 = vmatpush2.msra.mxu0 0.0
        %2295 = vmatprep.subr.mxu0 0.0
        %2296 = vmatpush2.msra.mxu0 0.0
        %2297 = vmatprep.subr.mxu0 0.0
        %2298 = vmatpush2.msra.mxu0 0.0
        %2299 = vmatprep.subr.mxu0 0.0
        %2300 = vmatpush2.msra.mxu0 0.0
        %2301 = vmatprep.subr.mxu0 0.0
        %2302 = vmatpush2.msra.mxu0 0.0
        %2303 = vmatprep.subr.mxu0 0.0
        %2304 = vmatpush2.msra.mxu0 0.0
        %2305 = vmatprep.subr.mxu0 0.0
        %2306 = vmatpush2.msra.mxu0 0.0
        %2307 = vmatprep.subr.mxu0 0.0
        %2308 = vmatpush2.msra.mxu0 0.0
        %2309 = vmatprep.subr.mxu0 0.0
        %2310 = vmatpush2.msra.mxu0 0.0
        %2311 = vmatprep.mubr.f32.mxu0 0.0
        %2312 = vmatmul.mubr.f32.gmra.mxu0 %v2008
        %v2313 = vpop.f32.mrf.mxu0
        %v2314 = vadd.f32 %v2004, %v2313
        %v2315 = vpop.f32.mrf.mxu0
        %v2316 = vadd.f32 %v2004, %v2315
        %2317 = vdwg.mxu0
        %v2318 = vmax.f32 %v2101, 0.0
        %v2319 = vmax.f32 %v2103, 0.0
        %v2320 = vmax.f32 %v2172, 0.0
        %v2321 = vmax.f32 %v2174, 0.0
        %v2322 = vmax.f32 %v2243, 0.0
        %v2323 = vmax.f32 %v2245, 0.0
        %v2324 = vmax.f32 %v2314, 0.0
        %v2325 = vmax.f32 %v2316, 0.0
        %2334 = vrot.lane.b32.xlu0 %v2318, 127
        %v2335 = vpop.permute.xlu0 %2334
        %2336 = vrot.lane.b32.xlu0 %v2319, 127
        %v2337 = vpop.permute.xlu0 %2336
        %2338 = vrot.lane.b32.xlu0 %v2320, 127
        %v2339 = vpop.permute.xlu0 %2338
        %2340 = vrot.lane.b32.xlu0 %v2321, 127
        %v2341 = vpop.permute.xlu0 %2340
        %2342 = vrot.lane.b32.xlu0 %v2322, 127
        %v2343 = vpop.permute.xlu0 %2342
        %2344 = vrot.lane.b32.xlu0 %v2323, 127
        %v2345 = vpop.permute.xlu0 %2344
        %2346 = vrot.lane.b32.xlu0 %v2324, 127
        %v2347 = vpop.permute.xlu0 %2346
        %2348 = vrot.lane.b32.xlu0 %v2325, 127
        %v2349 = vpop.permute.xlu0 %2348
        %v2350 = vsel %vm1665, %v2335, %v2337
        %v2351 = vsel %vm1665, %v2337, %v2339
        %v2352 = vsel %vm1665, %v2339, %v2341
        %v2353 = vsel %vm1665, %v2341, %v2343
        %v2354 = vsel %vm1665, %v2343, %v2345
        %v2355 = vsel %vm1665, %v2345, %v2347
        %v2356 = vsel %vm1665, %v2347, %v2349
        %v2365 = vsel %vm1665, %v2349, 0.0
        %v2366 = vmax.f32 %v2318, %v2350
        %v2367 = vmax.f32 %v2319, %v2351
        %v2368 = vmax.f32 %v2320, %v2352
        %v2369 = vmax.f32 %v2321, %v2353
        %v2370 = vmax.f32 %v2322, %v2354
        %v2371 = vmax.f32 %v2323, %v2355
        %v2372 = vmax.f32 %v2324, %v2356
        %v2373 = vmax.f32 %v2325, %v2365
        %2374 = vrot.lane.b32.xlu0 %v2318, 96
        %v2375 = vpop.permute.xlu0 %2374
        %2376 = vrot.lane.b32.xlu0 %v2319, 96
        %v2377 = vpop.permute.xlu0 %2376
        %2378 = vrot.lane.b32.xlu0 %v2320, 96
        %v2379 = vpop.permute.xlu0 %2378
        %2380 = vrot.lane.b32.xlu0 %v2321, 96
        %v2381 = vpop.permute.xlu0 %2380
        %2382 = vrot.lane.b32.xlu0 %v2322, 96
        %v2383 = vpop.permute.xlu0 %2382
        %2384 = vrot.lane.b32.xlu0 %v2323, 96
        %v2385 = vpop.permute.xlu0 %2384
        %2386 = vrot.lane.b32.xlu0 %v2324, 96
        %v2387 = vpop.permute.xlu0 %2386
        %2388 = vrot.lane.b32.xlu0 %v2325, 96
        %v2389 = vpop.permute.xlu0 %2388
        %v2390 = vsel %vm1747, %v2375, %v2377
        %v2391 = vsel %vm1747, %v2377, %v2379
        %v2392 = vsel %vm1747, %v2379, %v2381
        %v2393 = vsel %vm1747, %v2381, %v2383
        %v2394 = vsel %vm1747, %v2383, %v2385
        %v2395 = vsel %vm1747, %v2385, %v2387
        %v2396 = vsel %vm1747, %v2387, %v2389
        %v2405 = vsel %vm1747, %v2389, 0.0
        %v2406 = vmax.f32 %v2366, %v2390
        %v2407 = vmax.f32 %v2367, %v2391
        %v2408 = vmax.f32 %v2368, %v2392
        %v2409 = vmax.f32 %v2369, %v2393
        %v2410 = vmax.f32 %v2370, %v2394
        %v2411 = vmax.f32 %v2371, %v2395
        %v2412 = vmax.f32 %v2372, %v2396
        %v2413 = vmax.f32 %v2373, %v2405
        %2414 = vrot.lane.b32.xlu0 %v2318, 95
        %v2415 = vpop.permute.xlu0 %2414
        %2416 = vrot.lane.b32.xlu0 %v2319, 95
        %v2417 = vpop.permute.xlu0 %2416
        %2418 = vrot.lane.b32.xlu0 %v2320, 95
        %v2419 = vpop.permute.xlu0 %2418
        %2420 = vrot.lane.b32.xlu0 %v2321, 95
        %v2421 = vpop.permute.xlu0 %2420
        %2422 = vrot.lane.b32.xlu0 %v2322, 95
        %v2423 = vpop.permute.xlu0 %2422
        %2424 = vrot.lane.b32.xlu0 %v2323, 95
        %v2425 = vpop.permute.xlu0 %2424
        %2426 = vrot.lane.b32.xlu0 %v2324, 95
        %v2427 = vpop.permute.xlu0 %2426
        %2428 = vrot.lane.b32.xlu0 %v2325, 95
        %v2429 = vpop.permute.xlu0 %2428
        %v2430 = vsel %vm1773, %v2415, %v2417
        %v2431 = vsel %vm1773, %v2417, %v2419
        %v2432 = vsel %vm1773, %v2419, %v2421
        %v2433 = vsel %vm1773, %v2421, %v2423
        %v2434 = vsel %vm1773, %v2423, %v2425
        %v2435 = vsel %vm1773, %v2425, %v2427
        %v2436 = vsel %vm1773, %v2427, %v2429
        %v2445 = vsel %vm1773, %v2429, 0.0
        %v2446 = vmax.f32 %v2406, %v2430
        %v2447 = vmax.f32 %v2407, %v2431
        %v2448 = vmax.f32 %v2408, %v2432
        %v2449 = vmax.f32 %v2409, %v2433
        %v2450 = vmax.f32 %v2410, %v2434
        %v2451 = vmax.f32 %v2411, %v2435
        %v2452 = vmax.f32 %v2412, %v2436
        %v2453 = vmax.f32 %v2413, %v2445
        %v2454 = vld [vmem:[#allocation41] sm:$0xff]
        %v2455 = vld [vmem:[#allocation41 + $0x8] sm:$0xff]
        %v2456 = vld [vmem:[#allocation41 + $0x10] sm:$0xff]
        %v2457 = vld [vmem:[#allocation41 + $0x18] sm:$0xff]
        %v2458 = vld [vmem:[#allocation41 + $0x20] sm:$0xff]
        %v2459 = vld [vmem:[#allocation41 + $0x28] sm:$0xff]
        %v2460 = vld [vmem:[#allocation41 + $0x30] sm:$0xff]
        %v2461 = vld [vmem:[#allocation41 + $0x38] sm:$0xff]
        %v2462 = vld [vmem:[#allocation41 + $0x40] sm:$0xff]
        %v2463 = vld [vmem:[#allocation41 + $0x48] sm:$0xff]
        %v2464 = vld [vmem:[#allocation41 + $0x50] sm:$0xff]
        %v2465 = vld [vmem:[#allocation41 + $0x58] sm:$0xff]
        %v2466 = vld [vmem:[#allocation41 + $0x60] sm:$0xff]
        %v2467 = vld [vmem:[#allocation41 + $0x68] sm:$0xff]
        %v2468 = vld [vmem:[#allocation41 + $0x70] sm:$0xff]
        %v2469 = vld [vmem:[#allocation41 + $0x78] sm:$0xff]
        %v2470 = vld [vmem:[#allocation41 + $0x80] sm:$0xff]
        %v2471 = vld [vmem:[#allocation41 + $0x88] sm:$0xff]
        %v2472 = vld [vmem:[#allocation41 + $0x90] sm:$0xff]
        %v2473 = vld [vmem:[#allocation41 + $0x98] sm:$0xff]
        %v2474 = vld [vmem:[#allocation41 + $0xa0] sm:$0xff]
        %v2475 = vld [vmem:[#allocation41 + $0xa8] sm:$0xff]
        %v2476 = vld [vmem:[#allocation41 + $0xb0] sm:$0xff]
        %v2477 = vld [vmem:[#allocation41 + $0xb8] sm:$0xff]
        %v2478 = vld [vmem:[#allocation41 + $0xc0] sm:$0xff]
        %v2479 = vld [vmem:[#allocation41 + $0xc8] sm:$0xff]
        %v2480 = vld [vmem:[#allocation41 + $0xd0] sm:$0xff]
        %v2481 = vld [vmem:[#allocation41 + $0xd8] sm:$0xff]
        %v2482 = vld [vmem:[#allocation41 + $0xe0] sm:$0xff]
        %v2483 = vld [vmem:[#allocation41 + $0xe8] sm:$0xff]
        %v2484 = vld [vmem:[#allocation41 + $0xf0] sm:$0xff]
        %v2485 = vld [vmem:[#allocation41 + $0xf8] sm:$0xff]
        %v2486 = vld [vmem:[#allocation41 + $0x100] sm:$0xff]
        %v2487 = vld [vmem:[#allocation41 + $0x108] sm:$0xff]
        %v2488 = vld [vmem:[#allocation41 + $0x110] sm:$0xff]
        %v2489 = vld [vmem:[#allocation41 + $0x118] sm:$0xff]
        %v2490 = vld [vmem:[#allocation41 + $0x120] sm:$0xff]
        %v2491 = vld [vmem:[#allocation41 + $0x128] sm:$0xff]
        %v2492 = vld [vmem:[#allocation41 + $0x130] sm:$0xff]
        %v2493 = vld [vmem:[#allocation41 + $0x138] sm:$0xff]
        %v2494 = vld [vmem:[#allocation41 + $0x140] sm:$0xff]
        %v2495 = vld [vmem:[#allocation41 + $0x148] sm:$0xff]
        %v2496 = vld [vmem:[#allocation41 + $0x150] sm:$0xff]
        %v2497 = vld [vmem:[#allocation41 + $0x158] sm:$0xff]
        %v2498 = vld [vmem:[#allocation41 + $0x160] sm:$0xff]
        %v2499 = vld [vmem:[#allocation41 + $0x168] sm:$0xff]
        %v2500 = vld [vmem:[#allocation41 + $0x170] sm:$0xff]
        %v2501 = vld [vmem:[#allocation41 + $0x178] sm:$0xff]
        %v2502 = vld [vmem:[#allocation41 + $0x180] sm:$0xff]
        %v2503 = vld [vmem:[#allocation41 + $0x188] sm:$0xff]
        %v2504 = vld [vmem:[#allocation41 + $0x190] sm:$0xff]
        %v2505 = vld [vmem:[#allocation41 + $0x198] sm:$0xff]
        %v2506 = vld [vmem:[#allocation41 + $0x1a0] sm:$0xff]
        %v2507 = vld [vmem:[#allocation41 + $0x1a8] sm:$0xff]
        %v2508 = vld [vmem:[#allocation41 + $0x1b0] sm:$0xff]
        %v2509 = vld [vmem:[#allocation41 + $0x1b8] sm:$0xff]
        %v2510 = vld [vmem:[#allocation41 + $0x1c0] sm:$0xff]
        %v2511 = vld [vmem:[#allocation41 + $0x1c8] sm:$0xff]
        %v2512 = vld [vmem:[#allocation41 + $0x1d0] sm:$0xff]
        %v2513 = vld [vmem:[#allocation41 + $0x1d8] sm:$0xff]
        %v2514 = vld [vmem:[#allocation41 + $0x1e0] sm:$0xff]
        %v2515 = vld [vmem:[#allocation41 + $0x1e8] sm:$0xff]
        %v2516 = vld [vmem:[#allocation41 + $0x1f0] sm:$0xff]
        %v2517 = vld [vmem:[#allocation41 + $0x1f8] sm:$0xff]
        %v2518 = vld [vmem:[#allocation41 + $0x200] sm:$0xff]
        %v2519 = vld [vmem:[#allocation41 + $0x208] sm:$0xff]
        %v2520 = vld [vmem:[#allocation41 + $0x210] sm:$0xff]
        %v2521 = vld [vmem:[#allocation41 + $0x218] sm:$0xff]
        %v2522 = vld [vmem:[#allocation41 + $0x220] sm:$0xff]
        %v2523 = vld [vmem:[#allocation41 + $0x228] sm:$0xff]
        %v2524 = vld [vmem:[#allocation41 + $0x230] sm:$0xff]
        %v2525 = vld [vmem:[#allocation41 + $0x238] sm:$0xff]
        %v2526 = vld [vmem:[#allocation41 + $0x240] sm:$0xff]
        %v2527 = vld [vmem:[#allocation41 + $0x248] sm:$0xff]
        %v2528 = vld [vmem:[#allocation41 + $0x250] sm:$0xff]
        %v2529 = vld [vmem:[#allocation41 + $0x258] sm:$0xff]
        %v2530 = vld [vmem:[#allocation41 + $0x260] sm:$0xff]
        %v2531 = vld [vmem:[#allocation41 + $0x268] sm:$0xff]
        %v2532 = vld [vmem:[#allocation41 + $0x270] sm:$0xff]
        %v2533 = vld [vmem:[#allocation41 + $0x278] sm:$0xff]
        %v2534 = vld [vmem:[#allocation41 + $0x280] sm:$0xff]
        %v2535 = vld [vmem:[#allocation41 + $0x288] sm:$0xff]
        %v2536 = vld [vmem:[#allocation41 + $0x290] sm:$0xff]
        %v2537 = vld [vmem:[#allocation41 + $0x298] sm:$0xff]
        %v2538 = vld [vmem:[#allocation41 + $0x2a0] sm:$0xff]
        %v2539 = vld [vmem:[#allocation41 + $0x2a8] sm:$0xff]
        %v2540 = vld [vmem:[#allocation41 + $0x2b0] sm:$0xff]
        %v2541 = vld [vmem:[#allocation41 + $0x2b8] sm:$0xff]
        %v2542 = vld [vmem:[#allocation41 + $0x2c0] sm:$0xff]
        %v2543 = vld [vmem:[#allocation41 + $0x2c8] sm:$0xff]
        %v2544 = vld [vmem:[#allocation41 + $0x2d0] sm:$0xff]
        %v2545 = vld [vmem:[#allocation41 + $0x2d8] sm:$0xff]
        %v2546 = vld [vmem:[#allocation41 + $0x2e0] sm:$0xff]
        %v2547 = vld [vmem:[#allocation41 + $0x2e8] sm:$0xff]
        %v2548 = vld [vmem:[#allocation41 + $0x2f0] sm:$0xff]
        %v2549 = vld [vmem:[#allocation41 + $0x2f8] sm:$0xff]
        %v2550 = vld [vmem:[#allocation41 + $0x300] sm:$0xff]
        %v2551 = vld [vmem:[#allocation41 + $0x308] sm:$0xff]
        %v2552 = vld [vmem:[#allocation41 + $0x310] sm:$0xff]
        %v2553 = vld [vmem:[#allocation41 + $0x318] sm:$0xff]
        %v2554 = vld [vmem:[#allocation41 + $0x320] sm:$0xff]
        %v2555 = vld [vmem:[#allocation41 + $0x328] sm:$0xff]
        %v2556 = vld [vmem:[#allocation41 + $0x330] sm:$0xff]
        %v2557 = vld [vmem:[#allocation41 + $0x338] sm:$0xff]
        %v2558 = vld [vmem:[#allocation41 + $0x340] sm:$0xff]
        %v2559 = vld [vmem:[#allocation41 + $0x348] sm:$0xff]
        %v2560 = vld [vmem:[#allocation41 + $0x350] sm:$0xff]
        %v2561 = vld [vmem:[#allocation41 + $0x358] sm:$0xff]
        %v2562 = vld [vmem:[#allocation41 + $0x360] sm:$0xff]
        %v2563 = vld [vmem:[#allocation41 + $0x368] sm:$0xff]
        %v2564 = vld [vmem:[#allocation41 + $0x370] sm:$0xff]
        %v2565 = vld [vmem:[#allocation41 + $0x378] sm:$0xff]
        %v2566 = vld [vmem:[#allocation41 + $0x380] sm:$0xff]
        %v2567 = vld [vmem:[#allocation41 + $0x388] sm:$0xff]
        %v2568 = vld [vmem:[#allocation41 + $0x390] sm:$0xff]
        %v2569 = vld [vmem:[#allocation41 + $0x398] sm:$0xff]
        %v2570 = vld [vmem:[#allocation41 + $0x3a0] sm:$0xff]
        %v2571 = vld [vmem:[#allocation41 + $0x3a8] sm:$0xff]
        %v2572 = vld [vmem:[#allocation41 + $0x3b0] sm:$0xff]
        %v2573 = vld [vmem:[#allocation41 + $0x3b8] sm:$0xff]
        %v2574 = vld [vmem:[#allocation41 + $0x3c0] sm:$0xff]
        %v2575 = vld [vmem:[#allocation41 + $0x3c8] sm:$0xff]
        %v2576 = vld [vmem:[#allocation41 + $0x3d0] sm:$0xff]
        %v2577 = vld [vmem:[#allocation41 + $0x3d8] sm:$0xff]
        %v2578 = vld [vmem:[#allocation41 + $0x3e0] sm:$0xff]
        %v2579 = vld [vmem:[#allocation41 + $0x3e8] sm:$0xff]
        %v2580 = vld [vmem:[#allocation41 + $0x3f0] sm:$0xff]
        %v2581 = vld [vmem:[#allocation41 + $0x3f8] sm:$0xff]
        %v2582 = vld [vmem:[#allocation41 + $0x400] sm:$0xff]
        %v2583 = vld [vmem:[#allocation41 + $0x408] sm:$0xff]
        %v2584 = vld [vmem:[#allocation41 + $0x410] sm:$0xff]
        %v2585 = vld [vmem:[#allocation41 + $0x418] sm:$0xff]
        %v2586 = vld [vmem:[#allocation41 + $0x420] sm:$0xff]
        %v2587 = vld [vmem:[#allocation41 + $0x428] sm:$0xff]
        %v2588 = vld [vmem:[#allocation41 + $0x430] sm:$0xff]
        %v2589 = vld [vmem:[#allocation41 + $0x438] sm:$0xff]
        %v2590 = vld [vmem:[#allocation41 + $0x440] sm:$0xff]
        %v2591 = vld [vmem:[#allocation41 + $0x448] sm:$0xff]
        %v2592 = vld [vmem:[#allocation41 + $0x450] sm:$0xff]
        %v2593 = vld [vmem:[#allocation41 + $0x458] sm:$0xff]
        %v2594 = vld [vmem:[#allocation41 + $0x460] sm:$0xff]
        %v2595 = vld [vmem:[#allocation41 + $0x468] sm:$0xff]
        %v2596 = vld [vmem:[#allocation41 + $0x470] sm:$0xff]
        %v2597 = vld [vmem:[#allocation41 + $0x478] sm:$0xff]
        %v2598 = vld [vmem:[#allocation41 + $0x480] sm:$0xff]
        %v2599 = vld [vmem:[#allocation41 + $0x488] sm:$0xff]
        %v2600 = vld [vmem:[#allocation41 + $0x490] sm:$0xff]
        %v2601 = vld [vmem:[#allocation41 + $0x498] sm:$0xff]
        %v2602 = vld [vmem:[#allocation41 + $0x4a0] sm:$0xff]
        %v2603 = vld [vmem:[#allocation41 + $0x4a8] sm:$0xff]
        %v2604 = vld [vmem:[#allocation41 + $0x4b0] sm:$0xff]
        %v2605 = vld [vmem:[#allocation41 + $0x4b8] sm:$0xff]
        %v2606 = vld [vmem:[#allocation41 + $0x4c0] sm:$0xff]
        %v2607 = vld [vmem:[#allocation41 + $0x4c8] sm:$0xff]
        %v2608 = vld [vmem:[#allocation41 + $0x4d0] sm:$0xff]
        %v2609 = vld [vmem:[#allocation41 + $0x4d8] sm:$0xff]
        %v2610 = vld [vmem:[#allocation41 + $0x4e0] sm:$0xff]
        %v2611 = vld [vmem:[#allocation41 + $0x4e8] sm:$0xff]
        %v2612 = vld [vmem:[#allocation41 + $0x4f0] sm:$0xff]
        %v2613 = vld [vmem:[#allocation41 + $0x4f8] sm:$0xff]
        %v2614 = vld [vmem:[#allocation41 + $0x500] sm:$0xff]
        %v2615 = vld [vmem:[#allocation41 + $0x508] sm:$0xff]
        %v2616 = vld [vmem:[#allocation41 + $0x510] sm:$0xff]
        %v2617 = vld [vmem:[#allocation41 + $0x518] sm:$0xff]
        %v2618 = vld [vmem:[#allocation41 + $0x520] sm:$0xff]
        %v2619 = vld [vmem:[#allocation41 + $0x528] sm:$0xff]
        %v2620 = vld [vmem:[#allocation41 + $0x530] sm:$0xff]
        %v2621 = vld [vmem:[#allocation41 + $0x538] sm:$0xff]
        %v2622 = vld [vmem:[#allocation41 + $0x540] sm:$0xff]
        %v2623 = vld [vmem:[#allocation41 + $0x548] sm:$0xff]
        %v2624 = vld [vmem:[#allocation41 + $0x550] sm:$0xff]
        %v2625 = vld [vmem:[#allocation41 + $0x558] sm:$0xff]
        %v2626 = vld [vmem:[#allocation41 + $0x560] sm:$0xff]
        %v2627 = vld [vmem:[#allocation41 + $0x568] sm:$0xff]
        %v2628 = vld [vmem:[#allocation41 + $0x570] sm:$0xff]
        %v2629 = vld [vmem:[#allocation41 + $0x578] sm:$0xff]
        %v2630 = vld [vmem:[#allocation41 + $0x580] sm:$0xff]
        %v2631 = vld [vmem:[#allocation41 + $0x588] sm:$0xff]
        %v2632 = vld [vmem:[#allocation41 + $0x590] sm:$0xff]
        %v2633 = vld [vmem:[#allocation41 + $0x598] sm:$0xff]
        %v2634 = vld [vmem:[#allocation41 + $0x5a0] sm:$0xff]
        %v2635 = vld [vmem:[#allocation41 + $0x5a8] sm:$0xff]
        %v2636 = vld [vmem:[#allocation41 + $0x5b0] sm:$0xff]
        %v2637 = vld [vmem:[#allocation41 + $0x5b8] sm:$0xff]
        %v2638 = vld [vmem:[#allocation41 + $0x5c0] sm:$0xff]
        %v2639 = vld [vmem:[#allocation41 + $0x5c8] sm:$0xff]
        %v2640 = vld [vmem:[#allocation41 + $0x5d0] sm:$0xff]
        %v2641 = vld [vmem:[#allocation41 + $0x5d8] sm:$0xff]
        %v2642 = vld [vmem:[#allocation41 + $0x5e0] sm:$0xff]
        %v2643 = vld [vmem:[#allocation41 + $0x5e8] sm:$0xff]
        %v2644 = vld [vmem:[#allocation41 + $0x5f0] sm:$0xff]
        %v2645 = vld [vmem:[#allocation41 + $0x5f8] sm:$0xff]
        %v2646 = vld [vmem:[#allocation41 + $0x600] sm:$0xff]
        %v2647 = vld [vmem:[#allocation41 + $0x608] sm:$0xff]
        %v2648 = vld [vmem:[#allocation41 + $0x610] sm:$0xff]
        %v2649 = vld [vmem:[#allocation41 + $0x618] sm:$0xff]
        %v2650 = vld [vmem:[#allocation41 + $0x620] sm:$0xff]
        %v2651 = vld [vmem:[#allocation41 + $0x628] sm:$0xff]
        %v2652 = vld [vmem:[#allocation41 + $0x630] sm:$0xff]
        %v2653 = vld [vmem:[#allocation41 + $0x638] sm:$0xff]
        %v2654 = vld [vmem:[#allocation41 + $0x640] sm:$0xff]
        %v2655 = vld [vmem:[#allocation41 + $0x648] sm:$0xff]
        %v2656 = vld [vmem:[#allocation41 + $0x650] sm:$0xff]
        %v2657 = vld [vmem:[#allocation41 + $0x658] sm:$0xff]
        %v2658 = vld [vmem:[#allocation41 + $0x660] sm:$0xff]
        %v2659 = vld [vmem:[#allocation41 + $0x668] sm:$0xff]
        %v2660 = vld [vmem:[#allocation41 + $0x670] sm:$0xff]
        %v2661 = vld [vmem:[#allocation41 + $0x678] sm:$0xff]
        %v2662 = vld [vmem:[#allocation41 + $0x680] sm:$0xff]
        %v2663 = vld [vmem:[#allocation41 + $0x688] sm:$0xff]
        %v2664 = vld [vmem:[#allocation41 + $0x690] sm:$0xff]
        %v2665 = vld [vmem:[#allocation41 + $0x698] sm:$0xff]
        %v2666 = vld [vmem:[#allocation41 + $0x6a0] sm:$0xff]
        %v2667 = vld [vmem:[#allocation41 + $0x6a8] sm:$0xff]
        %v2668 = vld [vmem:[#allocation41 + $0x6b0] sm:$0xff]
        %v2669 = vld [vmem:[#allocation41 + $0x6b8] sm:$0xff]
        %v2670 = vld [vmem:[#allocation41 + $0x6c0] sm:$0xff]
        %v2671 = vld [vmem:[#allocation41 + $0x6c8] sm:$0xff]
        %v2672 = vld [vmem:[#allocation41 + $0x6d0] sm:$0xff]
        %v2673 = vld [vmem:[#allocation41 + $0x6d8] sm:$0xff]
        %v2674 = vld [vmem:[#allocation41 + $0x6e0] sm:$0xff]
        %v2675 = vld [vmem:[#allocation41 + $0x6e8] sm:$0xff]
        %v2676 = vld [vmem:[#allocation41 + $0x6f0] sm:$0xff]
        %v2677 = vld [vmem:[#allocation41 + $0x6f8] sm:$0xff]
        %v2678 = vld [vmem:[#allocation41 + $0x700] sm:$0xff]
        %v2679 = vld [vmem:[#allocation41 + $0x708] sm:$0xff]
        %v2680 = vld [vmem:[#allocation41 + $0x710] sm:$0xff]
        %v2681 = vld [vmem:[#allocation41 + $0x718] sm:$0xff]
        %v2682 = vld [vmem:[#allocation41 + $0x720] sm:$0xff]
        %v2683 = vld [vmem:[#allocation41 + $0x728] sm:$0xff]
        %v2684 = vld [vmem:[#allocation41 + $0x730] sm:$0xff]
        %v2685 = vld [vmem:[#allocation41 + $0x738] sm:$0xff]
        %v2686 = vld [vmem:[#allocation41 + $0x740] sm:$0xff]
        %v2687 = vld [vmem:[#allocation41 + $0x748] sm:$0xff]
        %v2688 = vld [vmem:[#allocation41 + $0x750] sm:$0xff]
        %v2689 = vld [vmem:[#allocation41 + $0x758] sm:$0xff]
        %v2690 = vld [vmem:[#allocation41 + $0x760] sm:$0xff]
        %v2691 = vld [vmem:[#allocation41 + $0x768] sm:$0xff]
        %v2692 = vld [vmem:[#allocation41 + $0x770] sm:$0xff]
        %v2693 = vld [vmem:[#allocation41 + $0x778] sm:$0xff]
        %v2694 = vld [vmem:[#allocation41 + $0x780] sm:$0xff]
        %v2695 = vld [vmem:[#allocation41 + $0x788] sm:$0xff]
        %v2696 = vld [vmem:[#allocation41 + $0x790] sm:$0xff]
        %v2697 = vld [vmem:[#allocation41 + $0x798] sm:$0xff]
        %v2698 = vld [vmem:[#allocation41 + $0x7a0] sm:$0xff]
        %v2699 = vld [vmem:[#allocation41 + $0x7a8] sm:$0xff]
        %v2700 = vld [vmem:[#allocation41 + $0x7b0] sm:$0xff]
        %v2701 = vld [vmem:[#allocation41 + $0x7b8] sm:$0xff]
        %v2702 = vld [vmem:[#allocation41 + $0x7c0] sm:$0xff]
        %v2703 = vld [vmem:[#allocation41 + $0x7c8] sm:$0xff]
        %v2704 = vld [vmem:[#allocation41 + $0x7d0] sm:$0xff]
        %v2705 = vld [vmem:[#allocation41 + $0x7d8] sm:$0xff]
        %v2706 = vld [vmem:[#allocation41 + $0x7e0] sm:$0xff]
        %v2707 = vld [vmem:[#allocation41 + $0x7e8] sm:$0xff]
        %v2708 = vld [vmem:[#allocation41 + $0x7f0] sm:$0xff]
        %v2709 = vld [vmem:[#allocation41 + $0x7f8] sm:$0xff]
        %2710 = vmatprep.subr.mxu0 %v2485
        %2711 = vmatpush1.msra.mxu0 %v2484
        %2712 = vmatprep.subr.mxu0 %v2483
        %2713 = vmatpush1.msra.mxu0 %v2482
        %2714 = vmatprep.subr.mxu0 %v2481
        %2715 = vmatpush1.msra.mxu0 %v2480
        %2716 = vmatprep.subr.mxu0 %v2479
        %2717 = vmatpush1.msra.mxu0 %v2478
        %2718 = vmatprep.subr.mxu0 %v2477
        %2719 = vmatpush1.msra.mxu0 %v2476
        %2720 = vmatprep.subr.mxu0 %v2475
        %2721 = vmatpush1.msra.mxu0 %v2474
        %2722 = vmatprep.subr.mxu0 %v2473
        %2723 = vmatpush1.msra.mxu0 %v2472
        %2724 = vmatprep.subr.mxu0 %v2471
        %2725 = vmatpush1.msra.mxu0 %v2470
        %2726 = vmatprep.subr.mxu0 %v2469
        %2727 = vmatpush1.msra.mxu0 %v2468
        %2728 = vmatprep.subr.mxu0 %v2467
        %2729 = vmatpush1.msra.mxu0 %v2466
        %2730 = vmatprep.subr.mxu0 %v2465
        %2731 = vmatpush1.msra.mxu0 %v2464
        %2732 = vmatprep.subr.mxu0 %v2463
        %2733 = vmatpush1.msra.mxu0 %v2462
        %2734 = vmatprep.subr.mxu0 %v2461
        %2735 = vmatpush1.msra.mxu0 %v2460
        %2736 = vmatprep.subr.mxu0 %v2459
        %2737 = vmatpush1.msra.mxu0 %v2458
        %2738 = vmatprep.subr.mxu0 %v2457
        %2739 = vmatpush1.msra.mxu0 %v2456
        %2740 = vmatprep.subr.mxu0 %v2455
        %2741 = vmatpush1.msra.mxu0 %v2454
        %2742 = vmatprep.subr.mxu0 %v2517
        %2743 = vmatpush2.msra.mxu0 %v2516
        %2744 = vmatprep.subr.mxu0 %v2515
        %2745 = vmatpush2.msra.mxu0 %v2514
        %2746 = vmatprep.subr.mxu0 %v2513
        %2747 = vmatpush2.msra.mxu0 %v2512
        %2748 = vmatprep.subr.mxu0 %v2511
        %2749 = vmatpush2.msra.mxu0 %v2510
        %2750 = vmatprep.subr.mxu0 %v2509
        %2751 = vmatpush2.msra.mxu0 %v2508
        %2752 = vmatprep.subr.mxu0 %v2507
        %2753 = vmatpush2.msra.mxu0 %v2506
        %2754 = vmatprep.subr.mxu0 %v2505
        %2755 = vmatpush2.msra.mxu0 %v2504
        %2756 = vmatprep.subr.mxu0 %v2503
        %2757 = vmatpush2.msra.mxu0 %v2502
        %2758 = vmatprep.subr.mxu0 %v2501
        %2759 = vmatpush2.msra.mxu0 %v2500
        %2760 = vmatprep.subr.mxu0 %v2499
        %2761 = vmatpush2.msra.mxu0 %v2498
        %2762 = vmatprep.subr.mxu0 %v2497
        %2763 = vmatpush2.msra.mxu0 %v2496
        %2764 = vmatprep.subr.mxu0 %v2495
        %2765 = vmatpush2.msra.mxu0 %v2494
        %2766 = vmatprep.subr.mxu0 %v2493
        %2767 = vmatpush2.msra.mxu0 %v2492
        %2768 = vmatprep.subr.mxu0 %v2491
        %2769 = vmatpush2.msra.mxu0 %v2490
        %2770 = vmatprep.subr.mxu0 %v2489
        %2771 = vmatpush2.msra.mxu0 %v2488
        %2772 = vmatprep.subr.mxu0 %v2487
        %2773 = vmatpush2.msra.mxu0 %v2486
        %2774 = vmatprep.mubr.f32.mxu0 %v2447
        %2775 = vmatmul.mubr.f32.gmra.mxu0 %v2446
        %v2776 = vpop.f32.mrf.mxu0
        %v2777 = vadd.f32 0.0, %v2776
        %v2778 = vpop.f32.mrf.mxu0
        %v2779 = vadd.f32 0.0, %v2778
        %2780 = vdwg.mxu0
        %2781 = vmatprep.subr.mxu0 %v2549
        %2782 = vmatpush1.msra.mxu0 %v2548
        %2783 = vmatprep.subr.mxu0 %v2547
        %2784 = vmatpush1.msra.mxu0 %v2546
        %2785 = vmatprep.subr.mxu0 %v2545
        %2786 = vmatpush1.msra.mxu0 %v2544
        %2787 = vmatprep.subr.mxu0 %v2543
        %2788 = vmatpush1.msra.mxu0 %v2542
        %2789 = vmatprep.subr.mxu0 %v2541
        %2790 = vmatpush1.msra.mxu0 %v2540
        %2791 = vmatprep.subr.mxu0 %v2539
        %2792 = vmatpush1.msra.mxu0 %v2538
        %2793 = vmatprep.subr.mxu0 %v2537
        %2794 = vmatpush1.msra.mxu0 %v2536
        %2795 = vmatprep.subr.mxu0 %v2535
        %2796 = vmatpush1.msra.mxu0 %v2534
        %2797 = vmatprep.subr.mxu0 %v2533
        %2798 = vmatpush1.msra.mxu0 %v2532
        %2799 = vmatprep.subr.mxu0 %v2531
        %2800 = vmatpush1.msra.mxu0 %v2530
        %2801 = vmatprep.subr.mxu0 %v2529
        %2802 = vmatpush1.msra.mxu0 %v2528
        %2803 = vmatprep.subr.mxu0 %v2527
        %2804 = vmatpush1.msra.mxu0 %v2526
        %2805 = vmatprep.subr.mxu0 %v2525
        %2806 = vmatpush1.msra.mxu0 %v2524
        %2807 = vmatprep.subr.mxu0 %v2523
        %2808 = vmatpush1.msra.mxu0 %v2522
        %2809 = vmatprep.subr.mxu0 %v2521
        %2810 = vmatpush1.msra.mxu0 %v2520
        %2811 = vmatprep.subr.mxu0 %v2519
        %2812 = vmatpush1.msra.mxu0 %v2518
        %2813 = vmatprep.subr.mxu0 %v2581
        %2814 = vmatpush2.msra.mxu0 %v2580
        %2815 = vmatprep.subr.mxu0 %v2579
        %2816 = vmatpush2.msra.mxu0 %v2578
        %2817 = vmatprep.subr.mxu0 %v2577
        %2818 = vmatpush2.msra.mxu0 %v2576
        %2819 = vmatprep.subr.mxu0 %v2575
        %2820 = vmatpush2.msra.mxu0 %v2574
        %2821 = vmatprep.subr.mxu0 %v2573
        %2822 = vmatpush2.msra.mxu0 %v2572
        %2823 = vmatprep.subr.mxu0 %v2571
        %2824 = vmatpush2.msra.mxu0 %v2570
        %2825 = vmatprep.subr.mxu0 %v2569
        %2826 = vmatpush2.msra.mxu0 %v2568
        %2827 = vmatprep.subr.mxu0 %v2567
        %2828 = vmatpush2.msra.mxu0 %v2566
        %2829 = vmatprep.subr.mxu0 %v2565
        %2830 = vmatpush2.msra.mxu0 %v2564
        %2831 = vmatprep.subr.mxu0 %v2563
        %2832 = vmatpush2.msra.mxu0 %v2562
        %2833 = vmatprep.subr.mxu0 %v2561
        %2834 = vmatpush2.msra.mxu0 %v2560
        %2835 = vmatprep.subr.mxu0 %v2559
        %2836 = vmatpush2.msra.mxu0 %v2558
        %2837 = vmatprep.subr.mxu0 %v2557
        %2838 = vmatpush2.msra.mxu0 %v2556
        %2839 = vmatprep.subr.mxu0 %v2555
        %2840 = vmatpush2.msra.mxu0 %v2554
        %2841 = vmatprep.subr.mxu0 %v2553
        %2842 = vmatpush2.msra.mxu0 %v2552
        %2843 = vmatprep.subr.mxu0 %v2551
        %2844 = vmatpush2.msra.mxu0 %v2550
        %2845 = vmatprep.mubr.f32.mxu0 %v2449
        %2846 = vmatmul.mubr.f32.gmra.mxu0 %v2448
        %v2847 = vpop.f32.mrf.mxu0
        %v2848 = vadd.f32 %v2777, %v2847
        %v2849 = vpop.f32.mrf.mxu0
        %v2850 = vadd.f32 %v2779, %v2849
        %2851 = vdwg.mxu0
        %2852 = vmatprep.subr.mxu0 %v2613
        %2853 = vmatpush1.msra.mxu0 %v2612
        %2854 = vmatprep.subr.mxu0 %v2611
        %2855 = vmatpush1.msra.mxu0 %v2610
        %2856 = vmatprep.subr.mxu0 %v2609
        %2857 = vmatpush1.msra.mxu0 %v2608
        %2858 = vmatprep.subr.mxu0 %v2607
        %2859 = vmatpush1.msra.mxu0 %v2606
        %2860 = vmatprep.subr.mxu0 %v2605
        %2861 = vmatpush1.msra.mxu0 %v2604
        %2862 = vmatprep.subr.mxu0 %v2603
        %2863 = vmatpush1.msra.mxu0 %v2602
        %2864 = vmatprep.subr.mxu0 %v2601
        %2865 = vmatpush1.msra.mxu0 %v2600
        %2866 = vmatprep.subr.mxu0 %v2599
        %2867 = vmatpush1.msra.mxu0 %v2598
        %2868 = vmatprep.subr.mxu0 %v2597
        %2869 = vmatpush1.msra.mxu0 %v2596
        %2870 = vmatprep.subr.mxu0 %v2595
        %2871 = vmatpush1.msra.mxu0 %v2594
        %2872 = vmatprep.subr.mxu0 %v2593
        %2873 = vmatpush1.msra.mxu0 %v2592
        %2874 = vmatprep.subr.mxu0 %v2591
        %2875 = vmatpush1.msra.mxu0 %v2590
        %2876 = vmatprep.subr.mxu0 %v2589
        %2877 = vmatpush1.msra.mxu0 %v2588
        %2878 = vmatprep.subr.mxu0 %v2587
        %2879 = vmatpush1.msra.mxu0 %v2586
        %2880 = vmatprep.subr.mxu0 %v2585
        %2881 = vmatpush1.msra.mxu0 %v2584
        %2882 = vmatprep.subr.mxu0 %v2583
        %2883 = vmatpush1.msra.mxu0 %v2582
        %2884 = vmatprep.subr.mxu0 %v2645
        %2885 = vmatpush2.msra.mxu0 %v2644
        %2886 = vmatprep.subr.mxu0 %v2643
        %2887 = vmatpush2.msra.mxu0 %v2642
        %2888 = vmatprep.subr.mxu0 %v2641
        %2889 = vmatpush2.msra.mxu0 %v2640
        %2890 = vmatprep.subr.mxu0 %v2639
        %2891 = vmatpush2.msra.mxu0 %v2638
        %2892 = vmatprep.subr.mxu0 %v2637
        %2893 = vmatpush2.msra.mxu0 %v2636
        %2894 = vmatprep.subr.mxu0 %v2635
        %2895 = vmatpush2.msra.mxu0 %v2634
        %2896 = vmatprep.subr.mxu0 %v2633
        %2897 = vmatpush2.msra.mxu0 %v2632
        %2898 = vmatprep.subr.mxu0 %v2631
        %2899 = vmatpush2.msra.mxu0 %v2630
        %2900 = vmatprep.subr.mxu0 %v2629
        %2901 = vmatpush2.msra.mxu0 %v2628
        %2902 = vmatprep.subr.mxu0 %v2627
        %2903 = vmatpush2.msra.mxu0 %v2626
        %2904 = vmatprep.subr.mxu0 %v2625
        %2905 = vmatpush2.msra.mxu0 %v2624
        %2906 = vmatprep.subr.mxu0 %v2623
        %2907 = vmatpush2.msra.mxu0 %v2622
        %2908 = vmatprep.subr.mxu0 %v2621
        %2909 = vmatpush2.msra.mxu0 %v2620
        %2910 = vmatprep.subr.mxu0 %v2619
        %2911 = vmatpush2.msra.mxu0 %v2618
        %2912 = vmatprep.subr.mxu0 %v2617
        %2913 = vmatpush2.msra.mxu0 %v2616
        %2914 = vmatprep.subr.mxu0 %v2615
        %2915 = vmatpush2.msra.mxu0 %v2614
        %2916 = vmatprep.mubr.f32.mxu0 %v2451
        %2917 = vmatmul.mubr.f32.gmra.mxu0 %v2450
        %v2918 = vpop.f32.mrf.mxu0
        %v2919 = vadd.f32 %v2848, %v2918
        %v2920 = vpop.f32.mrf.mxu0
        %v2921 = vadd.f32 %v2850, %v2920
        %2922 = vdwg.mxu0
        %2923 = vmatprep.subr.mxu0 %v2677
        %2924 = vmatpush1.msra.mxu0 %v2676
        %2925 = vmatprep.subr.mxu0 %v2675
        %2926 = vmatpush1.msra.mxu0 %v2674
        %2927 = vmatprep.subr.mxu0 %v2673
        %2928 = vmatpush1.msra.mxu0 %v2672
        %2929 = vmatprep.subr.mxu0 %v2671
        %2930 = vmatpush1.msra.mxu0 %v2670
        %2931 = vmatprep.subr.mxu0 %v2669
        %2932 = vmatpush1.msra.mxu0 %v2668
        %2933 = vmatprep.subr.mxu0 %v2667
        %2934 = vmatpush1.msra.mxu0 %v2666
        %2935 = vmatprep.subr.mxu0 %v2665
        %2936 = vmatpush1.msra.mxu0 %v2664
        %2937 = vmatprep.subr.mxu0 %v2663
        %2938 = vmatpush1.msra.mxu0 %v2662
        %2939 = vmatprep.subr.mxu0 %v2661
        %2940 = vmatpush1.msra.mxu0 %v2660
        %2941 = vmatprep.subr.mxu0 %v2659
        %2942 = vmatpush1.msra.mxu0 %v2658
        %2943 = vmatprep.subr.mxu0 %v2657
        %2944 = vmatpush1.msra.mxu0 %v2656
        %2945 = vmatprep.subr.mxu0 %v2655
        %2946 = vmatpush1.msra.mxu0 %v2654
        %2947 = vmatprep.subr.mxu0 %v2653
        %2948 = vmatpush1.msra.mxu0 %v2652
        %2949 = vmatprep.subr.mxu0 %v2651
        %2950 = vmatpush1.msra.mxu0 %v2650
        %2951 = vmatprep.subr.mxu0 %v2649
        %2952 = vmatpush1.msra.mxu0 %v2648
        %2953 = vmatprep.subr.mxu0 %v2647
        %2954 = vmatpush1.msra.mxu0 %v2646
        %2955 = vmatprep.subr.mxu0 %v2709
        %2956 = vmatpush2.msra.mxu0 %v2708
        %2957 = vmatprep.subr.mxu0 %v2707
        %2958 = vmatpush2.msra.mxu0 %v2706
        %2959 = vmatprep.subr.mxu0 %v2705
        %2960 = vmatpush2.msra.mxu0 %v2704
        %2961 = vmatprep.subr.mxu0 %v2703
        %2962 = vmatpush2.msra.mxu0 %v2702
        %2963 = vmatprep.subr.mxu0 %v2701
        %2964 = vmatpush2.msra.mxu0 %v2700
        %2965 = vmatprep.subr.mxu0 %v2699
        %2966 = vmatpush2.msra.mxu0 %v2698
        %2967 = vmatprep.subr.mxu0 %v2697
        %2968 = vmatpush2.msra.mxu0 %v2696
        %2969 = vmatprep.subr.mxu0 %v2695
        %2970 = vmatpush2.msra.mxu0 %v2694
        %2971 = vmatprep.subr.mxu0 %v2693
        %2972 = vmatpush2.msra.mxu0 %v2692
        %2973 = vmatprep.subr.mxu0 %v2691
        %2974 = vmatpush2.msra.mxu0 %v2690
        %2975 = vmatprep.subr.mxu0 %v2689
        %2976 = vmatpush2.msra.mxu0 %v2688
        %2977 = vmatprep.subr.mxu0 %v2687
        %2978 = vmatpush2.msra.mxu0 %v2686
        %2979 = vmatprep.subr.mxu0 %v2685
        %2980 = vmatpush2.msra.mxu0 %v2684
        %2981 = vmatprep.subr.mxu0 %v2683
        %2982 = vmatpush2.msra.mxu0 %v2682
        %2983 = vmatprep.subr.mxu0 %v2681
        %2984 = vmatpush2.msra.mxu0 %v2680
        %2985 = vmatprep.subr.mxu0 %v2679
        %2986 = vmatpush2.msra.mxu0 %v2678
        %2987 = vmatprep.mubr.f32.mxu0 %v2453
        %2988 = vmatmul.mubr.f32.gmra.mxu0 %v2452
        %v2989 = vpop.f32.mrf.mxu0
        %v2990 = vadd.f32 %v2919, %v2989
        %v2991 = vpop.f32.mrf.mxu0
        %v2992 = vadd.f32 %v2921, %v2991
        %2993 = vdwg.mxu0
        %v2994 = vand.u32 %v1428, 15
        %v2995 = vand.u32 %v1429, 15
        %vm2996 = vcmp.gt.s32.totalorder %v2994, 0
        %vm2997 = vcmp.gt.s32.totalorder %v2995, 0
        %vm2998 = vcmp.lt.s32.totalorder %v2994, 15
        %vm2999 = vcmp.lt.s32.totalorder %v2995, 15
        %3002 = vrot.lane.b32.xlu0 %v2990, 17
        %v3003 = vpop.permute.xlu0 %3002
        %3004 = vrot.lane.b32.xlu0 %v2992, 17
        %v3005 = vpop.permute.xlu0 %3004
        %vm3006 = vcmask 138240
        %v3007 = vsel %vm3006, %v3003, %v3005
        %v3010 = vsel %vm3006, 0.0, %v3003
        %v3011 = vsel %vm2996, 1, 0
        %v3012 = vsel %vm2997, 1, 0
        %vm3013 = vcmp.eq.s32.totalorder %v3011, 1
        %vm3014 = vcmp.eq.s32.totalorder %v3012, 1
        %v3015 = vsel %vm3013, %v3010, 0.0
        %v3016 = vsel %vm3014, %v3007, 0.0
        %3017 = vrot.lane.b32.xlu0 %v2990, 16
        %v3018 = vpop.permute.xlu0 %3017
        %3019 = vrot.lane.b32.xlu0 %v2992, 16
        %v3020 = vpop.permute.xlu0 %3019
        %vm3021 = vcmask 130048
        %v3022 = vsel %vm3021, %v3018, %v3020
        %v3024 = vsel %vm3021, 0.0, %v3018
        %3025 = vrot.lane.b32.xlu0 %v2990, 15
        %v3026 = vpop.permute.xlu0 %3025
        %3027 = vrot.lane.b32.xlu0 %v2992, 15
        %v3028 = vpop.permute.xlu0 %3027
        %vm3029 = vcmask 121856
        %v3030 = vsel %vm3029, %v3026, %v3028
        %v3033 = vsel %vm3029, 0.0, %v3026
        %v3034 = vsel %vm2998, 1, 0
        %v3035 = vsel %vm2999, 1, 0
        %vm3036 = vcmp.eq.s32.totalorder %v3034, 1
        %vm3037 = vcmp.eq.s32.totalorder %v3035, 1
        %v3038 = vsel %vm3036, %v3033, 0.0
        %v3039 = vsel %vm3037, %v3030, 0.0
        %3040 = vrot.lane.b32.xlu0 %v2990, 1
        %v3041 = vpop.permute.xlu0 %3040
        %3042 = vrot.lane.b32.xlu0 %v2992, 1
        %v3043 = vpop.permute.xlu0 %3042
        %v3044 = vsel %vm1624, %v3041, %v3043
        %v3047 = vsel %vm1624, 0.0, %v3041
        %v3048 = vsel %vm3013, %v3047, 0.0
        %v3049 = vsel %vm3014, %v3044, 0.0
        %3050 = vrot.lane.b32.xlu0 %v2990, 127
        %v3051 = vpop.permute.xlu0 %3050
        %3052 = vrot.lane.b32.xlu0 %v2992, 127
        %v3053 = vpop.permute.xlu0 %3052
        %v3054 = vsel %vm1665, %v3051, %v3053
        %v3057 = vsel %vm1665, %v3053, 0.0
        %v3058 = vsel %vm3036, %v3054, 0.0
        %v3059 = vsel %vm3037, %v3057, 0.0
        %3060 = vrot.lane.b32.xlu0 %v2990, 113
        %v3061 = vpop.permute.xlu0 %3060
        %3062 = vrot.lane.b32.xlu0 %v2992, 113
        %v3063 = vpop.permute.xlu0 %3062
        %vm3064 = vcmask 924672
        %v3065 = vsel %vm3064, %v3061, %v3063
        %v3068 = vsel %vm3064, %v3063, 0.0
        %v3069 = vsel %vm3013, %v3065, 0.0
        %v3070 = vsel %vm3014, %v3068, 0.0
        %3071 = vrot.lane.b32.xlu0 %v2990, 112
        %v3072 = vpop.permute.xlu0 %3071
        %3073 = vrot.lane.b32.xlu0 %v2992, 112
        %v3074 = vpop.permute.xlu0 %3073
        %vm3075 = vcmask 916480
        %v3076 = vsel %vm3075, %v3072, %v3074
        %v3078 = vsel %vm3075, %v3074, 0.0
        %3079 = vrot.lane.b32.xlu0 %v2990, 111
        %v3080 = vpop.permute.xlu0 %3079
        %3081 = vrot.lane.b32.xlu0 %v2992, 111
        %v3082 = vpop.permute.xlu0 %3081
        %vm3083 = vcmask 908288
        %v3084 = vsel %vm3083, %v3080, %v3082
        %v3087 = vsel %vm3083, %v3082, 0.0
        %v3088 = vsel %vm3036, %v3084, 0.0
        %v3089 = vsel %vm3037, %v3087, 0.0
        %v3091 = vrot.slane %v3024, 6
        %v3092 = vrot.slane %v3022, 6
        %v3097 = vrot.slane %v3038, 4
        %v3098 = vrot.slane %v3039, 4
        %v3103 = vrot.slane %v3048, 2
        %v3104 = vrot.slane %v3049, 2
        %v3109 = vrot.slane %v3058, 6
        %v3110 = vrot.slane %v3059, 6
        %v3115 = vrot.slane %v3069, 4
        %v3116 = vrot.slane %v3070, 4
        %v3120 = vrot.slane %v3076, 2
        %v3121 = vrot.slane %v3078, 2
        %v3124 = vsel %vm1981, %v3015, %v3091
        %v3125 = vsel %vm1981, %v3016, %v3092
        %v3126 = vsel %vm1963, %v3124, %v3097
        %v3127 = vsel %vm1963, %v3125, %v3098
        %v3128 = vsel %vm1945, %v3126, %v3103
        %v3129 = vsel %vm1945, %v3127, %v3104
        %v3130 = vsel %vm1981, %v2990, %v3109
        %v3131 = vsel %vm1981, %v2992, %v3110
        %v3132 = vsel %vm1963, %v3130, %v3115
        %v3133 = vsel %vm1963, %v3131, %v3116
        %v3134 = vsel %vm1945, %v3132, %v3120
        %v3135 = vsel %vm1945, %v3133, %v3121
        %v3136 = vld [vmem:[%s7] sm:$0xf]
        %v3137 = vld [vmem:[#allocation3] sm:$0xf]
        %3139 = vset.pattern.permute.xlu0 0
        %3140 = vperm.xlu0 %3139, %v3137
        %v3141 = vpop.permute.xlu0 %3140
        %vm3143 = vcmask 146432
        %v3145 = vsel %vm3143, %v3136, 0
        %v3148 = vsel %vm1981, %v3088, 0
        %v3151 = vsel %vm1981, %v3089, 0
        %3153 = vmatprep.subr.mxu0 0.0
        %3154 = vmatpush1.msra.mxu0 0.0
        %3155 = vmatprep.subr.mxu0 0.0
        %3156 = vmatpush1.msra.mxu0 0.0
        %3157 = vmatprep.subr.mxu0 0.0
        %3158 = vmatpush1.msra.mxu0 0.0
        %3159 = vmatprep.subr.mxu0 0.0
        %3160 = vmatpush1.msra.mxu0 0.0
        %3161 = vmatprep.subr.mxu0 0.0
        %3162 = vmatpush1.msra.mxu0 0.0
        %3163 = vmatprep.subr.mxu0 0.0
        %3164 = vmatpush1.msra.mxu0 0.0
        %3165 = vmatprep.subr.mxu0 0.0
        %3166 = vmatpush1.msra.mxu0 0.0
        %3167 = vmatprep.subr.mxu0 0.0
        %3168 = vmatpush1.msra.mxu0 0.0
        %3169 = vmatprep.subr.mxu0 0.0
        %3170 = vmatpush1.msra.mxu0 0.0
        %3171 = vmatprep.subr.mxu0 0.0
        %3172 = vmatpush1.msra.mxu0 0.0
        %3173 = vmatprep.subr.mxu0 0.0
        %3174 = vmatpush1.msra.mxu0 0.0
        %3175 = vmatprep.subr.mxu0 0.0
        %3176 = vmatpush1.msra.mxu0 0.0
        %3177 = vmatprep.subr.mxu0 0.0
        %3178 = vmatpush1.msra.mxu0 0.0
        %3179 = vmatprep.subr.mxu0 %v3151
        %3180 = vmatpush1.msra.mxu0 %v3148
        %3181 = vmatprep.subr.mxu0 %v3135
        %3182 = vmatpush1.msra.mxu0 %v3134
        %3183 = vmatprep.subr.mxu0 %v3129
        %3184 = vmatpush1.msra.mxu0 %v3128
        %3185 = vmatprep.subr.mxu0 0.0
        %3186 = vmatpush2.msra.mxu0 0.0
        %3187 = vmatprep.subr.mxu0 0.0
        %3188 = vmatpush2.msra.mxu0 0.0
        %3189 = vmatprep.subr.mxu0 0.0
        %3190 = vmatpush2.msra.mxu0 0.0
        %3191 = vmatprep.subr.mxu0 0.0
        %3192 = vmatpush2.msra.mxu0 0.0
        %3193 = vmatprep.subr.mxu0 0.0
        %3194 = vmatpush2.msra.mxu0 0.0
        %3195 = vmatprep.subr.mxu0 0.0
        %3196 = vmatpush2.msra.mxu0 0.0
        %3197 = vmatprep.subr.mxu0 0.0
        %3198 = vmatpush2.msra.mxu0 0.0
        %3199 = vmatprep.subr.mxu0 0.0
        %3200 = vmatpush2.msra.mxu0 0.0
        %3201 = vmatprep.subr.mxu0 0.0
        %3202 = vmatpush2.msra.mxu0 0.0
        %3203 = vmatprep.subr.mxu0 0.0
        %3204 = vmatpush2.msra.mxu0 0.0
        %3205 = vmatprep.subr.mxu0 0.0
        %3206 = vmatpush2.msra.mxu0 0.0
        %3207 = vmatprep.subr.mxu0 0.0
        %3208 = vmatpush2.msra.mxu0 0.0
        %3209 = vmatprep.subr.mxu0 0.0
        %3210 = vmatpush2.msra.mxu0 0.0
        %3211 = vmatprep.subr.mxu0 0.0
        %3212 = vmatpush2.msra.mxu0 0.0
        %3213 = vmatprep.subr.mxu0 0.0
        %3214 = vmatpush2.msra.mxu0 0.0
        %3215 = vmatprep.subr.mxu0 0.0
        %3216 = vmatpush2.msra.mxu0 0.0
        %3217 = vmatprep.mubr.f32.mxu0 0.0
        %3218 = vmatmul.mubr.f32.gmra.mxu0 %v3145
        %v3219 = vpop.f32.mrf.mxu0
        %v3220 = vadd.f32 %v3141, %v3219
        %v3221 = vpop.f32.mrf.mxu0
        %v3222 = vadd.f32 %v3141, %v3221
        %3223 = vdwg.mxu0
        %v3224 = vmax.f32 %v3220, 0.0
        %v3225 = vmax.f32 %v3222, 0.0
        %3228 = vrot.lane.b32.xlu0 %v3224, 127
        %v3229 = vpop.permute.xlu0 %3228
        %3230 = vrot.lane.b32.xlu0 %v3225, 127
        %v3231 = vpop.permute.xlu0 %3230
        %v3232 = vsel %vm1665, %v3229, %v3231
        %v3235 = vsel %vm1665, %v3231, 0.0
        %v3236 = vmax.f32 %v3224, %v3232
        %v3237 = vmax.f32 %v3225, %v3235
        %3238 = vrot.lane.b32.xlu0 %v3224, 112
        %v3239 = vpop.permute.xlu0 %3238
        %3240 = vrot.lane.b32.xlu0 %v3225, 112
        %v3241 = vpop.permute.xlu0 %3240
        %v3242 = vsel %vm3075, %v3239, %v3241
        %v3245 = vsel %vm3075, %v3241, 0.0
        %v3246 = vmax.f32 %v3236, %v3242
        %v3247 = vmax.f32 %v3237, %v3245
        %3248 = vrot.lane.b32.xlu0 %v3224, 111
        %v3249 = vpop.permute.xlu0 %3248
        %3250 = vrot.lane.b32.xlu0 %v3225, 111
        %v3251 = vpop.permute.xlu0 %3250
        %v3252 = vsel %vm3083, %v3249, %v3251
        %v3255 = vsel %vm3083, %v3251, 0.0
        %v3256 = vmax.f32 %v3246, %v3252
        %v3257 = vmax.f32 %v3247, %v3255
        %v3258 = vld [vmem:[%s63] sm:$0xff]
        %v3259 = vld [vmem:[%s63 + $0x8] sm:$0xff]
        %v3260 = vld [vmem:[%s63 + $0x10] sm:$0xff]
        %v3261 = vld [vmem:[%s63 + $0x18] sm:$0xff]
        %v3262 = vld [vmem:[%s63 + $0x20] sm:$0xff]
        %v3263 = vld [vmem:[%s63 + $0x28] sm:$0xff]
        %v3264 = vld [vmem:[%s63 + $0x30] sm:$0xff]
        %v3265 = vld [vmem:[%s63 + $0x38] sm:$0xff]
        %v3266 = vld [vmem:[%s63 + $0x40] sm:$0xff]
        %v3267 = vld [vmem:[%s63 + $0x48] sm:$0xff]
        %v3268 = vld [vmem:[%s63 + $0x50] sm:$0xff]
        %v3269 = vld [vmem:[%s63 + $0x58] sm:$0xff]
        %v3270 = vld [vmem:[%s63 + $0x60] sm:$0xff]
        %v3271 = vld [vmem:[%s63 + $0x68] sm:$0xff]
        %v3272 = vld [vmem:[%s63 + $0x70] sm:$0xff]
        %v3273 = vld [vmem:[%s63 + $0x78] sm:$0xff]
        %v3274 = vld [vmem:[%s63 + $0x80] sm:$0xff]
        %v3275 = vld [vmem:[%s63 + $0x88] sm:$0xff]
        %v3276 = vld [vmem:[%s63 + $0x90] sm:$0xff]
        %v3277 = vld [vmem:[%s63 + $0x98] sm:$0xff]
        %v3278 = vld [vmem:[%s63 + $0xa0] sm:$0xff]
        %v3279 = vld [vmem:[%s63 + $0xa8] sm:$0xff]
        %v3280 = vld [vmem:[%s63 + $0xb0] sm:$0xff]
        %v3281 = vld [vmem:[%s63 + $0xb8] sm:$0xff]
        %v3282 = vld [vmem:[%s63 + $0xc0] sm:$0xff]
        %v3283 = vld [vmem:[%s63 + $0xc8] sm:$0xff]
        %v3284 = vld [vmem:[%s63 + $0xd0] sm:$0xff]
        %v3285 = vld [vmem:[%s63 + $0xd8] sm:$0xff]
        %v3286 = vld [vmem:[%s63 + $0xe0] sm:$0xff]
        %v3287 = vld [vmem:[%s63 + $0xe8] sm:$0xff]
        %v3288 = vld [vmem:[%s63 + $0xf0] sm:$0xff]
        %v3289 = vld [vmem:[%s63 + $0xf8] sm:$0xff]
        %3290 = vmatprep.subr.mxu0 0.0
        %3291 = vmatpush1.msra.mxu0 %v3273
        %3292 = vmatprep.subr.mxu0 0.0
        %3293 = vmatpush1.msra.mxu0 %v3272
        %3294 = vmatprep.subr.mxu0 0.0
        %3295 = vmatpush1.msra.mxu0 %v3271
        %3296 = vmatprep.subr.mxu0 0.0
        %3297 = vmatpush1.msra.mxu0 %v3270
        %3298 = vmatprep.subr.mxu0 0.0
        %3299 = vmatpush1.msra.mxu0 %v3269
        %3300 = vmatprep.subr.mxu0 0.0
        %3301 = vmatpush1.msra.mxu0 %v3268
        %3302 = vmatprep.subr.mxu0 0.0
        %3303 = vmatpush1.msra.mxu0 %v3267
        %3304 = vmatprep.subr.mxu0 0.0
        %3305 = vmatpush1.msra.mxu0 %v3266
        %3306 = vmatprep.subr.mxu0 0.0
        %3307 = vmatpush1.msra.mxu0 %v3265
        %3308 = vmatprep.subr.mxu0 0.0
        %3309 = vmatpush1.msra.mxu0 %v3264
        %3310 = vmatprep.subr.mxu0 0.0
        %3311 = vmatpush1.msra.mxu0 %v3263
        %3312 = vmatprep.subr.mxu0 0.0
        %3313 = vmatpush1.msra.mxu0 %v3262
        %3314 = vmatprep.subr.mxu0 0.0
        %3315 = vmatpush1.msra.mxu0 %v3261
        %3316 = vmatprep.subr.mxu0 0.0
        %3317 = vmatpush1.msra.mxu0 %v3260
        %3318 = vmatprep.subr.mxu0 0.0
        %3319 = vmatpush1.msra.mxu0 %v3259
        %3320 = vmatprep.subr.mxu0 0.0
        %3321 = vmatpush1.msra.mxu0 %v3258
        %3322 = vmatprep.subr.mxu0 0.0
        %3323 = vmatpush2.msra.mxu0 %v3289
        %3324 = vmatprep.subr.mxu0 0.0
        %3325 = vmatpush2.msra.mxu0 %v3288
        %3326 = vmatprep.subr.mxu0 0.0
        %3327 = vmatpush2.msra.mxu0 %v3287
        %3328 = vmatprep.subr.mxu0 0.0
        %3329 = vmatpush2.msra.mxu0 %v3286
        %3330 = vmatprep.subr.mxu0 0.0
        %3331 = vmatpush2.msra.mxu0 %v3285
        %3332 = vmatprep.subr.mxu0 0.0
        %3333 = vmatpush2.msra.mxu0 %v3284
        %3334 = vmatprep.subr.mxu0 0.0
        %3335 = vmatpush2.msra.mxu0 %v3283
        %3336 = vmatprep.subr.mxu0 0.0
        %3337 = vmatpush2.msra.mxu0 %v3282
        %3338 = vmatprep.subr.mxu0 0.0
        %3339 = vmatpush2.msra.mxu0 %v3281
        %3340 = vmatprep.subr.mxu0 0.0
        %3341 = vmatpush2.msra.mxu0 %v3280
        %3342 = vmatprep.subr.mxu0 0.0
        %3343 = vmatpush2.msra.mxu0 %v3279
        %3344 = vmatprep.subr.mxu0 0.0
        %3345 = vmatpush2.msra.mxu0 %v3278
        %3346 = vmatprep.subr.mxu0 0.0
        %3347 = vmatpush2.msra.mxu0 %v3277
        %3348 = vmatprep.subr.mxu0 0.0
        %3349 = vmatpush2.msra.mxu0 %v3276
        %3350 = vmatprep.subr.mxu0 0.0
        %3351 = vmatpush2.msra.mxu0 %v3275
        %3352 = vmatprep.subr.mxu0 0.0
        %3353 = vmatpush2.msra.mxu0 %v3274
        %3354 = vmatprep.mubr.f32.mxu0 %v3257
        %3355 = vmatmul.mubr.f32.gmra.mxu0 %v3256
        %v3356 = vpop.f32.mrf.mxu0
        %v3357 = vadd.f32 0.0, %v3356
        %v3358 = vpop.f32.mrf.mxu0
        %3359 = vdwg.mxu0
        %v3360 = vand.u32 %v1428, 7
        %vm3361 = vcmp.gt.s32.totalorder %v3360, 0
        %vm3362 = vcmp.lt.s32.totalorder %v3360, 7
        %3364 = vrot.lane.b32.xlu0 %v3357, 9
        %v3365 = vpop.permute.xlu0 %3364
        %vm3367 = vcmask 72704
        %v3368 = vsel %vm3367, 0.0, %v3365
        %v3369 = vsel %vm3361, 1, 0
        %vm3370 = vcmp.eq.s32.totalorder %v3369, 1
        %v3371 = vsel %vm3370, %v3368, 0.0
        %3372 = vrot.lane.b32.xlu0 %v3357, 8
        %v3373 = vpop.permute.xlu0 %3372
        %vm3375 = vcmask 64512
        %v3376 = vsel %vm3375, 0.0, %v3373
        %3377 = vrot.lane.b32.xlu0 %v3357, 7
        %v3378 = vpop.permute.xlu0 %3377
        %vm3380 = vcmask 56320
        %v3381 = vsel %vm3380, 0.0, %v3378
        %v3382 = vsel %vm3362, 1, 0
        %vm3383 = vcmp.eq.s32.totalorder %v3382, 1
        %v3384 = vsel %vm3383, %v3381, 0.0
        %3385 = vrot.lane.b32.xlu0 %v3357, 1
        %v3386 = vpop.permute.xlu0 %3385
        %v3388 = vsel %vm1624, 0.0, %v3386
        %v3389 = vsel %vm3370, %v3388, 0.0
        %3390 = vrot.lane.b32.xlu0 %v3357, 127
        %v3391 = vpop.permute.xlu0 %3390
        %vm3393 = vcmask 515072
        %v3394 = vsel %vm3393, %v3391, 0.0
        %v3395 = vsel %vm3383, %v3394, 0.0
        %3396 = vrot.lane.b32.xlu0 %v3357, 121
        %v3397 = vpop.permute.xlu0 %3396
        %vm3399 = vcmask 465920
        %v3400 = vsel %vm3399, %v3397, 0.0
        %v3401 = vsel %vm3370, %v3400, 0.0
        %3402 = vrot.lane.b32.xlu0 %v3357, 120
        %v3403 = vpop.permute.xlu0 %3402
        %vm3405 = vcmask 457728
        %v3406 = vsel %vm3405, %v3403, 0.0
        %3407 = vrot.lane.b32.xlu0 %v3357, 119
        %v3408 = vpop.permute.xlu0 %3407
        %vm3410 = vcmask 449536
        %v3411 = vsel %vm3410, %v3408, 0.0
        %v3412 = vsel %vm3383, %v3411, 0.0
        %v3414 = vrot.slane %v3376, 4
        %v3417 = vrot.slane %v3389, 4
        %v3420 = vrot.slane %v3395, 4
        %v3423 = vrot.slane %v3406, 4
        %v3425 = vsel %vm1963, %v3371, %v3414
        %v3426 = vsel %vm1963, %v3384, %v3417
        %v3427 = vsel %vm1963, %v3357, %v3420
        %v3428 = vsel %vm1963, %v3401, %v3423
        %v3429 = vld [vmem:[#allocation5] sm:$0xff]
        %v3430 = vld [vmem:[#allocation7] sm:$0xff]
        %3432 = vset.pattern.permute.xlu0 0
        %3433 = vperm.xlu0 %3432, %v3430
        %v3434 = vpop.permute.xlu0 %3433
        %vm3436 = vcmask 293888
        %v3438 = vsel %vm3436, %v3429, 0
        %v3441 = vsel %vm1963, %v3412, 0
        %3443 = vmatprep.subr.mxu0 0.0
        %3444 = vmatpush1.msra.mxu0 0.0
        %3445 = vmatprep.subr.mxu0 0.0
        %3446 = vmatpush1.msra.mxu0 0.0
        %3447 = vmatprep.subr.mxu0 0.0
        %3448 = vmatpush1.msra.mxu0 0.0
        %3449 = vmatprep.subr.mxu0 0.0
        %3450 = vmatpush1.msra.mxu0 0.0
        %3451 = vmatprep.subr.mxu0 0.0
        %3452 = vmatpush1.msra.mxu0 0.0
        %3453 = vmatprep.subr.mxu0 0.0
        %3454 = vmatpush1.msra.mxu0 0.0
        %3455 = vmatprep.subr.mxu0 0.0
        %3456 = vmatpush1.msra.mxu0 0.0
        %3457 = vmatprep.subr.mxu0 0.0
        %3458 = vmatpush1.msra.mxu0 0.0
        %3459 = vmatprep.subr.mxu0 0.0
        %3460 = vmatpush1.msra.mxu0 0.0
        %3461 = vmatprep.subr.mxu0 0.0
        %3462 = vmatpush1.msra.mxu0 0.0
        %3463 = vmatprep.subr.mxu0 0.0
        %3464 = vmatpush1.msra.mxu0 0.0
        %3465 = vmatprep.subr.mxu0 0.0
        %3466 = vmatpush1.msra.mxu0 %v3441
        %3467 = vmatprep.subr.mxu0 0.0
        %3468 = vmatpush1.msra.mxu0 %v3428
        %3469 = vmatprep.subr.mxu0 0.0
        %3470 = vmatpush1.msra.mxu0 %v3427
        %3471 = vmatprep.subr.mxu0 0.0
        %3472 = vmatpush1.msra.mxu0 %v3426
        %3473 = vmatprep.subr.mxu0 0.0
        %3474 = vmatpush1.msra.mxu0 %v3425
        %3475 = vmatprep.subr.mxu0 0.0
        %3476 = vmatpush2.msra.mxu0 0.0
        %3477 = vmatprep.subr.mxu0 0.0
        %3478 = vmatpush2.msra.mxu0 0.0
        %3479 = vmatprep.subr.mxu0 0.0
        %3480 = vmatpush2.msra.mxu0 0.0
        %3481 = vmatprep.subr.mxu0 0.0
        %3482 = vmatpush2.msra.mxu0 0.0
        %3483 = vmatprep.subr.mxu0 0.0
        %3484 = vmatpush2.msra.mxu0 0.0
        %3485 = vmatprep.subr.mxu0 0.0
        %3486 = vmatpush2.msra.mxu0 0.0
        %3487 = vmatprep.subr.mxu0 0.0
        %3488 = vmatpush2.msra.mxu0 0.0
        %3489 = vmatprep.subr.mxu0 0.0
        %3490 = vmatpush2.msra.mxu0 0.0
        %3491 = vmatprep.subr.mxu0 0.0
        %3492 = vmatpush2.msra.mxu0 0.0
        %3493 = vmatprep.subr.mxu0 0.0
        %3494 = vmatpush2.msra.mxu0 0.0
        %3495 = vmatprep.subr.mxu0 0.0
        %3496 = vmatpush2.msra.mxu0 0.0
        %3497 = vmatprep.subr.mxu0 0.0
        %3498 = vmatpush2.msra.mxu0 0.0
        %3499 = vmatprep.subr.mxu0 0.0
        %3500 = vmatpush2.msra.mxu0 0.0
        %3501 = vmatprep.subr.mxu0 0.0
        %3502 = vmatpush2.msra.mxu0 0.0
        %3503 = vmatprep.subr.mxu0 0.0
        %3504 = vmatpush2.msra.mxu0 0.0
        %3505 = vmatprep.subr.mxu0 0.0
        %3506 = vmatpush2.msra.mxu0 0.0
        %3507 = vmatprep.mubr.f32.mxu0 0.0
        %3508 = vmatmul.mubr.f32.gmra.mxu0 %v3438
        %v3509 = vpop.f32.mrf.mxu0
        %v3510 = vadd.f32 %v3434, %v3509
        %v3511 = vpop.f32.mrf.mxu0
        %3512 = vdwg.mxu0
        %v3513 = vmax.f32 %v3510, 0.0
        %3515 = vrot.lane.b32.xlu0 %v3513, 127
        %v3516 = vpop.permute.xlu0 %3515
        %v3518 = vsel %vm3393, %v3516, 0.0
        %v3519 = vmax.f32 %v3513, %v3518
        %3520 = vrot.lane.b32.xlu0 %v3513, 120
        %v3521 = vpop.permute.xlu0 %3520
        %v3523 = vsel %vm3405, %v3521, 0.0
        %v3524 = vmax.f32 %v3519, %v3523
        %3525 = vrot.lane.b32.xlu0 %v3513, 119
        %v3526 = vpop.permute.xlu0 %3525
        %v3528 = vsel %vm3410, %v3526, 0.0
        %v3529 = vmax.f32 %v3524, %v3528
        %v3530 = vld [vmem:[%s65] sm:$0xff]
        %v3531 = vld [vmem:[%s65 + $0x8] sm:$0xff]
        %v3532 = vld [vmem:[%s65 + $0x10] sm:$0xff]
        %v3533 = vld [vmem:[%s65 + $0x18] sm:$0xff]
        %v3534 = vld [vmem:[%s65 + $0x20] sm:$0xff]
        %v3535 = vld [vmem:[%s65 + $0x28] sm:$0xff]
        %v3536 = vld [vmem:[%s65 + $0x30] sm:$0xff]
        %v3537 = vld [vmem:[%s65 + $0x38] sm:$0xff]
        %vm3538 = vcmask 523264
        %v3540 = vsel %vm3538, %v3529, 0
        %3542 = vmatprep.subr.mxu0 0.0
        %3543 = vmatpush1.msra.mxu0 0.0
        %3544 = vmatprep.subr.mxu0 0.0
        %3545 = vmatpush1.msra.mxu0 0.0
        %3546 = vmatprep.subr.mxu0 0.0
        %3547 = vmatpush1.msra.mxu0 0.0
        %3548 = vmatprep.subr.mxu0 0.0
        %3549 = vmatpush1.msra.mxu0 0.0
        %3550 = vmatprep.subr.mxu0 0.0
        %3551 = vmatpush1.msra.mxu0 0.0
        %3552 = vmatprep.subr.mxu0 0.0
        %3553 = vmatpush1.msra.mxu0 0.0
        %3554 = vmatprep.subr.mxu0 0.0
        %3555 = vmatpush1.msra.mxu0 0.0
        %3556 = vmatprep.subr.mxu0 0.0
        %3557 = vmatpush1.msra.mxu0 0.0
        %3558 = vmatprep.subr.mxu0 0.0
        %3559 = vmatpush1.msra.mxu0 %v3537
        %3560 = vmatprep.subr.mxu0 0.0
        %3561 = vmatpush1.msra.mxu0 %v3536
        %3562 = vmatprep.subr.mxu0 0.0
        %3563 = vmatpush1.msra.mxu0 %v3535
        %3564 = vmatprep.subr.mxu0 0.0
        %3565 = vmatpush1.msra.mxu0 %v3534
        %3566 = vmatprep.subr.mxu0 0.0
        %3567 = vmatpush1.msra.mxu0 %v3533
        %3568 = vmatprep.subr.mxu0 0.0
        %3569 = vmatpush1.msra.mxu0 %v3532
        %3570 = vmatprep.subr.mxu0 0.0
        %3571 = vmatpush1.msra.mxu0 %v3531
        %3572 = vmatprep.subr.mxu0 0.0
        %3573 = vmatpush1.msra.mxu0 %v3530
        %3574 = vmatprep.subr.mxu0 0.0
        %3575 = vmatpush2.msra.mxu0 0.0
        %3576 = vmatprep.subr.mxu0 0.0
        %3577 = vmatpush2.msra.mxu0 0.0
        %3578 = vmatprep.subr.mxu0 0.0
        %3579 = vmatpush2.msra.mxu0 0.0
        %3580 = vmatprep.subr.mxu0 0.0
        %3581 = vmatpush2.msra.mxu0 0.0
        %3582 = vmatprep.subr.mxu0 0.0
        %3583 = vmatpush2.msra.mxu0 0.0
        %3584 = vmatprep.subr.mxu0 0.0
        %3585 = vmatpush2.msra.mxu0 0.0
        %3586 = vmatprep.subr.mxu0 0.0
        %3587 = vmatpush2.msra.mxu0 0.0
        %3588 = vmatprep.subr.mxu0 0.0
        %3589 = vmatpush2.msra.mxu0 0.0
        %3590 = vmatprep.subr.mxu0 0.0
        %3591 = vmatpush2.msra.mxu0 0.0
        %3592 = vmatprep.subr.mxu0 0.0
        %3593 = vmatpush2.msra.mxu0 0.0
        %3594 = vmatprep.subr.mxu0 0.0
        %3595 = vmatpush2.msra.mxu0 0.0
        %3596 = vmatprep.subr.mxu0 0.0
        %3597 = vmatpush2.msra.mxu0 0.0
        %3598 = vmatprep.subr.mxu0 0.0
        %3599 = vmatpush2.msra.mxu0 0.0
        %3600 = vmatprep.subr.mxu0 0.0
        %3601 = vmatpush2.msra.mxu0 0.0
        %3602 = vmatprep.subr.mxu0 0.0
        %3603 = vmatpush2.msra.mxu0 0.0
        %3604 = vmatprep.subr.mxu0 0.0
        %3605 = vmatpush2.msra.mxu0 0.0
        %3606 = vmatprep.mubr.f32.mxu0 0.0
        %3607 = vmatmul.mubr.f32.gmra.mxu0 %v3540
        %v3608 = vpop.f32.mrf.mxu0
        %v3609 = vadd.f32 0.0, %v3608
        %v3610 = vpop.f32.mrf.mxu0
        %3611 = vdwg.mxu0
        %v3612 = vand.u32 %v1428, 3
        %vm3613 = vcmp.gt.s32.totalorder %v3612, 0
        %vm3614 = vcmp.lt.s32.totalorder %v3612, 3
        %3616 = vrot.lane.b32.xlu0 %v3609, 5
        %v3617 = vpop.permute.xlu0 %3616
        %vm3619 = vcmask 39936
        %v3620 = vsel %vm3619, 0.0, %v3617
        %v3621 = vsel %vm3613, 1, 0
        %vm3622 = vcmp.eq.s32.totalorder %v3621, 1
        %v3623 = vsel %vm3622, %v3620, 0.0
        %3624 = vrot.lane.b32.xlu0 %v3609, 4
        %v3625 = vpop.permute.xlu0 %3624
        %vm3627 = vcmask 31744
        %v3628 = vsel %vm3627, 0.0, %v3625
        %3629 = vrot.lane.b32.xlu0 %v3609, 3
        %v3630 = vpop.permute.xlu0 %3629
        %vm3632 = vcmask 23552
        %v3633 = vsel %vm3632, 0.0, %v3630
        %v3634 = vsel %vm3614, 1, 0
        %vm3635 = vcmp.eq.s32.totalorder %v3634, 1
        %v3636 = vsel %vm3635, %v3633, 0.0
        %3637 = vrot.lane.b32.xlu0 %v3609, 1
        %v3638 = vpop.permute.xlu0 %3637
        %v3640 = vsel %vm1624, 0.0, %v3638
        %v3641 = vsel %vm3622, %v3640, 0.0
        %3642 = vrot.lane.b32.xlu0 %v3609, 127
        %v3643 = vpop.permute.xlu0 %3642
        %v3645 = vsel %vm3029, %v3643, 0.0
        %v3646 = vsel %vm3635, %v3645, 0.0
        %3647 = vrot.lane.b32.xlu0 %v3609, 125
        %v3648 = vpop.permute.xlu0 %3647
        %vm3650 = vcmask 105472
        %v3651 = vsel %vm3650, %v3648, 0.0
        %v3652 = vsel %vm3622, %v3651, 0.0
        %3653 = vrot.lane.b32.xlu0 %v3609, 124
        %v3654 = vpop.permute.xlu0 %3653
        %vm3656 = vcmask 97280
        %v3657 = vsel %vm3656, %v3654, 0.0
        %3658 = vrot.lane.b32.xlu0 %v3609, 123
        %v3659 = vpop.permute.xlu0 %3658
        %vm3661 = vcmask 89088
        %v3662 = vsel %vm3661, %v3659, 0.0
        %v3663 = vsel %vm3635, %v3662, 0.0
        %v3664 = vld [vmem:[#allocation8] sm:$0xff]
        %v3665 = vld [vmem:[#allocation8 + $0x8] sm:$0xff]
        %v3666 = vld [vmem:[#allocation10] sm:$0xff]
        %v3667 = vld [vmem:[#allocation10 + $0x8] sm:$0xff]
        %3669 = vset.pattern.permute.xlu0 0
        %3670 = vperm.xlu0 %3669, %v3666
        %v3671 = vpop.permute.xlu0 %3670
        %3674 = vset.pattern.permute.xlu0 0
        %3675 = vperm.xlu0 %3674, %v3667
        %v3676 = vpop.permute.xlu0 %3675
        %vm3678 = vcmask 588800
        %v3680 = vsel %vm3678, %v3664, 0
        %v3683 = vsel %vm3678, %v3665, 0
        %3685 = vmatprep.subr.mxu0 0.0
        %3686 = vmatpush1.msra.mxu0 0.0
        %3687 = vmatprep.subr.mxu0 0.0
        %3688 = vmatpush1.msra.mxu0 0.0
        %3689 = vmatprep.subr.mxu0 0.0
        %3690 = vmatpush1.msra.mxu0 0.0
        %3691 = vmatprep.subr.mxu0 0.0
        %3692 = vmatpush1.msra.mxu0 0.0
        %3693 = vmatprep.subr.mxu0 0.0
        %3694 = vmatpush1.msra.mxu0 0.0
        %3695 = vmatprep.subr.mxu0 0.0
        %3696 = vmatpush1.msra.mxu0 0.0
        %3697 = vmatprep.subr.mxu0 0.0
        %3698 = vmatpush1.msra.mxu0 0.0
        %3699 = vmatprep.subr.mxu0 0.0
        %3700 = vmatpush1.msra.mxu0 %v3663
        %3701 = vmatprep.subr.mxu0 0.0
        %3702 = vmatpush1.msra.mxu0 %v3657
        %3703 = vmatprep.subr.mxu0 0.0
        %3704 = vmatpush1.msra.mxu0 %v3652
        %3705 = vmatprep.subr.mxu0 0.0
        %3706 = vmatpush1.msra.mxu0 %v3646
        %3707 = vmatprep.subr.mxu0 0.0
        %3708 = vmatpush1.msra.mxu0 %v3609
        %3709 = vmatprep.subr.mxu0 0.0
        %3710 = vmatpush1.msra.mxu0 %v3641
        %3711 = vmatprep.subr.mxu0 0.0
        %3712 = vmatpush1.msra.mxu0 %v3636
        %3713 = vmatprep.subr.mxu0 0.0
        %3714 = vmatpush1.msra.mxu0 %v3628
        %3715 = vmatprep.subr.mxu0 0.0
        %3716 = vmatpush1.msra.mxu0 %v3623
        %3717 = vmatprep.subr.mxu0 0.0
        %3718 = vmatpush2.msra.mxu0 0.0
        %3719 = vmatprep.subr.mxu0 0.0
        %3720 = vmatpush2.msra.mxu0 0.0
        %3721 = vmatprep.subr.mxu0 0.0
        %3722 = vmatpush2.msra.mxu0 0.0
        %3723 = vmatprep.subr.mxu0 0.0
        %3724 = vmatpush2.msra.mxu0 0.0
        %3725 = vmatprep.subr.mxu0 0.0
        %3726 = vmatpush2.msra.mxu0 0.0
        %3727 = vmatprep.subr.mxu0 0.0
        %3728 = vmatpush2.msra.mxu0 0.0
        %3729 = vmatprep.subr.mxu0 0.0
        %3730 = vmatpush2.msra.mxu0 0.0
        %3731 = vmatprep.subr.mxu0 0.0
        %3732 = vmatpush2.msra.mxu0 0.0
        %3733 = vmatprep.subr.mxu0 0.0
        %3734 = vmatpush2.msra.mxu0 0.0
        %3735 = vmatprep.subr.mxu0 0.0
        %3736 = vmatpush2.msra.mxu0 0.0
        %3737 = vmatprep.subr.mxu0 0.0
        %3738 = vmatpush2.msra.mxu0 0.0
        %3739 = vmatprep.subr.mxu0 0.0
        %3740 = vmatpush2.msra.mxu0 0.0
        %3741 = vmatprep.subr.mxu0 0.0
        %3742 = vmatpush2.msra.mxu0 0.0
        %3743 = vmatprep.subr.mxu0 0.0
        %3744 = vmatpush2.msra.mxu0 0.0
        %3745 = vmatprep.subr.mxu0 0.0
        %3746 = vmatpush2.msra.mxu0 0.0
        %3747 = vmatprep.subr.mxu0 0.0
        %3748 = vmatpush2.msra.mxu0 0.0
        %3749 = vmatprep.mubr.f32.mxu0 0.0
        %3750 = vmatmul.mubr.f32.gmra.mxu0 %v3680
        %v3751 = vpop.f32.mrf.mxu0
        %v3752 = vadd.f32 %v3671, %v3751
        %v3753 = vpop.f32.mrf.mxu0
        %3754 = vmatprep.mubr.f32.mxu0 0.0
        %3755 = vmatmul.mubr.f32.gmra.mxu0 %v3683
        %v3756 = vpop.f32.mrf.mxu0
        %v3757 = vadd.f32 %v3676, %v3756
        %v3758 = vpop.f32.mrf.mxu0
        %3759 = vdwg.mxu0
        %v3760 = vmax.f32 %v3752, 0.0
        %v3761 = vmax.f32 %v3757, 0.0
        %3764 = vrot.lane.b32.xlu0 %v3760, 127
        %v3765 = vpop.permute.xlu0 %3764
        %3766 = vrot.lane.b32.xlu0 %v3761, 127
        %v3767 = vpop.permute.xlu0 %3766
        %v3770 = vsel %vm3029, %v3765, 0.0
        %v3771 = vsel %vm3029, %v3767, 0.0
        %v3772 = vmax.f32 %v3760, %v3770
        %v3773 = vmax.f32 %v3761, %v3771
        %3774 = vrot.lane.b32.xlu0 %v3760, 124
        %v3775 = vpop.permute.xlu0 %3774
        %3776 = vrot.lane.b32.xlu0 %v3761, 124
        %v3777 = vpop.permute.xlu0 %3776
        %v3780 = vsel %vm3656, %v3775, 0.0
        %v3781 = vsel %vm3656, %v3777, 0.0
        %v3782 = vmax.f32 %v3772, %v3780
        %v3783 = vmax.f32 %v3773, %v3781
        %3784 = vrot.lane.b32.xlu0 %v3760, 123
        %v3785 = vpop.permute.xlu0 %3784
        %3786 = vrot.lane.b32.xlu0 %v3761, 123
        %v3787 = vpop.permute.xlu0 %3786
        %v3790 = vsel %vm3661, %v3785, 0.0
        %v3791 = vsel %vm3661, %v3787, 0.0
        %v3792 = vmax.f32 %v3782, %v3790
        %v3793 = vmax.f32 %v3783, %v3791
        %v3794 = vld [vmem:[#allocation43] sm:$0xff]
        %v3795 = vld [vmem:[#allocation43 + $0x8] sm:$0xff]
        %v3797 = vsel %vm3021, %v3792, 0
        %v3800 = vsel %vm3021, %v3793, 0
        %3802 = vmatprep.subr.mxu0 0.0
        %3803 = vmatpush1.msra.mxu0 0.0
        %3804 = vmatprep.subr.mxu0 0.0
        %3805 = vmatpush1.msra.mxu0 0.0
        %3806 = vmatprep.subr.mxu0 0.0
        %3807 = vmatpush1.msra.mxu0 0.0
        %3808 = vmatprep.subr.mxu0 0.0
        %3809 = vmatpush1.msra.mxu0 0.0
        %3810 = vmatprep.subr.mxu0 0.0
        %3811 = vmatpush1.msra.mxu0 0.0
        %3812 = vmatprep.subr.mxu0 0.0
        %3813 = vmatpush1.msra.mxu0 0.0
        %3814 = vmatprep.subr.mxu0 0.0
        %3815 = vmatpush1.msra.mxu0 0.0
        %3816 = vmatprep.subr.mxu0 0.0
        %3817 = vmatpush1.msra.mxu0 0.0
        %3818 = vmatprep.subr.mxu0 0.0
        %3819 = vmatpush1.msra.mxu0 0.0
        %3820 = vmatprep.subr.mxu0 0.0
        %3821 = vmatpush1.msra.mxu0 0.0
        %3822 = vmatprep.subr.mxu0 0.0
        %3823 = vmatpush1.msra.mxu0 0.0
        %3824 = vmatprep.subr.mxu0 0.0
        %3825 = vmatpush1.msra.mxu0 0.0
        %3826 = vmatprep.subr.mxu0 0.0
        %3827 = vmatpush1.msra.mxu0 0.0
        %3828 = vmatprep.subr.mxu0 0.0
        %3829 = vmatpush1.msra.mxu0 0.0
        %3830 = vmatprep.subr.mxu0 0.0
        %3831 = vmatpush1.msra.mxu0 %v3795
        %3832 = vmatprep.subr.mxu0 0.0
        %3833 = vmatpush1.msra.mxu0 %v3794
        %3834 = vmatprep.subr.mxu0 0.0
        %3835 = vmatpush2.msra.mxu0 0.0
        %3836 = vmatprep.subr.mxu0 0.0
        %3837 = vmatpush2.msra.mxu0 0.0
        %3838 = vmatprep.subr.mxu0 0.0
        %3839 = vmatpush2.msra.mxu0 0.0
        %3840 = vmatprep.subr.mxu0 0.0
        %3841 = vmatpush2.msra.mxu0 0.0
        %3842 = vmatprep.subr.mxu0 0.0
        %3843 = vmatpush2.msra.mxu0 0.0
        %3844 = vmatprep.subr.mxu0 0.0
        %3845 = vmatpush2.msra.mxu0 0.0
        %3846 = vmatprep.subr.mxu0 0.0
        %3847 = vmatpush2.msra.mxu0 0.0
        %3848 = vmatprep.subr.mxu0 0.0
        %3849 = vmatpush2.msra.mxu0 0.0
        %3850 = vmatprep.subr.mxu0 0.0
        %3851 = vmatpush2.msra.mxu0 0.0
        %3852 = vmatprep.subr.mxu0 0.0
        %3853 = vmatpush2.msra.mxu0 0.0
        %3854 = vmatprep.subr.mxu0 0.0
        %3855 = vmatpush2.msra.mxu0 0.0
        %3856 = vmatprep.subr.mxu0 0.0
        %3857 = vmatpush2.msra.mxu0 0.0
        %3858 = vmatprep.subr.mxu0 0.0
        %3859 = vmatpush2.msra.mxu0 0.0
        %3860 = vmatprep.subr.mxu0 0.0
        %3861 = vmatpush2.msra.mxu0 0.0
        %3862 = vmatprep.subr.mxu0 0.0
        %3863 = vmatpush2.msra.mxu0 0.0
        %3864 = vmatprep.subr.mxu0 0.0
        %3865 = vmatpush2.msra.mxu0 0.0
        %3866 = vmatprep.mubr.f32.mxu0 0.0
        %3867 = vmatmul.mubr.f32.gmra.mxu0 %v3797
        %v3868 = vpop.f32.mrf.mxu0
        %v3869 = vadd.f32 0.0, %v3868
        %v3870 = vpop.f32.mrf.mxu0
        %3871 = vmatprep.mubr.f32.mxu0 0.0
        %3872 = vmatmul.mubr.f32.gmra.mxu0 %v3800
        %v3873 = vpop.f32.mrf.mxu0
        %v3874 = vadd.f32 0.0, %v3873
        %v3875 = vpop.f32.mrf.mxu0
        %3876 = vdwg.mxu0
        %v3877 = vand.u32 %v1428, 1
        %vm3878 = vcmp.gt.s32.totalorder %v3877, 0
        %vm3879 = vcmp.lt.s32.totalorder %v3877, 1
        %3882 = vrot.lane.b32.xlu0 %v3869, 3
        %v3883 = vpop.permute.xlu0 %3882
        %3884 = vrot.lane.b32.xlu0 %v3874, 3
        %v3885 = vpop.permute.xlu0 %3884
        %v3888 = vsel %vm3632, 0.0, %v3883
        %v3889 = vsel %vm3632, 0.0, %v3885
        %v3890 = vsel %vm3878, 1, 0
        %vm3891 = vcmp.eq.s32.totalorder %v3890, 1
        %v3892 = vsel %vm3891, %v3888, 0.0
        %v3893 = vsel %vm3891, %v3889, 0.0
        %3894 = vrot.lane.b32.xlu0 %v3869, 2
        %v3895 = vpop.permute.xlu0 %3894
        %3896 = vrot.lane.b32.xlu0 %v3874, 2
        %v3897 = vpop.permute.xlu0 %3896
        %vm3900 = vcmask 15360
        %v3901 = vsel %vm3900, 0.0, %v3895
        %v3902 = vsel %vm3900, 0.0, %v3897
        %3903 = vrot.lane.b32.xlu0 %v3869, 1
        %v3904 = vpop.permute.xlu0 %3903
        %3905 = vrot.lane.b32.xlu0 %v3874, 1
        %v3906 = vpop.permute.xlu0 %3905
        %v3909 = vsel %vm1624, 0.0, %v3904
        %v3910 = vsel %vm1624, 0.0, %v3906
        %v3911 = vsel %vm3879, 1, 0
        %vm3912 = vcmp.eq.s32.totalorder %v3911, 1
        %v3913 = vsel %vm3912, %v3909, 0.0
        %v3914 = vsel %vm3912, %v3910, 0.0
        %v3915 = vsel %vm3891, %v3909, 0.0
        %v3916 = vsel %vm3891, %v3910, 0.0
        %3917 = vrot.lane.b32.xlu0 %v3869, 127
        %v3918 = vpop.permute.xlu0 %3917
        %3919 = vrot.lane.b32.xlu0 %v3874, 127
        %v3920 = vpop.permute.xlu0 %3919
        %v3923 = vsel %vm3632, %v3918, 0.0
        %v3924 = vsel %vm3632, %v3920, 0.0
        %v3925 = vsel %vm3912, %v3923, 0.0
        %v3926 = vsel %vm3912, %v3924, 0.0
        %v3927 = vsel %vm3891, %v3923, 0.0
        %v3928 = vsel %vm3891, %v3924, 0.0
        %3929 = vrot.lane.b32.xlu0 %v3869, 126
        %v3930 = vpop.permute.xlu0 %3929
        %3931 = vrot.lane.b32.xlu0 %v3874, 126
        %v3932 = vpop.permute.xlu0 %3931
        %v3935 = vsel %vm3900, %v3930, 0.0
        %v3936 = vsel %vm3900, %v3932, 0.0
        %3937 = vrot.lane.b32.xlu0 %v3869, 125
        %v3938 = vpop.permute.xlu0 %3937
        %3939 = vrot.lane.b32.xlu0 %v3874, 125
        %v3940 = vpop.permute.xlu0 %3939
        %v3943 = vsel %vm1624, %v3938, 0.0
        %v3944 = vsel %vm1624, %v3940, 0.0
        %v3945 = vsel %vm3912, %v3943, 0.0
        %v3946 = vsel %vm3912, %v3944, 0.0
        %v3947 = vld [vmem:[#allocation11] sm:$0xff]
        %v3948 = vld [vmem:[#allocation11 + $0x8] sm:$0xff]
        %v3949 = vld [vmem:[#allocation11 + $0x10] sm:$0xff]
        %v3950 = vld [vmem:[#allocation11 + $0x18] sm:$0xff]
        %v3951 = vld [vmem:[#allocation13] sm:$0xff]
        %v3952 = vld [vmem:[#allocation13 + $0x8] sm:$0xff]
        %3954 = vset.pattern.permute.xlu0 0
        %3955 = vperm.xlu0 %3954, %v3951
        %v3956 = vpop.permute.xlu0 %3955
        %3959 = vset.pattern.permute.xlu0 0
        %3960 = vperm.xlu0 %3959, %v3952
        %v3961 = vpop.permute.xlu0 %3960
        %v3964 = vsel %vm3021, %v3948, 0
        %v3967 = vsel %vm3021, %v3950, 0
        %3969 = vmatprep.subr.mxu0 0.0
        %3970 = vmatpush1.msra.mxu0 %v3936
        %3971 = vmatprep.subr.mxu0 0.0
        %3972 = vmatpush1.msra.mxu0 %v3935
        %3973 = vmatprep.subr.mxu0 0.0
        %3974 = vmatpush1.msra.mxu0 %v3928
        %3975 = vmatprep.subr.mxu0 0.0
        %3976 = vmatpush1.msra.mxu0 %v3927
        %3977 = vmatprep.subr.mxu0 0.0
        %3978 = vmatpush1.msra.mxu0 %v3926
        %3979 = vmatprep.subr.mxu0 0.0
        %3980 = vmatpush1.msra.mxu0 %v3925
        %3981 = vmatprep.subr.mxu0 0.0
        %3982 = vmatpush1.msra.mxu0 %v3874
        %3983 = vmatprep.subr.mxu0 0.0
        %3984 = vmatpush1.msra.mxu0 %v3869
        %3985 = vmatprep.subr.mxu0 0.0
        %3986 = vmatpush1.msra.mxu0 %v3916
        %3987 = vmatprep.subr.mxu0 0.0
        %3988 = vmatpush1.msra.mxu0 %v3915
        %3989 = vmatprep.subr.mxu0 0.0
        %3990 = vmatpush1.msra.mxu0 %v3914
        %3991 = vmatprep.subr.mxu0 0.0
        %3992 = vmatpush1.msra.mxu0 %v3913
        %3993 = vmatprep.subr.mxu0 0.0
        %3994 = vmatpush1.msra.mxu0 %v3902
        %3995 = vmatprep.subr.mxu0 0.0
        %3996 = vmatpush1.msra.mxu0 %v3901
        %3997 = vmatprep.subr.mxu0 0.0
        %3998 = vmatpush1.msra.mxu0 %v3893
        %3999 = vmatprep.subr.mxu0 0.0
        %4000 = vmatpush1.msra.mxu0 %v3892
        %4001 = vmatprep.subr.mxu0 0.0
        %4002 = vmatpush2.msra.mxu0 0.0
        %4003 = vmatprep.subr.mxu0 0.0
        %4004 = vmatpush2.msra.mxu0 0.0
        %4005 = vmatprep.subr.mxu0 0.0
        %4006 = vmatpush2.msra.mxu0 0.0
        %4007 = vmatprep.subr.mxu0 0.0
        %4008 = vmatpush2.msra.mxu0 0.0
        %4009 = vmatprep.subr.mxu0 0.0
        %4010 = vmatpush2.msra.mxu0 0.0
        %4011 = vmatprep.subr.mxu0 0.0
        %4012 = vmatpush2.msra.mxu0 0.0
        %4013 = vmatprep.subr.mxu0 0.0
        %4014 = vmatpush2.msra.mxu0 0.0
        %4015 = vmatprep.subr.mxu0 0.0
        %4016 = vmatpush2.msra.mxu0 0.0
        %4017 = vmatprep.subr.mxu0 0.0
        %4018 = vmatpush2.msra.mxu0 0.0
        %4019 = vmatprep.subr.mxu0 0.0
        %4020 = vmatpush2.msra.mxu0 0.0
        %4021 = vmatprep.subr.mxu0 0.0
        %4022 = vmatpush2.msra.mxu0 0.0
        %4023 = vmatprep.subr.mxu0 0.0
        %4024 = vmatpush2.msra.mxu0 0.0
        %4025 = vmatprep.subr.mxu0 0.0
        %4026 = vmatpush2.msra.mxu0 0.0
        %4027 = vmatprep.subr.mxu0 0.0
        %4028 = vmatpush2.msra.mxu0 0.0
        %4029 = vmatprep.subr.mxu0 0.0
        %4030 = vmatpush2.msra.mxu0 %v3946
        %4031 = vmatprep.subr.mxu0 0.0
        %4032 = vmatpush2.msra.mxu0 %v3945
        %4033 = vmatprep.mubr.f32.mxu0 %v3964
        %4034 = vmatmul.mubr.f32.gmra.mxu0 %v3947
        %v4035 = vpop.f32.mrf.mxu0
        %v4036 = vadd.f32 %v3956, %v4035
        %v4037 = vpop.f32.mrf.mxu0
        %4038 = vmatprep.mubr.f32.mxu0 %v3967
        %4039 = vmatmul.mubr.f32.gmra.mxu0 %v3949
        %v4040 = vpop.f32.mrf.mxu0
        %v4041 = vadd.f32 %v3961, %v4040
        %v4042 = vpop.f32.mrf.mxu0
        %4043 = vdwg.mxu0
        %v4044 = vmax.f32 %v4036, 0.0
        %v4045 = vmax.f32 %v4041, 0.0
        %4048 = vrot.lane.b32.xlu0 %v4044, 3
        %v4049 = vpop.permute.xlu0 %4048
        %4050 = vrot.lane.b32.xlu0 %v4045, 3
        %v4051 = vpop.permute.xlu0 %4050
        %v4054 = vsel %vm3632, 0.0, %v4049
        %v4055 = vsel %vm3632, 0.0, %v4051
        %v4056 = vsel %vm3891, %v4054, 0.0
        %v4057 = vsel %vm3891, %v4055, 0.0
        %4058 = vrot.lane.b32.xlu0 %v4044, 2
        %v4059 = vpop.permute.xlu0 %4058
        %4060 = vrot.lane.b32.xlu0 %v4045, 2
        %v4061 = vpop.permute.xlu0 %4060
        %v4064 = vsel %vm3900, 0.0, %v4059
        %v4065 = vsel %vm3900, 0.0, %v4061
        %4066 = vrot.lane.b32.xlu0 %v4044, 1
        %v4067 = vpop.permute.xlu0 %4066
        %4068 = vrot.lane.b32.xlu0 %v4045, 1
        %v4069 = vpop.permute.xlu0 %4068
        %v4072 = vsel %vm1624, 0.0, %v4067
        %v4073 = vsel %vm1624, 0.0, %v4069
        %v4074 = vsel %vm3912, %v4072, 0.0
        %v4075 = vsel %vm3912, %v4073, 0.0
        %v4076 = vsel %vm3891, %v4072, 0.0
        %v4077 = vsel %vm3891, %v4073, 0.0
        %4078 = vrot.lane.b32.xlu0 %v4044, 127
        %v4079 = vpop.permute.xlu0 %4078
        %4080 = vrot.lane.b32.xlu0 %v4045, 127
        %v4081 = vpop.permute.xlu0 %4080
        %v4084 = vsel %vm3632, %v4079, 0.0
        %v4085 = vsel %vm3632, %v4081, 0.0
        %v4086 = vsel %vm3912, %v4084, 0.0
        %v4087 = vsel %vm3912, %v4085, 0.0
        %v4088 = vsel %vm3891, %v4084, 0.0
        %v4089 = vsel %vm3891, %v4085, 0.0
        %4090 = vrot.lane.b32.xlu0 %v4044, 126
        %v4091 = vpop.permute.xlu0 %4090
        %4092 = vrot.lane.b32.xlu0 %v4045, 126
        %v4093 = vpop.permute.xlu0 %4092
        %v4096 = vsel %vm3900, %v4091, 0.0
        %v4097 = vsel %vm3900, %v4093, 0.0
        %4098 = vrot.lane.b32.xlu0 %v4044, 125
        %v4099 = vpop.permute.xlu0 %4098
        %4100 = vrot.lane.b32.xlu0 %v4045, 125
        %v4101 = vpop.permute.xlu0 %4100
        %v4104 = vsel %vm1624, %v4099, 0.0
        %v4105 = vsel %vm1624, %v4101, 0.0
        %v4106 = vsel %vm3912, %v4104, 0.0
        %v4107 = vsel %vm3912, %v4105, 0.0
        %v4108 = vld [vmem:[#allocation14] sm:$0xff]
        %v4109 = vld [vmem:[#allocation14 + $0x8] sm:$0xff]
        %v4110 = vld [vmem:[#allocation14 + $0x10] sm:$0xff]
        %v4111 = vld [vmem:[#allocation14 + $0x18] sm:$0xff]
        %v4112 = vld [vmem:[#allocation16] sm:$0xff]
        %v4113 = vld [vmem:[#allocation16 + $0x8] sm:$0xff]
        %4115 = vset.pattern.permute.xlu0 0
        %4116 = vperm.xlu0 %4115, %v4112
        %v4117 = vpop.permute.xlu0 %4116
        %4120 = vset.pattern.permute.xlu0 0
        %4121 = vperm.xlu0 %4120, %v4113
        %v4122 = vpop.permute.xlu0 %4121
        %v4125 = vsel %vm3021, %v4109, 0
        %v4128 = vsel %vm3021, %v4111, 0
        %4130 = vmatprep.subr.mxu0 0.0
        %4131 = vmatpush1.msra.mxu0 %v4097
        %4132 = vmatprep.subr.mxu0 0.0
        %4133 = vmatpush1.msra.mxu0 %v4096
        %4134 = vmatprep.subr.mxu0 0.0
        %4135 = vmatpush1.msra.mxu0 %v4089
        %4136 = vmatprep.subr.mxu0 0.0
        %4137 = vmatpush1.msra.mxu0 %v4088
        %4138 = vmatprep.subr.mxu0 0.0
        %4139 = vmatpush1.msra.mxu0 %v4087
        %4140 = vmatprep.subr.mxu0 0.0
        %4141 = vmatpush1.msra.mxu0 %v4086
        %4142 = vmatprep.subr.mxu0 0.0
        %4143 = vmatpush1.msra.mxu0 %v4045
        %4144 = vmatprep.subr.mxu0 0.0
        %4145 = vmatpush1.msra.mxu0 %v4044
        %4146 = vmatprep.subr.mxu0 0.0
        %4147 = vmatpush1.msra.mxu0 %v4077
        %4148 = vmatprep.subr.mxu0 0.0
        %4149 = vmatpush1.msra.mxu0 %v4076
        %4150 = vmatprep.subr.mxu0 0.0
        %4151 = vmatpush1.msra.mxu0 %v4075
        %4152 = vmatprep.subr.mxu0 0.0
        %4153 = vmatpush1.msra.mxu0 %v4074
        %4154 = vmatprep.subr.mxu0 0.0
        %4155 = vmatpush1.msra.mxu0 %v4065
        %4156 = vmatprep.subr.mxu0 0.0
        %4157 = vmatpush1.msra.mxu0 %v4064
        %4158 = vmatprep.subr.mxu0 0.0
        %4159 = vmatpush1.msra.mxu0 %v4057
        %4160 = vmatprep.subr.mxu0 0.0
        %4161 = vmatpush1.msra.mxu0 %v4056
        %4162 = vmatprep.subr.mxu0 0.0
        %4163 = vmatpush2.msra.mxu0 0.0
        %4164 = vmatprep.subr.mxu0 0.0
        %4165 = vmatpush2.msra.mxu0 0.0
        %4166 = vmatprep.subr.mxu0 0.0
        %4167 = vmatpush2.msra.mxu0 0.0
        %4168 = vmatprep.subr.mxu0 0.0
        %4169 = vmatpush2.msra.mxu0 0.0
        %4170 = vmatprep.subr.mxu0 0.0
        %4171 = vmatpush2.msra.mxu0 0.0
        %4172 = vmatprep.subr.mxu0 0.0
        %4173 = vmatpush2.msra.mxu0 0.0
        %4174 = vmatprep.subr.mxu0 0.0
        %4175 = vmatpush2.msra.mxu0 0.0
        %4176 = vmatprep.subr.mxu0 0.0
        %4177 = vmatpush2.msra.mxu0 0.0
        %4178 = vmatprep.subr.mxu0 0.0
        %4179 = vmatpush2.msra.mxu0 0.0
        %4180 = vmatprep.subr.mxu0 0.0
        %4181 = vmatpush2.msra.mxu0 0.0
        %4182 = vmatprep.subr.mxu0 0.0
        %4183 = vmatpush2.msra.mxu0 0.0
        %4184 = vmatprep.subr.mxu0 0.0
        %4185 = vmatpush2.msra.mxu0 0.0
        %4186 = vmatprep.subr.mxu0 0.0
        %4187 = vmatpush2.msra.mxu0 0.0
        %4188 = vmatprep.subr.mxu0 0.0
        %4189 = vmatpush2.msra.mxu0 0.0
        %4190 = vmatprep.subr.mxu0 0.0
        %4191 = vmatpush2.msra.mxu0 %v4107
        %4192 = vmatprep.subr.mxu0 0.0
        %4193 = vmatpush2.msra.mxu0 %v4106
        %4194 = vmatprep.mubr.f32.mxu0 %v4125
        %4195 = vmatmul.mubr.f32.gmra.mxu0 %v4108
        %v4196 = vpop.f32.mrf.mxu0
        %v4197 = vadd.f32 %v4117, %v4196
        %v4198 = vpop.f32.mrf.mxu0
        %4199 = vmatprep.mubr.f32.mxu0 %v4128
        %4200 = vmatmul.mubr.f32.gmra.mxu0 %v4110
        %v4201 = vpop.f32.mrf.mxu0
        %v4202 = vadd.f32 %v4122, %v4201
        %v4203 = vpop.f32.mrf.mxu0
        %4204 = vdwg.mxu0
        %v4205 = vadd.f32 %v3869, %v4197
        %v4206 = vadd.f32 %v3874, %v4202
        %v4207 = vmax.f32 %v4205, 0.0
        %v4208 = vmax.f32 %v4206, 0.0
        %4211 = vrot.lane.b32.xlu0 %v4207, 3
        %v4212 = vpop.permute.xlu0 %4211
        %4213 = vrot.lane.b32.xlu0 %v4208, 3
        %v4214 = vpop.permute.xlu0 %4213
        %v4217 = vsel %vm3632, 0.0, %v4212
        %v4218 = vsel %vm3632, 0.0, %v4214
        %v4219 = vsel %vm3891, %v4217, 0.0
        %v4220 = vsel %vm3891, %v4218, 0.0
        %4221 = vrot.lane.b32.xlu0 %v4207, 2
        %v4222 = vpop.permute.xlu0 %4221
        %4223 = vrot.lane.b32.xlu0 %v4208, 2
        %v4224 = vpop.permute.xlu0 %4223
        %v4227 = vsel %vm3900, 0.0, %v4222
        %v4228 = vsel %vm3900, 0.0, %v4224
        %4229 = vrot.lane.b32.xlu0 %v4207, 1
        %v4230 = vpop.permute.xlu0 %4229
        %4231 = vrot.lane.b32.xlu0 %v4208, 1
        %v4232 = vpop.permute.xlu0 %4231
        %v4235 = vsel %vm1624, 0.0, %v4230
        %v4236 = vsel %vm1624, 0.0, %v4232
        %v4237 = vsel %vm3912, %v4235, 0.0
        %v4238 = vsel %vm3912, %v4236, 0.0
        %v4239 = vsel %vm3891, %v4235, 0.0
        %v4240 = vsel %vm3891, %v4236, 0.0
        %4241 = vrot.lane.b32.xlu0 %v4207, 127
        %v4242 = vpop.permute.xlu0 %4241
        %4243 = vrot.lane.b32.xlu0 %v4208, 127
        %v4244 = vpop.permute.xlu0 %4243
        %v4247 = vsel %vm3632, %v4242, 0.0
        %v4248 = vsel %vm3632, %v4244, 0.0
        %v4249 = vsel %vm3912, %v4247, 0.0
        %v4250 = vsel %vm3912, %v4248, 0.0
        %v4251 = vsel %vm3891, %v4247, 0.0
        %v4252 = vsel %vm3891, %v4248, 0.0
        %4253 = vrot.lane.b32.xlu0 %v4207, 126
        %v4254 = vpop.permute.xlu0 %4253
        %4255 = vrot.lane.b32.xlu0 %v4208, 126
        %v4256 = vpop.permute.xlu0 %4255
        %v4259 = vsel %vm3900, %v4254, 0.0
        %v4260 = vsel %vm3900, %v4256, 0.0
        %4261 = vrot.lane.b32.xlu0 %v4207, 125
        %v4262 = vpop.permute.xlu0 %4261
        %4263 = vrot.lane.b32.xlu0 %v4208, 125
        %v4264 = vpop.permute.xlu0 %4263
        %v4267 = vsel %vm1624, %v4262, 0.0
        %v4268 = vsel %vm1624, %v4264, 0.0
        %v4269 = vsel %vm3912, %v4267, 0.0
        %v4270 = vsel %vm3912, %v4268, 0.0
        %v4271 = vld [vmem:[#allocation17] sm:$0xff]
        %v4272 = vld [vmem:[#allocation17 + $0x8] sm:$0xff]
        %v4273 = vld [vmem:[#allocation17 + $0x10] sm:$0xff]
        %v4274 = vld [vmem:[#allocation17 + $0x18] sm:$0xff]
        %v4275 = vld [vmem:[#allocation19] sm:$0xff]
        %v4276 = vld [vmem:[#allocation19 + $0x8] sm:$0xff]
        %4278 = vset.pattern.permute.xlu0 0
        %4279 = vperm.xlu0 %4278, %v4275
        %v4280 = vpop.permute.xlu0 %4279
        %4283 = vset.pattern.permute.xlu0 0
        %4284 = vperm.xlu0 %4283, %v4276
        %v4285 = vpop.permute.xlu0 %4284
        %v4288 = vsel %vm3021, %v4272, 0
        %v4291 = vsel %vm3021, %v4274, 0
        %4293 = vmatprep.subr.mxu0 0.0
        %4294 = vmatpush1.msra.mxu0 %v4260
        %4295 = vmatprep.subr.mxu0 0.0
        %4296 = vmatpush1.msra.mxu0 %v4259
        %4297 = vmatprep.subr.mxu0 0.0
        %4298 = vmatpush1.msra.mxu0 %v4252
        %4299 = vmatprep.subr.mxu0 0.0
        %4300 = vmatpush1.msra.mxu0 %v4251
        %4301 = vmatprep.subr.mxu0 0.0
        %4302 = vmatpush1.msra.mxu0 %v4250
        %4303 = vmatprep.subr.mxu0 0.0
        %4304 = vmatpush1.msra.mxu0 %v4249
        %4305 = vmatprep.subr.mxu0 0.0
        %4306 = vmatpush1.msra.mxu0 %v4208
        %4307 = vmatprep.subr.mxu0 0.0
        %4308 = vmatpush1.msra.mxu0 %v4207
        %4309 = vmatprep.subr.mxu0 0.0
        %4310 = vmatpush1.msra.mxu0 %v4240
        %4311 = vmatprep.subr.mxu0 0.0
        %4312 = vmatpush1.msra.mxu0 %v4239
        %4313 = vmatprep.subr.mxu0 0.0
        %4314 = vmatpush1.msra.mxu0 %v4238
        %4315 = vmatprep.subr.mxu0 0.0
        %4316 = vmatpush1.msra.mxu0 %v4237
        %4317 = vmatprep.subr.mxu0 0.0
        %4318 = vmatpush1.msra.mxu0 %v4228
        %4319 = vmatprep.subr.mxu0 0.0
        %4320 = vmatpush1.msra.mxu0 %v4227
        %4321 = vmatprep.subr.mxu0 0.0
        %4322 = vmatpush1.msra.mxu0 %v4220
        %4323 = vmatprep.subr.mxu0 0.0
        %4324 = vmatpush1.msra.mxu0 %v4219
        %4325 = vmatprep.subr.mxu0 0.0
        %4326 = vmatpush2.msra.mxu0 0.0
        %4327 = vmatprep.subr.mxu0 0.0
        %4328 = vmatpush2.msra.mxu0 0.0
        %4329 = vmatprep.subr.mxu0 0.0
        %4330 = vmatpush2.msra.mxu0 0.0
        %4331 = vmatprep.subr.mxu0 0.0
        %4332 = vmatpush2.msra.mxu0 0.0
        %4333 = vmatprep.subr.mxu0 0.0
        %4334 = vmatpush2.msra.mxu0 0.0
        %4335 = vmatprep.subr.mxu0 0.0
        %4336 = vmatpush2.msra.mxu0 0.0
        %4337 = vmatprep.subr.mxu0 0.0
        %4338 = vmatpush2.msra.mxu0 0.0
        %4339 = vmatprep.subr.mxu0 0.0
        %4340 = vmatpush2.msra.mxu0 0.0
        %4341 = vmatprep.subr.mxu0 0.0
        %4342 = vmatpush2.msra.mxu0 0.0
        %4343 = vmatprep.subr.mxu0 0.0
        %4344 = vmatpush2.msra.mxu0 0.0
        %4345 = vmatprep.subr.mxu0 0.0
        %4346 = vmatpush2.msra.mxu0 0.0
        %4347 = vmatprep.subr.mxu0 0.0
        %4348 = vmatpush2.msra.mxu0 0.0
        %4349 = vmatprep.subr.mxu0 0.0
        %4350 = vmatpush2.msra.mxu0 0.0
        %4351 = vmatprep.subr.mxu0 0.0
        %4352 = vmatpush2.msra.mxu0 0.0
        %4353 = vmatprep.subr.mxu0 0.0
        %4354 = vmatpush2.msra.mxu0 %v4270
        %4355 = vmatprep.subr.mxu0 0.0
        %4356 = vmatpush2.msra.mxu0 %v4269
        %4357 = vmatprep.mubr.f32.mxu0 %v4288
        %4358 = vmatmul.mubr.f32.gmra.mxu0 %v4271
        %v4359 = vpop.f32.mrf.mxu0
        %v4360 = vadd.f32 %v4280, %v4359
        %v4361 = vpop.f32.mrf.mxu0
        %4362 = vmatprep.mubr.f32.mxu0 %v4291
        %4363 = vmatmul.mubr.f32.gmra.mxu0 %v4273
        %v4364 = vpop.f32.mrf.mxu0
        %v4365 = vadd.f32 %v4285, %v4364
        %v4366 = vpop.f32.mrf.mxu0
        %4367 = vdwg.mxu0
        %v4368 = vmax.f32 %v4360, 0.0
        %v4369 = vmax.f32 %v4365, 0.0
        %4372 = vrot.lane.b32.xlu0 %v4368, 3
        %v4373 = vpop.permute.xlu0 %4372
        %4374 = vrot.lane.b32.xlu0 %v4369, 3
        %v4375 = vpop.permute.xlu0 %4374
        %v4378 = vsel %vm3632, 0.0, %v4373
        %v4379 = vsel %vm3632, 0.0, %v4375
        %v4380 = vsel %vm3891, %v4378, 0.0
        %v4381 = vsel %vm3891, %v4379, 0.0
        %4382 = vrot.lane.b32.xlu0 %v4368, 2
        %v4383 = vpop.permute.xlu0 %4382
        %4384 = vrot.lane.b32.xlu0 %v4369, 2
        %v4385 = vpop.permute.xlu0 %4384
        %v4388 = vsel %vm3900, 0.0, %v4383
        %v4389 = vsel %vm3900, 0.0, %v4385
        %4390 = vrot.lane.b32.xlu0 %v4368, 1
        %v4391 = vpop.permute.xlu0 %4390
        %4392 = vrot.lane.b32.xlu0 %v4369, 1
        %v4393 = vpop.permute.xlu0 %4392
        %v4396 = vsel %vm1624, 0.0, %v4391
        %v4397 = vsel %vm1624, 0.0, %v4393
        %v4398 = vsel %vm3912, %v4396, 0.0
        %v4399 = vsel %vm3912, %v4397, 0.0
        %v4400 = vsel %vm3891, %v4396, 0.0
        %v4401 = vsel %vm3891, %v4397, 0.0
        %4402 = vrot.lane.b32.xlu0 %v4368, 127
        %v4403 = vpop.permute.xlu0 %4402
        %4404 = vrot.lane.b32.xlu0 %v4369, 127
        %v4405 = vpop.permute.xlu0 %4404
        %v4408 = vsel %vm3632, %v4403, 0.0
        %v4409 = vsel %vm3632, %v4405, 0.0
        %v4410 = vsel %vm3912, %v4408, 0.0
        %v4411 = vsel %vm3912, %v4409, 0.0
        %v4412 = vsel %vm3891, %v4408, 0.0
        %v4413 = vsel %vm3891, %v4409, 0.0
        %4414 = vrot.lane.b32.xlu0 %v4368, 126
        %v4415 = vpop.permute.xlu0 %4414
        %4416 = vrot.lane.b32.xlu0 %v4369, 126
        %v4417 = vpop.permute.xlu0 %4416
        %v4420 = vsel %vm3900, %v4415, 0.0
        %v4421 = vsel %vm3900, %v4417, 0.0
        %4422 = vrot.lane.b32.xlu0 %v4368, 125
        %v4423 = vpop.permute.xlu0 %4422
        %4424 = vrot.lane.b32.xlu0 %v4369, 125
        %v4425 = vpop.permute.xlu0 %4424
        %v4428 = vsel %vm1624, %v4423, 0.0
        %v4429 = vsel %vm1624, %v4425, 0.0
        %v4430 = vsel %vm3912, %v4428, 0.0
        %v4431 = vsel %vm3912, %v4429, 0.0
        %v4432 = vld [vmem:[#allocation20] sm:$0xff]
        %v4433 = vld [vmem:[#allocation20 + $0x8] sm:$0xff]
        %v4434 = vld [vmem:[#allocation20 + $0x10] sm:$0xff]
        %v4435 = vld [vmem:[#allocation20 + $0x18] sm:$0xff]
        %v4436 = vld [vmem:[#allocation22] sm:$0xff]
        %v4437 = vld [vmem:[#allocation22 + $0x8] sm:$0xff]
        %4439 = vset.pattern.permute.xlu0 0
        %4440 = vperm.xlu0 %4439, %v4436
        %v4441 = vpop.permute.xlu0 %4440
        %4444 = vset.pattern.permute.xlu0 0
        %4445 = vperm.xlu0 %4444, %v4437
        %v4446 = vpop.permute.xlu0 %4445
        %v4449 = vsel %vm3021, %v4433, 0
        %v4452 = vsel %vm3021, %v4435, 0
        %4454 = vmatprep.subr.mxu0 0.0
        %4455 = vmatpush1.msra.mxu0 %v4421
        %4456 = vmatprep.subr.mxu0 0.0
        %4457 = vmatpush1.msra.mxu0 %v4420
        %4458 = vmatprep.subr.mxu0 0.0
        %4459 = vmatpush1.msra.mxu0 %v4413
        %4460 = vmatprep.subr.mxu0 0.0
        %4461 = vmatpush1.msra.mxu0 %v4412
        %4462 = vmatprep.subr.mxu0 0.0
        %4463 = vmatpush1.msra.mxu0 %v4411
        %4464 = vmatprep.subr.mxu0 0.0
        %4465 = vmatpush1.msra.mxu0 %v4410
        %4466 = vmatprep.subr.mxu0 0.0
        %4467 = vmatpush1.msra.mxu0 %v4369
        %4468 = vmatprep.subr.mxu0 0.0
        %4469 = vmatpush1.msra.mxu0 %v4368
        %4470 = vmatprep.subr.mxu0 0.0
        %4471 = vmatpush1.msra.mxu0 %v4401
        %4472 = vmatprep.subr.mxu0 0.0
        %4473 = vmatpush1.msra.mxu0 %v4400
        %4474 = vmatprep.subr.mxu0 0.0
        %4475 = vmatpush1.msra.mxu0 %v4399
        %4476 = vmatprep.subr.mxu0 0.0
        %4477 = vmatpush1.msra.mxu0 %v4398
        %4478 = vmatprep.subr.mxu0 0.0
        %4479 = vmatpush1.msra.mxu0 %v4389
        %4480 = vmatprep.subr.mxu0 0.0
        %4481 = vmatpush1.msra.mxu0 %v4388
        %4482 = vmatprep.subr.mxu0 0.0
        %4483 = vmatpush1.msra.mxu0 %v4381
        %4484 = vmatprep.subr.mxu0 0.0
        %4485 = vmatpush1.msra.mxu0 %v4380
        %4486 = vmatprep.subr.mxu0 0.0
        %4487 = vmatpush2.msra.mxu0 0.0
        %4488 = vmatprep.subr.mxu0 0.0
        %4489 = vmatpush2.msra.mxu0 0.0
        %4490 = vmatprep.subr.mxu0 0.0
        %4491 = vmatpush2.msra.mxu0 0.0
        %4492 = vmatprep.subr.mxu0 0.0
        %4493 = vmatpush2.msra.mxu0 0.0
        %4494 = vmatprep.subr.mxu0 0.0
        %4495 = vmatpush2.msra.mxu0 0.0
        %4496 = vmatprep.subr.mxu0 0.0
        %4497 = vmatpush2.msra.mxu0 0.0
        %4498 = vmatprep.subr.mxu0 0.0
        %4499 = vmatpush2.msra.mxu0 0.0
        %4500 = vmatprep.subr.mxu0 0.0
        %4501 = vmatpush2.msra.mxu0 0.0
        %4502 = vmatprep.subr.mxu0 0.0
        %4503 = vmatpush2.msra.mxu0 0.0
        %4504 = vmatprep.subr.mxu0 0.0
        %4505 = vmatpush2.msra.mxu0 0.0
        %4506 = vmatprep.subr.mxu0 0.0
        %4507 = vmatpush2.msra.mxu0 0.0
        %4508 = vmatprep.subr.mxu0 0.0
        %4509 = vmatpush2.msra.mxu0 0.0
        %4510 = vmatprep.subr.mxu0 0.0
        %4511 = vmatpush2.msra.mxu0 0.0
        %4512 = vmatprep.subr.mxu0 0.0
        %4513 = vmatpush2.msra.mxu0 0.0
        %4514 = vmatprep.subr.mxu0 0.0
        %4515 = vmatpush2.msra.mxu0 %v4431
        %4516 = vmatprep.subr.mxu0 0.0
        %4517 = vmatpush2.msra.mxu0 %v4430
        %4518 = vmatprep.mubr.f32.mxu0 %v4449
        %4519 = vmatmul.mubr.f32.gmra.mxu0 %v4432
        %v4520 = vpop.f32.mrf.mxu0
        %v4521 = vadd.f32 %v4441, %v4520
        %v4522 = vpop.f32.mrf.mxu0
        %4523 = vmatprep.mubr.f32.mxu0 %v4452
        %4524 = vmatmul.mubr.f32.gmra.mxu0 %v4434
        %v4525 = vpop.f32.mrf.mxu0
        %v4526 = vadd.f32 %v4446, %v4525
        %v4527 = vpop.f32.mrf.mxu0
        %4528 = vdwg.mxu0
        %v4529 = vadd.f32 %v4207, %v4521
        %v4530 = vadd.f32 %v4208, %v4526
        %v4531 = vmax.f32 %v4529, 0.0
        %v4532 = vmax.f32 %v4530, 0.0
        %4535 = vrot.lane.b32.xlu0 %v4531, 3
        %v4536 = vpop.permute.xlu0 %4535
        %4537 = vrot.lane.b32.xlu0 %v4532, 3
        %v4538 = vpop.permute.xlu0 %4537
        %v4541 = vsel %vm3632, 0.0, %v4536
        %v4542 = vsel %vm3632, 0.0, %v4538
        %v4543 = vsel %vm3891, %v4541, 0.0
        %v4544 = vsel %vm3891, %v4542, 0.0
        %4545 = vrot.lane.b32.xlu0 %v4531, 2
        %v4546 = vpop.permute.xlu0 %4545
        %4547 = vrot.lane.b32.xlu0 %v4532, 2
        %v4548 = vpop.permute.xlu0 %4547
        %v4551 = vsel %vm3900, 0.0, %v4546
        %v4552 = vsel %vm3900, 0.0, %v4548
        %4553 = vrot.lane.b32.xlu0 %v4531, 1
        %v4554 = vpop.permute.xlu0 %4553
        %4555 = vrot.lane.b32.xlu0 %v4532, 1
        %v4556 = vpop.permute.xlu0 %4555
        %v4559 = vsel %vm1624, 0.0, %v4554
        %v4560 = vsel %vm1624, 0.0, %v4556
        %v4561 = vsel %vm3912, %v4559, 0.0
        %v4562 = vsel %vm3912, %v4560, 0.0
        %v4563 = vsel %vm3891, %v4559, 0.0
        %v4564 = vsel %vm3891, %v4560, 0.0
        %4565 = vrot.lane.b32.xlu0 %v4531, 127
        %v4566 = vpop.permute.xlu0 %4565
        %4567 = vrot.lane.b32.xlu0 %v4532, 127
        %v4568 = vpop.permute.xlu0 %4567
        %v4571 = vsel %vm3632, %v4566, 0.0
        %v4572 = vsel %vm3632, %v4568, 0.0
        %v4573 = vsel %vm3912, %v4571, 0.0
        %v4574 = vsel %vm3912, %v4572, 0.0
        %v4575 = vsel %vm3891, %v4571, 0.0
        %v4576 = vsel %vm3891, %v4572, 0.0
        %4577 = vrot.lane.b32.xlu0 %v4531, 126
        %v4578 = vpop.permute.xlu0 %4577
        %4579 = vrot.lane.b32.xlu0 %v4532, 126
        %v4580 = vpop.permute.xlu0 %4579
        %v4583 = vsel %vm3900, %v4578, 0.0
        %v4584 = vsel %vm3900, %v4580, 0.0
        %4585 = vrot.lane.b32.xlu0 %v4531, 125
        %v4586 = vpop.permute.xlu0 %4585
        %4587 = vrot.lane.b32.xlu0 %v4532, 125
        %v4588 = vpop.permute.xlu0 %4587
        %v4591 = vsel %vm1624, %v4586, 0.0
        %v4592 = vsel %vm1624, %v4588, 0.0
        %v4593 = vsel %vm3912, %v4591, 0.0
        %v4594 = vsel %vm3912, %v4592, 0.0
        %v4595 = vld [vmem:[#allocation23] sm:$0xff]
        %v4596 = vld [vmem:[#allocation23 + $0x8] sm:$0xff]
        %v4597 = vld [vmem:[#allocation23 + $0x10] sm:$0xff]
        %v4598 = vld [vmem:[#allocation23 + $0x18] sm:$0xff]
        %v4599 = vld [vmem:[#allocation25] sm:$0xff]
        %v4600 = vld [vmem:[#allocation25 + $0x8] sm:$0xff]
        %4602 = vset.pattern.permute.xlu0 0
        %4603 = vperm.xlu0 %4602, %v4599
        %v4604 = vpop.permute.xlu0 %4603
        %4607 = vset.pattern.permute.xlu0 0
        %4608 = vperm.xlu0 %4607, %v4600
        %v4609 = vpop.permute.xlu0 %4608
        %v4612 = vsel %vm3021, %v4596, 0
        %v4615 = vsel %vm3021, %v4598, 0
        %4617 = vmatprep.subr.mxu0 0.0
        %4618 = vmatpush1.msra.mxu0 %v4584
        %4619 = vmatprep.subr.mxu0 0.0
        %4620 = vmatpush1.msra.mxu0 %v4583
        %4621 = vmatprep.subr.mxu0 0.0
        %4622 = vmatpush1.msra.mxu0 %v4576
        %4623 = vmatprep.subr.mxu0 0.0
        %4624 = vmatpush1.msra.mxu0 %v4575
        %4625 = vmatprep.subr.mxu0 0.0
        %4626 = vmatpush1.msra.mxu0 %v4574
        %4627 = vmatprep.subr.mxu0 0.0
        %4628 = vmatpush1.msra.mxu0 %v4573
        %4629 = vmatprep.subr.mxu0 0.0
        %4630 = vmatpush1.msra.mxu0 %v4532
        %4631 = vmatprep.subr.mxu0 0.0
        %4632 = vmatpush1.msra.mxu0 %v4531
        %4633 = vmatprep.subr.mxu0 0.0
        %4634 = vmatpush1.msra.mxu0 %v4564
        %4635 = vmatprep.subr.mxu0 0.0
        %4636 = vmatpush1.msra.mxu0 %v4563
        %4637 = vmatprep.subr.mxu0 0.0
        %4638 = vmatpush1.msra.mxu0 %v4562
        %4639 = vmatprep.subr.mxu0 0.0
        %4640 = vmatpush1.msra.mxu0 %v4561
        %4641 = vmatprep.subr.mxu0 0.0
        %4642 = vmatpush1.msra.mxu0 %v4552
        %4643 = vmatprep.subr.mxu0 0.0
        %4644 = vmatpush1.msra.mxu0 %v4551
        %4645 = vmatprep.subr.mxu0 0.0
        %4646 = vmatpush1.msra.mxu0 %v4544
        %4647 = vmatprep.subr.mxu0 0.0
        %4648 = vmatpush1.msra.mxu0 %v4543
        %4649 = vmatprep.subr.mxu0 0.0
        %4650 = vmatpush2.msra.mxu0 0.0
        %4651 = vmatprep.subr.mxu0 0.0
        %4652 = vmatpush2.msra.mxu0 0.0
        %4653 = vmatprep.subr.mxu0 0.0
        %4654 = vmatpush2.msra.mxu0 0.0
        %4655 = vmatprep.subr.mxu0 0.0
        %4656 = vmatpush2.msra.mxu0 0.0
        %4657 = vmatprep.subr.mxu0 0.0
        %4658 = vmatpush2.msra.mxu0 0.0
        %4659 = vmatprep.subr.mxu0 0.0
        %4660 = vmatpush2.msra.mxu0 0.0
        %4661 = vmatprep.subr.mxu0 0.0
        %4662 = vmatpush2.msra.mxu0 0.0
        %4663 = vmatprep.subr.mxu0 0.0
        %4664 = vmatpush2.msra.mxu0 0.0
        %4665 = vmatprep.subr.mxu0 0.0
        %4666 = vmatpush2.msra.mxu0 0.0
        %4667 = vmatprep.subr.mxu0 0.0
        %4668 = vmatpush2.msra.mxu0 0.0
        %4669 = vmatprep.subr.mxu0 0.0
        %4670 = vmatpush2.msra.mxu0 0.0
        %4671 = vmatprep.subr.mxu0 0.0
        %4672 = vmatpush2.msra.mxu0 0.0
        %4673 = vmatprep.subr.mxu0 0.0
        %4674 = vmatpush2.msra.mxu0 0.0
        %4675 = vmatprep.subr.mxu0 0.0
        %4676 = vmatpush2.msra.mxu0 0.0
        %4677 = vmatprep.subr.mxu0 0.0
        %4678 = vmatpush2.msra.mxu0 %v4594
        %4679 = vmatprep.subr.mxu0 0.0
        %4680 = vmatpush2.msra.mxu0 %v4593
        %4681 = vmatprep.mubr.f32.mxu0 %v4612
        %4682 = vmatmul.mubr.f32.gmra.mxu0 %v4595
        %v4683 = vpop.f32.mrf.mxu0
        %v4684 = vadd.f32 %v4604, %v4683
        %v4685 = vpop.f32.mrf.mxu0
        %4686 = vmatprep.mubr.f32.mxu0 %v4615
        %4687 = vmatmul.mubr.f32.gmra.mxu0 %v4597
        %v4688 = vpop.f32.mrf.mxu0
        %v4689 = vadd.f32 %v4609, %v4688
        %v4690 = vpop.f32.mrf.mxu0
        %4691 = vdwg.mxu0
        %v4692 = vmax.f32 %v4684, 0.0
        %v4693 = vmax.f32 %v4689, 0.0
        %4696 = vrot.lane.b32.xlu0 %v4692, 3
        %v4697 = vpop.permute.xlu0 %4696
        %4698 = vrot.lane.b32.xlu0 %v4693, 3
        %v4699 = vpop.permute.xlu0 %4698
        %v4702 = vsel %vm3632, 0.0, %v4697
        %v4703 = vsel %vm3632, 0.0, %v4699
        %v4704 = vsel %vm3891, %v4702, 0.0
        %v4705 = vsel %vm3891, %v4703, 0.0
        %4706 = vrot.lane.b32.xlu0 %v4692, 2
        %v4707 = vpop.permute.xlu0 %4706
        %4708 = vrot.lane.b32.xlu0 %v4693, 2
        %v4709 = vpop.permute.xlu0 %4708
        %v4712 = vsel %vm3900, 0.0, %v4707
        %v4713 = vsel %vm3900, 0.0, %v4709
        %4714 = vrot.lane.b32.xlu0 %v4692, 1
        %v4715 = vpop.permute.xlu0 %4714
        %4716 = vrot.lane.b32.xlu0 %v4693, 1
        %v4717 = vpop.permute.xlu0 %4716
        %v4720 = vsel %vm1624, 0.0, %v4715
        %v4721 = vsel %vm1624, 0.0, %v4717
        %v4722 = vsel %vm3912, %v4720, 0.0
        %v4723 = vsel %vm3912, %v4721, 0.0
        %v4724 = vsel %vm3891, %v4720, 0.0
        %v4725 = vsel %vm3891, %v4721, 0.0
        %4726 = vrot.lane.b32.xlu0 %v4692, 127
        %v4727 = vpop.permute.xlu0 %4726
        %4728 = vrot.lane.b32.xlu0 %v4693, 127
        %v4729 = vpop.permute.xlu0 %4728
        %v4732 = vsel %vm3632, %v4727, 0.0
        %v4733 = vsel %vm3632, %v4729, 0.0
        %v4734 = vsel %vm3912, %v4732, 0.0
        %v4735 = vsel %vm3912, %v4733, 0.0
        %v4736 = vsel %vm3891, %v4732, 0.0
        %v4737 = vsel %vm3891, %v4733, 0.0
        %4738 = vrot.lane.b32.xlu0 %v4692, 126
        %v4739 = vpop.permute.xlu0 %4738
        %4740 = vrot.lane.b32.xlu0 %v4693, 126
        %v4741 = vpop.permute.xlu0 %4740
        %v4744 = vsel %vm3900, %v4739, 0.0
        %v4745 = vsel %vm3900, %v4741, 0.0
        %4746 = vrot.lane.b32.xlu0 %v4692, 125
        %v4747 = vpop.permute.xlu0 %4746
        %4748 = vrot.lane.b32.xlu0 %v4693, 125
        %v4749 = vpop.permute.xlu0 %4748
        %v4752 = vsel %vm1624, %v4747, 0.0
        %v4753 = vsel %vm1624, %v4749, 0.0
        %v4754 = vsel %vm3912, %v4752, 0.0
        %v4755 = vsel %vm3912, %v4753, 0.0
        %v4756 = vld [vmem:[#allocation26] sm:$0xff]
        %v4757 = vld [vmem:[#allocation26 + $0x8] sm:$0xff]
        %v4758 = vld [vmem:[#allocation26 + $0x10] sm:$0xff]
        %v4759 = vld [vmem:[#allocation26 + $0x18] sm:$0xff]
        %v4760 = vld [vmem:[#allocation28] sm:$0xff]
        %v4761 = vld [vmem:[#allocation28 + $0x8] sm:$0xff]
        %4763 = vset.pattern.permute.xlu0 0
        %4764 = vperm.xlu0 %4763, %v4760
        %v4765 = vpop.permute.xlu0 %4764
        %4768 = vset.pattern.permute.xlu0 0
        %4769 = vperm.xlu0 %4768, %v4761
        %v4770 = vpop.permute.xlu0 %4769
        %v4773 = vsel %vm3021, %v4757, 0
        %v4776 = vsel %vm3021, %v4759, 0
        %4778 = vmatprep.subr.mxu0 0.0
        %4779 = vmatpush1.msra.mxu0 %v4745
        %4780 = vmatprep.subr.mxu0 0.0
        %4781 = vmatpush1.msra.mxu0 %v4744
        %4782 = vmatprep.subr.mxu0 0.0
        %4783 = vmatpush1.msra.mxu0 %v4737
        %4784 = vmatprep.subr.mxu0 0.0
        %4785 = vmatpush1.msra.mxu0 %v4736
        %4786 = vmatprep.subr.mxu0 0.0
        %4787 = vmatpush1.msra.mxu0 %v4735
        %4788 = vmatprep.subr.mxu0 0.0
        %4789 = vmatpush1.msra.mxu0 %v4734
        %4790 = vmatprep.subr.mxu0 0.0
        %4791 = vmatpush1.msra.mxu0 %v4693
        %4792 = vmatprep.subr.mxu0 0.0
        %4793 = vmatpush1.msra.mxu0 %v4692
        %4794 = vmatprep.subr.mxu0 0.0
        %4795 = vmatpush1.msra.mxu0 %v4725
        %4796 = vmatprep.subr.mxu0 0.0
        %4797 = vmatpush1.msra.mxu0 %v4724
        %4798 = vmatprep.subr.mxu0 0.0
        %4799 = vmatpush1.msra.mxu0 %v4723
        %4800 = vmatprep.subr.mxu0 0.0
        %4801 = vmatpush1.msra.mxu0 %v4722
        %4802 = vmatprep.subr.mxu0 0.0
        %4803 = vmatpush1.msra.mxu0 %v4713
        %4804 = vmatprep.subr.mxu0 0.0
        %4805 = vmatpush1.msra.mxu0 %v4712
        %4806 = vmatprep.subr.mxu0 0.0
        %4807 = vmatpush1.msra.mxu0 %v4705
        %4808 = vmatprep.subr.mxu0 0.0
        %4809 = vmatpush1.msra.mxu0 %v4704
        %4810 = vmatprep.subr.mxu0 0.0
        %4811 = vmatpush2.msra.mxu0 0.0
        %4812 = vmatprep.subr.mxu0 0.0
        %4813 = vmatpush2.msra.mxu0 0.0
        %4814 = vmatprep.subr.mxu0 0.0
        %4815 = vmatpush2.msra.mxu0 0.0
        %4816 = vmatprep.subr.mxu0 0.0
        %4817 = vmatpush2.msra.mxu0 0.0
        %4818 = vmatprep.subr.mxu0 0.0
        %4819 = vmatpush2.msra.mxu0 0.0
        %4820 = vmatprep.subr.mxu0 0.0
        %4821 = vmatpush2.msra.mxu0 0.0
        %4822 = vmatprep.subr.mxu0 0.0
        %4823 = vmatpush2.msra.mxu0 0.0
        %4824 = vmatprep.subr.mxu0 0.0
        %4825 = vmatpush2.msra.mxu0 0.0
        %4826 = vmatprep.subr.mxu0 0.0
        %4827 = vmatpush2.msra.mxu0 0.0
        %4828 = vmatprep.subr.mxu0 0.0
        %4829 = vmatpush2.msra.mxu0 0.0
        %4830 = vmatprep.subr.mxu0 0.0
        %4831 = vmatpush2.msra.mxu0 0.0
        %4832 = vmatprep.subr.mxu0 0.0
        %4833 = vmatpush2.msra.mxu0 0.0
        %4834 = vmatprep.subr.mxu0 0.0
        %4835 = vmatpush2.msra.mxu0 0.0
        %4836 = vmatprep.subr.mxu0 0.0
        %4837 = vmatpush2.msra.mxu0 0.0
        %4838 = vmatprep.subr.mxu0 0.0
        %4839 = vmatpush2.msra.mxu0 %v4755
        %4840 = vmatprep.subr.mxu0 0.0
        %4841 = vmatpush2.msra.mxu0 %v4754
        %4842 = vmatprep.mubr.f32.mxu0 %v4773
        %4843 = vmatmul.mubr.f32.gmra.mxu0 %v4756
        %v4844 = vpop.f32.mrf.mxu0
        %v4845 = vadd.f32 %v4765, %v4844
        %v4846 = vpop.f32.mrf.mxu0
        %4847 = vmatprep.mubr.f32.mxu0 %v4776
        %4848 = vmatmul.mubr.f32.gmra.mxu0 %v4758
        %v4849 = vpop.f32.mrf.mxu0
        %v4850 = vadd.f32 %v4770, %v4849
        %v4851 = vpop.f32.mrf.mxu0
        %4852 = vdwg.mxu0
        %v4853 = vadd.f32 %v4531, %v4845
        %v4854 = vadd.f32 %v4532, %v4850
        %v4855 = vmax.f32 %v4853, 0.0
        %v4856 = vmax.f32 %v4854, 0.0
        %v4857 = vld [vmem:[#allocation29] sm:$0x3]
        %v4858 = vld [vmem:[#allocation31] sm:$0x3]
        %4860 = vset.pattern.permute.xlu0 0
        %4861 = vperm.xlu0 %4860, %v4858
        %v4862 = vpop.permute.xlu0 %4861
        %v4865 = vsel %vm3021, %v4857, 0
        %4867 = vmatprep.subr.mxu0 0.0
        %4868 = vmatpush1.msra.mxu0 0.0
        %4869 = vmatprep.subr.mxu0 0.0
        %4870 = vmatpush1.msra.mxu0 0.0
        %4871 = vmatprep.subr.mxu0 0.0
        %4872 = vmatpush1.msra.mxu0 0.0
        %4873 = vmatprep.subr.mxu0 0.0
        %4874 = vmatpush1.msra.mxu0 0.0
        %4875 = vmatprep.subr.mxu0 0.0
        %4876 = vmatpush1.msra.mxu0 0.0
        %4877 = vmatprep.subr.mxu0 0.0
        %4878 = vmatpush1.msra.mxu0 0.0
        %4879 = vmatprep.subr.mxu0 0.0
        %4880 = vmatpush1.msra.mxu0 0.0
        %4881 = vmatprep.subr.mxu0 0.0
        %4882 = vmatpush1.msra.mxu0 0.0
        %4883 = vmatprep.subr.mxu0 0.0
        %4884 = vmatpush1.msra.mxu0 0.0
        %4885 = vmatprep.subr.mxu0 0.0
        %4886 = vmatpush1.msra.mxu0 0.0
        %4887 = vmatprep.subr.mxu0 0.0
        %4888 = vmatpush1.msra.mxu0 0.0
        %4889 = vmatprep.subr.mxu0 0.0
        %4890 = vmatpush1.msra.mxu0 0.0
        %4891 = vmatprep.subr.mxu0 0.0
        %4892 = vmatpush1.msra.mxu0 0.0
        %4893 = vmatprep.subr.mxu0 0.0
        %4894 = vmatpush1.msra.mxu0 0.0
        %4895 = vmatprep.subr.mxu0 0.0
        %4896 = vmatpush1.msra.mxu0 %v4856
        %4897 = vmatprep.subr.mxu0 0.0
        %4898 = vmatpush1.msra.mxu0 %v4855
        %4899 = vmatprep.subr.mxu0 0.0
        %4900 = vmatpush2.msra.mxu0 0.0
        %4901 = vmatprep.subr.mxu0 0.0
        %4902 = vmatpush2.msra.mxu0 0.0
        %4903 = vmatprep.subr.mxu0 0.0
        %4904 = vmatpush2.msra.mxu0 0.0
        %4905 = vmatprep.subr.mxu0 0.0
        %4906 = vmatpush2.msra.mxu0 0.0
        %4907 = vmatprep.subr.mxu0 0.0
        %4908 = vmatpush2.msra.mxu0 0.0
        %4909 = vmatprep.subr.mxu0 0.0
        %4910 = vmatpush2.msra.mxu0 0.0
        %4911 = vmatprep.subr.mxu0 0.0
        %4912 = vmatpush2.msra.mxu0 0.0
        %4913 = vmatprep.subr.mxu0 0.0
        %4914 = vmatpush2.msra.mxu0 0.0
        %4915 = vmatprep.subr.mxu0 0.0
        %4916 = vmatpush2.msra.mxu0 0.0
        %4917 = vmatprep.subr.mxu0 0.0
        %4918 = vmatpush2.msra.mxu0 0.0
        %4919 = vmatprep.subr.mxu0 0.0
        %4920 = vmatpush2.msra.mxu0 0.0
        %4921 = vmatprep.subr.mxu0 0.0
        %4922 = vmatpush2.msra.mxu0 0.0
        %4923 = vmatprep.subr.mxu0 0.0
        %4924 = vmatpush2.msra.mxu0 0.0
        %4925 = vmatprep.subr.mxu0 0.0
        %4926 = vmatpush2.msra.mxu0 0.0
        %4927 = vmatprep.subr.mxu0 0.0
        %4928 = vmatpush2.msra.mxu0 0.0
        %4929 = vmatprep.subr.mxu0 0.0
        %4930 = vmatpush2.msra.mxu0 0.0
        %4931 = vmatprep.mubr.f32.mxu0 0.0
        %4932 = vmatmul.mubr.f32.gmra.mxu0 %v4865
        %v4933 = vpop.f32.mrf.mxu0
        %v4934 = vadd.f32 %v4862, %v4933
        %v4935 = vpop.f32.mrf.mxu0
        %4936 = vdwg.mxu0
        %v4937 = vld [vmem:[#allocation32] sm:$0x3]
        %v4938 = vld [vmem:[#allocation34] sm:$0x3]
        %4940 = vset.pattern.permute.xlu0 0
        %4941 = vperm.xlu0 %4940, %v4938
        %v4942 = vpop.permute.xlu0 %4941
        %v4945 = vsel %vm3021, %v4937, 0
        %4947 = vmatprep.subr.mxu0 0.0
        %4948 = vmatpush1.msra.mxu0 0.0
        %4949 = vmatprep.subr.mxu0 0.0
        %4950 = vmatpush1.msra.mxu0 0.0
        %4951 = vmatprep.subr.mxu0 0.0
        %4952 = vmatpush1.msra.mxu0 0.0
        %4953 = vmatprep.subr.mxu0 0.0
        %4954 = vmatpush1.msra.mxu0 0.0
        %4955 = vmatprep.subr.mxu0 0.0
        %4956 = vmatpush1.msra.mxu0 0.0
        %4957 = vmatprep.subr.mxu0 0.0
        %4958 = vmatpush1.msra.mxu0 0.0
        %4959 = vmatprep.subr.mxu0 0.0
        %4960 = vmatpush1.msra.mxu0 0.0
        %4961 = vmatprep.subr.mxu0 0.0
        %4962 = vmatpush1.msra.mxu0 0.0
        %4963 = vmatprep.subr.mxu0 0.0
        %4964 = vmatpush1.msra.mxu0 0.0
        %4965 = vmatprep.subr.mxu0 0.0
        %4966 = vmatpush1.msra.mxu0 0.0
        %4967 = vmatprep.subr.mxu0 0.0
        %4968 = vmatpush1.msra.mxu0 0.0
        %4969 = vmatprep.subr.mxu0 0.0
        %4970 = vmatpush1.msra.mxu0 0.0
        %4971 = vmatprep.subr.mxu0 0.0
        %4972 = vmatpush1.msra.mxu0 0.0
        %4973 = vmatprep.subr.mxu0 0.0
        %4974 = vmatpush1.msra.mxu0 0.0
        %4975 = vmatprep.subr.mxu0 0.0
        %4976 = vmatpush1.msra.mxu0 %v4856
        %4977 = vmatprep.subr.mxu0 0.0
        %4978 = vmatpush1.msra.mxu0 %v4855
        %4979 = vmatprep.subr.mxu0 0.0
        %4980 = vmatpush2.msra.mxu0 0.0
        %4981 = vmatprep.subr.mxu0 0.0
        %4982 = vmatpush2.msra.mxu0 0.0
        %4983 = vmatprep.subr.mxu0 0.0
        %4984 = vmatpush2.msra.mxu0 0.0
        %4985 = vmatprep.subr.mxu0 0.0
        %4986 = vmatpush2.msra.mxu0 0.0
        %4987 = vmatprep.subr.mxu0 0.0
        %4988 = vmatpush2.msra.mxu0 0.0
        %4989 = vmatprep.subr.mxu0 0.0
        %4990 = vmatpush2.msra.mxu0 0.0
        %4991 = vmatprep.subr.mxu0 0.0
        %4992 = vmatpush2.msra.mxu0 0.0
        %4993 = vmatprep.subr.mxu0 0.0
        %4994 = vmatpush2.msra.mxu0 0.0
        %4995 = vmatprep.subr.mxu0 0.0
        %4996 = vmatpush2.msra.mxu0 0.0
        %4997 = vmatprep.subr.mxu0 0.0
        %4998 = vmatpush2.msra.mxu0 0.0
        %4999 = vmatprep.subr.mxu0 0.0
        %5000 = vmatpush2.msra.mxu0 0.0
        %5001 = vmatprep.subr.mxu0 0.0
        %5002 = vmatpush2.msra.mxu0 0.0
        %5003 = vmatprep.subr.mxu0 0.0
        %5004 = vmatpush2.msra.mxu0 0.0
        %5005 = vmatprep.subr.mxu0 0.0
        %5006 = vmatpush2.msra.mxu0 0.0
        %5007 = vmatprep.subr.mxu0 0.0
        %5008 = vmatpush2.msra.mxu0 0.0
        %5009 = vmatprep.subr.mxu0 0.0
        %5010 = vmatpush2.msra.mxu0 0.0
        %5011 = vmatprep.mubr.f32.mxu0 0.0
        %5012 = vmatmul.mubr.f32.gmra.mxu0 %v4945
        %v5013 = vpop.f32.mrf.mxu0
        %v5014 = vadd.f32 %v4942, %v5013
        %v5015 = vpop.f32.mrf.mxu0
        %5016 = vdwg.mxu0
        %v5017 = vld [vmem:[#allocation35] sm:$0xff]
        %v5018 = vld [vmem:[#allocation35 + $0x8] sm:$0xff]
        %v5019 = vld [vmem:[#allocation37] sm:$0xff]
        %v5020 = vld [vmem:[#allocation37 + $0x8] sm:$0xff]
        %5022 = vset.pattern.permute.xlu0 0
        %5023 = vperm.xlu0 %5022, %v5019
        %v5024 = vpop.permute.xlu0 %5023
        %5027 = vset.pattern.permute.xlu0 0
        %5028 = vperm.xlu0 %5027, %v5020
        %v5029 = vpop.permute.xlu0 %5028
        %v5032 = vsel %vm3021, %v5017, 0
        %v5035 = vsel %vm3021, %v5018, 0
        %5037 = vmatprep.subr.mxu0 0.0
        %5038 = vmatpush1.msra.mxu0 0.0
        %5039 = vmatprep.subr.mxu0 0.0
        %5040 = vmatpush1.msra.mxu0 0.0
        %5041 = vmatprep.subr.mxu0 0.0
        %5042 = vmatpush1.msra.mxu0 0.0
        %5043 = vmatprep.subr.mxu0 0.0
        %5044 = vmatpush1.msra.mxu0 0.0
        %5045 = vmatprep.subr.mxu0 0.0
        %5046 = vmatpush1.msra.mxu0 0.0
        %5047 = vmatprep.subr.mxu0 0.0
        %5048 = vmatpush1.msra.mxu0 0.0
        %5049 = vmatprep.subr.mxu0 0.0
        %5050 = vmatpush1.msra.mxu0 0.0
        %5051 = vmatprep.subr.mxu0 0.0
        %5052 = vmatpush1.msra.mxu0 0.0
        %5053 = vmatprep.subr.mxu0 0.0
        %5054 = vmatpush1.msra.mxu0 0.0
        %5055 = vmatprep.subr.mxu0 0.0
        %5056 = vmatpush1.msra.mxu0 0.0
        %5057 = vmatprep.subr.mxu0 0.0
        %5058 = vmatpush1.msra.mxu0 0.0
        %5059 = vmatprep.subr.mxu0 0.0
        %5060 = vmatpush1.msra.mxu0 0.0
        %5061 = vmatprep.subr.mxu0 0.0
        %5062 = vmatpush1.msra.mxu0 0.0
        %5063 = vmatprep.subr.mxu0 0.0
        %5064 = vmatpush1.msra.mxu0 0.0
        %5065 = vmatprep.subr.mxu0 0.0
        %5066 = vmatpush1.msra.mxu0 %v4856
        %5067 = vmatprep.subr.mxu0 0.0
        %5068 = vmatpush1.msra.mxu0 %v4855
        %5069 = vmatprep.subr.mxu0 0.0
        %5070 = vmatpush2.msra.mxu0 0.0
        %5071 = vmatprep.subr.mxu0 0.0
        %5072 = vmatpush2.msra.mxu0 0.0
        %5073 = vmatprep.subr.mxu0 0.0
        %5074 = vmatpush2.msra.mxu0 0.0
        %5075 = vmatprep.subr.mxu0 0.0
        %5076 = vmatpush2.msra.mxu0 0.0
        %5077 = vmatprep.subr.mxu0 0.0
        %5078 = vmatpush2.msra.mxu0 0.0
        %5079 = vmatprep.subr.mxu0 0.0
        %5080 = vmatpush2.msra.mxu0 0.0
        %5081 = vmatprep.subr.mxu0 0.0
        %5082 = vmatpush2.msra.mxu0 0.0
        %5083 = vmatprep.subr.mxu0 0.0
        %5084 = vmatpush2.msra.mxu0 0.0
        %5085 = vmatprep.subr.mxu0 0.0
        %5086 = vmatpush2.msra.mxu0 0.0
        %5087 = vmatprep.subr.mxu0 0.0
        %5088 = vmatpush2.msra.mxu0 0.0
        %5089 = vmatprep.subr.mxu0 0.0
        %5090 = vmatpush2.msra.mxu0 0.0
        %5091 = vmatprep.subr.mxu0 0.0
        %5092 = vmatpush2.msra.mxu0 0.0
        %5093 = vmatprep.subr.mxu0 0.0
        %5094 = vmatpush2.msra.mxu0 0.0
        %5095 = vmatprep.subr.mxu0 0.0
        %5096 = vmatpush2.msra.mxu0 0.0
        %5097 = vmatprep.subr.mxu0 0.0
        %5098 = vmatpush2.msra.mxu0 0.0
        %5099 = vmatprep.subr.mxu0 0.0
        %5100 = vmatpush2.msra.mxu0 0.0
        %5101 = vmatprep.mubr.f32.mxu0 0.0
        %5102 = vmatmul.mubr.f32.gmra.mxu0 %v5032
        %v5103 = vpop.f32.mrf.mxu0
        %v5104 = vadd.f32 %v5024, %v5103
        %v5105 = vpop.f32.mrf.mxu0
        %5106 = vmatprep.mubr.f32.mxu0 0.0
        %5107 = vmatmul.mubr.f32.gmra.mxu0 %v5035
        %v5108 = vpop.f32.mrf.mxu0
        %v5109 = vadd.f32 %v5029, %v5108
        %v5110 = vpop.f32.mrf.mxu0
        %5111 = vdwg.mxu0
        %5112 = vxpose.xlu0.b32.start [1/16] %v4934, 128
        %5113 = vxpose.xlu0.b32.cont [2/16] 0.0, 128
        %5114 = vxpose.xlu0.b32.cont [3/16] 0.0, 128
        %5115 = vxpose.xlu0.b32.cont [4/16] 0.0, 128
        %5116 = vxpose.xlu0.b32.cont [5/16] 0.0, 128
        %5117 = vxpose.xlu0.b32.cont [6/16] 0.0, 128
        %5118 = vxpose.xlu0.b32.cont [7/16] 0.0, 128
        %5119 = vxpose.xlu0.b32.cont [8/16] 0.0, 128
        %5120 = vxpose.xlu0.b32.cont [9/16] 0.0, 128
        %5121 = vxpose.xlu0.b32.cont [10/16] 0.0, 128
        %5122 = vxpose.xlu0.b32.cont [11/16] 0.0, 128
        %5123 = vxpose.xlu0.b32.cont [12/16] 0.0, 128
        %5124 = vxpose.xlu0.b32.cont [13/16] 0.0, 128
        %5125 = vxpose.xlu0.b32.cont [14/16] 0.0, 128
        %5126 = vxpose.xlu0.b32.cont [15/16] 0.0, 128
        %5127 = vxpose.xlu0.b32.end [16/16] 0.0, 128
        %v5128 = vpop.trf.xlu0
        %v5129 = vpop.trf.xlu0
        %v5130 = vpop.trf.xlu0
        %v5131 = vpop.trf.xlu0
        %v5132 = vpop.trf.xlu0
        %v5133 = vpop.trf.xlu0
        %v5134 = vpop.trf.xlu0
        %v5135 = vpop.trf.xlu0
        %v5136 = vpop.trf.xlu0
        %v5137 = vpop.trf.xlu0
        %v5138 = vpop.trf.xlu0
        %v5139 = vpop.trf.xlu0
        %v5140 = vpop.trf.xlu0
        %v5141 = vpop.trf.xlu0
        %v5142 = vpop.trf.xlu0
        %v5143 = vpop.trf.xlu0
        %v5145 = vsel %vm3900, %v5128, 0
        %v5148 = vsel %vm1981, %v5014, 0
        %5150 = vmatprep.subr.mxu0 0.0
        %5151 = vmatpush1.msra.mxu0 0.0
        %5152 = vmatprep.subr.mxu0 0.0
        %5153 = vmatpush1.msra.mxu0 0.0
        %5154 = vmatprep.subr.mxu0 0.0
        %5155 = vmatpush1.msra.mxu0 0.0
        %5156 = vmatprep.subr.mxu0 0.0
        %5157 = vmatpush1.msra.mxu0 0.0
        %5158 = vmatprep.subr.mxu0 0.0
        %5159 = vmatpush1.msra.mxu0 0.0
        %5160 = vmatprep.subr.mxu0 0.0
        %5161 = vmatpush1.msra.mxu0 0.0
        %5162 = vmatprep.subr.mxu0 0.0
        %5163 = vmatpush1.msra.mxu0 0.0
        %5164 = vmatprep.subr.mxu0 0.0
        %5165 = vmatpush1.msra.mxu0 0.0
        %5166 = vmatprep.subr.mxu0 0.0
        %5167 = vmatpush1.msra.mxu0 0.0
        %5168 = vmatprep.subr.mxu0 0.0
        %5169 = vmatpush1.msra.mxu0 0.0
        %5170 = vmatprep.subr.mxu0 0.0
        %5171 = vmatpush1.msra.mxu0 0.0
        %5172 = vmatprep.subr.mxu0 0.0
        %5173 = vmatpush1.msra.mxu0 0.0
        %5174 = vmatprep.subr.mxu0 0.0
        %5175 = vmatpush1.msra.mxu0 0.0
        %5176 = vmatprep.subr.mxu0 0.0
        %5177 = vmatpush1.msra.mxu0 0.0
        %5178 = vmatprep.subr.mxu0 0.0
        %5179 = vmatpush1.msra.mxu0 0.0
        %5180 = vmatprep.subr.mxu0 0.0
        %5181 = vmatpush1.msra.mxu0 %v5148
        %5182 = vmatprep.subr.mxu0 0.0
        %5183 = vmatpush2.msra.mxu0 0.0
        %5184 = vmatprep.subr.mxu0 0.0
        %5185 = vmatpush2.msra.mxu0 0.0
        %5186 = vmatprep.subr.mxu0 0.0
        %5187 = vmatpush2.msra.mxu0 0.0
        %5188 = vmatprep.subr.mxu0 0.0
        %5189 = vmatpush2.msra.mxu0 0.0
        %5190 = vmatprep.subr.mxu0 0.0
        %5191 = vmatpush2.msra.mxu0 0.0
        %5192 = vmatprep.subr.mxu0 0.0
        %5193 = vmatpush2.msra.mxu0 0.0
        %5194 = vmatprep.subr.mxu0 0.0
        %5195 = vmatpush2.msra.mxu0 0.0
        %5196 = vmatprep.subr.mxu0 0.0
        %5197 = vmatpush2.msra.mxu0 0.0
        %5198 = vmatprep.subr.mxu0 0.0
        %5199 = vmatpush2.msra.mxu0 0.0
        %5200 = vmatprep.subr.mxu0 0.0
        %5201 = vmatpush2.msra.mxu0 0.0
        %5202 = vmatprep.subr.mxu0 0.0
        %5203 = vmatpush2.msra.mxu0 0.0
        %5204 = vmatprep.subr.mxu0 0.0
        %5205 = vmatpush2.msra.mxu0 0.0
        %5206 = vmatprep.subr.mxu0 0.0
        %5207 = vmatpush2.msra.mxu0 0.0
        %5208 = vmatprep.subr.mxu0 0.0
        %5209 = vmatpush2.msra.mxu0 0.0
        %5210 = vmatprep.subr.mxu0 0.0
        %5211 = vmatpush2.msra.mxu0 0.0
        %5212 = vmatprep.subr.mxu0 0.0
        %5213 = vmatpush2.msra.mxu0 0.0
        %5214 = vmatprep.mubr.f32.mxu0 0.0
        %5215 = vmatmul.mubr.f32.gmra.mxu0 %v5145
        %v5216 = vpop.f32.mrf.mxu0
        %v5217 = vadd.f32 0.0, %v5216
        %v5218 = vpop.f32.mrf.mxu0
        %5219 = vdwg.mxu0
        %v5220 = vmul.f32 %v5217, 0.70710677
        %vm5221 = vcmask 27648
        %v5222 = vsel %vm5221, %v5220, -inf
        %5223 = vmax.xlane.f32.xlu0 %v5222
        %v5224 = vpop.xlane.xlu0 %5223
        %v5225 = vsub.f32 %v5220, %v5224
        %v5226 = vmul.f32 %v5225, 1.442695
        %v5227 = vpow.pop %v5226
        %v5228 = vsel %vm5221, %v5227, 0.0
        %5229 = vadd.xlane.f32.xlu0 %v5228
        %v5230 = vpop.xlane.xlu0 %5229
        %v5231 = vrcp.pop %v5230
        %v5232 = vmul.f32 %v5227, %v5231
        %v5234 = vsel %vm3627, %v5104, 0
        %v5237 = vsel %vm3627, %v5109, 0
        %v5240 = vsel %vm3627, %v5232, 0
        %5242 = vmatprep.subr.mxu0 0.0
        %5243 = vmatpush1.xpose.msra.mxu0 0.0
        %5244 = vmatprep.subr.mxu0 0.0
        %5245 = vmatpush1.xpose.msra.mxu0 0.0
        %5246 = vmatprep.subr.mxu0 0.0
        %5247 = vmatpush1.xpose.msra.mxu0 0.0
        %5248 = vmatprep.subr.mxu0 0.0
        %5249 = vmatpush1.xpose.msra.mxu0 0.0
        %5250 = vmatprep.subr.mxu0 0.0
        %5251 = vmatpush1.xpose.msra.mxu0 0.0
        %5252 = vmatprep.subr.mxu0 0.0
        %5253 = vmatpush1.xpose.msra.mxu0 0.0
        %5254 = vmatprep.subr.mxu0 0.0
        %5255 = vmatpush1.xpose.msra.mxu0 0.0
        %5256 = vmatprep.subr.mxu0 0.0
        %5257 = vmatpush1.xpose.msra.mxu0 0.0
        %5258 = vmatprep.subr.mxu0 0.0
        %5259 = vmatpush1.xpose.msra.mxu0 0.0
        %5260 = vmatprep.subr.mxu0 0.0
        %5261 = vmatpush1.xpose.msra.mxu0 0.0
        %5262 = vmatprep.subr.mxu0 0.0
        %5263 = vmatpush1.xpose.msra.mxu0 0.0
        %5264 = vmatprep.subr.mxu0 0.0
        %5265 = vmatpush1.xpose.msra.mxu0 0.0
        %5266 = vmatprep.subr.mxu0 0.0
        %5267 = vmatpush1.xpose.msra.mxu0 0.0
        %5268 = vmatprep.subr.mxu0 0.0
        %5269 = vmatpush1.xpose.msra.mxu0 0.0
        %5270 = vmatprep.subr.mxu0 0.0
        %5271 = vmatpush1.xpose.msra.mxu0 0.0
        %5272 = vmatprep.subr.mxu0 0.0
        %5273 = vmatpush1.xpose.msra.mxu0 %v5240
        %5274 = vmatprep.subr.mxu0 0.0
        %5275 = vmatpush2.xpose.msra.mxu0 0.0
        %5276 = vmatprep.subr.mxu0 0.0
        %5277 = vmatpush2.xpose.msra.mxu0 0.0
        %5278 = vmatprep.subr.mxu0 0.0
        %5279 = vmatpush2.xpose.msra.mxu0 0.0
        %5280 = vmatprep.subr.mxu0 0.0
        %5281 = vmatpush2.xpose.msra.mxu0 0.0
        %5282 = vmatprep.subr.mxu0 0.0
        %5283 = vmatpush2.xpose.msra.mxu0 0.0
        %5284 = vmatprep.subr.mxu0 0.0
        %5285 = vmatpush2.xpose.msra.mxu0 0.0
        %5286 = vmatprep.subr.mxu0 0.0
        %5287 = vmatpush2.xpose.msra.mxu0 0.0
        %5288 = vmatprep.subr.mxu0 0.0
        %5289 = vmatpush2.xpose.msra.mxu0 0.0
        %5290 = vmatprep.subr.mxu0 0.0
        %5291 = vmatpush2.xpose.msra.mxu0 0.0
        %5292 = vmatprep.subr.mxu0 0.0
        %5293 = vmatpush2.xpose.msra.mxu0 0.0
        %5294 = vmatprep.subr.mxu0 0.0
        %5295 = vmatpush2.xpose.msra.mxu0 0.0
        %5296 = vmatprep.subr.mxu0 0.0
        %5297 = vmatpush2.xpose.msra.mxu0 0.0
        %5298 = vmatprep.subr.mxu0 0.0
        %5299 = vmatpush2.xpose.msra.mxu0 0.0
        %5300 = vmatprep.subr.mxu0 0.0
        %5301 = vmatpush2.xpose.msra.mxu0 0.0
        %5302 = vmatprep.subr.mxu0 0.0
        %5303 = vmatpush2.xpose.msra.mxu0 0.0
        %5304 = vmatprep.subr.mxu0 0.0
        %5305 = vmatpush2.xpose.msra.mxu0 0.0
        %5306 = vmatprep.mubr.f32.mxu0 0.0
        %5307 = vmatmul.mubr.f32.gmra.mxu0 %v5234
        %v5308 = vpop.f32.mrf.mxu0
        %v5309 = vadd.f32 0.0, %v5308
        %v5310 = vpop.f32.mrf.mxu0
        %5311 = vmatprep.mubr.f32.mxu0 0.0
        %5312 = vmatmul.mubr.f32.gmra.mxu0 %v5237
        %v5313 = vpop.f32.mrf.mxu0
        %v5314 = vadd.f32 0.0, %v5313
        %v5315 = vpop.f32.mrf.mxu0
        %5316 = vdwg.mxu0
        %v5317 = vld [vmem:[#allocation2] sm:$0x1]
        %v5319 = vlaneseq
        %v5320 = vshrl.u32 %v5319, 7
        %v5321 = vsub.s32 0, %v5320
        %v5322 = vrot.slane %v5317, %v5321
        %5323 = vset.pattern.permute.xlu0 0
        %5324 = vperm.xlu0 %5323, %v5322
        %v5325 = vpop.permute.xlu0 %5324
        %v5327 = vmul.f32 %v5325, %v5309
        %v5328 = vmul.f32 %v5325, %v5314
        %v5329 = vadd.f32 %v5327, %v4855
        %v5330 = vadd.f32 %v5328, %v4856
        %v5331 = vld [vmem:[#allocation38] sm:$0xff]
        %v5332 = vld [vmem:[#allocation38 + $0x8] sm:$0xff]
        %v5333 = vld [vmem:[#allocation38 + $0x10] sm:$0xff]
        %v5334 = vld [vmem:[#allocation40] sm:$0xff]
        %v5335 = vld [vmem:[#allocation40 + $0x8] sm:$0xff]
        %v5336 = vld [vmem:[#allocation40 + $0x10] sm:$0xff]
        %5338 = vset.pattern.permute.xlu0 0
        %5339 = vperm.xlu0 %5338, %v5334
        %v5340 = vpop.permute.xlu0 %5339
        %5343 = vset.pattern.permute.xlu0 0
        %5344 = vperm.xlu0 %5343, %v5335
        %v5345 = vpop.permute.xlu0 %5344
        %5348 = vset.pattern.permute.xlu0 0
        %5349 = vperm.xlu0 %5348, %v5336
        %v5350 = vpop.permute.xlu0 %5349
        %v5353 = vsel %vm3021, %v5331, 0
        %v5356 = vsel %vm3021, %v5332, 0
        %v5359 = vsel %vm3021, %v5333, 0
        %5361 = vmatprep.subr.mxu0 0.0
        %5362 = vmatpush1.msra.mxu0 0.0
        %5363 = vmatprep.subr.mxu0 0.0
        %5364 = vmatpush1.msra.mxu0 0.0
        %5365 = vmatprep.subr.mxu0 0.0
        %5366 = vmatpush1.msra.mxu0 0.0
        %5367 = vmatprep.subr.mxu0 0.0
        %5368 = vmatpush1.msra.mxu0 0.0
        %5369 = vmatprep.subr.mxu0 0.0
        %5370 = vmatpush1.msra.mxu0 0.0
        %5371 = vmatprep.subr.mxu0 0.0
        %5372 = vmatpush1.msra.mxu0 0.0
        %5373 = vmatprep.subr.mxu0 0.0
        %5374 = vmatpush1.msra.mxu0 0.0
        %5375 = vmatprep.subr.mxu0 0.0
        %5376 = vmatpush1.msra.mxu0 0.0
        %5377 = vmatprep.subr.mxu0 0.0
        %5378 = vmatpush1.msra.mxu0 0.0
        %5379 = vmatprep.subr.mxu0 0.0
        %5380 = vmatpush1.msra.mxu0 0.0
        %5381 = vmatprep.subr.mxu0 0.0
        %5382 = vmatpush1.msra.mxu0 0.0
        %5383 = vmatprep.subr.mxu0 0.0
        %5384 = vmatpush1.msra.mxu0 0.0
        %5385 = vmatprep.subr.mxu0 0.0
        %5386 = vmatpush1.msra.mxu0 0.0
        %5387 = vmatprep.subr.mxu0 0.0
        %5388 = vmatpush1.msra.mxu0 0.0
        %5389 = vmatprep.subr.mxu0 0.0
        %5390 = vmatpush1.msra.mxu0 %v5330
        %5391 = vmatprep.subr.mxu0 0.0
        %5392 = vmatpush1.msra.mxu0 %v5329
        %5393 = vmatprep.subr.mxu0 0.0
        %5394 = vmatpush2.msra.mxu0 0.0
        %5395 = vmatprep.subr.mxu0 0.0
        %5396 = vmatpush2.msra.mxu0 0.0
        %5397 = vmatprep.subr.mxu0 0.0
        %5398 = vmatpush2.msra.mxu0 0.0
        %5399 = vmatprep.subr.mxu0 0.0
        %5400 = vmatpush2.msra.mxu0 0.0
        %5401 = vmatprep.subr.mxu0 0.0
        %5402 = vmatpush2.msra.mxu0 0.0
        %5403 = vmatprep.subr.mxu0 0.0
        %5404 = vmatpush2.msra.mxu0 0.0
        %5405 = vmatprep.subr.mxu0 0.0
        %5406 = vmatpush2.msra.mxu0 0.0
        %5407 = vmatprep.subr.mxu0 0.0
        %5408 = vmatpush2.msra.mxu0 0.0
        %5409 = vmatprep.subr.mxu0 0.0
        %5410 = vmatpush2.msra.mxu0 0.0
        %5411 = vmatprep.subr.mxu0 0.0
        %5412 = vmatpush2.msra.mxu0 0.0
        %5413 = vmatprep.subr.mxu0 0.0
        %5414 = vmatpush2.msra.mxu0 0.0
        %5415 = vmatprep.subr.mxu0 0.0
        %5416 = vmatpush2.msra.mxu0 0.0
        %5417 = vmatprep.subr.mxu0 0.0
        %5418 = vmatpush2.msra.mxu0 0.0
        %5419 = vmatprep.subr.mxu0 0.0
        %5420 = vmatpush2.msra.mxu0 0.0
        %5421 = vmatprep.subr.mxu0 0.0
        %5422 = vmatpush2.msra.mxu0 0.0
        %5423 = vmatprep.subr.mxu0 0.0
        %5424 = vmatpush2.msra.mxu0 0.0
        %5425 = vmatprep.mubr.f32.mxu0 0.0
        %5426 = vmatmul.mubr.f32.gmra.mxu0 %v5353
        %v5427 = vpop.f32.mrf.mxu0
        %v5428 = vadd.f32 %v5340, %v5427
        %v5429 = vpop.f32.mrf.mxu0
        %5430 = vmatprep.mubr.f32.mxu0 0.0
        %5431 = vmatmul.mubr.f32.gmra.mxu0 %v5356
        %v5432 = vpop.f32.mrf.mxu0
        %v5433 = vadd.f32 %v5345, %v5432
        %v5434 = vpop.f32.mrf.mxu0
        %5435 = vmatprep.mubr.f32.mxu0 0.0
        %5436 = vmatmul.mubr.f32.gmra.mxu0 %v5359
        %v5437 = vpop.f32.mrf.mxu0
        %v5438 = vadd.f32 %v5350, %v5437
        %v5439 = vpop.f32.mrf.mxu0
        %5440 = vdwg.mxu0
        %5441 = vst.msk [vmem:[%s1422] sm:$0xff] %vm3627, %v5428
        %5442 = vst.msk [vmem:[%s1422 + $0x8] sm:$0xff] %vm3627, %v5433
        %5443 = vst.msk [vmem:[%s1422 + $0x10] sm:$0xff] %vm3627, %v5438
        %p5444 = scmp.lt.s32.totalorder %s96, 1
        %s5445 = scalar_select %p5444, %s96, 1
        %s5446 = smul.addr %s5445, 3
        %s5447 = smul.addr %s5446, 8
        %s5448 = scalar_lea.vmem %s69, %s5447
        // Predicated region
        $region265: #{hdr_forward.2} parent=155 // pred_check
          %p5449 = pneg %p833
        $region266: #{hdr_forward.2} parent=155 // pred_check_branch
          %5451 = sbr.rel (%p5449) target = $region268
        $region267: #{hdr_forward.2} parent=155 // pred_region
          _
        $region268: #{hdr_forward.2} parent=155 // pred_fallthru
          _
      $region156: #{hdr_forward.2} parent=5 // pred_fallthru
        _
      %p5452 = scmp.le.s32.totalorder 2, %s91
      // Predicated region
      $region269: #{hdr_forward.2} parent=5 // pred_check
        %p5453 = pneg %p5452
      $region270: #{hdr_forward.2} parent=5 // pred_check_branch
        %5455 = sbr.rel (%p5453) target = $region272
      $region271: #{hdr_forward.2} parent=5 // pred_region
        %s5456 = ssub.s32 %s91, 2
        // Predicated region
        $region273: #{hdr_forward.2} parent=271 // pred_check
          %p5457 = pneg %p839
        $region274: #{hdr_forward.2} parent=271 // pred_check_branch
          %5459 = sbr.rel (%p5457) target = $region276
        $region275: #{hdr_forward.2} parent=271 // pred_region
          %p5460 = scmp.lt.s32.totalorder %s97, 1
          %s5461 = scalar_select %p5460, %s97, 1
          %s5462 = smul.addr %s5461, 3
          %s5463 = smul.addr %s5462, 8
          %s5464 = scalar_lea.vmem %s69, %s5463
        $region276: #{hdr_forward.2} parent=271 // pred_fallthru
          _
      $region272: #{hdr_forward.2} parent=5 // pred_fallthru
        _
    $region6: #{hdr_forward.2} parent=1 // loop_footer
      %s95 = sadd.s32 1, %s91
    $region7: #{hdr_forward.2} parent=1 // loop_footer_branch
      %90 = sbr.rel target = $region3
    $region8: #{hdr_forward.2} parent=1 // loop_exit
      _
    %5465 = vsyncpa [#allocation4], 1
    %s5466 = scalar_lea.sflag [#allocation4], 1
    %5467 = vsyncpa %s5466, 1
    %5468 = vsyncpa [#allocation6], 1
    %5469 = vsyncpa [#allocation9], 1
    %5470 = vsyncpa [#allocation12], 1
    %5471 = vsyncpa [#allocation15], 1
    %5472 = vsyncpa [#allocation18], 1
    %5473 = vsyncpa [#allocation21], 1
    %5474 = vsyncpa [#allocation24], 1
    %5475 = vsyncpa [#allocation27], 1
    %5476 = vsyncpa [#allocation30], 1
    %5477 = vsyncpa [#allocation33], 1
    %5478 = vsyncpa [#allocation36], 1
    %5479 = vsyncpa [#allocation39], 1
    %5480 = vsyncpa [#allocation42], 1

</llo_original>
